<compile_context>
chip_gen: v6e
topology: v6e:2x2x1
jax: 0.10.0
libtpu: 0.0.40
codegen_flags: <defaults>
</compile_context>

<pallas_src>
import functools
import math

import jax
import jax.numpy as jnp
from jax.experimental import pallas as pl
from jax.experimental.pallas import tpu as pltpu

_VMEM_LIMIT = 48 * 1024 * 1024   # sized against v7x's 64 MiB physical VMEM


# ---------------------------------------------------------------------------
# Small helpers
# ---------------------------------------------------------------------------

def _round_up(x, m):
    return ((x + m - 1) // m) * m


def _choose_tm(m_pad):
    """m_pad is a multiple of 128.  Prefer ~512-wide lane tiles and >=2 grid steps."""
    if m_pad <= 128:
        return m_pad
    if m_pad <= 256:
        return 128
    tm = min(512, (m_pad // 2 // 128) * 128)
    tm = max(tm, 128)
    while m_pad % tm != 0:
        tm -= 128
    return tm


# ---------------------------------------------------------------------------
# Pallas kernels
# ---------------------------------------------------------------------------

def _mm_bias_kernel(w_ref, x_ref, b_ref, o_ref, *, relu):
    """out = W @ cols + shift, optionally ReLU'd.  bf16 inputs, f32 accumulation."""
    acc = jnp.dot(w_ref[...], x_ref[...], preferred_element_type=jnp.float32)
    y = acc + b_ref[...]
    if relu:
        y = jnp.maximum(y, 0.0)
    o_ref[...] = y.astype(o_ref.dtype)


def _mm_bias_res_kernel(w_ref, x_ref, b_ref, r_ref, o_ref, *, relu):
    """out = W @ cols + shift + residual, optionally ReLU'd."""
    acc = jnp.dot(w_ref[...], x_ref[...], preferred_element_type=jnp.float32)
    y = acc + b_ref[...] + r_ref[...].astype(jnp.float32)
    if relu:
        y = jnp.maximum(y, 0.0)
    o_ref[...] = y.astype(o_ref.dtype)


def _maxpool_kernel(x_ref, o_ref):
    """Accumulating max over the pooling-window grid axis (axis 1 of the grid)."""
    kk = pl.program_id(1)
    x = x_ref[...]

    @pl.when(kk == 0)
    def _():
        o_ref[...] = x

    @pl.when(kk > 0)
    def _():
        o_ref[...] = jnp.maximum(o_ref[...], x)


def _avgpool_fc_kernel(x_ref, a_ref, w_ref, b_ref, o_ref):
    """pooled = x @ A (spatial averaging matrix); logits.T = fc_w @ pooled + b."""
    pooled = jnp.dot(x_ref[...], a_ref[...], preferred_element_type=jnp.float32)
    o_ref[...] = (jnp.dot(w_ref[...], pooled, preferred_element_type=jnp.float32)
                  + b_ref[...])


# ---------------------------------------------------------------------------
# Pallas wrappers
# ---------------------------------------------------------------------------

def matmul_bias(wm, cols, bias, residual=None, relu=False):
    """wm: (Cout, K_pad) bf16, cols: (K_pad, M_pad) bf16, bias: (Cout, 1) f32,
    residual: (Cout, M_pad) bf16 or None  ->  (Cout, M_pad) f32."""
    Cout, K_pad = wm.shape
    _, M_pad = cols.shape
    tm = _choose_tm(M_pad)
    grid = (M_pad // tm,)

    in_specs = [
        pl.BlockSpec((Cout, K_pad), lambda i: (0, 0)),
        pl.BlockSpec((K_pad, tm), lambda i: (0, i)),
        pl.BlockSpec((Cout, 1), lambda i: (0, 0)),
    ]
    args = [wm, cols, bias]
    if residual is not None:
        in_specs.append(pl.BlockSpec((Cout, tm), lambda i: (0, i)))
        args.append(residual)
        kernel = functools.partial(_mm_bias_res_kernel, relu=relu)
    else:
        kernel = functools.partial(_mm_bias_kernel, relu=relu)

    return pl.pallas_call(
        kernel,
        out_shape=jax.ShapeDtypeStruct((Cout, M_pad), jnp.float32),
        grid=grid,
        in_specs=in_specs,
        out_specs=pl.BlockSpec((Cout, tm), lambda i: (0, i)),
        compiler_params=pltpu.CompilerParams(
            dimension_semantics=("parallel",),
            vmem_limit_bytes=_VMEM_LIMIT),
    )(*args)


def maxpool2d_cf(x_cf, k=3, stride=2, pad=1):
    """PyTorch-style MaxPool2d on (C, N, H, W) input, tiled over M with a
    window-axis reduction grid (reduction axis last, accumulator-resident output)."""
    # TODO(synk): the k*k shifted windows are still materialized by XLA glue;
    # fusing the strided window reads into the kernel would remove that traffic.
    C, N, H, W = x_cf.shape
    neg = jnp.finfo(jnp.float32).min
    xp = jnp.pad(x_cf, ((0, 0), (0, 0), (pad, pad), (pad, pad)), constant_values=neg)
    Ho = (H + 2 * pad - k) // stride + 1
    Wo = (W + 2 * pad - k) // stride + 1
    M = N * Ho * Wo
    M_pad = _round_up(M, 128)

    wins = []
    for ki in range(k):
        for kj in range(k):
            sl = xp[:, :, ki:ki + stride * Ho:stride, kj:kj + stride * Wo:stride]
            wins.append(sl.reshape(C, M))
    stacked = jnp.stack(wins, axis=0)                              # (k*k, C, M)
    stacked = jnp.pad(stacked, ((0, 0), (0, 0), (0, M_pad - M)), constant_values=neg)

    KK = k * k
    tm = _choose_tm(M_pad)
    grid = (M_pad // tm, KK)    # reduction (window) axis last

    out = pl.pallas_call(
        _maxpool_kernel,
        out_shape=jax.ShapeDtypeStruct((C, M_pad), jnp.float32),
        grid=grid,
        in_specs=[pl.BlockSpec((None, C, tm), lambda mi, kk: (kk, 0, mi))],
        out_specs=pl.BlockSpec((C, tm), lambda mi, kk: (0, mi)),
        compiler_params=pltpu.CompilerParams(
            dimension_semantics=("parallel", "arbitrary"),
            vmem_limit_bytes=_VMEM_LIMIT),
    )(stacked)
    return out[:, :M].reshape(C, N, Ho, Wo)


def avgpool_fc(x_cf, fc_w, fc_b):
    """Fused AdaptiveAvgPool2d((1,1)) + flatten + Linear: (C, N, H, W) -> (N, nc)."""
    C, N, H, W = x_cf.shape
    HW = H * W
    nc = fc_w.shape[0]
    x2 = x_cf.reshape(C, N * HW).astype(jnp.float32)
    # Averaging matrix: A[n*HW+hw, n] = 1/HW
    avg = jnp.repeat(jnp.eye(N, dtype=jnp.float32), HW, axis=0) / float(HW)
    b2 = fc_b.reshape(nc, 1).astype(jnp.float32)

    out = pl.pallas_call(
        _avgpool_fc_kernel,
        out_shape=jax.ShapeDtypeStruct((nc, N), jnp.float32),
        grid=(1,),
        in_specs=[
            pl.BlockSpec((C, N * HW), lambda i: (0, 0)),
            pl.BlockSpec((N * HW, N), lambda i: (0, 0)),
            pl.BlockSpec((nc, C), lambda i: (0, 0)),
            pl.BlockSpec((nc, 1), lambda i: (0, 0)),
        ],
        out_specs=pl.BlockSpec((nc, N), lambda i: (0, 0)),
        compiler_params=pltpu.CompilerParams(vmem_limit_bytes=_VMEM_LIMIT),
    )(x2, avg, fc_w.astype(jnp.float32), b2)
    return out.T                                                   # (N, nc)


# ---------------------------------------------------------------------------
# Glue: im2col (channel-first), conv+bn(+res)(+relu), blocks
# ---------------------------------------------------------------------------

def _im2col_cf(x_cf, kh, kw, stride, pad, k_pad):
    """Build cols (K_pad, M_pad) in bf16 with K ordered (Cin, kh, kw) and
    M = N*Ho*Wo on the lane axis (padded to a multiple of 128)."""
    # TODO(synk): the kh*kw-expanded patch matrix is still materialized by XLA;
    # fusing the patch gather into the matmul kernel is the remaining big traffic win.
    C, N, H, W = x_cf.shape
    x_bf = x_cf.astype(jnp.bfloat16)
    xp = jnp.pad(x_bf, ((0, 0), (0, 0), (pad, pad), (pad, pad)))
    Ho = (H + 2 * pad - kh) // stride + 1
    Wo = (W + 2 * pad - kw) // stride + 1
    slabs = []
    for ki in range(kh):
        for kj in range(kw):
            slabs.append(xp[:, :, ki:ki + stride * Ho:stride, kj:kj + stride * Wo:stride])
    p = jnp.stack(slabs, axis=1)                    # (C, kh*kw, N, Ho, Wo)
    M = N * Ho * Wo
    M_pad = _round_up(M, 128)
    cols = p.reshape(C * kh * kw, M)                # K order (cin, ki, kj) = weight order
    cols = jnp.pad(cols, ((0, k_pad - C * kh * kw), (0, M_pad - M)))
    return cols, (N, Ho, Wo)


def conv_bn_cf(x_cf, w, bn_scale, bn_shift, stride, pad, relu, residual_cf=None):
    Cout, Cin, kh, kw = w.shape
    K = Cin * kh * kw
    K_pad = _round_up(K, 128)
    cols, (N, Ho, Wo) = _im2col_cf(x_cf, kh, kw, stride, pad, K_pad)
    M = N * Ho * Wo
    M_pad = cols.shape[1]

    # Fold BN scale into the weight matrix; keep only the shift as a bias column.
    wm = w.reshape(Cout, K) * bn_scale.reshape(Cout, 1)
    wm = jnp.pad(wm, ((0, 0), (0, K_pad - K))).astype(jnp.bfloat16)
    bias = bn_shift.reshape(Cout, 1).astype(jnp.float32)

    res = None
    if residual_cf is not None:
        res = residual_cf.reshape(Cout, M)
        res = jnp.pad(res, ((0, 0), (0, M_pad - M))).astype(jnp.bfloat16)

    y = matmul_bias(wm, cols, bias, residual=res, relu=relu)       # (Cout, M_pad) f32
    return y[:, :M].reshape(Cout, N, Ho, Wo)


def basic_block(x_cf, bp):
    stride = bp["stride"]
    out = conv_bn_cf(x_cf, bp["w1"], *bp["bn1"], stride=stride, pad=1, relu=True)
    if "wd" in bp:
        identity = conv_bn_cf(x_cf, bp["wd"], *bp["bnd"], stride=stride, pad=0, relu=False)
    else:
        identity = x_cf
    out = conv_bn_cf(out, bp["w2"], *bp["bn2"], stride=1, pad=1, relu=True,
                     residual_cf=identity)
    return out


def resnet_forward(params, x_nchw):
    # Single layout conversion at the model boundary: NCHW -> (C, N, H, W).
    x = jnp.transpose(x_nchw, (1, 0, 2, 3)).astype(jnp.float32)
    x = conv_bn_cf(x, params["conv1_w"], *params["bn1"], stride=2, pad=3, relu=True)
    x = maxpool2d_cf(x, k=3, stride=2, pad=1)
    for layer in params["layers"]:
        for bp in layer:
            x = basic_block(x, bp)
    return avgpool_fc(x, params["fc_w"], params["fc_b"])           # (N, num_classes)


# ---------------------------------------------------------------------------
# Deterministic parameter initialization
# ---------------------------------------------------------------------------

def _denseshift_quantize(w):
    # TODO(synk): exact DenseShiftConv2d8bit quantizer semantics unknown; approximate
    # with signed power-of-two rounding of full-precision weights.
    sign = jnp.sign(w)
    mag = jnp.maximum(jnp.abs(w), 1e-12)
    expo = jnp.clip(jnp.round(jnp.log2(mag)), -7, 0)
    return sign * jnp.exp2(expo)


def init_params(key, num_classes=10):
    planes = [16, 32, 64, 128]
    num_blocks = [1, 1, 1, 1]     # one BasicBlock (expansion=1) per stage (small synthetic config)
    strides = [1, 2, 2, 2]
    keys = iter(jax.random.split(key, 256))

    def conv_w(cout, cin, k):
        fan_in = cin * k * k
        return (jax.random.normal(next(keys), (cout, cin, k, k), jnp.float32)
                * math.sqrt(2.0 / fan_in))

    def bn(c):
        gamma = 1.0 + 0.1 * jax.random.normal(next(keys), (c,), jnp.float32)
        beta = 0.1 * jax.random.normal(next(keys), (c,), jnp.float32)
        mean = 0.1 * jax.random.normal(next(keys), (c,), jnp.float32)
        var = jnp.abs(jax.random.normal(next(keys), (c,), jnp.float32)) * 0.1 + 1.0
        eps = 1e-5
        scale = gamma / jnp.sqrt(var + eps)
        shift = beta - mean * scale
        return scale, shift

    params = {"conv1_w": conv_w(16, 3, 7), "bn1": bn(16)}
    inplanes = 16
    layers = []
    for p, nb, st in zip(planes, num_blocks, strides):
        blocks = []
        for bi in range(nb):
            stride = st if bi == 0 else 1
            bp = {
                "w1": conv_w(p, inplanes, 3),
                "bn1": bn(p),
                "w2": conv_w(p, p, 3),
                "bn2": bn(p),
                "stride": stride,
            }
            if stride != 1 or inplanes != p:
                bp["wd"] = _denseshift_quantize(conv_w(p, inplanes, 1))
                bp["bnd"] = bn(p)
            inplanes = p
            blocks.append(bp)
        layers.append(blocks)
    params["layers"] = layers
    params["fc_w"] = (jax.random.normal(next(keys), (num_classes, inplanes), jnp.float32)
                      * math.sqrt(1.0 / inplanes))
    params["fc_b"] = 0.01 * jax.random.normal(next(keys), (num_classes,), jnp.float32)
    return params


# ---------------------------------------------------------------------------

if __name__ == "__main__":
    key = jax.random.PRNGKey(0)
    pkey, xkey = jax.random.split(key)
    params = init_params(pkey, num_classes=10)

    # NCHW input, small shapes: batch=2, channels=3, spatial=32x32
    x = jax.random.normal(xkey, (2, 3, 32, 32), jnp.float32)

    # jit with params closed over as constants (keeps per-block Python ints static
    # and lets XLA fuse the im2col / padding glue around the Pallas kernels).
    fwd = jax.jit(functools.partial(resnet_forward, params))
    logits = fwd(x)
    logits = jax.block_until_ready(logits)
    assert logits.shape == (2, 10), logits.shape
    assert bool(jnp.all(jnp.isfinite(logits)))
    print("KERNEL_OK")
</pallas_src>

<mosaic_0001>
module attributes {stable_mosaic.version = 11 : i64} {
  func.func @_mm_bias_kernel(%arg0: i32, %arg1: memref<16x256xbf16, #tpu.memory_space<vmem>>, %arg2: memref<256x256xbf16, #tpu.memory_space<vmem>>, %arg3: memref<16x1xf32, #tpu.memory_space<vmem>>, %arg4: memref<16x256xf32, #tpu.memory_space<vmem>>) attributes {dimension_semantics = [#tpu.dimension_semantics<parallel>], iteration_bounds = array<i64: 2>, scalar_prefetch = 0 : i64, scratch_operands = 0 : i64, tpu.core_type = #tpu.core_type<tc>, window_params = [{pipeline_mode = #tpu.pipeline_mode<synchronous>, transform_indices = @transform_0, window_bounds = array<i64: 16, 256>}, {transform_indices = @transform_1, window_bounds = array<i64: 256, 256>}, {pipeline_mode = #tpu.pipeline_mode<synchronous>, transform_indices = @transform_2, window_bounds = array<i64: 16, 1>}, {transform_indices = @transform_3, window_bounds = array<i64: 16, 256>}]} {
    %c0 = arith.constant 0 : index
    %c0_0 = arith.constant 0 : index
    %0 = vector.load %arg1[%c0, %c0_0] : memref<16x256xbf16, #tpu.memory_space<vmem>>, vector<16x256xbf16>
    %c0_1 = arith.constant 0 : index
    %c0_2 = arith.constant 0 : index
    %1 = vector.load %arg2[%c0_1, %c0_2] : memref<256x256xbf16, #tpu.memory_space<vmem>>, vector<256x256xbf16>
    %cst = arith.constant dense<0.000000e+00> : vector<16x256xf32>
    %2 = tpu.matmul %0, %1, %cst {dimension_numbers = #tpu.dot_dimension_numbers<[1], [0], [0], [1], [0, 0, 1, 1], [], []>} : vector<16x256xbf16>, vector<256x256xbf16>, vector<16x256xf32> -> vector<16x256xf32>
    %c0_3 = arith.constant 0 : index
    %c0_4 = arith.constant 0 : index
    %3 = vector.load %arg3[%c0_3, %c0_4] : memref<16x1xf32, #tpu.memory_space<vmem>>, vector<16x1xf32>
    %4 = vector.broadcast %3 : vector<16x1xf32> to vector<16x256xf32>
    %5 = arith.addf %2, %4 : vector<16x256xf32>
    %cst_5 = arith.constant 0.000000e+00 : f32
    %6 = vector.broadcast %cst_5 : f32 to vector<16x256xf32>
    %7 = arith.maximumf %5, %6 : vector<16x256xf32>
    %c0_6 = arith.constant 0 : index
    %c0_7 = arith.constant 0 : index
    %8 = vector.load %arg4[%c0_6, %c0_7] : memref<16x256xf32, #tpu.memory_space<vmem>>, vector<16x256xf32>
    tpu.vector_store %arg4[%c0_6, %c0_7], %7 {strides = array<i32>} : memref<16x256xf32, #tpu.memory_space<vmem>>, vector<16x256xf32>,
    return
  }
  func.func @transform_0(%arg0: i32) -> (i32, i32) {
    %c0_i32 = arith.constant 0 : i32
    %c0_i32_0 = arith.constant 0 : i32
    %c0_i32_1 = arith.constant 0 : i32
    return %c0_i32, %c0_i32_0 : i32, i32
  }
  func.func @transform_1(%arg0: i32) -> (i32, i32) {
    %c0_i32 = arith.constant 0 : i32
    %c0_i32_0 = arith.constant 0 : i32
    return %c0_i32, %arg0 : i32, i32
  }
  func.func @transform_2(%arg0: i32) -> (i32, i32) {
    %c0_i32 = arith.constant 0 : i32
    %c0_i32_0 = arith.constant 0 : i32
    %c0_i32_1 = arith.constant 0 : i32
    return %c0_i32, %c0_i32_0 : i32, i32
  }
  func.func @transform_3(%arg0: i32) -> (i32, i32) {
    %c0_i32 = arith.constant 0 : i32
    %c0_i32_0 = arith.constant 0 : i32
    return %c0_i32, %arg0 : i32, i32
  }
}

module attributes {stable_mosaic.version = 11 : i64} {
  func.func @_maxpool_kernel(%arg0: i32, %arg1: i32, %arg2: memref<1x16x128xf32, #tpu.memory_space<vmem>>, %arg3: memref<16x128xf32, #tpu.memory_space<vmem>>) attributes {dimension_semantics = [#tpu.dimension_semantics<parallel>, #tpu.dimension_semantics<arbitrary>], iteration_bounds = array<i64: 1, 9>, scalar_prefetch = 0 : i64, scratch_operands = 0 : i64, tpu.core_type = #tpu.core_type<tc>, window_params = [{transform_indices = @transform_0, window_bounds = array<i64: 1, 16, 128>}, {transform_indices = @transform_1, window_bounds = array<i64: 16, 128>}]} {
    %c0 = arith.constant 0 : index
    %c0_0 = arith.constant 0 : index
    %c0_1 = arith.constant 0 : index
    %0 = vector.load %arg2[%c0, %c0_0, %c0_1] : memref<1x16x128xf32, #tpu.memory_space<vmem>>, vector<1x16x128xf32>
    %1 = vector.shape_cast %0 : vector<1x16x128xf32> to vector<16x128xf32>
    %c0_i32 = arith.constant 0 : i32
    %2 = arith.cmpi eq, %arg1, %c0_i32 : i32
    %3 = arith.extui %2 : i1 to i32
    %c0_i32_2 = arith.constant 0 : i32
    %4 = arith.cmpi ne, %3, %c0_i32_2 : i32
    scf.if %4 {
      %c0_5 = arith.constant 0 : index
      %c0_6 = arith.constant 0 : index
      %8 = vector.load %arg3[%c0_5, %c0_6] : memref<16x128xf32, #tpu.memory_space<vmem>>, vector<16x128xf32>
      tpu.vector_store %arg3[%c0_5, %c0_6], %1 {strides = array<i32>} : memref<16x128xf32, #tpu.memory_space<vmem>>, vector<16x128xf32>,
    } else {
    }
    %c0_i32_3 = arith.constant 0 : i32
    %5 = arith.cmpi sgt, %arg1, %c0_i32_3 : i32
    %6 = arith.extui %5 : i1 to i32
    %c0_i32_4 = arith.constant 0 : i32
    %7 = arith.cmpi ne, %6, %c0_i32_4 : i32
    scf.if %7 {
      %c0_5 = arith.constant 0 : index
      %c0_6 = arith.constant 0 : index
      %8 = vector.load %arg3[%c0_5, %c0_6] : memref<16x128xf32, #tpu.memory_space<vmem>>, vector<16x128xf32>
      %9 = arith.maximumf %8, %1 : vector<16x128xf32>
      %c0_7 = arith.constant 0 : index
      %c0_8 = arith.constant 0 : index
      %10 = vector.load %arg3[%c0_7, %c0_8] : memref<16x128xf32, #tpu.memory_space<vmem>>, vector<16x128xf32>
      tpu.vector_store %arg3[%c0_7, %c0_8], %9 {strides = array<i32>} : memref<16x128xf32, #tpu.memory_space<vmem>>, vector<16x128xf32>,
    } else {
    }
    return
  }
  func.func @transform_0(%arg0: i32, %arg1: i32) -> (i32, i32, i32) {
    %c0_i32 = arith.constant 0 : i32
    %c0_i32_0 = arith.constant 0 : i32
    return %arg1, %c0_i32, %arg0 : i32, i32, i32
  }
  func.func @transform_1(%arg0: i32, %arg1: i32) -> (i32, i32) {
    %c0_i32 = arith.constant 0 : i32
    %c0_i32_0 = arith.constant 0 : i32
    return %c0_i32, %arg0 : i32, i32
  }
}

module attributes {stable_mosaic.version = 11 : i64} {
  func.func @_mm_bias_kernel(%arg0: i32, %arg1: memref<16x256xbf16, #tpu.memory_space<vmem>>, %arg2: memref<256x128xbf16, #tpu.memory_space<vmem>>, %arg3: memref<16x1xf32, #tpu.memory_space<vmem>>, %arg4: memref<16x128xf32, #tpu.memory_space<vmem>>) attributes {dimension_semantics = [#tpu.dimension_semantics<parallel>], iteration_bounds = array<i64: 1>, scalar_prefetch = 0 : i64, scratch_operands = 0 : i64, tpu.core_type = #tpu.core_type<tc>, window_params = [{pipeline_mode = #tpu.pipeline_mode<synchronous>, transform_indices = @transform_0, window_bounds = array<i64: 16, 256>}, {transform_indices = @transform_1, window_bounds = array<i64: 256, 128>}, {pipeline_mode = #tpu.pipeline_mode<synchronous>, transform_indices = @transform_2, window_bounds = array<i64: 16, 1>}, {transform_indices = @transform_3, window_bounds = array<i64: 16, 128>}]} {
    %c0 = arith.constant 0 : index
    %c0_0 = arith.constant 0 : index
    %0 = vector.load %arg1[%c0, %c0_0] : memref<16x256xbf16, #tpu.memory_space<vmem>>, vector<16x256xbf16>
    %c0_1 = arith.constant 0 : index
    %c0_2 = arith.constant 0 : index
    %1 = vector.load %arg2[%c0_1, %c0_2] : memref<256x128xbf16, #tpu.memory_space<vmem>>, vector<256x128xbf16>
    %cst = arith.constant dense<0.000000e+00> : vector<16x128xf32>
    %2 = tpu.matmul %0, %1, %cst {dimension_numbers = #tpu.dot_dimension_numbers<[1], [0], [0], [1], [0, 0, 1, 1], [], []>} : vector<16x256xbf16>, vector<256x128xbf16>, vector<16x128xf32> -> vector<16x128xf32>
    %c0_3 = arith.constant 0 : index
    %c0_4 = arith.constant 0 : index
    %3 = vector.load %arg3[%c0_3, %c0_4] : memref<16x1xf32, #tpu.memory_space<vmem>>, vector<16x1xf32>
    %4 = vector.broadcast %3 : vector<16x1xf32> to vector<16x128xf32>
    %5 = arith.addf %2, %4 : vector<16x128xf32>
    %cst_5 = arith.constant 0.000000e+00 : f32
    %6 = vector.broadcast %cst_5 : f32 to vector<16x128xf32>
    %7 = arith.maximumf %5, %6 : vector<16x128xf32>
    %c0_6 = arith.constant 0 : index
    %c0_7 = arith.constant 0 : index
    %8 = vector.load %arg4[%c0_6, %c0_7] : memref<16x128xf32, #tpu.memory_space<vmem>>, vector<16x128xf32>
    tpu.vector_store %arg4[%c0_6, %c0_7], %7 {strides = array<i32>} : memref<16x128xf32, #tpu.memory_space<vmem>>, vector<16x128xf32>,
    return
  }
  func.func @transform_0(%arg0: i32) -> (i32, i32) {
    %c0_i32 = arith.constant 0 : i32
    %c0_i32_0 = arith.constant 0 : i32
    %c0_i32_1 = arith.constant 0 : i32
    return %c0_i32, %c0_i32_0 : i32, i32
  }
  func.func @transform_1(%arg0: i32) -> (i32, i32) {
    %c0_i32 = arith.constant 0 : i32
    %c0_i32_0 = arith.constant 0 : i32
    return %c0_i32, %arg0 : i32, i32
  }
  func.func @transform_2(%arg0: i32) -> (i32, i32) {
    %c0_i32 = arith.constant 0 : i32
    %c0_i32_0 = arith.constant 0 : i32
    %c0_i32_1 = arith.constant 0 : i32
    return %c0_i32, %c0_i32_0 : i32, i32
  }
  func.func @transform_3(%arg0: i32) -> (i32, i32) {
    %c0_i32 = arith.constant 0 : i32
    %c0_i32_0 = arith.constant 0 : i32
    return %c0_i32, %arg0 : i32, i32
  }
}

module attributes {stable_mosaic.version = 11 : i64} {
  func.func @_mm_bias_res_kernel(%arg0: i32, %arg1: memref<16x256xbf16, #tpu.memory_space<vmem>>, %arg2: memref<256x128xbf16, #tpu.memory_space<vmem>>, %arg3: memref<16x1xf32, #tpu.memory_space<vmem>>, %arg4: memref<16x128xbf16, #tpu.memory_space<vmem>>, %arg5: memref<16x128xf32, #tpu.memory_space<vmem>>) attributes {dimension_semantics = [#tpu.dimension_semantics<parallel>], iteration_bounds = array<i64: 1>, scalar_prefetch = 0 : i64, scratch_operands = 0 : i64, tpu.core_type = #tpu.core_type<tc>, window_params = [{pipeline_mode = #tpu.pipeline_mode<synchronous>, transform_indices = @transform_0, window_bounds = array<i64: 16, 256>}, {transform_indices = @transform_1, window_bounds = array<i64: 256, 128>}, {pipeline_mode = #tpu.pipeline_mode<synchronous>, transform_indices = @transform_2, window_bounds = array<i64: 16, 1>}, {transform_indices = @transform_3, window_bounds = array<i64: 16, 128>}, {transform_indices = @transform_4, window_bounds = array<i64: 16, 128>}]} {
    %c0 = arith.constant 0 : index
    %c0_0 = arith.constant 0 : index
    %0 = vector.load %arg1[%c0, %c0_0] : memref<16x256xbf16, #tpu.memory_space<vmem>>, vector<16x256xbf16>
    %c0_1 = arith.constant 0 : index
    %c0_2 = arith.constant 0 : index
    %1 = vector.load %arg2[%c0_1, %c0_2] : memref<256x128xbf16, #tpu.memory_space<vmem>>, vector<256x128xbf16>
    %cst = arith.constant dense<0.000000e+00> : vector<16x128xf32>
    %2 = tpu.matmul %0, %1, %cst {dimension_numbers = #tpu.dot_dimension_numbers<[1], [0], [0], [1], [0, 0, 1, 1], [], []>} : vector<16x256xbf16>, vector<256x128xbf16>, vector<16x128xf32> -> vector<16x128xf32>
    %c0_3 = arith.constant 0 : index
    %c0_4 = arith.constant 0 : index
    %3 = vector.load %arg3[%c0_3, %c0_4] : memref<16x1xf32, #tpu.memory_space<vmem>>, vector<16x1xf32>
    %4 = vector.broadcast %3 : vector<16x1xf32> to vector<16x128xf32>
    %5 = arith.addf %2, %4 : vector<16x128xf32>
    %c0_5 = arith.constant 0 : index
    %c0_6 = arith.constant 0 : index
    %6 = vector.load %arg4[%c0_5, %c0_6] : memref<16x128xbf16, #tpu.memory_space<vmem>>, vector<16x128xbf16>
    %7 = arith.extf %6 : vector<16x128xbf16> to vector<16x128xf32>
    %8 = arith.addf %5, %7 : vector<16x128xf32>
    %cst_7 = arith.constant 0.000000e+00 : f32
    %9 = vector.broadcast %cst_7 : f32 to vector<16x128xf32>
    %10 = arith.maximumf %8, %9 : vector<16x128xf32>
    %c0_8 = arith.constant 0 : index
    %c0_9 = arith.constant 0 : index
    %11 = vector.load %arg5[%c0_8, %c0_9] : memref<16x128xf32, #tpu.memory_space<vmem>>, vector<16x128xf32>
    tpu.vector_store %arg5[%c0_8, %c0_9], %10 {strides = array<i32>} : memref<16x128xf32, #tpu.memory_space<vmem>>, vector<16x128xf32>,
    return
  }
  func.func @transform_0(%arg0: i32) -> (i32, i32) {
    %c0_i32 = arith.constant 0 : i32
    %c0_i32_0 = arith.constant 0 : i32
    %c0_i32_1 = arith.constant 0 : i32
    return %c0_i32, %c0_i32_0 : i32, i32
  }
  func.func @transform_1(%arg0: i32) -> (i32, i32) {
    %c0_i32 = arith.constant 0 : i32
    %c0_i32_0 = arith.constant 0 : i32
    return %c0_i32, %arg0 : i32, i32
  }
  func.func @transform_2(%arg0: i32) -> (i32, i32) {
    %c0_i32 = arith.constant 0 : i32
    %c0_i32_0 = arith.constant 0 : i32
    %c0_i32_1 = arith.constant 0 : i32
    return %c0_i32, %c0_i32_0 : i32, i32
  }
  func.func @transform_3(%arg0: i32) -> (i32, i32) {
    %c0_i32 = arith.constant 0 : i32
    %c0_i32_0 = arith.constant 0 : i32
    return %c0_i32, %arg0 : i32, i32
  }
  func.func @transform_4(%arg0: i32) -> (i32, i32) {
    %c0_i32 = arith.constant 0 : i32
    %c0_i32_0 = arith.constant 0 : i32
    return %c0_i32, %arg0 : i32, i32
  }
}

module attributes {stable_mosaic.version = 11 : i64} {
  func.func @_mm_bias_kernel(%arg0: i32, %arg1: memref<32x256xbf16, #tpu.memory_space<vmem>>, %arg2: memref<256x128xbf16, #tpu.memory_space<vmem>>, %arg3: memref<32x1xf32, #tpu.memory_space<vmem>>, %arg4: memref<32x128xf32, #tpu.memory_space<vmem>>) attributes {dimension_semantics = [#tpu.dimension_semantics<parallel>], iteration_bounds = array<i64: 1>, scalar_prefetch = 0 : i64, scratch_operands = 0 : i64, tpu.core_type = #tpu.core_type<tc>, window_params = [{pipeline_mode = #tpu.pipeline_mode<synchronous>, transform_indices = @transform_0, window_bounds = array<i64: 32, 256>}, {transform_indices = @transform_1, window_bounds = array<i64: 256, 128>}, {pipeline_mode = #tpu.pipeline_mode<synchronous>, transform_indices = @transform_2, window_bounds = array<i64: 32, 1>}, {transform_indices = @transform_3, window_bounds = array<i64: 32, 128>}]} {
    %c0 = arith.constant 0 : index
    %c0_0 = arith.constant 0 : index
    %0 = vector.load %arg1[%c0, %c0_0] : memref<32x256xbf16, #tpu.memory_space<vmem>>, vector<32x256xbf16>
    %c0_1 = arith.constant 0 : index
    %c0_2 = arith.constant 0 : index
    %1 = vector.load %arg2[%c0_1, %c0_2] : memref<256x128xbf16, #tpu.memory_space<vmem>>, vector<256x128xbf16>
    %cst = arith.constant dense<0.000000e+00> : vector<32x128xf32>
    %2 = tpu.matmul %0, %1, %cst {dimension_numbers = #tpu.dot_dimension_numbers<[1], [0], [0], [1], [0, 0, 1, 1], [], []>} : vector<32x256xbf16>, vector<256x128xbf16>, vector<32x128xf32> -> vector<32x128xf32>
    %c0_3 = arith.constant 0 : index
    %c0_4 = arith.constant 0 : index
    %3 = vector.load %arg3[%c0_3, %c0_4] : memref<32x1xf32, #tpu.memory_space<vmem>>, vector<32x1xf32>
    %4 = vector.broadcast %3 : vector<32x1xf32> to vector<32x128xf32>
    %5 = arith.addf %2, %4 : vector<32x128xf32>
    %cst_5 = arith.constant 0.000000e+00 : f32
    %6 = vector.broadcast %cst_5 : f32 to vector<32x128xf32>
    %7 = arith.maximumf %5, %6 : vector<32x128xf32>
    %c0_6 = arith.constant 0 : index
    %c0_7 = arith.constant 0 : index
    %8 = vector.load %arg4[%c0_6, %c0_7] : memref<32x128xf32, #tpu.memory_space<vmem>>, vector<32x128xf32>
    tpu.vector_store %arg4[%c0_6, %c0_7], %7 {strides = array<i32>} : memref<32x128xf32, #tpu.memory_space<vmem>>, vector<32x128xf32>,
    return
  }
  func.func @transform_0(%arg0: i32) -> (i32, i32) {
    %c0_i32 = arith.constant 0 : i32
    %c0_i32_0 = arith.constant 0 : i32
    %c0_i32_1 = arith.constant 0 : i32
    return %c0_i32, %c0_i32_0 : i32, i32
  }
  func.func @transform_1(%arg0: i32) -> (i32, i32) {
    %c0_i32 = arith.constant 0 : i32
    %c0_i32_0 = arith.constant 0 : i32
    return %c0_i32, %arg0 : i32, i32
  }
  func.func @transform_2(%arg0: i32) -> (i32, i32) {
    %c0_i32 = arith.constant 0 : i32
    %c0_i32_0 = arith.constant 0 : i32
    %c0_i32_1 = arith.constant 0 : i32
    return %c0_i32, %c0_i32_0 : i32, i32
  }
  func.func @transform_3(%arg0: i32) -> (i32, i32) {
    %c0_i32 = arith.constant 0 : i32
    %c0_i32_0 = arith.constant 0 : i32
    return %c0_i32, %arg0 : i32, i32
  }
}

module attributes {stable_mosaic.version = 11 : i64} {
  func.func @_mm_bias_kernel(%arg0: i32, %arg1: memref<32x128xbf16, #tpu.memory_space<vmem>>, %arg2: memref<128x128xbf16, #tpu.memory_space<vmem>>, %arg3: memref<32x1xf32, #tpu.memory_space<vmem>>, %arg4: memref<32x128xf32, #tpu.memory_space<vmem>>) attributes {dimension_semantics = [#tpu.dimension_semantics<parallel>], iteration_bounds = array<i64: 1>, scalar_prefetch = 0 : i64, scratch_operands = 0 : i64, tpu.core_type = #tpu.core_type<tc>, window_params = [{pipeline_mode = #tpu.pipeline_mode<synchronous>, transform_indices = @transform_0, window_bounds = array<i64: 32, 128>}, {transform_indices = @transform_1, window_bounds = array<i64: 128, 128>}, {pipeline_mode = #tpu.pipeline_mode<synchronous>, transform_indices = @transform_2, window_bounds = array<i64: 32, 1>}, {transform_indices = @transform_3, window_bounds = array<i64: 32, 128>}]} {
    %c0 = arith.constant 0 : index
    %c0_0 = arith.constant 0 : index
    %0 = vector.load %arg1[%c0, %c0_0] : memref<32x128xbf16, #tpu.memory_space<vmem>>, vector<32x128xbf16>
    %c0_1 = arith.constant 0 : index
    %c0_2 = arith.constant 0 : index
    %1 = vector.load %arg2[%c0_1, %c0_2] : memref<128x128xbf16, #tpu.memory_space<vmem>>, vector<128x128xbf16>
    %cst = arith.constant dense<0.000000e+00> : vector<32x128xf32>
    %2 = tpu.matmul %0, %1, %cst {dimension_numbers = #tpu.dot_dimension_numbers<[1], [0], [0], [1], [0, 0, 1, 1], [], []>} : vector<32x128xbf16>, vector<128x128xbf16>, vector<32x128xf32> -> vector<32x128xf32>
    %c0_3 = arith.constant 0 : index
    %c0_4 = arith.constant 0 : index
    %3 = vector.load %arg3[%c0_3, %c0_4] : memref<32x1xf32, #tpu.memory_space<vmem>>, vector<32x1xf32>
    %4 = vector.broadcast %3 : vector<32x1xf32> to vector<32x128xf32>
    %5 = arith.addf %2, %4 : vector<32x128xf32>
    %c0_5 = arith.constant 0 : index
    %c0_6 = arith.constant 0 : index
    %6 = vector.load %arg4[%c0_5, %c0_6] : memref<32x128xf32, #tpu.memory_space<vmem>>, vector<32x128xf32>
    tpu.vector_store %arg4[%c0_5, %c0_6], %5 {strides = array<i32>} : memref<32x128xf32, #tpu.memory_space<vmem>>, vector<32x128xf32>,
    return
  }
  func.func @transform_0(%arg0: i32) -> (i32, i32) {
    %c0_i32 = arith.constant 0 : i32
    %c0_i32_0 = arith.constant 0 : i32
    %c0_i32_1 = arith.constant 0 : i32
    return %c0_i32, %c0_i32_0 : i32, i32
  }
  func.func @transform_1(%arg0: i32) -> (i32, i32) {
    %c0_i32 = arith.constant 0 : i32
    %c0_i32_0 = arith.constant 0 : i32
    return %c0_i32, %arg0 : i32, i32
  }
  func.func @transform_2(%arg0: i32) -> (i32, i32) {
    %c0_i32 = arith.constant 0 : i32
    %c0_i32_0 = arith.constant 0 : i32
    %c0_i32_1 = arith.constant 0 : i32
    return %c0_i32, %c0_i32_0 : i32, i32
  }
  func.func @transform_3(%arg0: i32) -> (i32, i32) {
    %c0_i32 = arith.constant 0 : i32
    %c0_i32_0 = arith.constant 0 : i32
    return %c0_i32, %arg0 : i32, i32
  }
}

module attributes {stable_mosaic.version = 11 : i64} {
  func.func @_mm_bias_res_kernel(%arg0: i32, %arg1: memref<32x384xbf16, #tpu.memory_space<vmem>>, %arg2: memref<384x128xbf16, #tpu.memory_space<vmem>>, %arg3: memref<32x1xf32, #tpu.memory_space<vmem>>, %arg4: memref<32x128xbf16, #tpu.memory_space<vmem>>, %arg5: memref<32x128xf32, #tpu.memory_space<vmem>>) attributes {dimension_semantics = [#tpu.dimension_semantics<parallel>], iteration_bounds = array<i64: 1>, scalar_prefetch = 0 : i64, scratch_operands = 0 : i64, tpu.core_type = #tpu.core_type<tc>, window_params = [{pipeline_mode = #tpu.pipeline_mode<synchronous>, transform_indices = @transform_0, window_bounds = array<i64: 32, 384>}, {transform_indices = @transform_1, window_bounds = array<i64: 384, 128>}, {pipeline_mode = #tpu.pipeline_mode<synchronous>, transform_indices = @transform_2, window_bounds = array<i64: 32, 1>}, {transform_indices = @transform_3, window_bounds = array<i64: 32, 128>}, {transform_indices = @transform_4, window_bounds = array<i64: 32, 128>}]} {
    %c0 = arith.constant 0 : index
    %c0_0 = arith.constant 0 : index
    %0 = vector.load %arg1[%c0, %c0_0] : memref<32x384xbf16, #tpu.memory_space<vmem>>, vector<32x384xbf16>
    %c0_1 = arith.constant 0 : index
    %c0_2 = arith.constant 0 : index
    %1 = vector.load %arg2[%c0_1, %c0_2] : memref<384x128xbf16, #tpu.memory_space<vmem>>, vector<384x128xbf16>
    %cst = arith.constant dense<0.000000e+00> : vector<32x128xf32>
    %2 = tpu.matmul %0, %1, %cst {dimension_numbers = #tpu.dot_dimension_numbers<[1], [0], [0], [1], [0, 0, 1, 1], [], []>} : vector<32x384xbf16>, vector<384x128xbf16>, vector<32x128xf32> -> vector<32x128xf32>
    %c0_3 = arith.constant 0 : index
    %c0_4 = arith.constant 0 : index
    %3 = vector.load %arg3[%c0_3, %c0_4] : memref<32x1xf32, #tpu.memory_space<vmem>>, vector<32x1xf32>
    %4 = vector.broadcast %3 : vector<32x1xf32> to vector<32x128xf32>
    %5 = arith.addf %2, %4 : vector<32x128xf32>
    %c0_5 = arith.constant 0 : index
    %c0_6 = arith.constant 0 : index
    %6 = vector.load %arg4[%c0_5, %c0_6] : memref<32x128xbf16, #tpu.memory_space<vmem>>, vector<32x128xbf16>
    %7 = arith.extf %6 : vector<32x128xbf16> to vector<32x128xf32>
    %8 = arith.addf %5, %7 : vector<32x128xf32>
    %cst_7 = arith.constant 0.000000e+00 : f32
    %9 = vector.broadcast %cst_7 : f32 to vector<32x128xf32>
    %10 = arith.maximumf %8, %9 : vector<32x128xf32>
    %c0_8 = arith.constant 0 : index
    %c0_9 = arith.constant 0 : index
    %11 = vector.load %arg5[%c0_8, %c0_9] : memref<32x128xf32, #tpu.memory_space<vmem>>, vector<32x128xf32>
    tpu.vector_store %arg5[%c0_8, %c0_9], %10 {strides = array<i32>} : memref<32x128xf32, #tpu.memory_space<vmem>>, vector<32x128xf32>,
    return
  }
  func.func @transform_0(%arg0: i32) -> (i32, i32) {
    %c0_i32 = arith.constant 0 : i32
    %c0_i32_0 = arith.constant 0 : i32
    %c0_i32_1 = arith.constant 0 : i32
    return %c0_i32, %c0_i32_0 : i32, i32
  }
  func.func @transform_1(%arg0: i32) -> (i32, i32) {
    %c0_i32 = arith.constant 0 : i32
    %c0_i32_0 = arith.constant 0 : i32
    return %c0_i32, %arg0 : i32, i32
  }
  func.func @transform_2(%arg0: i32) -> (i32, i32) {
    %c0_i32 = arith.constant 0 : i32
    %c0_i32_0 = arith.constant 0 : i32
    %c0_i32_1 = arith.constant 0 : i32
    return %c0_i32, %c0_i32_0 : i32, i32
  }
  func.func @transform_3(%arg0: i32) -> (i32, i32) {
    %c0_i32 = arith.constant 0 : i32
    %c0_i32_0 = arith.constant 0 : i32
    return %c0_i32, %arg0 : i32, i32
  }
  func.func @transform_4(%arg0: i32) -> (i32, i32) {
    %c0_i32 = arith.constant 0 : i32
    %c0_i32_0 = arith.constant 0 : i32
    return %c0_i32, %arg0 : i32, i32
  }
}

module attributes {stable_mosaic.version = 11 : i64} {
  func.func @_mm_bias_kernel(%arg0: i32, %arg1: memref<64x384xbf16, #tpu.memory_space<vmem>>, %arg2: memref<384x128xbf16, #tpu.memory_space<vmem>>, %arg3: memref<64x1xf32, #tpu.memory_space<vmem>>, %arg4: memref<64x128xf32, #tpu.memory_space<vmem>>) attributes {dimension_semantics = [#tpu.dimension_semantics<parallel>], iteration_bounds = array<i64: 1>, scalar_prefetch = 0 : i64, scratch_operands = 0 : i64, tpu.core_type = #tpu.core_type<tc>, window_params = [{pipeline_mode = #tpu.pipeline_mode<synchronous>, transform_indices = @transform_0, window_bounds = array<i64: 64, 384>}, {transform_indices = @transform_1, window_bounds = array<i64: 384, 128>}, {pipeline_mode = #tpu.pipeline_mode<synchronous>, transform_indices = @transform_2, window_bounds = array<i64: 64, 1>}, {transform_indices = @transform_3, window_bounds = array<i64: 64, 128>}]} {
    %c0 = arith.constant 0 : index
    %c0_0 = arith.constant 0 : index
    %0 = vector.load %arg1[%c0, %c0_0] : memref<64x384xbf16, #tpu.memory_space<vmem>>, vector<64x384xbf16>
    %c0_1 = arith.constant 0 : index
    %c0_2 = arith.constant 0 : index
    %1 = vector.load %arg2[%c0_1, %c0_2] : memref<384x128xbf16, #tpu.memory_space<vmem>>, vector<384x128xbf16>
    %cst = arith.constant dense<0.000000e+00> : vector<64x128xf32>
    %2 = tpu.matmul %0, %1, %cst {dimension_numbers = #tpu.dot_dimension_numbers<[1], [0], [0], [1], [0, 0, 1, 1], [], []>} : vector<64x384xbf16>, vector<384x128xbf16>, vector<64x128xf32> -> vector<64x128xf32>
    %c0_3 = arith.constant 0 : index
    %c0_4 = arith.constant 0 : index
    %3 = vector.load %arg3[%c0_3, %c0_4] : memref<64x1xf32, #tpu.memory_space<vmem>>, vector<64x1xf32>
    %4 = vector.broadcast %3 : vector<64x1xf32> to vector<64x128xf32>
    %5 = arith.addf %2, %4 : vector<64x128xf32>
    %cst_5 = arith.constant 0.000000e+00 : f32
    %6 = vector.broadcast %cst_5 : f32 to vector<64x128xf32>
    %7 = arith.maximumf %5, %6 : vector<64x128xf32>
    %c0_6 = arith.constant 0 : index
    %c0_7 = arith.constant 0 : index
    %8 = vector.load %arg4[%c0_6, %c0_7] : memref<64x128xf32, #tpu.memory_space<vmem>>, vector<64x128xf32>
    tpu.vector_store %arg4[%c0_6, %c0_7], %7 {strides = array<i32>} : memref<64x128xf32, #tpu.memory_space<vmem>>, vector<64x128xf32>,
    return
  }
  func.func @transform_0(%arg0: i32) -> (i32, i32) {
    %c0_i32 = arith.constant 0 : i32
    %c0_i32_0 = arith.constant 0 : i32
    %c0_i32_1 = arith.constant 0 : i32
    return %c0_i32, %c0_i32_0 : i32, i32
  }
  func.func @transform_1(%arg0: i32) -> (i32, i32) {
    %c0_i32 = arith.constant 0 : i32
    %c0_i32_0 = arith.constant 0 : i32
    return %c0_i32, %arg0 : i32, i32
  }
  func.func @transform_2(%arg0: i32) -> (i32, i32) {
    %c0_i32 = arith.constant 0 : i32
    %c0_i32_0 = arith.constant 0 : i32
    %c0_i32_1 = arith.constant 0 : i32
    return %c0_i32, %c0_i32_0 : i32, i32
  }
  func.func @transform_3(%arg0: i32) -> (i32, i32) {
    %c0_i32 = arith.constant 0 : i32
    %c0_i32_0 = arith.constant 0 : i32
    return %c0_i32, %arg0 : i32, i32
  }
}

module attributes {stable_mosaic.version = 11 : i64} {
  func.func @_mm_bias_kernel(%arg0: i32, %arg1: memref<64x128xbf16, #tpu.memory_space<vmem>>, %arg2: memref<128x128xbf16, #tpu.memory_space<vmem>>, %arg3: memref<64x1xf32, #tpu.memory_space<vmem>>, %arg4: memref<64x128xf32, #tpu.memory_space<vmem>>) attributes {dimension_semantics = [#tpu.dimension_semantics<parallel>], iteration_bounds = array<i64: 1>, scalar_prefetch = 0 : i64, scratch_operands = 0 : i64, tpu.core_type = #tpu.core_type<tc>, window_params = [{pipeline_mode = #tpu.pipeline_mode<synchronous>, transform_indices = @transform_0, window_bounds = array<i64: 64, 128>}, {transform_indices = @transform_1, window_bounds = array<i64: 128, 128>}, {pipeline_mode = #tpu.pipeline_mode<synchronous>, transform_indices = @transform_2, window_bounds = array<i64: 64, 1>}, {transform_indices = @transform_3, window_bounds = array<i64: 64, 128>}]} {
    %c0 = arith.constant 0 : index
    %c0_0 = arith.constant 0 : index
    %0 = vector.load %arg1[%c0, %c0_0] : memref<64x128xbf16, #tpu.memory_space<vmem>>, vector<64x128xbf16>
    %c0_1 = arith.constant 0 : index
    %c0_2 = arith.constant 0 : index
    %1 = vector.load %arg2[%c0_1, %c0_2] : memref<128x128xbf16, #tpu.memory_space<vmem>>, vector<128x128xbf16>
    %cst = arith.constant dense<0.000000e+00> : vector<64x128xf32>
    %2 = tpu.matmul %0, %1, %cst {dimension_numbers = #tpu.dot_dimension_numbers<[1], [0], [0], [1], [0, 0, 1, 1], [], []>} : vector<64x128xbf16>, vector<128x128xbf16>, vector<64x128xf32> -> vector<64x128xf32>
    %c0_3 = arith.constant 0 : index
    %c0_4 = arith.constant 0 : index
    %3 = vector.load %arg3[%c0_3, %c0_4] : memref<64x1xf32, #tpu.memory_space<vmem>>, vector<64x1xf32>
    %4 = vector.broadcast %3 : vector<64x1xf32> to vector<64x128xf32>
    %5 = arith.addf %2, %4 : vector<64x128xf32>
    %c0_5 = arith.constant 0 : index
    %c0_6 = arith.constant 0 : index
    %6 = vector.load %arg4[%c0_5, %c0_6] : memref<64x128xf32, #tpu.memory_space<vmem>>, vector<64x128xf32>
    tpu.vector_store %arg4[%c0_5, %c0_6], %5 {strides = array<i32>} : memref<64x128xf32, #tpu.memory_space<vmem>>, vector<64x128xf32>,
    return
  }
  func.func @transform_0(%arg0: i32) -> (i32, i32) {
    %c0_i32 = arith.constant 0 : i32
    %c0_i32_0 = arith.constant 0 : i32
    %c0_i32_1 = arith.constant 0 : i32
    return %c0_i32, %c0_i32_0 : i32, i32
  }
  func.func @transform_1(%arg0: i32) -> (i32, i32) {
    %c0_i32 = arith.constant 0 : i32
    %c0_i32_0 = arith.constant 0 : i32
    return %c0_i32, %arg0 : i32, i32
  }
  func.func @transform_2(%arg0: i32) -> (i32, i32) {
    %c0_i32 = arith.constant 0 : i32
    %c0_i32_0 = arith.constant 0 : i32
    %c0_i32_1 = arith.constant 0 : i32
    return %c0_i32, %c0_i32_0 : i32, i32
  }
  func.func @transform_3(%arg0: i32) -> (i32, i32) {
    %c0_i32 = arith.constant 0 : i32
    %c0_i32_0 = arith.constant 0 : i32
    return %c0_i32, %arg0 : i32, i32
  }
}

module attributes {stable_mosaic.version = 11 : i64} {
  func.func @_mm_bias_res_kernel(%arg0: i32, %arg1: memref<64x640xbf16, #tpu.memory_space<vmem>>, %arg2: memref<640x128xbf16, #tpu.memory_space<vmem>>, %arg3: memref<64x1xf32, #tpu.memory_space<vmem>>, %arg4: memref<64x128xbf16, #tpu.memory_space<vmem>>, %arg5: memref<64x128xf32, #tpu.memory_space<vmem>>) attributes {dimension_semantics = [#tpu.dimension_semantics<parallel>], iteration_bounds = array<i64: 1>, scalar_prefetch = 0 : i64, scratch_operands = 0 : i64, tpu.core_type = #tpu.core_type<tc>, window_params = [{pipeline_mode = #tpu.pipeline_mode<synchronous>, transform_indices = @transform_0, window_bounds = array<i64: 64, 640>}, {transform_indices = @transform_1, window_bounds = array<i64: 640, 128>}, {pipeline_mode = #tpu.pipeline_mode<synchronous>, transform_indices = @transform_2, window_bounds = array<i64: 64, 1>}, {transform_indices = @transform_3, window_bounds = array<i64: 64, 128>}, {transform_indices = @transform_4, window_bounds = array<i64: 64, 128>}]} {
    %c0 = arith.constant 0 : index
    %c0_0 = arith.constant 0 : index
    %0 = vector.load %arg1[%c0, %c0_0] : memref<64x640xbf16, #tpu.memory_space<vmem>>, vector<64x640xbf16>
    %c0_1 = arith.constant 0 : index
    %c0_2 = arith.constant 0 : index
    %1 = vector.load %arg2[%c0_1, %c0_2] : memref<640x128xbf16, #tpu.memory_space<vmem>>, vector<640x128xbf16>
    %cst = arith.constant dense<0.000000e+00> : vector<64x128xf32>
    %2 = tpu.matmul %0, %1, %cst {dimension_numbers = #tpu.dot_dimension_numbers<[1], [0], [0], [1], [0, 0, 1, 1], [], []>} : vector<64x640xbf16>, vector<640x128xbf16>, vector<64x128xf32> -> vector<64x128xf32>
    %c0_3 = arith.constant 0 : index
    %c0_4 = arith.constant 0 : index
    %3 = vector.load %arg3[%c0_3, %c0_4] : memref<64x1xf32, #tpu.memory_space<vmem>>, vector<64x1xf32>
    %4 = vector.broadcast %3 : vector<64x1xf32> to vector<64x128xf32>
    %5 = arith.addf %2, %4 : vector<64x128xf32>
    %c0_5 = arith.constant 0 : index
    %c0_6 = arith.constant 0 : index
    %6 = vector.load %arg4[%c0_5, %c0_6] : memref<64x128xbf16, #tpu.memory_space<vmem>>, vector<64x128xbf16>
    %7 = arith.extf %6 : vector<64x128xbf16> to vector<64x128xf32>
    %8 = arith.addf %5, %7 : vector<64x128xf32>
    %cst_7 = arith.constant 0.000000e+00 : f32
    %9 = vector.broadcast %cst_7 : f32 to vector<64x128xf32>
    %10 = arith.maximumf %8, %9 : vector<64x128xf32>
    %c0_8 = arith.constant 0 : index
    %c0_9 = arith.constant 0 : index
    %11 = vector.load %arg5[%c0_8, %c0_9] : memref<64x128xf32, #tpu.memory_space<vmem>>, vector<64x128xf32>
    tpu.vector_store %arg5[%c0_8, %c0_9], %10 {strides = array<i32>} : memref<64x128xf32, #tpu.memory_space<vmem>>, vector<64x128xf32>,
    return
  }
  func.func @transform_0(%arg0: i32) -> (i32, i32) {
    %c0_i32 = arith.constant 0 : i32
    %c0_i32_0 = arith.constant 0 : i32
    %c0_i32_1 = arith.constant 0 : i32
    return %c0_i32, %c0_i32_0 : i32, i32
  }
  func.func @transform_1(%arg0: i32) -> (i32, i32) {
    %c0_i32 = arith.constant 0 : i32
    %c0_i32_0 = arith.constant 0 : i32
    return %c0_i32, %arg0 : i32, i32
  }
  func.func @transform_2(%arg0: i32) -> (i32, i32) {
    %c0_i32 = arith.constant 0 : i32
    %c0_i32_0 = arith.constant 0 : i32
    %c0_i32_1 = arith.constant 0 : i32
    return %c0_i32, %c0_i32_0 : i32, i32
  }
  func.func @transform_3(%arg0: i32) -> (i32, i32) {
    %c0_i32 = arith.constant 0 : i32
    %c0_i32_0 = arith.constant 0 : i32
    return %c0_i32, %arg0 : i32, i32
  }
  func.func @transform_4(%arg0: i32) -> (i32, i32) {
    %c0_i32 = arith.constant 0 : i32
    %c0_i32_0 = arith.constant 0 : i32
    return %c0_i32, %arg0 : i32, i32
  }
}

module attributes {stable_mosaic.version = 11 : i64} {
  func.func @_mm_bias_kernel(%arg0: i32, %arg1: memref<128x640xbf16, #tpu.memory_space<vmem>>, %arg2: memref<640x128xbf16, #tpu.memory_space<vmem>>, %arg3: memref<128x1xf32, #tpu.memory_space<vmem>>, %arg4: memref<128x128xf32, #tpu.memory_space<vmem>>) attributes {dimension_semantics = [#tpu.dimension_semantics<parallel>], iteration_bounds = array<i64: 1>, scalar_prefetch = 0 : i64, scratch_operands = 0 : i64, tpu.core_type = #tpu.core_type<tc>, window_params = [{pipeline_mode = #tpu.pipeline_mode<synchronous>, transform_indices = @transform_0, window_bounds = array<i64: 128, 640>}, {transform_indices = @transform_1, window_bounds = array<i64: 640, 128>}, {pipeline_mode = #tpu.pipeline_mode<synchronous>, transform_indices = @transform_2, window_bounds = array<i64: 128, 1>}, {transform_indices = @transform_3, window_bounds = array<i64: 128, 128>}]} {
    %c0 = arith.constant 0 : index
    %c0_0 = arith.constant 0 : index
    %0 = vector.load %arg1[%c0, %c0_0] : memref<128x640xbf16, #tpu.memory_space<vmem>>, vector<128x640xbf16>
    %c0_1 = arith.constant 0 : index
    %c0_2 = arith.constant 0 : index
    %1 = vector.load %arg2[%c0_1, %c0_2] : memref<640x128xbf16, #tpu.memory_space<vmem>>, vector<640x128xbf16>
    %cst = arith.constant dense<0.000000e+00> : vector<128x128xf32>
    %2 = tpu.matmul %0, %1, %cst {dimension_numbers = #tpu.dot_dimension_numbers<[1], [0], [0], [1], [0, 0, 1, 1], [], []>} : vector<128x640xbf16>, vector<640x128xbf16>, vector<128x128xf32> -> vector<128x128xf32>
    %c0_3 = arith.constant 0 : index
    %c0_4 = arith.constant 0 : index
    %3 = vector.load %arg3[%c0_3, %c0_4] : memref<128x1xf32, #tpu.memory_space<vmem>>, vector<128x1xf32>
    %4 = vector.broadcast %3 : vector<128x1xf32> to vector<128x128xf32>
    %5 = arith.addf %2, %4 : vector<128x128xf32>
    %cst_5 = arith.constant 0.000000e+00 : f32
    %6 = vector.broadcast %cst_5 : f32 to vector<128x128xf32>
    %7 = arith.maximumf %5, %6 : vector<128x128xf32>
    %c0_6 = arith.constant 0 : index
    %c0_7 = arith.constant 0 : index
    %8 = vector.load %arg4[%c0_6, %c0_7] : memref<128x128xf32, #tpu.memory_space<vmem>>, vector<128x128xf32>
    tpu.vector_store %arg4[%c0_6, %c0_7], %7 {strides = array<i32>} : memref<128x128xf32, #tpu.memory_space<vmem>>, vector<128x128xf32>,
    return
  }
  func.func @transform_0(%arg0: i32) -> (i32, i32) {
    %c0_i32 = arith.constant 0 : i32
    %c0_i32_0 = arith.constant 0 : i32
    %c0_i32_1 = arith.constant 0 : i32
    return %c0_i32, %c0_i32_0 : i32, i32
  }
  func.func @transform_1(%arg0: i32) -> (i32, i32) {
    %c0_i32 = arith.constant 0 : i32
    %c0_i32_0 = arith.constant 0 : i32
    return %c0_i32, %arg0 : i32, i32
  }
  func.func @transform_2(%arg0: i32) -> (i32, i32) {
    %c0_i32 = arith.constant 0 : i32
    %c0_i32_0 = arith.constant 0 : i32
    %c0_i32_1 = arith.constant 0 : i32
    return %c0_i32, %c0_i32_0 : i32, i32
  }
  func.func @transform_3(%arg0: i32) -> (i32, i32) {
    %c0_i32 = arith.constant 0 : i32
    %c0_i32_0 = arith.constant 0 : i32
    return %c0_i32, %arg0 : i32, i32
  }
}

module attributes {stable_mosaic.version = 11 : i64} {
  func.func @_mm_bias_kernel(%arg0: i32, %arg1: memref<128x128xbf16, #tpu.memory_space<vmem>>, %arg2: memref<128x128xbf16, #tpu.memory_space<vmem>>, %arg3: memref<128x1xf32, #tpu.memory_space<vmem>>, %arg4: memref<128x128xf32, #tpu.memory_space<vmem>>) attributes {dimension_semantics = [#tpu.dimension_semantics<parallel>], iteration_bounds = array<i64: 1>, scalar_prefetch = 0 : i64, scratch_operands = 0 : i64, tpu.core_type = #tpu.core_type<tc>, window_params = [{pipeline_mode = #tpu.pipeline_mode<synchronous>, transform_indices = @transform_0, window_bounds = array<i64: 128, 128>}, {transform_indices = @transform_1, window_bounds = array<i64: 128, 128>}, {pipeline_mode = #tpu.pipeline_mode<synchronous>, transform_indices = @transform_2, window_bounds = array<i64: 128, 1>}, {transform_indices = @transform_3, window_bounds = array<i64: 128, 128>}]} {
    %c0 = arith.constant 0 : index
    %c0_0 = arith.constant 0 : index
    %0 = vector.load %arg1[%c0, %c0_0] : memref<128x128xbf16, #tpu.memory_space<vmem>>, vector<128x128xbf16>
    %c0_1 = arith.constant 0 : index
    %c0_2 = arith.constant 0 : index
    %1 = vector.load %arg2[%c0_1, %c0_2] : memref<128x128xbf16, #tpu.memory_space<vmem>>, vector<128x128xbf16>
    %cst = arith.constant dense<0.000000e+00> : vector<128x128xf32>
    %2 = tpu.matmul %0, %1, %cst {dimension_numbers = #tpu.dot_dimension_numbers<[1], [0], [0], [1], [0, 0, 1, 1], [], []>} : vector<128x128xbf16>, vector<128x128xbf16>, vector<128x128xf32> -> vector<128x128xf32>
    %c0_3 = arith.constant 0 : index
    %c0_4 = arith.constant 0 : index
    %3 = vector.load %arg3[%c0_3, %c0_4] : memref<128x1xf32, #tpu.memory_space<vmem>>, vector<128x1xf32>
    %4 = vector.broadcast %3 : vector<128x1xf32> to vector<128x128xf32>
    %5 = arith.addf %2, %4 : vector<128x128xf32>
    %c0_5 = arith.constant 0 : index
    %c0_6 = arith.constant 0 : index
    %6 = vector.load %arg4[%c0_5, %c0_6] : memref<128x128xf32, #tpu.memory_space<vmem>>, vector<128x128xf32>
    tpu.vector_store %arg4[%c0_5, %c0_6], %5 {strides = array<i32>} : memref<128x128xf32, #tpu.memory_space<vmem>>, vector<128x128xf32>,
    return
  }
  func.func @transform_0(%arg0: i32) -> (i32, i32) {
    %c0_i32 = arith.constant 0 : i32
    %c0_i32_0 = arith.constant 0 : i32
    %c0_i32_1 = arith.constant 0 : i32
    return %c0_i32, %c0_i32_0 : i32, i32
  }
  func.func @transform_1(%arg0: i32) -> (i32, i32) {
    %c0_i32 = arith.constant 0 : i32
    %c0_i32_0 = arith.constant 0 : i32
    return %c0_i32, %arg0 : i32, i32
  }
  func.func @transform_2(%arg0: i32) -> (i32, i32) {
    %c0_i32 = arith.constant 0 : i32
    %c0_i32_0 = arith.constant 0 : i32
    %c0_i32_1 = arith.constant 0 : i32
    return %c0_i32, %c0_i32_0 : i32, i32
  }
  func.func @transform_3(%arg0: i32) -> (i32, i32) {
    %c0_i32 = arith.constant 0 : i32
    %c0_i32_0 = arith.constant 0 : i32
    return %c0_i32, %arg0 : i32, i32
  }
}

module attributes {stable_mosaic.version = 11 : i64} {
  func.func @_mm_bias_res_kernel(%arg0: i32, %arg1: memref<128x1152xbf16, #tpu.memory_space<vmem>>, %arg2: memref<1152x128xbf16, #tpu.memory_space<vmem>>, %arg3: memref<128x1xf32, #tpu.memory_space<vmem>>, %arg4: memref<128x128xbf16, #tpu.memory_space<vmem>>, %arg5: memref<128x128xf32, #tpu.memory_space<vmem>>) attributes {dimension_semantics = [#tpu.dimension_semantics<parallel>], iteration_bounds = array<i64: 1>, scalar_prefetch = 0 : i64, scratch_operands = 0 : i64, tpu.core_type = #tpu.core_type<tc>, window_params = [{pipeline_mode = #tpu.pipeline_mode<synchronous>, transform_indices = @transform_0, window_bounds = array<i64: 128, 1152>}, {transform_indices = @transform_1, window_bounds = array<i64: 1152, 128>}, {pipeline_mode = #tpu.pipeline_mode<synchronous>, transform_indices = @transform_2, window_bounds = array<i64: 128, 1>}, {transform_indices = @transform_3, window_bounds = array<i64: 128, 128>}, {transform_indices = @transform_4, window_bounds = array<i64: 128, 128>}]} {
    %c0 = arith.constant 0 : index
    %c0_0 = arith.constant 0 : index
    %0 = vector.load %arg1[%c0, %c0_0] : memref<128x1152xbf16, #tpu.memory_space<vmem>>, vector<128x1152xbf16>
    %c0_1 = arith.constant 0 : index
    %c0_2 = arith.constant 0 : index
    %1 = vector.load %arg2[%c0_1, %c0_2] : memref<1152x128xbf16, #tpu.memory_space<vmem>>, vector<1152x128xbf16>
    %cst = arith.constant dense<0.000000e+00> : vector<128x128xf32>
    %2 = tpu.matmul %0, %1, %cst {dimension_numbers = #tpu.dot_dimension_numbers<[1], [0], [0], [1], [0, 0, 1, 1], [], []>} : vector<128x1152xbf16>, vector<1152x128xbf16>, vector<128x128xf32> -> vector<128x128xf32>
    %c0_3 = arith.constant 0 : index
    %c0_4 = arith.constant 0 : index
    %3 = vector.load %arg3[%c0_3, %c0_4] : memref<128x1xf32, #tpu.memory_space<vmem>>, vector<128x1xf32>
    %4 = vector.broadcast %3 : vector<128x1xf32> to vector<128x128xf32>
    %5 = arith.addf %2, %4 : vector<128x128xf32>
    %c0_5 = arith.constant 0 : index
    %c0_6 = arith.constant 0 : index
    %6 = vector.load %arg4[%c0_5, %c0_6] : memref<128x128xbf16, #tpu.memory_space<vmem>>, vector<128x128xbf16>
    %7 = arith.extf %6 : vector<128x128xbf16> to vector<128x128xf32>
    %8 = arith.addf %5, %7 : vector<128x128xf32>
    %cst_7 = arith.constant 0.000000e+00 : f32
    %9 = vector.broadcast %cst_7 : f32 to vector<128x128xf32>
    %10 = arith.maximumf %8, %9 : vector<128x128xf32>
    %c0_8 = arith.constant 0 : index
    %c0_9 = arith.constant 0 : index
    %11 = vector.load %arg5[%c0_8, %c0_9] : memref<128x128xf32, #tpu.memory_space<vmem>>, vector<128x128xf32>
    tpu.vector_store %arg5[%c0_8, %c0_9], %10 {strides = array<i32>} : memref<128x128xf32, #tpu.memory_space<vmem>>, vector<128x128xf32>,
    return
  }
  func.func @transform_0(%arg0: i32) -> (i32, i32) {
    %c0_i32 = arith.constant 0 : i32
    %c0_i32_0 = arith.constant 0 : i32
    %c0_i32_1 = arith.constant 0 : i32
    return %c0_i32, %c0_i32_0 : i32, i32
  }
  func.func @transform_1(%arg0: i32) -> (i32, i32) {
    %c0_i32 = arith.constant 0 : i32
    %c0_i32_0 = arith.constant 0 : i32
    return %c0_i32, %arg0 : i32, i32
  }
  func.func @transform_2(%arg0: i32) -> (i32, i32) {
    %c0_i32 = arith.constant 0 : i32
    %c0_i32_0 = arith.constant 0 : i32
    %c0_i32_1 = arith.constant 0 : i32
    return %c0_i32, %c0_i32_0 : i32, i32
  }
  func.func @transform_3(%arg0: i32) -> (i32, i32) {
    %c0_i32 = arith.constant 0 : i32
    %c0_i32_0 = arith.constant 0 : i32
    return %c0_i32, %arg0 : i32, i32
  }
  func.func @transform_4(%arg0: i32) -> (i32, i32) {
    %c0_i32 = arith.constant 0 : i32
    %c0_i32_0 = arith.constant 0 : i32
    return %c0_i32, %arg0 : i32, i32
  }
}

module attributes {stable_mosaic.version = 11 : i64} {
  func.func @_avgpool_fc_kernel(%arg0: i32, %arg1: memref<128x2xf32, #tpu.memory_space<vmem>>, %arg2: memref<2x2xf32, #tpu.memory_space<vmem>>, %arg3: memref<10x128xf32, #tpu.memory_space<vmem>>, %arg4: memref<10x1xf32, #tpu.memory_space<vmem>>, %arg5: memref<10x2xf32, #tpu.memory_space<vmem>>) attributes {dimension_semantics = [#tpu.dimension_semantics<arbitrary>], iteration_bounds = array<i64: 1>, scalar_prefetch = 0 : i64, scratch_operands = 0 : i64, tpu.core_type = #tpu.core_type<tc>, window_params = [{pipeline_mode = #tpu.pipeline_mode<synchronous>, transform_indices = @transform_0, window_bounds = array<i64: 128, 2>}, {pipeline_mode = #tpu.pipeline_mode<synchronous>, transform_indices = @transform_1, window_bounds = array<i64: 2, 2>}, {pipeline_mode = #tpu.pipeline_mode<synchronous>, transform_indices = @transform_2, window_bounds = array<i64: 10, 128>}, {pipeline_mode = #tpu.pipeline_mode<synchronous>, transform_indices = @transform_3, window_bounds = array<i64: 10, 1>}, {pipeline_mode = #tpu.pipeline_mode<synchronous>, transform_indices = @transform_4, window_bounds = array<i64: 10, 2>}]} {
    %c0 = arith.constant 0 : index
    %c0_0 = arith.constant 0 : index
    %0 = vector.load %arg1[%c0, %c0_0] : memref<128x2xf32, #tpu.memory_space<vmem>>, vector<128x2xf32>
    %c0_1 = arith.constant 0 : index
    %c0_2 = arith.constant 0 : index
    %1 = vector.load %arg2[%c0_1, %c0_2] : memref<2x2xf32, #tpu.memory_space<vmem>>, vector<2x2xf32>
    %cst = arith.constant dense<0.000000e+00> : vector<128x2xf32>
    %2 = tpu.matmul %0, %1, %cst {dimension_numbers = #tpu.dot_dimension_numbers<[1], [0], [0], [1], [0, 0, 1, 1], [], []>} : vector<128x2xf32>, vector<2x2xf32>, vector<128x2xf32> -> vector<128x2xf32>
    %c0_3 = arith.constant 0 : index
    %c0_4 = arith.constant 0 : index
    %3 = vector.load %arg3[%c0_3, %c0_4] : memref<10x128xf32, #tpu.memory_space<vmem>>, vector<10x128xf32>
    %cst_5 = arith.constant dense<0.000000e+00> : vector<10x2xf32>
    %4 = tpu.matmul %3, %2, %cst_5 {dimension_numbers = #tpu.dot_dimension_numbers<[1], [0], [0], [1], [0, 0, 1, 1], [], []>} : vector<10x128xf32>, vector<128x2xf32>, vector<10x2xf32> -> vector<10x2xf32>
    %c0_6 = arith.constant 0 : index
    %c0_7 = arith.constant 0 : index
    %5 = vector.load %arg4[%c0_6, %c0_7] : memref<10x1xf32, #tpu.memory_space<vmem>>, vector<10x1xf32>
    %6 = vector.broadcast %5 : vector<10x1xf32> to vector<10x2xf32>
    %7 = arith.addf %4, %6 : vector<10x2xf32>
    %c0_8 = arith.constant 0 : index
    %c0_9 = arith.constant 0 : index
    %8 = vector.load %arg5[%c0_8, %c0_9] : memref<10x2xf32, #tpu.memory_space<vmem>>, vector<10x2xf32>
    tpu.vector_store %arg5[%c0_8, %c0_9], %7 {strides = array<i32>} : memref<10x2xf32, #tpu.memory_space<vmem>>, vector<10x2xf32>,
    return
  }
  func.func @transform_0(%arg0: i32) -> (i32, i32) {
    %c0_i32 = arith.constant 0 : i32
    %c0_i32_0 = arith.constant 0 : i32
    %c0_i32_1 = arith.constant 0 : i32
    return %c0_i32, %c0_i32_0 : i32, i32
  }
  func.func @transform_1(%arg0: i32) -> (i32, i32) {
    %c0_i32 = arith.constant 0 : i32
    %c0_i32_0 = arith.constant 0 : i32
    %c0_i32_1 = arith.constant 0 : i32
    return %c0_i32, %c0_i32_0 : i32, i32
  }
  func.func @transform_2(%arg0: i32) -> (i32, i32) {
    %c0_i32 = arith.constant 0 : i32
    %c0_i32_0 = arith.constant 0 : i32
    %c0_i32_1 = arith.constant 0 : i32
    return %c0_i32, %c0_i32_0 : i32, i32
  }
  func.func @transform_3(%arg0: i32) -> (i32, i32) {
    %c0_i32 = arith.constant 0 : i32
    %c0_i32_0 = arith.constant 0 : i32
    %c0_i32_1 = arith.constant 0 : i32
    return %c0_i32, %c0_i32_0 : i32, i32
  }
  func.func @transform_4(%arg0: i32) -> (i32, i32) {
    %c0_i32 = arith.constant 0 : i32
    %c0_i32_0 = arith.constant 0 : i32
    %c0_i32_1 = arith.constant 0 : i32
    return %c0_i32, %c0_i32_0 : i32, i32
  }
}

</mosaic_0001>

<llo_original>
// kernel: resnet_forward.14
$region0: #{resnet_forward.14}
  #allocation0 [shape = 'u32[]', space=smem, size = 0x4, offset = 0x4, fixed_abs, tag = 'smem constant byte address 0x4 - core index']
  #allocation1 [shape = 'u32[144,128]{1,0:T(1,128)}', space=vmem, size = 0x12000, scoped, tag = 'internal scratch']
  %s0 = inlined_call_operand.vmem [shape: bf16[16,256], index: 0, kind: input, shape index: {}]
  %s1 = inlined_call_operand.vmem [shape: bf16[256,512], index: 1, kind: input, shape index: {}]
  %s2 = inlined_call_operand.vmem [shape: f32[16,1], index: 2, kind: input, shape index: {}]
  %s3 = inlined_call_operand.vmem [shape: f32[16,512], index: 3, kind: output, shape index: {}]
  %s4 = sld [smem:[#allocation0]]
  $region102: #{resnet_forward.14} parent=0
    _
  %s6 = ssub.s32 1, %s4
  %s7 = scalar_select 0, %s6, %s4
  $region1: #{resnet_forward.14} parent=0
    #allocation2 [shape = 'u8[262144]{0}', space=vmem, size = 0x40000, scoped, tag = 'input window, operand 1']
    #allocation3 [shape = 'u8[32768]{0}', space=vmem, size = 0x8000, scoped, tag = 'output window, operand 0']
    loop: start=0, step=1, limit=4
    $region2: #{resnet_forward.14} parent=1 // loop_pre_header
      _
    $region3: #{resnet_forward.14} parent=1 // loop_header
      %s9 = sphi 0, %s13
      %p10 = scmp.ge.s32.totalorder %s9, 4
      %s17 = sphi 0, %s17
      %s19 = sphi 0, %s17
      %s20 = sphi 0, %s19
      %s34 = sphi 0, %s20
      %s40 = sphi 0, %s42
      %s43 = sphi 0, %s40
      %s44 = sphi 0, %s43
      %s60 = sphi 0, %s44
      %s64 = sphi 0, %s64
      %s66 = sphi 0, %s64
      %s67 = sphi 0, %s66
      %s81 = sphi 0, %s67
      %s87 = sphi 0, %s89
      %s90 = sphi 0, %s87
      %s91 = sphi 0, %s90
      %s107 = sphi 0, %s91
    $region4: #{resnet_forward.14} parent=1 // loop_header_branch
      %12 = sbr.rel (%p10) target = $region8
    $region5: #{resnet_forward.14} parent=1 // loop_body
      %s14 = ssub.s32 %s9, 1
      %s15 = ssub.s32 %s9, 2
      %s16 = sadd.s32 %s9, 1
      %s18 = sadd.s32 %s17, 1
      %p21 = scmp.eq.s32.totalorder %s9, 1
      %p22 = scmp.ne.s32.totalorder %s17, %s19
      %p23 = scmp.eq.s32.totalorder %s9, 0
      %p24 = por %p22, %p23
      %p25 = scmp.ne.s32.totalorder %s17, %s19
      %p26 = scmp.eq.s32.totalorder %s14, 1
      %p27 = por %p25, %p26
      %p28 = scmp.ne.s32.totalorder %s19, %s20
      %p29 = scmp.eq.s32.totalorder %s14, 0
      %p30 = por %p28, %p29
      %p31 = scmp.ne.s32.totalorder %s19, %s20
      %p32 = scmp.eq.s32.totalorder %s15, 1
      %p33 = por %p31, %p32
      %p35 = scmp.ne.s32.totalorder %s20, %s34
      %p36 = scmp.eq.s32.totalorder %s15, 0
      %p37 = por %p35, %p36
      %s38 = ssub.s32 %s9, %s16
      %p39 = scmp.eq.s32.totalorder %s38, 0
      %s41 = sadd.s32 %s40, 1
      %s42 = scalar_select %p39, %s40, %s41
      %p45 = pneg %p39
      %p46 = scmp.eq.s32.totalorder %s9, 1
      %p47 = por %p45, %p46
      %p48 = scmp.ne.s32.totalorder %s40, %s43
      %p49 = scmp.eq.s32.totalorder %s9, 0
      %p50 = por %p48, %p49
      %p51 = scmp.ne.s32.totalorder %s40, %s43
      %p52 = scmp.eq.s32.totalorder %s14, 1
      %p53 = por %p51, %p52
      %p54 = scmp.ne.s32.totalorder %s43, %s44
      %p55 = scmp.eq.s32.totalorder %s14, 0
      %p56 = por %p54, %p55
      %p57 = scmp.ne.s32.totalorder %s43, %s44
      %p58 = scmp.eq.s32.totalorder %s15, 1
      %p59 = por %p57, %p58
      %p61 = scmp.ne.s32.totalorder %s44, %s60
      %p62 = scmp.eq.s32.totalorder %s15, 0
      %p63 = por %p61, %p62
      %s65 = sadd.s32 %s64, 1
      %p68 = scmp.eq.s32.totalorder %s9, 1
      %p69 = scmp.ne.s32.totalorder %s64, %s66
      %p70 = scmp.eq.s32.totalorder %s9, 0
      %p71 = por %p69, %p70
      %p72 = scmp.ne.s32.totalorder %s64, %s66
      %p73 = scmp.eq.s32.totalorder %s14, 1
      %p74 = por %p72, %p73
      %p75 = scmp.ne.s32.totalorder %s66, %s67
      %p76 = scmp.eq.s32.totalorder %s14, 0
      %p77 = por %p75, %p76
      %p78 = scmp.ne.s32.totalorder %s66, %s67
      %p79 = scmp.eq.s32.totalorder %s15, 1
      %p80 = por %p78, %p79
      %p82 = scmp.ne.s32.totalorder %s67, %s81
      %p83 = scmp.eq.s32.totalorder %s15, 0
      %p84 = por %p82, %p83
      %s85 = ssub.s32 %s9, %s16
      %p86 = scmp.eq.s32.totalorder %s85, 0
      %s88 = sadd.s32 %s87, 1
      %s89 = scalar_select %p86, %s87, %s88
      %p92 = pneg %p86
      %p93 = scmp.eq.s32.totalorder %s9, 1
      %p94 = por %p92, %p93
      %p95 = scmp.ne.s32.totalorder %s87, %s90
      %p96 = scmp.eq.s32.totalorder %s9, 0
      %p97 = por %p95, %p96
      %p98 = scmp.ne.s32.totalorder %s87, %s90
      %p99 = scmp.eq.s32.totalorder %s14, 1
      %p100 = por %p98, %p99
      %p101 = scmp.ne.s32.totalorder %s90, %s91
      %p102 = scmp.eq.s32.totalorder %s14, 0
      %p103 = por %p101, %p102
      %p104 = scmp.ne.s32.totalorder %s90, %s91
      %p105 = scmp.eq.s32.totalorder %s15, 1
      %p106 = por %p104, %p105
      %p108 = scmp.ne.s32.totalorder %s91, %s107
      %p109 = scmp.eq.s32.totalorder %s15, 0
      %p110 = por %p108, %p109
      %p111 = scmp.le.s32.totalorder 1, %s9
      %p112 = scmp.lt.s32.totalorder %s9, 3
      %p113 = pnand %p111, %p112
      %p114 = pneg %p113
      // Predicated region
      $region9: #{resnet_forward.14} parent=5 // pred_check
        _
      $region10: #{resnet_forward.14} parent=5 // pred_check_branch
        %116 = sbr.rel (%p113) target = $region12
      $region11: #{resnet_forward.14} parent=5 // pred_region
        %s117 = ssub.s32 %s9, 1
        // Predicated region
        $region13: #{resnet_forward.14} parent=11 // pred_check
          %p118 = pneg %p30
        $region14: #{resnet_forward.14} parent=11 // pred_check_branch
          %120 = sbr.rel (%p118) target = $region16
        $region15: #{resnet_forward.14} parent=11 // pred_region
          _
        $region16: #{resnet_forward.14} parent=11 // pred_fallthru
          _
        // Predicated region
        $region17: #{resnet_forward.14} parent=11 // pred_check
          %p121 = pneg %p77
        $region18: #{resnet_forward.14} parent=11 // pred_check_branch
          %123 = sbr.rel (%p121) target = $region20
        $region19: #{resnet_forward.14} parent=11 // pred_region
          _
        $region20: #{resnet_forward.14} parent=11 // pred_fallthru
          _
      $region12: #{resnet_forward.14} parent=5 // pred_fallthru
        _
      %p124 = scmp.lt.s32.totalorder %s9, 2
      // Predicated region
      $region21: #{resnet_forward.14} parent=5 // pred_check
        %p125 = pneg %p124
      $region22: #{resnet_forward.14} parent=5 // pred_check_branch
        %127 = sbr.rel (%p125) target = $region24
      $region23: #{resnet_forward.14} parent=5 // pred_region
        // Predicated region
        $region25: #{resnet_forward.14} parent=23 // pred_check
          %p128 = pneg %p50
        $region26: #{resnet_forward.14} parent=23 // pred_check_branch
          %130 = sbr.rel (%p128) target = $region28
        $region27: #{resnet_forward.14} parent=23 // pred_region
          %s131 = sand.u32 %s40, 1
          %s132 = sand.u32 %s40, 1
          %s133 = smul.addr %s132, 256
          %s134 = scalar_lea.vmem [#allocation2], %s133
          %s135 = smul.u32 2, %s9
          %s136 = smul.addr %s135, 4
          %s137 = scalar_lea.vmem %s1, %s136
          // Predicated region
          $region29: #{resnet_forward.14} parent=27 // pred_check
            _
          $region30: #{resnet_forward.14} parent=27 // pred_check_branch
            %139 = sbr.rel (0) target = $region32
          $region31: #{resnet_forward.14} parent=27 // pred_region
            // Predicated region
            $region33: #{resnet_forward.14} parent=31 // pred_check
              _
            $region34: #{resnet_forward.14} parent=31 // pred_check_branch
              %141 = sbr.rel (0) target = $region36
            $region35: #{resnet_forward.14} parent=31 // pred_region
              // Predicated region
              $region48: #{resnet_forward.14} parent=35 // pred_check
                _
              $region49: #{resnet_forward.14} parent=35 // pred_check_branch
                %219 = sbr.rel (0) target = $region51
              $region50: #{resnet_forward.14} parent=35 // pred_region
                loop: start=0, step=1, limit=1
                $region52: #{resnet_forward.14} parent=50 // loop_pre_header
                  _
                $region53: #{resnet_forward.14} parent=50 // loop_header
                  %s221 = sphi 0, %s225
                  %p222 = scmp.ge.s32.totalorder %s221, 1
                  %s226 = sphi %s137, %s137
                  %s227 = sphi %s134, %s134
                $region54: #{resnet_forward.14} parent=50 // loop_header_branch
                  %224 = sbr.rel (%p222) target = $region58
                $region55: #{resnet_forward.14} parent=50 // loop_body
                  %v228 = vld [vmem:[%s226] sm:$0xff]
                  %229 = vst [vmem:[%s227] sm:$0xff] %v228
                  %v230 = vld [vmem:[%s226 + $0x10] sm:$0xff]
                  %231 = vst [vmem:[%s227 + $0x8] sm:$0xff] %v230
                  %v232 = vld [vmem:[%s226 + $0x20] sm:$0xff]
                  %233 = vst [vmem:[%s227 + $0x10] sm:$0xff] %v232
                  %v234 = vld [vmem:[%s226 + $0x30] sm:$0xff]
                  %235 = vst [vmem:[%s227 + $0x18] sm:$0xff] %v234
                  %v236 = vld [vmem:[%s226 + $0x40] sm:$0xff]
                  %237 = vst [vmem:[%s227 + $0x20] sm:$0xff] %v236
                  %v238 = vld [vmem:[%s226 + $0x50] sm:$0xff]
                  %239 = vst [vmem:[%s227 + $0x28] sm:$0xff] %v238
                  %v240 = vld [vmem:[%s226 + $0x60] sm:$0xff]
                  %241 = vst [vmem:[%s227 + $0x30] sm:$0xff] %v240
                  %v242 = vld [vmem:[%s226 + $0x70] sm:$0xff]
                  %243 = vst [vmem:[%s227 + $0x38] sm:$0xff] %v242
                  %v244 = vld [vmem:[%s226 + $0x80] sm:$0xff]
                  %245 = vst [vmem:[%s227 + $0x40] sm:$0xff] %v244
                  %v246 = vld [vmem:[%s226 + $0x90] sm:$0xff]
                  %247 = vst [vmem:[%s227 + $0x48] sm:$0xff] %v246
                  %v248 = vld [vmem:[%s226 + $0xa0] sm:$0xff]
                  %249 = vst [vmem:[%s227 + $0x50] sm:$0xff] %v248
                  %v250 = vld [vmem:[%s226 + $0xb0] sm:$0xff]
                  %251 = vst [vmem:[%s227 + $0x58] sm:$0xff] %v250
                  %v252 = vld [vmem:[%s226 + $0xc0] sm:$0xff]
                  %253 = vst [vmem:[%s227 + $0x60] sm:$0xff] %v252
                  %v254 = vld [vmem:[%s226 + $0xd0] sm:$0xff]
                  %255 = vst [vmem:[%s227 + $0x68] sm:$0xff] %v254
                  %v256 = vld [vmem:[%s226 + $0xe0] sm:$0xff]
                  %257 = vst [vmem:[%s227 + $0x70] sm:$0xff] %v256
                  %v258 = vld [vmem:[%s226 + $0xf0] sm:$0xff]
                  %259 = vst [vmem:[%s227 + $0x78] sm:$0xff] %v258
                  %v260 = vld [vmem:[%s226 + $0x100] sm:$0xff]
                  %261 = vst [vmem:[%s227 + $0x80] sm:$0xff] %v260
                  %v262 = vld [vmem:[%s226 + $0x110] sm:$0xff]
                  %263 = vst [vmem:[%s227 + $0x88] sm:$0xff] %v262
                  %v264 = vld [vmem:[%s226 + $0x120] sm:$0xff]
                  %265 = vst [vmem:[%s227 + $0x90] sm:$0xff] %v264
                  %v266 = vld [vmem:[%s226 + $0x130] sm:$0xff]
                  %267 = vst [vmem:[%s227 + $0x98] sm:$0xff] %v266
                  %v268 = vld [vmem:[%s226 + $0x140] sm:$0xff]
                  %269 = vst [vmem:[%s227 + $0xa0] sm:$0xff] %v268
                  %v270 = vld [vmem:[%s226 + $0x150] sm:$0xff]
                  %271 = vst [vmem:[%s227 + $0xa8] sm:$0xff] %v270
                  %v272 = vld [vmem:[%s226 + $0x160] sm:$0xff]
                  %273 = vst [vmem:[%s227 + $0xb0] sm:$0xff] %v272
                  %v274 = vld [vmem:[%s226 + $0x170] sm:$0xff]
                  %275 = vst [vmem:[%s227 + $0xb8] sm:$0xff] %v274
                  %v276 = vld [vmem:[%s226 + $0x180] sm:$0xff]
                  %277 = vst [vmem:[%s227 + $0xc0] sm:$0xff] %v276
                  %v278 = vld [vmem:[%s226 + $0x190] sm:$0xff]
                  %279 = vst [vmem:[%s227 + $0xc8] sm:$0xff] %v278
                  %v280 = vld [vmem:[%s226 + $0x1a0] sm:$0xff]
                  %281 = vst [vmem:[%s227 + $0xd0] sm:$0xff] %v280
                  %v282 = vld [vmem:[%s226 + $0x1b0] sm:$0xff]
                  %283 = vst [vmem:[%s227 + $0xd8] sm:$0xff] %v282
                  %v284 = vld [vmem:[%s226 + $0x1c0] sm:$0xff]
                  %285 = vst [vmem:[%s227 + $0xe0] sm:$0xff] %v284
                  %v286 = vld [vmem:[%s226 + $0x1d0] sm:$0xff]
                  %287 = vst [vmem:[%s227 + $0xe8] sm:$0xff] %v286
                  %v288 = vld [vmem:[%s226 + $0x1e0] sm:$0xff]
                  %289 = vst [vmem:[%s227 + $0xf0] sm:$0xff] %v288
                  %v290 = vld [vmem:[%s226 + $0x1f0] sm:$0xff]
                  %291 = vst [vmem:[%s227 + $0xf8] sm:$0xff] %v290
                $region56: #{resnet_forward.14} parent=50 // loop_footer
                  %s225 = sadd.s32 1, %s221
                $region57: #{resnet_forward.14} parent=50 // loop_footer_branch
                  %220 = sbr.rel target = $region53
                $region58: #{resnet_forward.14} parent=50 // loop_exit
                  _
              $region51: #{resnet_forward.14} parent=35 // pred_fallthru
                _
              // Predicated region
              $region59: #{resnet_forward.14} parent=35 // pred_check
                _
              $region60: #{resnet_forward.14} parent=35 // pred_check_branch
                %293 = sbr.rel target = $region62
              $region61: #{resnet_forward.14} parent=35 // pred_region
                _
              $region62: #{resnet_forward.14} parent=35 // pred_fallthru
                _
            $region36: #{resnet_forward.14} parent=31 // pred_fallthru
              _
            // Predicated region
            $region37: #{resnet_forward.14} parent=31 // pred_check
              _
            $region38: #{resnet_forward.14} parent=31 // pred_check_branch
              %143 = sbr.rel target = $region40
            $region39: #{resnet_forward.14} parent=31 // pred_region
              %s145 = ssub.s32 256, 1
              loop: start=0, step=1, limit=1
              $region41: #{resnet_forward.14} parent=39 // loop_pre_header
                _
              $region42: #{resnet_forward.14} parent=39 // loop_header
                %s147 = sphi 0, %s151
                %p148 = scmp.ge.s32.totalorder %s147, 1
                %s152 = sphi %s137, %s137
                %s153 = sphi %s134, %s134
              $region43: #{resnet_forward.14} parent=39 // loop_header_branch
                %150 = sbr.rel (%p148) target = $region47
              $region44: #{resnet_forward.14} parent=39 // loop_body
                %v154 = vld [vmem:[%s152] sm:%s145]
                %155 = vst [vmem:[%s153] sm:%s145] %v154
                %v156 = vld [vmem:[%s152 + $0x10] sm:%s145]
                %157 = vst [vmem:[%s153 + $0x8] sm:%s145] %v156
                %v158 = vld [vmem:[%s152 + $0x20] sm:%s145]
                %159 = vst [vmem:[%s153 + $0x10] sm:%s145] %v158
                %v160 = vld [vmem:[%s152 + $0x30] sm:%s145]
                %161 = vst [vmem:[%s153 + $0x18] sm:%s145] %v160
                %v162 = vld [vmem:[%s152 + $0x40] sm:%s145]
                %163 = vst [vmem:[%s153 + $0x20] sm:%s145] %v162
                %v164 = vld [vmem:[%s152 + $0x50] sm:%s145]
                %165 = vst [vmem:[%s153 + $0x28] sm:%s145] %v164
                %v166 = vld [vmem:[%s152 + $0x60] sm:%s145]
                %167 = vst [vmem:[%s153 + $0x30] sm:%s145] %v166
                %v168 = vld [vmem:[%s152 + $0x70] sm:%s145]
                %169 = vst [vmem:[%s153 + $0x38] sm:%s145] %v168
                %v170 = vld [vmem:[%s152 + $0x80] sm:%s145]
                %171 = vst [vmem:[%s153 + $0x40] sm:%s145] %v170
                %v172 = vld [vmem:[%s152 + $0x90] sm:%s145]
                %173 = vst [vmem:[%s153 + $0x48] sm:%s145] %v172
                %v174 = vld [vmem:[%s152 + $0xa0] sm:%s145]
                %175 = vst [vmem:[%s153 + $0x50] sm:%s145] %v174
                %v176 = vld [vmem:[%s152 + $0xb0] sm:%s145]
                %177 = vst [vmem:[%s153 + $0x58] sm:%s145] %v176
                %v178 = vld [vmem:[%s152 + $0xc0] sm:%s145]
                %179 = vst [vmem:[%s153 + $0x60] sm:%s145] %v178
                %v180 = vld [vmem:[%s152 + $0xd0] sm:%s145]
                %181 = vst [vmem:[%s153 + $0x68] sm:%s145] %v180
                %v182 = vld [vmem:[%s152 + $0xe0] sm:%s145]
                %183 = vst [vmem:[%s153 + $0x70] sm:%s145] %v182
                %v184 = vld [vmem:[%s152 + $0xf0] sm:%s145]
                %185 = vst [vmem:[%s153 + $0x78] sm:%s145] %v184
                %v186 = vld [vmem:[%s152 + $0x100] sm:%s145]
                %187 = vst [vmem:[%s153 + $0x80] sm:%s145] %v186
                %v188 = vld [vmem:[%s152 + $0x110] sm:%s145]
                %189 = vst [vmem:[%s153 + $0x88] sm:%s145] %v188
                %v190 = vld [vmem:[%s152 + $0x120] sm:%s145]
                %191 = vst [vmem:[%s153 + $0x90] sm:%s145] %v190
                %v192 = vld [vmem:[%s152 + $0x130] sm:%s145]
                %193 = vst [vmem:[%s153 + $0x98] sm:%s145] %v192
                %v194 = vld [vmem:[%s152 + $0x140] sm:%s145]
                %195 = vst [vmem:[%s153 + $0xa0] sm:%s145] %v194
                %v196 = vld [vmem:[%s152 + $0x150] sm:%s145]
                %197 = vst [vmem:[%s153 + $0xa8] sm:%s145] %v196
                %v198 = vld [vmem:[%s152 + $0x160] sm:%s145]
                %199 = vst [vmem:[%s153 + $0xb0] sm:%s145] %v198
                %v200 = vld [vmem:[%s152 + $0x170] sm:%s145]
                %201 = vst [vmem:[%s153 + $0xb8] sm:%s145] %v200
                %v202 = vld [vmem:[%s152 + $0x180] sm:%s145]
                %203 = vst [vmem:[%s153 + $0xc0] sm:%s145] %v202
                %v204 = vld [vmem:[%s152 + $0x190] sm:%s145]
                %205 = vst [vmem:[%s153 + $0xc8] sm:%s145] %v204
                %v206 = vld [vmem:[%s152 + $0x1a0] sm:%s145]
                %207 = vst [vmem:[%s153 + $0xd0] sm:%s145] %v206
                %v208 = vld [vmem:[%s152 + $0x1b0] sm:%s145]
                %209 = vst [vmem:[%s153 + $0xd8] sm:%s145] %v208
                %v210 = vld [vmem:[%s152 + $0x1c0] sm:%s145]
                %211 = vst [vmem:[%s153 + $0xe0] sm:%s145] %v210
                %v212 = vld [vmem:[%s152 + $0x1d0] sm:%s145]
                %213 = vst [vmem:[%s153 + $0xe8] sm:%s145] %v212
                %v214 = vld [vmem:[%s152 + $0x1e0] sm:%s145]
                %215 = vst [vmem:[%s153 + $0xf0] sm:%s145] %v214
                %v216 = vld [vmem:[%s152 + $0x1f0] sm:%s145]
                %217 = vst [vmem:[%s153 + $0xf8] sm:%s145] %v216
              $region45: #{resnet_forward.14} parent=39 // loop_footer
                %s151 = sadd.s32 1, %s147
              $region46: #{resnet_forward.14} parent=39 // loop_footer_branch
                %146 = sbr.rel target = $region42
              $region47: #{resnet_forward.14} parent=39 // loop_exit
                _
            $region40: #{resnet_forward.14} parent=31 // pred_fallthru
              _
          $region32: #{resnet_forward.14} parent=27 // pred_fallthru
            _
          %294 = vnop
        $region28: #{resnet_forward.14} parent=23 // pred_fallthru
          _
      $region24: #{resnet_forward.14} parent=5 // pred_fallthru
        _
      %p295 = scmp.le.s32.totalorder 1, %s9
      %p296 = scmp.lt.s32.totalorder %s9, 3
      %p297 = pnand %p295, %p296
      %p298 = pneg %p297
      // Predicated region
      $region63: #{resnet_forward.14} parent=5 // pred_check
        _
      $region64: #{resnet_forward.14} parent=5 // pred_check_branch
        %300 = sbr.rel (%p297) target = $region66
      $region65: #{resnet_forward.14} parent=5 // pred_region
        %s301 = ssub.s32 %s9, 1
        %s302 = sand.u32 %s43, 1
        %s303 = sand.u32 %s43, 1
        %s304 = smul.addr %s303, 256
        %s305 = scalar_lea.vmem [#allocation2], %s304
        // Predicated region
        $region67: #{resnet_forward.14} parent=65 // pred_check
          %p306 = pneg %p56
        $region68: #{resnet_forward.14} parent=65 // pred_check_branch
          %308 = sbr.rel (%p306) target = $region70
        $region69: #{resnet_forward.14} parent=65 // pred_region
          _
        $region70: #{resnet_forward.14} parent=65 // pred_fallthru
          _
        %p309 = pneg %p30
        %p310 = pneg %p27
        %s311 = sand.u32 %s43, 1
        %s312 = sand.u32 %s43, 1
        %s313 = smul.addr %s312, 256
        %s314 = scalar_lea.vmem [#allocation2], %s313
        %p315 = pneg %p56
        %p316 = pneg %p53
        %p317 = pneg %p77
        %p318 = pneg %p74
        %p319 = pneg %p103
        %p320 = pneg %p100
        %s321 = sand.u32 %s90, 1
        %s322 = sand.u32 %s90, 1
        %s323 = smul.addr %s322, 32
        %s324 = scalar_lea.vmem [#allocation3], %s323
        %s325 = smul.u32 2, %s14
        %s326 = smul.u32 2, %s14
        %v327 = vld [vmem:[%s0] sm:$0xff]
        %v328 = vld [vmem:[%s0 + $0x8] sm:$0xff]
        %v329 = vld [vmem:[%s305] sm:$0xff]
        %v330 = vld [vmem:[%s305 + $0x8] sm:$0xff]
        %v331 = vld [vmem:[%s305 + $0x10] sm:$0xff]
        %v332 = vld [vmem:[%s305 + $0x18] sm:$0xff]
        %v333 = vld [vmem:[%s305 + $0x20] sm:$0xff]
        %v334 = vld [vmem:[%s305 + $0x28] sm:$0xff]
        %v335 = vld [vmem:[%s305 + $0x30] sm:$0xff]
        %v336 = vld [vmem:[%s305 + $0x38] sm:$0xff]
        %v337 = vld [vmem:[%s305 + $0x40] sm:$0xff]
        %v338 = vld [vmem:[%s305 + $0x48] sm:$0xff]
        %v339 = vld [vmem:[%s305 + $0x50] sm:$0xff]
        %v340 = vld [vmem:[%s305 + $0x58] sm:$0xff]
        %v341 = vld [vmem:[%s305 + $0x60] sm:$0xff]
        %v342 = vld [vmem:[%s305 + $0x68] sm:$0xff]
        %v343 = vld [vmem:[%s305 + $0x70] sm:$0xff]
        %v344 = vld [vmem:[%s305 + $0x78] sm:$0xff]
        %v345 = vld [vmem:[%s305 + $0x80] sm:$0xff]
        %v346 = vld [vmem:[%s305 + $0x88] sm:$0xff]
        %v347 = vld [vmem:[%s305 + $0x90] sm:$0xff]
        %v348 = vld [vmem:[%s305 + $0x98] sm:$0xff]
        %v349 = vld [vmem:[%s305 + $0xa0] sm:$0xff]
        %v350 = vld [vmem:[%s305 + $0xa8] sm:$0xff]
        %v351 = vld [vmem:[%s305 + $0xb0] sm:$0xff]
        %v352 = vld [vmem:[%s305 + $0xb8] sm:$0xff]
        %v353 = vld [vmem:[%s305 + $0xc0] sm:$0xff]
        %v354 = vld [vmem:[%s305 + $0xc8] sm:$0xff]
        %v355 = vld [vmem:[%s305 + $0xd0] sm:$0xff]
        %v356 = vld [vmem:[%s305 + $0xd8] sm:$0xff]
        %v357 = vld [vmem:[%s305 + $0xe0] sm:$0xff]
        %v358 = vld [vmem:[%s305 + $0xe8] sm:$0xff]
        %v359 = vld [vmem:[%s305 + $0xf0] sm:$0xff]
        %v360 = vld [vmem:[%s305 + $0xf8] sm:$0xff]
        %v361 = vld [vmem:[%s2] sm:$0xff]
        %v362 = vld [vmem:[%s2 + $0x8] sm:$0xff]
        %364 = vset.pattern.permute.xlu0 0
        %365 = vperm.xlu0 %364, %v361
        %v366 = vpop.permute.xlu0 %365
        %369 = vset.pattern.permute.xlu0 0
        %370 = vperm.xlu0 %369, %v362
        %v371 = vpop.permute.xlu0 %370
        %v375 = vunpack.c.l.b16 %v327
        %v376 = vunpack.c.h.b16 %v327
        %v377 = vunpack.c.l.b16 %v328
        %v378 = vunpack.c.h.b16 %v328
        %v379 = vpack.c.b16 %v377, %v375
        %v380 = vpack.c.b16 %v378, %v376
        %v415 = vunpack.c.l.b16 %v329
        %v416 = vunpack.c.h.b16 %v329
        %v417 = vunpack.c.l.b16 %v330
        %v418 = vunpack.c.h.b16 %v330
        %v419 = vunpack.c.l.b16 %v331
        %v420 = vunpack.c.h.b16 %v331
        %v421 = vunpack.c.l.b16 %v332
        %v422 = vunpack.c.h.b16 %v332
        %v423 = vunpack.c.l.b16 %v333
        %v424 = vunpack.c.h.b16 %v333
        %v425 = vunpack.c.l.b16 %v334
        %v426 = vunpack.c.h.b16 %v334
        %v427 = vunpack.c.l.b16 %v335
        %v428 = vunpack.c.h.b16 %v335
        %v429 = vunpack.c.l.b16 %v336
        %v430 = vunpack.c.h.b16 %v336
        %v431 = vunpack.c.l.b16 %v337
        %v432 = vunpack.c.h.b16 %v337
        %v433 = vunpack.c.l.b16 %v338
        %v434 = vunpack.c.h.b16 %v338
        %v435 = vunpack.c.l.b16 %v339
        %v436 = vunpack.c.h.b16 %v339
        %v437 = vunpack.c.l.b16 %v340
        %v438 = vunpack.c.h.b16 %v340
        %v439 = vunpack.c.l.b16 %v341
        %v440 = vunpack.c.h.b16 %v341
        %v441 = vunpack.c.l.b16 %v342
        %v442 = vunpack.c.h.b16 %v342
        %v443 = vunpack.c.l.b16 %v343
        %v444 = vunpack.c.h.b16 %v343
        %v445 = vunpack.c.l.b16 %v344
        %v446 = vunpack.c.h.b16 %v344
        %v447 = vunpack.c.l.b16 %v345
        %v448 = vunpack.c.h.b16 %v345
        %v449 = vunpack.c.l.b16 %v346
        %v450 = vunpack.c.h.b16 %v346
        %v451 = vunpack.c.l.b16 %v347
        %v452 = vunpack.c.h.b16 %v347
        %v453 = vunpack.c.l.b16 %v348
        %v454 = vunpack.c.h.b16 %v348
        %v455 = vunpack.c.l.b16 %v349
        %v456 = vunpack.c.h.b16 %v349
        %v457 = vunpack.c.l.b16 %v350
        %v458 = vunpack.c.h.b16 %v350
        %v459 = vunpack.c.l.b16 %v351
        %v460 = vunpack.c.h.b16 %v351
        %v461 = vunpack.c.l.b16 %v352
        %v462 = vunpack.c.h.b16 %v352
        %v463 = vunpack.c.l.b16 %v353
        %v464 = vunpack.c.h.b16 %v353
        %v465 = vunpack.c.l.b16 %v354
        %v466 = vunpack.c.h.b16 %v354
        %v467 = vunpack.c.l.b16 %v355
        %v468 = vunpack.c.h.b16 %v355
        %v469 = vunpack.c.l.b16 %v356
        %v470 = vunpack.c.h.b16 %v356
        %v471 = vunpack.c.l.b16 %v357
        %v472 = vunpack.c.h.b16 %v357
        %v473 = vunpack.c.l.b16 %v358
        %v474 = vunpack.c.h.b16 %v358
        %v475 = vunpack.c.l.b16 %v359
        %v476 = vunpack.c.h.b16 %v359
        %v477 = vunpack.c.l.b16 %v360
        %v478 = vunpack.c.h.b16 %v360
        %v479 = vpack.c.b16 %v417, %v415
        %v480 = vpack.c.b16 %v418, %v416
        %v481 = vpack.c.b16 %v421, %v419
        %v482 = vpack.c.b16 %v422, %v420
        %v483 = vpack.c.b16 %v425, %v423
        %v484 = vpack.c.b16 %v426, %v424
        %v485 = vpack.c.b16 %v429, %v427
        %v486 = vpack.c.b16 %v430, %v428
        %v487 = vpack.c.b16 %v433, %v431
        %v488 = vpack.c.b16 %v434, %v432
        %v489 = vpack.c.b16 %v437, %v435
        %v490 = vpack.c.b16 %v438, %v436
        %v491 = vpack.c.b16 %v441, %v439
        %v492 = vpack.c.b16 %v442, %v440
        %v493 = vpack.c.b16 %v445, %v443
        %v494 = vpack.c.b16 %v446, %v444
        %v495 = vpack.c.b16 %v449, %v447
        %v496 = vpack.c.b16 %v450, %v448
        %v497 = vpack.c.b16 %v453, %v451
        %v498 = vpack.c.b16 %v454, %v452
        %v499 = vpack.c.b16 %v457, %v455
        %v500 = vpack.c.b16 %v458, %v456
        %v501 = vpack.c.b16 %v461, %v459
        %v502 = vpack.c.b16 %v462, %v460
        %v503 = vpack.c.b16 %v465, %v463
        %v504 = vpack.c.b16 %v466, %v464
        %v505 = vpack.c.b16 %v469, %v467
        %v506 = vpack.c.b16 %v470, %v468
        %v507 = vpack.c.b16 %v473, %v471
        %v508 = vpack.c.b16 %v474, %v472
        %v509 = vpack.c.b16 %v477, %v475
        %v510 = vpack.c.b16 %v478, %v476
        %543 = vmatprep.subr.bf16.mxu0 %v494
        %544 = vmatpush1.bf16.msra.mxu0 %v493
        %545 = vmatprep.subr.bf16.mxu0 %v492
        %546 = vmatpush1.bf16.msra.mxu0 %v491
        %547 = vmatprep.subr.bf16.mxu0 %v490
        %548 = vmatpush1.bf16.msra.mxu0 %v489
        %549 = vmatprep.subr.bf16.mxu0 %v488
        %550 = vmatpush1.bf16.msra.mxu0 %v487
        %551 = vmatprep.subr.bf16.mxu0 %v486
        %552 = vmatpush1.bf16.msra.mxu0 %v485
        %553 = vmatprep.subr.bf16.mxu0 %v484
        %554 = vmatpush1.bf16.msra.mxu0 %v483
        %555 = vmatprep.subr.bf16.mxu0 %v482
        %556 = vmatpush1.bf16.msra.mxu0 %v481
        %557 = vmatprep.subr.bf16.mxu0 %v480
        %558 = vmatpush1.bf16.msra.mxu0 %v479
        %559 = vmatprep.subr.bf16.mxu0 %v510
        %560 = vmatpush2.bf16.msra.mxu0 %v509
        %561 = vmatprep.subr.bf16.mxu0 %v508
        %562 = vmatpush2.bf16.msra.mxu0 %v507
        %563 = vmatprep.subr.bf16.mxu0 %v506
        %564 = vmatpush2.bf16.msra.mxu0 %v505
        %565 = vmatprep.subr.bf16.mxu0 %v504
        %566 = vmatpush2.bf16.msra.mxu0 %v503
        %567 = vmatprep.subr.bf16.mxu0 %v502
        %568 = vmatpush2.bf16.msra.mxu0 %v501
        %569 = vmatprep.subr.bf16.mxu0 %v500
        %570 = vmatpush2.bf16.msra.mxu0 %v499
        %571 = vmatprep.subr.bf16.mxu0 %v498
        %572 = vmatpush2.bf16.msra.mxu0 %v497
        %573 = vmatprep.subr.bf16.mxu0 %v496
        %574 = vmatpush2.bf16.msra.mxu0 %v495
        %575 = vmatprep.mubr.bf16.mxu0 %v380
        %576 = vmatmul.mubr.bf16.gmra.mxu0 %v379
        %v577 = vpop.f32.mrf.mxu0
        %v578 = vadd.f32 %v366, %v577
        %v579 = vpop.f32.mrf.mxu0
        %v580 = vadd.f32 %v366, %v579
        %v581 = vpop.f32.mrf.mxu0
        %v582 = vadd.f32 %v371, %v581
        %v583 = vpop.f32.mrf.mxu0
        %v584 = vadd.f32 %v371, %v583
        %585 = vdwg.mxu0
        %v586 = vmax.f32 %v578, 0.0
        %v587 = vmax.f32 %v580, 0.0
        %v588 = vmax.f32 %v582, 0.0
        %v589 = vmax.f32 %v584, 0.0
        %590 = vst [vmem:[%s324] sm:$0xff] %v586
        %591 = vst [vmem:[%s324 + $0x8] sm:$0xff] %v587
        %592 = vst [vmem:[%s324 + $0x10] sm:$0xff] %v588
        %593 = vst [vmem:[%s324 + $0x18] sm:$0xff] %v589
        %s594 = sand.u32 %s90, 1
        %s595 = sand.u32 %s90, 1
        %s596 = smul.addr %s595, 32
        %s597 = scalar_lea.vmem [#allocation3], %s596
        // Predicated region
        $region71: #{resnet_forward.14} parent=65 // pred_check
          %p598 = pneg %p100
        $region72: #{resnet_forward.14} parent=65 // pred_check_branch
          %600 = sbr.rel (%p598) target = $region74
        $region73: #{resnet_forward.14} parent=65 // pred_region
          %s601 = smul.u32 2, %s14
          %s602 = smul.addr %s601, 8
          %s603 = scalar_lea.vmem %s3, %s602
          // Predicated region
          $region75: #{resnet_forward.14} parent=73 // pred_check
            _
          $region76: #{resnet_forward.14} parent=73 // pred_check_branch
            %605 = sbr.rel (0) target = $region78
          $region77: #{resnet_forward.14} parent=73 // pred_region
            // Predicated region
            $region79: #{resnet_forward.14} parent=77 // pred_check
              _
            $region80: #{resnet_forward.14} parent=77 // pred_check_branch
              %607 = sbr.rel (0) target = $region82
            $region81: #{resnet_forward.14} parent=77 // pred_region
              loop: start=0, step=1, limit=1
              $region83: #{resnet_forward.14} parent=81 // loop_pre_header
                _
              $region84: #{resnet_forward.14} parent=81 // loop_header
                %s609 = sphi 0, %s613
                %p610 = scmp.ge.s32.totalorder %s609, 1
                %s614 = sphi %s597, %s597
                %s615 = sphi %s603, %s603
              $region85: #{resnet_forward.14} parent=81 // loop_header_branch
                %612 = sbr.rel (%p610) target = $region89
              $region86: #{resnet_forward.14} parent=81 // loop_body
                %v616 = vld [vmem:[%s614] sm:$0xff]
                %617 = vst [vmem:[%s615] sm:$0xff] %v616
                %v618 = vld [vmem:[%s614 + $0x8] sm:$0xff]
                %619 = vst [vmem:[%s615 + $0x8] sm:$0xff] %v618
                %v620 = vld [vmem:[%s614 + $0x10] sm:$0xff]
                %621 = vst [vmem:[%s615 + $0x20] sm:$0xff] %v620
                %v622 = vld [vmem:[%s614 + $0x18] sm:$0xff]
                %623 = vst [vmem:[%s615 + $0x28] sm:$0xff] %v622
              $region87: #{resnet_forward.14} parent=81 // loop_footer
                %s613 = sadd.s32 1, %s609
              $region88: #{resnet_forward.14} parent=81 // loop_footer_branch
                %608 = sbr.rel target = $region84
              $region89: #{resnet_forward.14} parent=81 // loop_exit
                _
            $region82: #{resnet_forward.14} parent=77 // pred_fallthru
              _
            // Predicated region
            $region90: #{resnet_forward.14} parent=77 // pred_check
              _
            $region91: #{resnet_forward.14} parent=77 // pred_check_branch
              %625 = sbr.rel target = $region93
            $region92: #{resnet_forward.14} parent=77 // pred_region
              _
            $region93: #{resnet_forward.14} parent=77 // pred_fallthru
              _
          $region78: #{resnet_forward.14} parent=73 // pred_fallthru
            _
          %626 = vnop
        $region74: #{resnet_forward.14} parent=65 // pred_fallthru
          _
      $region66: #{resnet_forward.14} parent=5 // pred_fallthru
        _
      %p627 = scmp.le.s32.totalorder 2, %s9
      // Predicated region
      $region94: #{resnet_forward.14} parent=5 // pred_check
        %p628 = pneg %p627
      $region95: #{resnet_forward.14} parent=5 // pred_check_branch
        %630 = sbr.rel (%p628) target = $region97
      $region96: #{resnet_forward.14} parent=5 // pred_region
        %s631 = ssub.s32 %s9, 2
        // Predicated region
        $region98: #{resnet_forward.14} parent=96 // pred_check
          %p632 = pneg %p106
        $region99: #{resnet_forward.14} parent=96 // pred_check_branch
          %634 = sbr.rel (%p632) target = $region101
        $region100: #{resnet_forward.14} parent=96 // pred_region
          %s635 = sand.u32 %s91, 1
          %s636 = sand.u32 %s91, 1
          %s637 = smul.addr %s636, 32
          %s638 = scalar_lea.vmem [#allocation3], %s637
        $region101: #{resnet_forward.14} parent=96 // pred_fallthru
          _
      $region97: #{resnet_forward.14} parent=5 // pred_fallthru
        _
    $region6: #{resnet_forward.14} parent=1 // loop_footer
      %s13 = sadd.s32 1, %s9
    $region7: #{resnet_forward.14} parent=1 // loop_footer_branch
      %8 = sbr.rel target = $region3
    $region8: #{resnet_forward.14} parent=1 // loop_exit
      _

// kernel: resnet_forward.15
$region0: #{resnet_forward.15}
  #allocation0 [shape = 'u32[]', space=smem, size = 0x4, offset = 0x4, fixed_abs, tag = 'smem constant byte address 0x4 - core index']
  #allocation1 [shape = 'u32[144,128]{1,0:T(1,128)}', space=vmem, size = 0x12000, scoped, tag = 'internal scratch']
  %s0 = inlined_call_operand.vmem [shape: f32[9,16,128], index: 0, kind: input, shape index: {}]
  %s1 = inlined_call_operand.vmem [shape: f32[16,128], index: 1, kind: output, shape index: {}]
  %s2 = sld [smem:[#allocation0]]
  $region45: #{resnet_forward.15} parent=0
    _
  %s4 = ssub.s32 1, %s2
  %s5 = scalar_select 0, %s4, %s2
  loop: start=0, step=1, limit=11
  $region2: #{resnet_forward.15} parent=0 // loop_pre_header
    _
  $region3: #{resnet_forward.15} parent=0 // loop_header
    %s7 = sphi 0, %s11
    %p8 = scmp.ge.s32.totalorder %s7, 11
    %s14 = sphi 0, %s26
    %s15 = sphi 0, %s22
    %s16 = sphi 0, %s14
    %s17 = sphi 0, %s15
    %s18 = sphi 0, %s16
    %s19 = sphi 0, %s17
    %s31 = sphi 0, %s33
    %s34 = sphi 0, %s31
    %s35 = sphi 0, %s34
    %s51 = sphi 0, %s35
    %s57 = sphi 0, %s59
    %s60 = sphi 0, %s57
    %s61 = sphi 0, %s60
    %s77 = sphi 0, %s61
  $region4: #{resnet_forward.15} parent=0 // loop_header_branch
    %10 = sbr.rel (%p8) target = $region8
  $region5: #{resnet_forward.15} parent=0 // loop_body
    %s12 = ssub.s32 %s7, 1
    %s13 = ssub.s32 %s7, 2
    %s20 = sadd.s32 1, %s15
    %p21 = scmp.ge.s32.totalorder %s20, 9
    %s22 = scalar_select %p21, 0, %s20
    %s23 = sadd.s32 1, %s14
    %s24 = scalar_select %p21, %s23, %s14
    %p25 = scmp.ge.s32.totalorder %s24, 1
    %s26 = scalar_select %p25, 0, %s24
    %s27 = ssub.s32 %s15, %s22
    %s28 = ssub.s32 %s14, %s26
    %s29 = sor.u32 %s27, %s28
    %p30 = scmp.eq.s32.totalorder %s29, 0
    %s32 = sadd.s32 %s31, 1
    %s33 = scalar_select %p30, %s31, %s32
    %p36 = pneg %p30
    %p37 = scmp.eq.s32.totalorder %s7, 8
    %p38 = por %p36, %p37
    %p39 = scmp.ne.s32.totalorder %s31, %s34
    %p40 = scmp.eq.s32.totalorder %s7, 0
    %p41 = por %p39, %p40
    %p42 = scmp.ne.s32.totalorder %s31, %s34
    %p43 = scmp.eq.s32.totalorder %s12, 8
    %p44 = por %p42, %p43
    %p45 = scmp.ne.s32.totalorder %s34, %s35
    %p46 = scmp.eq.s32.totalorder %s12, 0
    %p47 = por %p45, %p46
    %p48 = scmp.ne.s32.totalorder %s34, %s35
    %p49 = scmp.eq.s32.totalorder %s13, 8
    %p50 = por %p48, %p49
    %p52 = scmp.ne.s32.totalorder %s35, %s51
    %p53 = scmp.eq.s32.totalorder %s13, 0
    %p54 = por %p52, %p53
    %s55 = ssub.s32 %s14, %s26
    %p56 = scmp.eq.s32.totalorder %s55, 0
    %s58 = sadd.s32 %s57, 1
    %s59 = scalar_select %p56, %s57, %s58
    %p62 = pneg %p56
    %p63 = scmp.eq.s32.totalorder %s7, 8
    %p64 = por %p62, %p63
    %p65 = scmp.ne.s32.totalorder %s57, %s60
    %p66 = scmp.eq.s32.totalorder %s7, 0
    %p67 = por %p65, %p66
    %p68 = scmp.ne.s32.totalorder %s57, %s60
    %p69 = scmp.eq.s32.totalorder %s12, 8
    %p70 = por %p68, %p69
    %p71 = scmp.ne.s32.totalorder %s60, %s61
    %p72 = scmp.eq.s32.totalorder %s12, 0
    %p73 = por %p71, %p72
    %p74 = scmp.ne.s32.totalorder %s60, %s61
    %p75 = scmp.eq.s32.totalorder %s13, 8
    %p76 = por %p74, %p75
    %p78 = scmp.ne.s32.totalorder %s61, %s77
    %p79 = scmp.eq.s32.totalorder %s13, 0
    %p80 = por %p78, %p79
    %p81 = scmp.le.s32.totalorder 1, %s7
    %p82 = scmp.lt.s32.totalorder %s7, 10
    %p83 = pnand %p81, %p82
    %p84 = pneg %p83
    // Predicated region
    $region9: #{resnet_forward.15} parent=5 // pred_check
      _
    $region10: #{resnet_forward.15} parent=5 // pred_check_branch
      %86 = sbr.rel (%p83) target = $region12
    $region11: #{resnet_forward.15} parent=5 // pred_region
      %s87 = ssub.s32 %s7, 1
    $region12: #{resnet_forward.15} parent=5 // pred_fallthru
      _
    %p88 = scmp.lt.s32.totalorder %s7, 9
    // Predicated region
    $region13: #{resnet_forward.15} parent=5 // pred_check
      %p89 = pneg %p88
    $region14: #{resnet_forward.15} parent=5 // pred_check_branch
      %91 = sbr.rel (%p89) target = $region16
    $region15: #{resnet_forward.15} parent=5 // pred_region
      // Predicated region
      $region17: #{resnet_forward.15} parent=15 // pred_check
        %p92 = pneg %p41
      $region18: #{resnet_forward.15} parent=15 // pred_check_branch
        %94 = sbr.rel (%p92) target = $region20
      $region19: #{resnet_forward.15} parent=15 // pred_region
        %p95 = scmp.lt.s32.totalorder %s15, 8
        %s96 = scalar_select %p95, %s15, 8
        %p97 = scmp.lt.s32.totalorder %s14, 0
        %s98 = scalar_select %p97, %s14, 0
        %s99 = smul.addr %s96, 2
        %s100 = sadd.s32 %s98, %s99
        %s101 = smul.addr %s100, 8
        %s102 = scalar_lea.vmem %s0, %s101
      $region20: #{resnet_forward.15} parent=15 // pred_fallthru
        _
    $region16: #{resnet_forward.15} parent=5 // pred_fallthru
      _
    %p103 = scmp.le.s32.totalorder 1, %s7
    %p104 = scmp.lt.s32.totalorder %s7, 10
    %p105 = pnand %p103, %p104
    %p106 = pneg %p105
    // Predicated region
    $region21: #{resnet_forward.15} parent=5 // pred_check
      _
    $region22: #{resnet_forward.15} parent=5 // pred_check_branch
      %108 = sbr.rel (%p105) target = $region24
    $region23: #{resnet_forward.15} parent=5 // pred_region
      %s109 = ssub.s32 %s7, 1
      %p110 = scmp.lt.s32.totalorder %s17, 8
      %s111 = scalar_select %p110, %s17, 8
      %p112 = scmp.lt.s32.totalorder %s16, 0
      %s113 = scalar_select %p112, %s16, 0
      %s114 = smul.addr %s111, 2
      %s115 = sadd.s32 %s113, %s114
      %s116 = smul.addr %s115, 8
      %s117 = scalar_lea.vmem %s0, %s116
      %p118 = pneg %p47
      %p119 = pneg %p44
      %p120 = pneg %p73
      %p121 = pneg %p70
      %p122 = scmp.lt.s32.totalorder %s16, 0
      %s123 = scalar_select %p122, %s16, 0
      %s124 = smul.addr %s123, 8
      %s125 = scalar_lea.vmem %s1, %s124
      %p126 = scmp.lt.s32.totalorder %s17, 8
      %s127 = scalar_select %p126, %s17, 8
      %p128 = scmp.lt.s32.totalorder %s16, 0
      %s129 = scalar_select %p128, %s16, 0
      %s130 = smul.addr %s127, 2
      %s131 = sadd.s32 %s129, %s130
      %s132 = smul.addr %s131, 8
      %s133 = scalar_lea.vmem %s0, %s132
      %p134 = scmp.lt.s32.totalorder %s16, 0
      %s135 = scalar_select %p134, %s16, 0
      %s136 = smul.addr %s135, 8
      %s137 = scalar_lea.vmem %s1, %s136
      %v138 = vld [vmem:[%s133] sm:$0xff]
      %v139 = vld [vmem:[%s133 + $0x8] sm:$0xff]
      %p140 = scmp.eq.s32.totalorder %s17, 0
      // Predicated region
      $region25: #{resnet_forward.15} parent=23 // pred_check
        %p141 = pneg %p140
      $region26: #{resnet_forward.15} parent=23 // pred_check_branch
        %143 = sbr.rel (%p141) target = $region28
      $region27: #{resnet_forward.15} parent=23 // pred_region
        %144 = vst [vmem:[%s137] sm:$0xff] %v138
        %145 = vst [vmem:[%s137 + $0x8] sm:$0xff] %v139
      $region28: #{resnet_forward.15} parent=23 // pred_fallthru
        _
      %p146 = scmp.gt.s32.totalorder %s17, 0
      // Predicated region
      $region29: #{resnet_forward.15} parent=23 // pred_check
        %p147 = pneg %p146
      $region30: #{resnet_forward.15} parent=23 // pred_check_branch
        %149 = sbr.rel (%p147) target = $region32
      $region31: #{resnet_forward.15} parent=23 // pred_region
        %v150 = vld [vmem:[%s137] sm:$0xff]
        %v151 = vld [vmem:[%s137 + $0x8] sm:$0xff]
        %v152 = vmax.f32 %v150, %v138
        %v153 = vmax.f32 %v151, %v139
        %154 = vst [vmem:[%s137] sm:$0xff] %v152
        %155 = vst [vmem:[%s137 + $0x8] sm:$0xff] %v153
      $region32: #{resnet_forward.15} parent=23 // pred_fallthru
        _
      %p156 = scmp.lt.s32.totalorder %s16, 0
      %s157 = scalar_select %p156, %s16, 0
      %s158 = smul.addr %s157, 8
      %s159 = scalar_lea.vmem %s1, %s158
      // Predicated region
      $region33: #{resnet_forward.15} parent=23 // pred_check
        %p160 = pneg %p70
      $region34: #{resnet_forward.15} parent=23 // pred_check_branch
        %162 = sbr.rel (%p160) target = $region36
      $region35: #{resnet_forward.15} parent=23 // pred_region
        _
      $region36: #{resnet_forward.15} parent=23 // pred_fallthru
        _
      // Predicated region
      $region37: #{resnet_forward.15} parent=23 // pred_check
        %p163 = pneg %p70
      $region38: #{resnet_forward.15} parent=23 // pred_check_branch
        %165 = sbr.rel (%p163) target = $region40
      $region39: #{resnet_forward.15} parent=23 // pred_region
        %p166 = scmp.lt.s32.totalorder %s16, 0
        %s167 = scalar_select %p166, %s16, 0
        %s168 = smul.addr %s167, 8
        %s169 = scalar_lea.vmem %s1, %s168
      $region40: #{resnet_forward.15} parent=23 // pred_fallthru
        _
    $region24: #{resnet_forward.15} parent=5 // pred_fallthru
      _
    %p170 = scmp.le.s32.totalorder 2, %s7
    // Predicated region
    $region41: #{resnet_forward.15} parent=5 // pred_check
      %p171 = pneg %p170
    $region42: #{resnet_forward.15} parent=5 // pred_check_branch
      %173 = sbr.rel (%p171) target = $region44
    $region43: #{resnet_forward.15} parent=5 // pred_region
      %s174 = ssub.s32 %s7, 2
    $region44: #{resnet_forward.15} parent=5 // pred_fallthru
      _
  $region6: #{resnet_forward.15} parent=0 // loop_footer
    %s11 = sadd.s32 1, %s7
  $region7: #{resnet_forward.15} parent=0 // loop_footer_branch
    %6 = sbr.rel target = $region3
  $region8: #{resnet_forward.15} parent=0 // loop_exit
    _

// kernel: resnet_forward.16
$region0: #{resnet_forward.16}
  #allocation0 [shape = 'u32[]', space=smem, size = 0x4, offset = 0x4, fixed_abs, tag = 'smem constant byte address 0x4 - core index']
  #allocation1 [shape = 'u32[144,128]{1,0:T(1,128)}', space=vmem, size = 0x12000, scoped, tag = 'internal scratch']
  %s0 = inlined_call_operand.vmem [shape: bf16[16,256], index: 0, kind: input, shape index: {}]
  %s1 = inlined_call_operand.vmem [shape: bf16[256,128], index: 1, kind: input, shape index: {}]
  %s2 = inlined_call_operand.vmem [shape: f32[16,1], index: 2, kind: input, shape index: {}]
  %s3 = inlined_call_operand.vmem [shape: f32[16,128], index: 3, kind: output, shape index: {}]
  %s4 = sld [smem:[#allocation0]]
  $region22: #{resnet_forward.16} parent=0
    _
  %s6 = ssub.s32 1, %s4
  %s7 = scalar_select 0, %s6, %s4
  // Predicated region
  $region2: #{resnet_forward.16} parent=0 // pred_check
    _
  $region3: #{resnet_forward.16} parent=0 // pred_check_branch
    %9 = sbr.rel (0) target = $region5
  $region4: #{resnet_forward.16} parent=0 // pred_region
    _
  $region5: #{resnet_forward.16} parent=0 // pred_fallthru
    _
  // Predicated region
  $region6: #{resnet_forward.16} parent=0 // pred_check
    _
  $region7: #{resnet_forward.16} parent=0 // pred_check_branch
    %11 = sbr.rel (0) target = $region9
  $region8: #{resnet_forward.16} parent=0 // pred_region
    _
  $region9: #{resnet_forward.16} parent=0 // pred_fallthru
    _
  // Predicated region
  $region10: #{resnet_forward.16} parent=0 // pred_check
    _
  $region11: #{resnet_forward.16} parent=0 // pred_check_branch
    %13 = sbr.rel (0) target = $region13
  $region12: #{resnet_forward.16} parent=0 // pred_region
    _
  $region13: #{resnet_forward.16} parent=0 // pred_fallthru
    _
  %v15 = vld [vmem:[%s0] sm:$0xff]
  %v16 = vld [vmem:[%s0 + $0x8] sm:$0xff]
  %v17 = vld [vmem:[%s1] sm:$0xf]
  %v18 = vld [vmem:[%s1 + $0x4] sm:$0xf]
  %v19 = vld [vmem:[%s1 + $0x8] sm:$0xf]
  %v20 = vld [vmem:[%s1 + $0xc] sm:$0xf]
  %v21 = vld [vmem:[%s1 + $0x10] sm:$0xf]
  %v22 = vld [vmem:[%s1 + $0x14] sm:$0xf]
  %v23 = vld [vmem:[%s1 + $0x18] sm:$0xf]
  %v24 = vld [vmem:[%s1 + $0x1c] sm:$0xf]
  %v25 = vld [vmem:[%s1 + $0x20] sm:$0xf]
  %v26 = vld [vmem:[%s1 + $0x24] sm:$0xf]
  %v27 = vld [vmem:[%s1 + $0x28] sm:$0xf]
  %v28 = vld [vmem:[%s1 + $0x2c] sm:$0xf]
  %v29 = vld [vmem:[%s1 + $0x30] sm:$0xf]
  %v30 = vld [vmem:[%s1 + $0x34] sm:$0xf]
  %v31 = vld [vmem:[%s1 + $0x38] sm:$0xf]
  %v32 = vld [vmem:[%s1 + $0x3c] sm:$0xf]
  %v33 = vld [vmem:[%s1 + $0x40] sm:$0xf]
  %v34 = vld [vmem:[%s1 + $0x44] sm:$0xf]
  %v35 = vld [vmem:[%s1 + $0x48] sm:$0xf]
  %v36 = vld [vmem:[%s1 + $0x4c] sm:$0xf]
  %v37 = vld [vmem:[%s1 + $0x50] sm:$0xf]
  %v38 = vld [vmem:[%s1 + $0x54] sm:$0xf]
  %v39 = vld [vmem:[%s1 + $0x58] sm:$0xf]
  %v40 = vld [vmem:[%s1 + $0x5c] sm:$0xf]
  %v41 = vld [vmem:[%s1 + $0x60] sm:$0xf]
  %v42 = vld [vmem:[%s1 + $0x64] sm:$0xf]
  %v43 = vld [vmem:[%s1 + $0x68] sm:$0xf]
  %v44 = vld [vmem:[%s1 + $0x6c] sm:$0xf]
  %v45 = vld [vmem:[%s1 + $0x70] sm:$0xf]
  %v46 = vld [vmem:[%s1 + $0x74] sm:$0xf]
  %v47 = vld [vmem:[%s1 + $0x78] sm:$0xf]
  %v48 = vld [vmem:[%s1 + $0x7c] sm:$0xf]
  %v49 = vld [vmem:[%s2] sm:$0xff]
  %v50 = vld [vmem:[%s2 + $0x8] sm:$0xff]
  %52 = vset.pattern.permute.xlu0 0
  %53 = vperm.xlu0 %52, %v49
  %v54 = vpop.permute.xlu0 %53
  %57 = vset.pattern.permute.xlu0 0
  %58 = vperm.xlu0 %57, %v50
  %v59 = vpop.permute.xlu0 %58
  %v63 = vunpack.c.l.b16 %v15
  %v64 = vunpack.c.h.b16 %v15
  %v65 = vunpack.c.l.b16 %v16
  %v66 = vunpack.c.h.b16 %v16
  %v67 = vpack.c.b16 %v65, %v63
  %v68 = vpack.c.b16 %v66, %v64
  %v103 = vunpack.c.l.b16 %v17
  %v104 = vunpack.c.l.b16 %v18
  %v105 = vunpack.c.l.b16 %v19
  %v106 = vunpack.c.l.b16 %v20
  %v107 = vunpack.c.l.b16 %v21
  %v108 = vunpack.c.l.b16 %v22
  %v109 = vunpack.c.l.b16 %v23
  %v110 = vunpack.c.l.b16 %v24
  %v111 = vunpack.c.l.b16 %v25
  %v112 = vunpack.c.l.b16 %v26
  %v113 = vunpack.c.l.b16 %v27
  %v114 = vunpack.c.l.b16 %v28
  %v115 = vunpack.c.l.b16 %v29
  %v116 = vunpack.c.l.b16 %v30
  %v117 = vunpack.c.l.b16 %v31
  %v118 = vunpack.c.l.b16 %v32
  %v119 = vunpack.c.l.b16 %v33
  %v120 = vunpack.c.l.b16 %v34
  %v121 = vunpack.c.l.b16 %v35
  %v122 = vunpack.c.l.b16 %v36
  %v123 = vunpack.c.l.b16 %v37
  %v124 = vunpack.c.l.b16 %v38
  %v125 = vunpack.c.l.b16 %v39
  %v126 = vunpack.c.l.b16 %v40
  %v127 = vunpack.c.l.b16 %v41
  %v128 = vunpack.c.l.b16 %v42
  %v129 = vunpack.c.l.b16 %v43
  %v130 = vunpack.c.l.b16 %v44
  %v131 = vunpack.c.l.b16 %v45
  %v132 = vunpack.c.l.b16 %v46
  %v133 = vunpack.c.l.b16 %v47
  %v134 = vunpack.c.l.b16 %v48
  %v135 = vpack.c.b16 %v104, %v103
  %v136 = vpack.c.b16 %v106, %v105
  %v137 = vpack.c.b16 %v108, %v107
  %v138 = vpack.c.b16 %v110, %v109
  %v139 = vpack.c.b16 %v112, %v111
  %v140 = vpack.c.b16 %v114, %v113
  %v141 = vpack.c.b16 %v116, %v115
  %v142 = vpack.c.b16 %v118, %v117
  %v143 = vpack.c.b16 %v120, %v119
  %v144 = vpack.c.b16 %v122, %v121
  %v145 = vpack.c.b16 %v124, %v123
  %v146 = vpack.c.b16 %v126, %v125
  %v147 = vpack.c.b16 %v128, %v127
  %v148 = vpack.c.b16 %v130, %v129
  %v149 = vpack.c.b16 %v132, %v131
  %v150 = vpack.c.b16 %v134, %v133
  %167 = vmatprep.subr.bf16.mxu0 0
  %168 = vmatpush1.bf16.msra.mxu0 %v142
  %169 = vmatprep.subr.bf16.mxu0 0
  %170 = vmatpush1.bf16.msra.mxu0 %v141
  %171 = vmatprep.subr.bf16.mxu0 0
  %172 = vmatpush1.bf16.msra.mxu0 %v140
  %173 = vmatprep.subr.bf16.mxu0 0
  %174 = vmatpush1.bf16.msra.mxu0 %v139
  %175 = vmatprep.subr.bf16.mxu0 0
  %176 = vmatpush1.bf16.msra.mxu0 %v138
  %177 = vmatprep.subr.bf16.mxu0 0
  %178 = vmatpush1.bf16.msra.mxu0 %v137
  %179 = vmatprep.subr.bf16.mxu0 0
  %180 = vmatpush1.bf16.msra.mxu0 %v136
  %181 = vmatprep.subr.bf16.mxu0 0
  %182 = vmatpush1.bf16.msra.mxu0 %v135
  %183 = vmatprep.subr.bf16.mxu0 0
  %184 = vmatpush2.bf16.msra.mxu0 %v150
  %185 = vmatprep.subr.bf16.mxu0 0
  %186 = vmatpush2.bf16.msra.mxu0 %v149
  %187 = vmatprep.subr.bf16.mxu0 0
  %188 = vmatpush2.bf16.msra.mxu0 %v148
  %189 = vmatprep.subr.bf16.mxu0 0
  %190 = vmatpush2.bf16.msra.mxu0 %v147
  %191 = vmatprep.subr.bf16.mxu0 0
  %192 = vmatpush2.bf16.msra.mxu0 %v146
  %193 = vmatprep.subr.bf16.mxu0 0
  %194 = vmatpush2.bf16.msra.mxu0 %v145
  %195 = vmatprep.subr.bf16.mxu0 0
  %196 = vmatpush2.bf16.msra.mxu0 %v144
  %197 = vmatprep.subr.bf16.mxu0 0
  %198 = vmatpush2.bf16.msra.mxu0 %v143
  %199 = vmatprep.mubr.bf16.mxu0 %v68
  %200 = vmatmul.mubr.bf16.gmra.mxu0 %v67
  %v201 = vpop.f32.mrf.mxu0
  %v202 = vadd.f32 %v54, %v201
  %v203 = vpop.f32.mrf.mxu0
  %v204 = vpop.f32.mrf.mxu0
  %v205 = vadd.f32 %v59, %v204
  %v206 = vpop.f32.mrf.mxu0
  %207 = vdwg.mxu0
  %v208 = vmax.f32 %v202, 0.0
  %v209 = vmax.f32 %v205, 0.0
  %210 = vst [vmem:[%s3] sm:$0xff] %v208
  %211 = vst [vmem:[%s3 + $0x8] sm:$0xff] %v209
  // Predicated region
  $region14: #{resnet_forward.16} parent=0 // pred_check
    _
  $region15: #{resnet_forward.16} parent=0 // pred_check_branch
    %213 = sbr.rel (0) target = $region17
  $region16: #{resnet_forward.16} parent=0 // pred_region
    _
  $region17: #{resnet_forward.16} parent=0 // pred_fallthru
    _
  // Predicated region
  $region18: #{resnet_forward.16} parent=0 // pred_check
    _
  $region19: #{resnet_forward.16} parent=0 // pred_check_branch
    %215 = sbr.rel (0) target = $region21
  $region20: #{resnet_forward.16} parent=0 // pred_region
    _
  $region21: #{resnet_forward.16} parent=0 // pred_fallthru
    _

// kernel: resnet_forward.17
$region0: #{resnet_forward.17}
  #allocation0 [shape = 'u32[]', space=smem, size = 0x4, offset = 0x4, fixed_abs, tag = 'smem constant byte address 0x4 - core index']
  #allocation1 [shape = 'u32[144,128]{1,0:T(1,128)}', space=vmem, size = 0x12000, scoped, tag = 'internal scratch']
  %s0 = inlined_call_operand.vmem [shape: bf16[16,256], index: 0, kind: input, shape index: {}]
  %s1 = inlined_call_operand.vmem [shape: bf16[256,128], index: 1, kind: input, shape index: {}]
  %s2 = inlined_call_operand.vmem [shape: f32[16,1], index: 2, kind: input, shape index: {}]
  %s3 = inlined_call_operand.vmem [shape: bf16[16,128], index: 3, kind: input, shape index: {}]
  %s4 = inlined_call_operand.vmem [shape: f32[16,128], index: 4, kind: output, shape index: {}]
  %s5 = sld [smem:[#allocation0]]
  $region26: #{resnet_forward.17} parent=0
    _
  %s7 = ssub.s32 1, %s5
  %s8 = scalar_select 0, %s7, %s5
  // Predicated region
  $region2: #{resnet_forward.17} parent=0 // pred_check
    _
  $region3: #{resnet_forward.17} parent=0 // pred_check_branch
    %10 = sbr.rel (0) target = $region5
  $region4: #{resnet_forward.17} parent=0 // pred_region
    _
  $region5: #{resnet_forward.17} parent=0 // pred_fallthru
    _
  // Predicated region
  $region6: #{resnet_forward.17} parent=0 // pred_check
    _
  $region7: #{resnet_forward.17} parent=0 // pred_check_branch
    %12 = sbr.rel (0) target = $region9
  $region8: #{resnet_forward.17} parent=0 // pred_region
    _
  $region9: #{resnet_forward.17} parent=0 // pred_fallthru
    _
  // Predicated region
  $region10: #{resnet_forward.17} parent=0 // pred_check
    _
  $region11: #{resnet_forward.17} parent=0 // pred_check_branch
    %14 = sbr.rel (0) target = $region13
  $region12: #{resnet_forward.17} parent=0 // pred_region
    _
  $region13: #{resnet_forward.17} parent=0 // pred_fallthru
    _
  // Predicated region
  $region14: #{resnet_forward.17} parent=0 // pred_check
    _
  $region15: #{resnet_forward.17} parent=0 // pred_check_branch
    %16 = sbr.rel (0) target = $region17
  $region16: #{resnet_forward.17} parent=0 // pred_region
    _
  $region17: #{resnet_forward.17} parent=0 // pred_fallthru
    _
  %v18 = vld [vmem:[%s0] sm:$0xff]
  %v19 = vld [vmem:[%s0 + $0x8] sm:$0xff]
  %v20 = vld [vmem:[%s1] sm:$0xf]
  %v21 = vld [vmem:[%s1 + $0x4] sm:$0xf]
  %v22 = vld [vmem:[%s1 + $0x8] sm:$0xf]
  %v23 = vld [vmem:[%s1 + $0xc] sm:$0xf]
  %v24 = vld [vmem:[%s1 + $0x10] sm:$0xf]
  %v25 = vld [vmem:[%s1 + $0x14] sm:$0xf]
  %v26 = vld [vmem:[%s1 + $0x18] sm:$0xf]
  %v27 = vld [vmem:[%s1 + $0x1c] sm:$0xf]
  %v28 = vld [vmem:[%s1 + $0x20] sm:$0xf]
  %v29 = vld [vmem:[%s1 + $0x24] sm:$0xf]
  %v30 = vld [vmem:[%s1 + $0x28] sm:$0xf]
  %v31 = vld [vmem:[%s1 + $0x2c] sm:$0xf]
  %v32 = vld [vmem:[%s1 + $0x30] sm:$0xf]
  %v33 = vld [vmem:[%s1 + $0x34] sm:$0xf]
  %v34 = vld [vmem:[%s1 + $0x38] sm:$0xf]
  %v35 = vld [vmem:[%s1 + $0x3c] sm:$0xf]
  %v36 = vld [vmem:[%s1 + $0x40] sm:$0xf]
  %v37 = vld [vmem:[%s1 + $0x44] sm:$0xf]
  %v38 = vld [vmem:[%s1 + $0x48] sm:$0xf]
  %v39 = vld [vmem:[%s1 + $0x4c] sm:$0xf]
  %v40 = vld [vmem:[%s1 + $0x50] sm:$0xf]
  %v41 = vld [vmem:[%s1 + $0x54] sm:$0xf]
  %v42 = vld [vmem:[%s1 + $0x58] sm:$0xf]
  %v43 = vld [vmem:[%s1 + $0x5c] sm:$0xf]
  %v44 = vld [vmem:[%s1 + $0x60] sm:$0xf]
  %v45 = vld [vmem:[%s1 + $0x64] sm:$0xf]
  %v46 = vld [vmem:[%s1 + $0x68] sm:$0xf]
  %v47 = vld [vmem:[%s1 + $0x6c] sm:$0xf]
  %v48 = vld [vmem:[%s1 + $0x70] sm:$0xf]
  %v49 = vld [vmem:[%s1 + $0x74] sm:$0xf]
  %v50 = vld [vmem:[%s1 + $0x78] sm:$0xf]
  %v51 = vld [vmem:[%s1 + $0x7c] sm:$0xf]
  %v52 = vld [vmem:[%s2] sm:$0xff]
  %v53 = vld [vmem:[%s2 + $0x8] sm:$0xff]
  %55 = vset.pattern.permute.xlu0 0
  %56 = vperm.xlu0 %55, %v52
  %v57 = vpop.permute.xlu0 %56
  %60 = vset.pattern.permute.xlu0 0
  %61 = vperm.xlu0 %60, %v53
  %v62 = vpop.permute.xlu0 %61
  %v66 = vunpack.c.l.b16 %v18
  %v67 = vunpack.c.h.b16 %v18
  %v68 = vunpack.c.l.b16 %v19
  %v69 = vunpack.c.h.b16 %v19
  %v70 = vpack.c.b16 %v68, %v66
  %v71 = vpack.c.b16 %v69, %v67
  %v106 = vunpack.c.l.b16 %v20
  %v107 = vunpack.c.l.b16 %v21
  %v108 = vunpack.c.l.b16 %v22
  %v109 = vunpack.c.l.b16 %v23
  %v110 = vunpack.c.l.b16 %v24
  %v111 = vunpack.c.l.b16 %v25
  %v112 = vunpack.c.l.b16 %v26
  %v113 = vunpack.c.l.b16 %v27
  %v114 = vunpack.c.l.b16 %v28
  %v115 = vunpack.c.l.b16 %v29
  %v116 = vunpack.c.l.b16 %v30
  %v117 = vunpack.c.l.b16 %v31
  %v118 = vunpack.c.l.b16 %v32
  %v119 = vunpack.c.l.b16 %v33
  %v120 = vunpack.c.l.b16 %v34
  %v121 = vunpack.c.l.b16 %v35
  %v122 = vunpack.c.l.b16 %v36
  %v123 = vunpack.c.l.b16 %v37
  %v124 = vunpack.c.l.b16 %v38
  %v125 = vunpack.c.l.b16 %v39
  %v126 = vunpack.c.l.b16 %v40
  %v127 = vunpack.c.l.b16 %v41
  %v128 = vunpack.c.l.b16 %v42
  %v129 = vunpack.c.l.b16 %v43
  %v130 = vunpack.c.l.b16 %v44
  %v131 = vunpack.c.l.b16 %v45
  %v132 = vunpack.c.l.b16 %v46
  %v133 = vunpack.c.l.b16 %v47
  %v134 = vunpack.c.l.b16 %v48
  %v135 = vunpack.c.l.b16 %v49
  %v136 = vunpack.c.l.b16 %v50
  %v137 = vunpack.c.l.b16 %v51
  %v138 = vpack.c.b16 %v107, %v106
  %v139 = vpack.c.b16 %v109, %v108
  %v140 = vpack.c.b16 %v111, %v110
  %v141 = vpack.c.b16 %v113, %v112
  %v142 = vpack.c.b16 %v115, %v114
  %v143 = vpack.c.b16 %v117, %v116
  %v144 = vpack.c.b16 %v119, %v118
  %v145 = vpack.c.b16 %v121, %v120
  %v146 = vpack.c.b16 %v123, %v122
  %v147 = vpack.c.b16 %v125, %v124
  %v148 = vpack.c.b16 %v127, %v126
  %v149 = vpack.c.b16 %v129, %v128
  %v150 = vpack.c.b16 %v131, %v130
  %v151 = vpack.c.b16 %v133, %v132
  %v152 = vpack.c.b16 %v135, %v134
  %v153 = vpack.c.b16 %v137, %v136
  %170 = vmatprep.subr.bf16.mxu0 0
  %171 = vmatpush1.bf16.msra.mxu0 %v145
  %172 = vmatprep.subr.bf16.mxu0 0
  %173 = vmatpush1.bf16.msra.mxu0 %v144
  %174 = vmatprep.subr.bf16.mxu0 0
  %175 = vmatpush1.bf16.msra.mxu0 %v143
  %176 = vmatprep.subr.bf16.mxu0 0
  %177 = vmatpush1.bf16.msra.mxu0 %v142
  %178 = vmatprep.subr.bf16.mxu0 0
  %179 = vmatpush1.bf16.msra.mxu0 %v141
  %180 = vmatprep.subr.bf16.mxu0 0
  %181 = vmatpush1.bf16.msra.mxu0 %v140
  %182 = vmatprep.subr.bf16.mxu0 0
  %183 = vmatpush1.bf16.msra.mxu0 %v139
  %184 = vmatprep.subr.bf16.mxu0 0
  %185 = vmatpush1.bf16.msra.mxu0 %v138
  %186 = vmatprep.subr.bf16.mxu0 0
  %187 = vmatpush2.bf16.msra.mxu0 %v153
  %188 = vmatprep.subr.bf16.mxu0 0
  %189 = vmatpush2.bf16.msra.mxu0 %v152
  %190 = vmatprep.subr.bf16.mxu0 0
  %191 = vmatpush2.bf16.msra.mxu0 %v151
  %192 = vmatprep.subr.bf16.mxu0 0
  %193 = vmatpush2.bf16.msra.mxu0 %v150
  %194 = vmatprep.subr.bf16.mxu0 0
  %195 = vmatpush2.bf16.msra.mxu0 %v149
  %196 = vmatprep.subr.bf16.mxu0 0
  %197 = vmatpush2.bf16.msra.mxu0 %v148
  %198 = vmatprep.subr.bf16.mxu0 0
  %199 = vmatpush2.bf16.msra.mxu0 %v147
  %200 = vmatprep.subr.bf16.mxu0 0
  %201 = vmatpush2.bf16.msra.mxu0 %v146
  %202 = vmatprep.mubr.bf16.mxu0 %v71
  %203 = vmatmul.mubr.bf16.gmra.mxu0 %v70
  %v204 = vpop.f32.mrf.mxu0
  %v205 = vadd.f32 %v57, %v204
  %v206 = vpop.f32.mrf.mxu0
  %v207 = vpop.f32.mrf.mxu0
  %v208 = vadd.f32 %v62, %v207
  %v209 = vpop.f32.mrf.mxu0
  %210 = vdwg.mxu0
  %v211 = vld [vmem:[%s3] sm:$0xf]
  %v212 = vld [vmem:[%s3 + $0x4] sm:$0xf]
  %v213 = vunpack.c.l.bf16 %v211
  %v214 = vunpack.c.l.bf16 %v212
  %v215 = vadd.f32 %v205, %v213
  %v216 = vadd.f32 %v208, %v214
  %v217 = vmax.f32 %v215, 0.0
  %v218 = vmax.f32 %v216, 0.0
  %219 = vst [vmem:[%s4] sm:$0xff] %v217
  %220 = vst [vmem:[%s4 + $0x8] sm:$0xff] %v218
  // Predicated region
  $region18: #{resnet_forward.17} parent=0 // pred_check
    _
  $region19: #{resnet_forward.17} parent=0 // pred_check_branch
    %222 = sbr.rel (0) target = $region21
  $region20: #{resnet_forward.17} parent=0 // pred_region
    _
  $region21: #{resnet_forward.17} parent=0 // pred_fallthru
    _
  // Predicated region
  $region22: #{resnet_forward.17} parent=0 // pred_check
    _
  $region23: #{resnet_forward.17} parent=0 // pred_check_branch
    %224 = sbr.rel (0) target = $region25
  $region24: #{resnet_forward.17} parent=0 // pred_region
    _
  $region25: #{resnet_forward.17} parent=0 // pred_fallthru
    _

// kernel: resnet_forward.18
$region0: #{resnet_forward.18}
  #allocation0 [shape = 'u32[]', space=smem, size = 0x4, offset = 0x4, fixed_abs, tag = 'smem constant byte address 0x4 - core index']
  #allocation1 [shape = 'u32[144,128]{1,0:T(1,128)}', space=vmem, size = 0x12000, scoped, tag = 'internal scratch']
  %s0 = inlined_call_operand.vmem [shape: bf16[32,256], index: 0, kind: input, shape index: {}]
  %s1 = inlined_call_operand.vmem [shape: bf16[256,128], index: 1, kind: input, shape index: {}]
  %s2 = inlined_call_operand.vmem [shape: f32[32,1], index: 2, kind: input, shape index: {}]
  %s3 = inlined_call_operand.vmem [shape: f32[32,128], index: 3, kind: output, shape index: {}]
  %s4 = sld [smem:[#allocation0]]
  $region22: #{resnet_forward.18} parent=0
    _
  %s6 = ssub.s32 1, %s4
  %s7 = scalar_select 0, %s6, %s4
  // Predicated region
  $region2: #{resnet_forward.18} parent=0 // pred_check
    _
  $region3: #{resnet_forward.18} parent=0 // pred_check_branch
    %9 = sbr.rel (0) target = $region5
  $region4: #{resnet_forward.18} parent=0 // pred_region
    _
  $region5: #{resnet_forward.18} parent=0 // pred_fallthru
    _
  // Predicated region
  $region6: #{resnet_forward.18} parent=0 // pred_check
    _
  $region7: #{resnet_forward.18} parent=0 // pred_check_branch
    %11 = sbr.rel (0) target = $region9
  $region8: #{resnet_forward.18} parent=0 // pred_region
    _
  $region9: #{resnet_forward.18} parent=0 // pred_fallthru
    _
  // Predicated region
  $region10: #{resnet_forward.18} parent=0 // pred_check
    _
  $region11: #{resnet_forward.18} parent=0 // pred_check_branch
    %13 = sbr.rel (0) target = $region13
  $region12: #{resnet_forward.18} parent=0 // pred_region
    _
  $region13: #{resnet_forward.18} parent=0 // pred_fallthru
    _
  %v15 = vld [vmem:[%s0] sm:$0xff]
  %v16 = vld [vmem:[%s0 + $0x8] sm:$0xff]
  %v17 = vld [vmem:[%s0 + $0x10] sm:$0xff]
  %v18 = vld [vmem:[%s0 + $0x18] sm:$0xff]
  %v19 = vld [vmem:[%s1] sm:$0xf]
  %v20 = vld [vmem:[%s1 + $0x4] sm:$0xf]
  %v21 = vld [vmem:[%s1 + $0x8] sm:$0xf]
  %v22 = vld [vmem:[%s1 + $0xc] sm:$0xf]
  %v23 = vld [vmem:[%s1 + $0x10] sm:$0xf]
  %v24 = vld [vmem:[%s1 + $0x14] sm:$0xf]
  %v25 = vld [vmem:[%s1 + $0x18] sm:$0xf]
  %v26 = vld [vmem:[%s1 + $0x1c] sm:$0xf]
  %v27 = vld [vmem:[%s1 + $0x20] sm:$0xf]
  %v28 = vld [vmem:[%s1 + $0x24] sm:$0xf]
  %v29 = vld [vmem:[%s1 + $0x28] sm:$0xf]
  %v30 = vld [vmem:[%s1 + $0x2c] sm:$0xf]
  %v31 = vld [vmem:[%s1 + $0x30] sm:$0xf]
  %v32 = vld [vmem:[%s1 + $0x34] sm:$0xf]
  %v33 = vld [vmem:[%s1 + $0x38] sm:$0xf]
  %v34 = vld [vmem:[%s1 + $0x3c] sm:$0xf]
  %v35 = vld [vmem:[%s1 + $0x40] sm:$0xf]
  %v36 = vld [vmem:[%s1 + $0x44] sm:$0xf]
  %v37 = vld [vmem:[%s1 + $0x48] sm:$0xf]
  %v38 = vld [vmem:[%s1 + $0x4c] sm:$0xf]
  %v39 = vld [vmem:[%s1 + $0x50] sm:$0xf]
  %v40 = vld [vmem:[%s1 + $0x54] sm:$0xf]
  %v41 = vld [vmem:[%s1 + $0x58] sm:$0xf]
  %v42 = vld [vmem:[%s1 + $0x5c] sm:$0xf]
  %v43 = vld [vmem:[%s1 + $0x60] sm:$0xf]
  %v44 = vld [vmem:[%s1 + $0x64] sm:$0xf]
  %v45 = vld [vmem:[%s1 + $0x68] sm:$0xf]
  %v46 = vld [vmem:[%s1 + $0x6c] sm:$0xf]
  %v47 = vld [vmem:[%s1 + $0x70] sm:$0xf]
  %v48 = vld [vmem:[%s1 + $0x74] sm:$0xf]
  %v49 = vld [vmem:[%s1 + $0x78] sm:$0xf]
  %v50 = vld [vmem:[%s1 + $0x7c] sm:$0xf]
  %v51 = vld [vmem:[%s2] sm:$0xff]
  %v52 = vld [vmem:[%s2 + $0x8] sm:$0xff]
  %v53 = vld [vmem:[%s2 + $0x10] sm:$0xff]
  %v54 = vld [vmem:[%s2 + $0x18] sm:$0xff]
  %56 = vset.pattern.permute.xlu0 0
  %57 = vperm.xlu0 %56, %v51
  %v58 = vpop.permute.xlu0 %57
  %61 = vset.pattern.permute.xlu0 0
  %62 = vperm.xlu0 %61, %v52
  %v63 = vpop.permute.xlu0 %62
  %66 = vset.pattern.permute.xlu0 0
  %67 = vperm.xlu0 %66, %v53
  %v68 = vpop.permute.xlu0 %67
  %71 = vset.pattern.permute.xlu0 0
  %72 = vperm.xlu0 %71, %v54
  %v73 = vpop.permute.xlu0 %72
  %v79 = vunpack.c.l.b16 %v15
  %v80 = vunpack.c.h.b16 %v15
  %v81 = vunpack.c.l.b16 %v16
  %v82 = vunpack.c.h.b16 %v16
  %v83 = vunpack.c.l.b16 %v17
  %v84 = vunpack.c.h.b16 %v17
  %v85 = vunpack.c.l.b16 %v18
  %v86 = vunpack.c.h.b16 %v18
  %v87 = vpack.c.b16 %v81, %v79
  %v88 = vpack.c.b16 %v82, %v80
  %v89 = vpack.c.b16 %v85, %v83
  %v90 = vpack.c.b16 %v86, %v84
  %v127 = vunpack.c.l.b16 %v19
  %v128 = vunpack.c.l.b16 %v20
  %v129 = vunpack.c.l.b16 %v21
  %v130 = vunpack.c.l.b16 %v22
  %v131 = vunpack.c.l.b16 %v23
  %v132 = vunpack.c.l.b16 %v24
  %v133 = vunpack.c.l.b16 %v25
  %v134 = vunpack.c.l.b16 %v26
  %v135 = vunpack.c.l.b16 %v27
  %v136 = vunpack.c.l.b16 %v28
  %v137 = vunpack.c.l.b16 %v29
  %v138 = vunpack.c.l.b16 %v30
  %v139 = vunpack.c.l.b16 %v31
  %v140 = vunpack.c.l.b16 %v32
  %v141 = vunpack.c.l.b16 %v33
  %v142 = vunpack.c.l.b16 %v34
  %v143 = vunpack.c.l.b16 %v35
  %v144 = vunpack.c.l.b16 %v36
  %v145 = vunpack.c.l.b16 %v37
  %v146 = vunpack.c.l.b16 %v38
  %v147 = vunpack.c.l.b16 %v39
  %v148 = vunpack.c.l.b16 %v40
  %v149 = vunpack.c.l.b16 %v41
  %v150 = vunpack.c.l.b16 %v42
  %v151 = vunpack.c.l.b16 %v43
  %v152 = vunpack.c.l.b16 %v44
  %v153 = vunpack.c.l.b16 %v45
  %v154 = vunpack.c.l.b16 %v46
  %v155 = vunpack.c.l.b16 %v47
  %v156 = vunpack.c.l.b16 %v48
  %v157 = vunpack.c.l.b16 %v49
  %v158 = vunpack.c.l.b16 %v50
  %v159 = vpack.c.b16 %v128, %v127
  %v160 = vpack.c.b16 %v130, %v129
  %v161 = vpack.c.b16 %v132, %v131
  %v162 = vpack.c.b16 %v134, %v133
  %v163 = vpack.c.b16 %v136, %v135
  %v164 = vpack.c.b16 %v138, %v137
  %v165 = vpack.c.b16 %v140, %v139
  %v166 = vpack.c.b16 %v142, %v141
  %v167 = vpack.c.b16 %v144, %v143
  %v168 = vpack.c.b16 %v146, %v145
  %v169 = vpack.c.b16 %v148, %v147
  %v170 = vpack.c.b16 %v150, %v149
  %v171 = vpack.c.b16 %v152, %v151
  %v172 = vpack.c.b16 %v154, %v153
  %v173 = vpack.c.b16 %v156, %v155
  %v174 = vpack.c.b16 %v158, %v157
  %191 = vmatprep.subr.bf16.mxu0 0
  %192 = vmatpush1.bf16.msra.mxu0 %v166
  %193 = vmatprep.subr.bf16.mxu0 0
  %194 = vmatpush1.bf16.msra.mxu0 %v165
  %195 = vmatprep.subr.bf16.mxu0 0
  %196 = vmatpush1.bf16.msra.mxu0 %v164
  %197 = vmatprep.subr.bf16.mxu0 0
  %198 = vmatpush1.bf16.msra.mxu0 %v163
  %199 = vmatprep.subr.bf16.mxu0 0
  %200 = vmatpush1.bf16.msra.mxu0 %v162
  %201 = vmatprep.subr.bf16.mxu0 0
  %202 = vmatpush1.bf16.msra.mxu0 %v161
  %203 = vmatprep.subr.bf16.mxu0 0
  %204 = vmatpush1.bf16.msra.mxu0 %v160
  %205 = vmatprep.subr.bf16.mxu0 0
  %206 = vmatpush1.bf16.msra.mxu0 %v159
  %207 = vmatprep.subr.bf16.mxu0 0
  %208 = vmatpush2.bf16.msra.mxu0 %v174
  %209 = vmatprep.subr.bf16.mxu0 0
  %210 = vmatpush2.bf16.msra.mxu0 %v173
  %211 = vmatprep.subr.bf16.mxu0 0
  %212 = vmatpush2.bf16.msra.mxu0 %v172
  %213 = vmatprep.subr.bf16.mxu0 0
  %214 = vmatpush2.bf16.msra.mxu0 %v171
  %215 = vmatprep.subr.bf16.mxu0 0
  %216 = vmatpush2.bf16.msra.mxu0 %v170
  %217 = vmatprep.subr.bf16.mxu0 0
  %218 = vmatpush2.bf16.msra.mxu0 %v169
  %219 = vmatprep.subr.bf16.mxu0 0
  %220 = vmatpush2.bf16.msra.mxu0 %v168
  %221 = vmatprep.subr.bf16.mxu0 0
  %222 = vmatpush2.bf16.msra.mxu0 %v167
  %223 = vmatprep.mubr.bf16.mxu0 %v88
  %224 = vmatmul.mubr.bf16.gmra.mxu0 %v87
  %v225 = vpop.f32.mrf.mxu0
  %v226 = vadd.f32 %v58, %v225
  %v227 = vpop.f32.mrf.mxu0
  %v228 = vpop.f32.mrf.mxu0
  %v229 = vadd.f32 %v63, %v228
  %v230 = vpop.f32.mrf.mxu0
  %231 = vmatprep.mubr.bf16.mxu0 %v90
  %232 = vmatmul.mubr.bf16.gmra.mxu0 %v89
  %v233 = vpop.f32.mrf.mxu0
  %v234 = vadd.f32 %v68, %v233
  %v235 = vpop.f32.mrf.mxu0
  %v236 = vpop.f32.mrf.mxu0
  %v237 = vadd.f32 %v73, %v236
  %v238 = vpop.f32.mrf.mxu0
  %239 = vdwg.mxu0
  %v240 = vmax.f32 %v226, 0.0
  %v241 = vmax.f32 %v229, 0.0
  %v242 = vmax.f32 %v234, 0.0
  %v243 = vmax.f32 %v237, 0.0
  %244 = vst [vmem:[%s3] sm:$0xff] %v240
  %245 = vst [vmem:[%s3 + $0x8] sm:$0xff] %v241
  %246 = vst [vmem:[%s3 + $0x10] sm:$0xff] %v242
  %247 = vst [vmem:[%s3 + $0x18] sm:$0xff] %v243
  // Predicated region
  $region14: #{resnet_forward.18} parent=0 // pred_check
    _
  $region15: #{resnet_forward.18} parent=0 // pred_check_branch
    %249 = sbr.rel (0) target = $region17
  $region16: #{resnet_forward.18} parent=0 // pred_region
    _
  $region17: #{resnet_forward.18} parent=0 // pred_fallthru
    _
  // Predicated region
  $region18: #{resnet_forward.18} parent=0 // pred_check
    _
  $region19: #{resnet_forward.18} parent=0 // pred_check_branch
    %251 = sbr.rel (0) target = $region21
  $region20: #{resnet_forward.18} parent=0 // pred_region
    _
  $region21: #{resnet_forward.18} parent=0 // pred_fallthru
    _

// kernel: resnet_forward.19
$region0: #{resnet_forward.19}
  #allocation0 [shape = 'u32[]', space=smem, size = 0x4, offset = 0x4, fixed_abs, tag = 'smem constant byte address 0x4 - core index']
  #allocation1 [shape = 'u32[144,128]{1,0:T(1,128)}', space=vmem, size = 0x12000, scoped, tag = 'internal scratch']
  %s0 = inlined_call_operand.vmem [shape: bf16[32,128], index: 0, kind: input, shape index: {}]
  %s1 = inlined_call_operand.vmem [shape: bf16[128,128], index: 1, kind: input, shape index: {}]
  %s2 = inlined_call_operand.vmem [shape: f32[32,1], index: 2, kind: input, shape index: {}]
  %s3 = inlined_call_operand.vmem [shape: f32[32,128], index: 3, kind: output, shape index: {}]
  %s4 = sld [smem:[#allocation0]]
  $region22: #{resnet_forward.19} parent=0
    _
  %s6 = ssub.s32 1, %s4
  %s7 = scalar_select 0, %s6, %s4
  // Predicated region
  $region2: #{resnet_forward.19} parent=0 // pred_check
    _
  $region3: #{resnet_forward.19} parent=0 // pred_check_branch
    %9 = sbr.rel (0) target = $region5
  $region4: #{resnet_forward.19} parent=0 // pred_region
    _
  $region5: #{resnet_forward.19} parent=0 // pred_fallthru
    _
  // Predicated region
  $region6: #{resnet_forward.19} parent=0 // pred_check
    _
  $region7: #{resnet_forward.19} parent=0 // pred_check_branch
    %11 = sbr.rel (0) target = $region9
  $region8: #{resnet_forward.19} parent=0 // pred_region
    _
  $region9: #{resnet_forward.19} parent=0 // pred_fallthru
    _
  // Predicated region
  $region10: #{resnet_forward.19} parent=0 // pred_check
    _
  $region11: #{resnet_forward.19} parent=0 // pred_check_branch
    %13 = sbr.rel (0) target = $region13
  $region12: #{resnet_forward.19} parent=0 // pred_region
    _
  $region13: #{resnet_forward.19} parent=0 // pred_fallthru
    _
  %v15 = vld [vmem:[%s0] sm:$0xf]
  %v16 = vld [vmem:[%s0 + $0x4] sm:$0xf]
  %v17 = vld [vmem:[%s0 + $0x8] sm:$0xf]
  %v18 = vld [vmem:[%s0 + $0xc] sm:$0xf]
  %v19 = vld [vmem:[%s1] sm:$0xf]
  %v20 = vld [vmem:[%s1 + $0x4] sm:$0xf]
  %v21 = vld [vmem:[%s1 + $0x8] sm:$0xf]
  %v22 = vld [vmem:[%s1 + $0xc] sm:$0xf]
  %v23 = vld [vmem:[%s1 + $0x10] sm:$0xf]
  %v24 = vld [vmem:[%s1 + $0x14] sm:$0xf]
  %v25 = vld [vmem:[%s1 + $0x18] sm:$0xf]
  %v26 = vld [vmem:[%s1 + $0x1c] sm:$0xf]
  %v27 = vld [vmem:[%s1 + $0x20] sm:$0xf]
  %v28 = vld [vmem:[%s1 + $0x24] sm:$0xf]
  %v29 = vld [vmem:[%s1 + $0x28] sm:$0xf]
  %v30 = vld [vmem:[%s1 + $0x2c] sm:$0xf]
  %v31 = vld [vmem:[%s1 + $0x30] sm:$0xf]
  %v32 = vld [vmem:[%s1 + $0x34] sm:$0xf]
  %v33 = vld [vmem:[%s1 + $0x38] sm:$0xf]
  %v34 = vld [vmem:[%s1 + $0x3c] sm:$0xf]
  %v35 = vld [vmem:[%s2] sm:$0xff]
  %v36 = vld [vmem:[%s2 + $0x8] sm:$0xff]
  %v37 = vld [vmem:[%s2 + $0x10] sm:$0xff]
  %v38 = vld [vmem:[%s2 + $0x18] sm:$0xff]
  %40 = vset.pattern.permute.xlu0 0
  %41 = vperm.xlu0 %40, %v35
  %v42 = vpop.permute.xlu0 %41
  %45 = vset.pattern.permute.xlu0 0
  %46 = vperm.xlu0 %45, %v36
  %v47 = vpop.permute.xlu0 %46
  %50 = vset.pattern.permute.xlu0 0
  %51 = vperm.xlu0 %50, %v37
  %v52 = vpop.permute.xlu0 %51
  %55 = vset.pattern.permute.xlu0 0
  %56 = vperm.xlu0 %55, %v38
  %v57 = vpop.permute.xlu0 %56
  %v63 = vunpack.c.l.b16 %v15
  %v64 = vunpack.c.l.b16 %v16
  %v65 = vunpack.c.l.b16 %v17
  %v66 = vunpack.c.l.b16 %v18
  %v67 = vpack.c.b16 %v64, %v63
  %v68 = vpack.c.b16 %v66, %v65
  %v87 = vunpack.c.l.b16 %v19
  %v88 = vunpack.c.l.b16 %v20
  %v89 = vunpack.c.l.b16 %v21
  %v90 = vunpack.c.l.b16 %v22
  %v91 = vunpack.c.l.b16 %v23
  %v92 = vunpack.c.l.b16 %v24
  %v93 = vunpack.c.l.b16 %v25
  %v94 = vunpack.c.l.b16 %v26
  %v95 = vunpack.c.l.b16 %v27
  %v96 = vunpack.c.l.b16 %v28
  %v97 = vunpack.c.l.b16 %v29
  %v98 = vunpack.c.l.b16 %v30
  %v99 = vunpack.c.l.b16 %v31
  %v100 = vunpack.c.l.b16 %v32
  %v101 = vunpack.c.l.b16 %v33
  %v102 = vunpack.c.l.b16 %v34
  %v103 = vpack.c.b16 %v88, %v87
  %v104 = vpack.c.b16 %v90, %v89
  %v105 = vpack.c.b16 %v92, %v91
  %v106 = vpack.c.b16 %v94, %v93
  %v107 = vpack.c.b16 %v96, %v95
  %v108 = vpack.c.b16 %v98, %v97
  %v109 = vpack.c.b16 %v100, %v99
  %v110 = vpack.c.b16 %v102, %v101
  %119 = vmatprep.subr.bf16.mxu0 0
  %120 = vmatpush1.bf16.msra.mxu0 %v110
  %121 = vmatprep.subr.bf16.mxu0 0
  %122 = vmatpush1.bf16.msra.mxu0 %v109
  %123 = vmatprep.subr.bf16.mxu0 0
  %124 = vmatpush1.bf16.msra.mxu0 %v108
  %125 = vmatprep.subr.bf16.mxu0 0
  %126 = vmatpush1.bf16.msra.mxu0 %v107
  %127 = vmatprep.subr.bf16.mxu0 0
  %128 = vmatpush1.bf16.msra.mxu0 %v106
  %129 = vmatprep.subr.bf16.mxu0 0
  %130 = vmatpush1.bf16.msra.mxu0 %v105
  %131 = vmatprep.subr.bf16.mxu0 0
  %132 = vmatpush1.bf16.msra.mxu0 %v104
  %133 = vmatprep.subr.bf16.mxu0 0
  %134 = vmatpush1.bf16.msra.mxu0 %v103
  %135 = vmatprep.subr.bf16.mxu0 0
  %136 = vmatpush2.bf16.msra.mxu0 0
  %137 = vmatprep.subr.bf16.mxu0 0
  %138 = vmatpush2.bf16.msra.mxu0 0
  %139 = vmatprep.subr.bf16.mxu0 0
  %140 = vmatpush2.bf16.msra.mxu0 0
  %141 = vmatprep.subr.bf16.mxu0 0
  %142 = vmatpush2.bf16.msra.mxu0 0
  %143 = vmatprep.subr.bf16.mxu0 0
  %144 = vmatpush2.bf16.msra.mxu0 0
  %145 = vmatprep.subr.bf16.mxu0 0
  %146 = vmatpush2.bf16.msra.mxu0 0
  %147 = vmatprep.subr.bf16.mxu0 0
  %148 = vmatpush2.bf16.msra.mxu0 0
  %149 = vmatprep.subr.bf16.mxu0 0
  %150 = vmatpush2.bf16.msra.mxu0 0
  %151 = vmatprep.mubr.bf16.mxu0 0
  %152 = vmatmul.mubr.bf16.gmra.mxu0 %v67
  %v153 = vpop.f32.mrf.mxu0
  %v154 = vadd.f32 %v42, %v153
  %v155 = vpop.f32.mrf.mxu0
  %v156 = vpop.f32.mrf.mxu0
  %v157 = vadd.f32 %v47, %v156
  %v158 = vpop.f32.mrf.mxu0
  %159 = vmatprep.mubr.bf16.mxu0 0
  %160 = vmatmul.mubr.bf16.gmra.mxu0 %v68
  %v161 = vpop.f32.mrf.mxu0
  %v162 = vadd.f32 %v52, %v161
  %v163 = vpop.f32.mrf.mxu0
  %v164 = vpop.f32.mrf.mxu0
  %v165 = vadd.f32 %v57, %v164
  %v166 = vpop.f32.mrf.mxu0
  %167 = vdwg.mxu0
  %168 = vst [vmem:[%s3] sm:$0xff] %v154
  %169 = vst [vmem:[%s3 + $0x8] sm:$0xff] %v157
  %170 = vst [vmem:[%s3 + $0x10] sm:$0xff] %v162
  %171 = vst [vmem:[%s3 + $0x18] sm:$0xff] %v165
  // Predicated region
  $region14: #{resnet_forward.19} parent=0 // pred_check
    _
  $region15: #{resnet_forward.19} parent=0 // pred_check_branch
    %173 = sbr.rel (0) target = $region17
  $region16: #{resnet_forward.19} parent=0 // pred_region
    _
  $region17: #{resnet_forward.19} parent=0 // pred_fallthru
    _
  // Predicated region
  $region18: #{resnet_forward.19} parent=0 // pred_check
    _
  $region19: #{resnet_forward.19} parent=0 // pred_check_branch
    %175 = sbr.rel (0) target = $region21
  $region20: #{resnet_forward.19} parent=0 // pred_region
    _
  $region21: #{resnet_forward.19} parent=0 // pred_fallthru
    _

// kernel: resnet_forward.20
$region0: #{resnet_forward.20}
  #allocation0 [shape = 'u32[]', space=smem, size = 0x4, offset = 0x4, fixed_abs, tag = 'smem constant byte address 0x4 - core index']
  #allocation1 [shape = 'u32[144,128]{1,0:T(1,128)}', space=vmem, size = 0x12000, scoped, tag = 'internal scratch']
  %s0 = inlined_call_operand.vmem [shape: bf16[32,384], index: 0, kind: input, shape index: {}]
  %s1 = inlined_call_operand.vmem [shape: bf16[384,128], index: 1, kind: input, shape index: {}]
  %s2 = inlined_call_operand.vmem [shape: f32[32,1], index: 2, kind: input, shape index: {}]
  %s3 = inlined_call_operand.vmem [shape: bf16[32,128], index: 3, kind: input, shape index: {}]
  %s4 = inlined_call_operand.vmem [shape: f32[32,128], index: 4, kind: output, shape index: {}]
  %s5 = sld [smem:[#allocation0]]
  $region26: #{resnet_forward.20} parent=0
    _
  %s7 = ssub.s32 1, %s5
  %s8 = scalar_select 0, %s7, %s5
  // Predicated region
  $region2: #{resnet_forward.20} parent=0 // pred_check
    _
  $region3: #{resnet_forward.20} parent=0 // pred_check_branch
    %10 = sbr.rel (0) target = $region5
  $region4: #{resnet_forward.20} parent=0 // pred_region
    _
  $region5: #{resnet_forward.20} parent=0 // pred_fallthru
    _
  // Predicated region
  $region6: #{resnet_forward.20} parent=0 // pred_check
    _
  $region7: #{resnet_forward.20} parent=0 // pred_check_branch
    %12 = sbr.rel (0) target = $region9
  $region8: #{resnet_forward.20} parent=0 // pred_region
    _
  $region9: #{resnet_forward.20} parent=0 // pred_fallthru
    _
  // Predicated region
  $region10: #{resnet_forward.20} parent=0 // pred_check
    _
  $region11: #{resnet_forward.20} parent=0 // pred_check_branch
    %14 = sbr.rel (0) target = $region13
  $region12: #{resnet_forward.20} parent=0 // pred_region
    _
  $region13: #{resnet_forward.20} parent=0 // pred_fallthru
    _
  // Predicated region
  $region14: #{resnet_forward.20} parent=0 // pred_check
    _
  $region15: #{resnet_forward.20} parent=0 // pred_check_branch
    %16 = sbr.rel (0) target = $region17
  $region16: #{resnet_forward.20} parent=0 // pred_region
    _
  $region17: #{resnet_forward.20} parent=0 // pred_fallthru
    _
  %v18 = vld [vmem:[%s0] sm:$0xff]
  %v19 = vld [vmem:[%s0 + $0x8] sm:$0xf]
  %v20 = vld [vmem:[%s0 + $0xc] sm:$0xff]
  %v21 = vld [vmem:[%s0 + $0x14] sm:$0xf]
  %v22 = vld [vmem:[%s0 + $0x18] sm:$0xff]
  %v23 = vld [vmem:[%s0 + $0x20] sm:$0xf]
  %v24 = vld [vmem:[%s0 + $0x24] sm:$0xff]
  %v25 = vld [vmem:[%s0 + $0x2c] sm:$0xf]
  %v26 = vld [vmem:[%s1] sm:$0xf]
  %v27 = vld [vmem:[%s1 + $0x4] sm:$0xf]
  %v28 = vld [vmem:[%s1 + $0x8] sm:$0xf]
  %v29 = vld [vmem:[%s1 + $0xc] sm:$0xf]
  %v30 = vld [vmem:[%s1 + $0x10] sm:$0xf]
  %v31 = vld [vmem:[%s1 + $0x14] sm:$0xf]
  %v32 = vld [vmem:[%s1 + $0x18] sm:$0xf]
  %v33 = vld [vmem:[%s1 + $0x1c] sm:$0xf]
  %v34 = vld [vmem:[%s1 + $0x20] sm:$0xf]
  %v35 = vld [vmem:[%s1 + $0x24] sm:$0xf]
  %v36 = vld [vmem:[%s1 + $0x28] sm:$0xf]
  %v37 = vld [vmem:[%s1 + $0x2c] sm:$0xf]
  %v38 = vld [vmem:[%s1 + $0x30] sm:$0xf]
  %v39 = vld [vmem:[%s1 + $0x34] sm:$0xf]
  %v40 = vld [vmem:[%s1 + $0x38] sm:$0xf]
  %v41 = vld [vmem:[%s1 + $0x3c] sm:$0xf]
  %v42 = vld [vmem:[%s1 + $0x40] sm:$0xf]
  %v43 = vld [vmem:[%s1 + $0x44] sm:$0xf]
  %v44 = vld [vmem:[%s1 + $0x48] sm:$0xf]
  %v45 = vld [vmem:[%s1 + $0x4c] sm:$0xf]
  %v46 = vld [vmem:[%s1 + $0x50] sm:$0xf]
  %v47 = vld [vmem:[%s1 + $0x54] sm:$0xf]
  %v48 = vld [vmem:[%s1 + $0x58] sm:$0xf]
  %v49 = vld [vmem:[%s1 + $0x5c] sm:$0xf]
  %v50 = vld [vmem:[%s1 + $0x60] sm:$0xf]
  %v51 = vld [vmem:[%s1 + $0x64] sm:$0xf]
  %v52 = vld [vmem:[%s1 + $0x68] sm:$0xf]
  %v53 = vld [vmem:[%s1 + $0x6c] sm:$0xf]
  %v54 = vld [vmem:[%s1 + $0x70] sm:$0xf]
  %v55 = vld [vmem:[%s1 + $0x74] sm:$0xf]
  %v56 = vld [vmem:[%s1 + $0x78] sm:$0xf]
  %v57 = vld [vmem:[%s1 + $0x7c] sm:$0xf]
  %v58 = vld [vmem:[%s1 + $0x80] sm:$0xf]
  %v59 = vld [vmem:[%s1 + $0x84] sm:$0xf]
  %v60 = vld [vmem:[%s1 + $0x88] sm:$0xf]
  %v61 = vld [vmem:[%s1 + $0x8c] sm:$0xf]
  %v62 = vld [vmem:[%s1 + $0x90] sm:$0xf]
  %v63 = vld [vmem:[%s1 + $0x94] sm:$0xf]
  %v64 = vld [vmem:[%s1 + $0x98] sm:$0xf]
  %v65 = vld [vmem:[%s1 + $0x9c] sm:$0xf]
  %v66 = vld [vmem:[%s1 + $0xa0] sm:$0xf]
  %v67 = vld [vmem:[%s1 + $0xa4] sm:$0xf]
  %v68 = vld [vmem:[%s1 + $0xa8] sm:$0xf]
  %v69 = vld [vmem:[%s1 + $0xac] sm:$0xf]
  %v70 = vld [vmem:[%s1 + $0xb0] sm:$0xf]
  %v71 = vld [vmem:[%s1 + $0xb4] sm:$0xf]
  %v72 = vld [vmem:[%s1 + $0xb8] sm:$0xf]
  %v73 = vld [vmem:[%s1 + $0xbc] sm:$0xf]
  %v74 = vld [vmem:[%s2] sm:$0xff]
  %v75 = vld [vmem:[%s2 + $0x8] sm:$0xff]
  %v76 = vld [vmem:[%s2 + $0x10] sm:$0xff]
  %v77 = vld [vmem:[%s2 + $0x18] sm:$0xff]
  %79 = vset.pattern.permute.xlu0 0
  %80 = vperm.xlu0 %79, %v74
  %v81 = vpop.permute.xlu0 %80
  %84 = vset.pattern.permute.xlu0 0
  %85 = vperm.xlu0 %84, %v75
  %v86 = vpop.permute.xlu0 %85
  %89 = vset.pattern.permute.xlu0 0
  %90 = vperm.xlu0 %89, %v76
  %v91 = vpop.permute.xlu0 %90
  %94 = vset.pattern.permute.xlu0 0
  %95 = vperm.xlu0 %94, %v77
  %v96 = vpop.permute.xlu0 %95
  %v106 = vunpack.c.l.b16 %v18
  %v107 = vunpack.c.h.b16 %v18
  %v108 = vunpack.c.l.b16 %v19
  %v109 = vunpack.c.l.b16 %v20
  %v110 = vunpack.c.h.b16 %v20
  %v111 = vunpack.c.l.b16 %v21
  %v112 = vunpack.c.l.b16 %v22
  %v113 = vunpack.c.h.b16 %v22
  %v114 = vunpack.c.l.b16 %v23
  %v115 = vunpack.c.l.b16 %v24
  %v116 = vunpack.c.h.b16 %v24
  %v117 = vunpack.c.l.b16 %v25
  %v118 = vpack.c.b16 %v109, %v106
  %v119 = vpack.c.b16 %v110, %v107
  %v120 = vpack.c.b16 %v111, %v108
  %v121 = vpack.c.b16 %v115, %v112
  %v122 = vpack.c.b16 %v116, %v113
  %v123 = vpack.c.b16 %v117, %v114
  %v178 = vunpack.c.l.b16 %v26
  %v179 = vunpack.c.l.b16 %v27
  %v180 = vunpack.c.l.b16 %v28
  %v181 = vunpack.c.l.b16 %v29
  %v182 = vunpack.c.l.b16 %v30
  %v183 = vunpack.c.l.b16 %v31
  %v184 = vunpack.c.l.b16 %v32
  %v185 = vunpack.c.l.b16 %v33
  %v186 = vunpack.c.l.b16 %v34
  %v187 = vunpack.c.l.b16 %v35
  %v188 = vunpack.c.l.b16 %v36
  %v189 = vunpack.c.l.b16 %v37
  %v190 = vunpack.c.l.b16 %v38
  %v191 = vunpack.c.l.b16 %v39
  %v192 = vunpack.c.l.b16 %v40
  %v193 = vunpack.c.l.b16 %v41
  %v194 = vunpack.c.l.b16 %v42
  %v195 = vunpack.c.l.b16 %v43
  %v196 = vunpack.c.l.b16 %v44
  %v197 = vunpack.c.l.b16 %v45
  %v198 = vunpack.c.l.b16 %v46
  %v199 = vunpack.c.l.b16 %v47
  %v200 = vunpack.c.l.b16 %v48
  %v201 = vunpack.c.l.b16 %v49
  %v202 = vunpack.c.l.b16 %v50
  %v203 = vunpack.c.l.b16 %v51
  %v204 = vunpack.c.l.b16 %v52
  %v205 = vunpack.c.l.b16 %v53
  %v206 = vunpack.c.l.b16 %v54
  %v207 = vunpack.c.l.b16 %v55
  %v208 = vunpack.c.l.b16 %v56
  %v209 = vunpack.c.l.b16 %v57
  %v210 = vunpack.c.l.b16 %v58
  %v211 = vunpack.c.l.b16 %v59
  %v212 = vunpack.c.l.b16 %v60
  %v213 = vunpack.c.l.b16 %v61
  %v214 = vunpack.c.l.b16 %v62
  %v215 = vunpack.c.l.b16 %v63
  %v216 = vunpack.c.l.b16 %v64
  %v217 = vunpack.c.l.b16 %v65
  %v218 = vunpack.c.l.b16 %v66
  %v219 = vunpack.c.l.b16 %v67
  %v220 = vunpack.c.l.b16 %v68
  %v221 = vunpack.c.l.b16 %v69
  %v222 = vunpack.c.l.b16 %v70
  %v223 = vunpack.c.l.b16 %v71
  %v224 = vunpack.c.l.b16 %v72
  %v225 = vunpack.c.l.b16 %v73
  %v226 = vpack.c.b16 %v179, %v178
  %v227 = vpack.c.b16 %v181, %v180
  %v228 = vpack.c.b16 %v183, %v182
  %v229 = vpack.c.b16 %v185, %v184
  %v230 = vpack.c.b16 %v187, %v186
  %v231 = vpack.c.b16 %v189, %v188
  %v232 = vpack.c.b16 %v191, %v190
  %v233 = vpack.c.b16 %v193, %v192
  %v234 = vpack.c.b16 %v195, %v194
  %v235 = vpack.c.b16 %v197, %v196
  %v236 = vpack.c.b16 %v199, %v198
  %v237 = vpack.c.b16 %v201, %v200
  %v238 = vpack.c.b16 %v203, %v202
  %v239 = vpack.c.b16 %v205, %v204
  %v240 = vpack.c.b16 %v207, %v206
  %v241 = vpack.c.b16 %v209, %v208
  %v242 = vpack.c.b16 %v211, %v210
  %v243 = vpack.c.b16 %v213, %v212
  %v244 = vpack.c.b16 %v215, %v214
  %v245 = vpack.c.b16 %v217, %v216
  %v246 = vpack.c.b16 %v219, %v218
  %v247 = vpack.c.b16 %v221, %v220
  %v248 = vpack.c.b16 %v223, %v222
  %v249 = vpack.c.b16 %v225, %v224
  %274 = vmatprep.subr.bf16.mxu0 0
  %275 = vmatpush1.bf16.msra.mxu0 %v233
  %276 = vmatprep.subr.bf16.mxu0 0
  %277 = vmatpush1.bf16.msra.mxu0 %v232
  %278 = vmatprep.subr.bf16.mxu0 0
  %279 = vmatpush1.bf16.msra.mxu0 %v231
  %280 = vmatprep.subr.bf16.mxu0 0
  %281 = vmatpush1.bf16.msra.mxu0 %v230
  %282 = vmatprep.subr.bf16.mxu0 0
  %283 = vmatpush1.bf16.msra.mxu0 %v229
  %284 = vmatprep.subr.bf16.mxu0 0
  %285 = vmatpush1.bf16.msra.mxu0 %v228
  %286 = vmatprep.subr.bf16.mxu0 0
  %287 = vmatpush1.bf16.msra.mxu0 %v227
  %288 = vmatprep.subr.bf16.mxu0 0
  %289 = vmatpush1.bf16.msra.mxu0 %v226
  %290 = vmatprep.subr.bf16.mxu0 0
  %291 = vmatpush2.bf16.msra.mxu0 %v241
  %292 = vmatprep.subr.bf16.mxu0 0
  %293 = vmatpush2.bf16.msra.mxu0 %v240
  %294 = vmatprep.subr.bf16.mxu0 0
  %295 = vmatpush2.bf16.msra.mxu0 %v239
  %296 = vmatprep.subr.bf16.mxu0 0
  %297 = vmatpush2.bf16.msra.mxu0 %v238
  %298 = vmatprep.subr.bf16.mxu0 0
  %299 = vmatpush2.bf16.msra.mxu0 %v237
  %300 = vmatprep.subr.bf16.mxu0 0
  %301 = vmatpush2.bf16.msra.mxu0 %v236
  %302 = vmatprep.subr.bf16.mxu0 0
  %303 = vmatpush2.bf16.msra.mxu0 %v235
  %304 = vmatprep.subr.bf16.mxu0 0
  %305 = vmatpush2.bf16.msra.mxu0 %v234
  %306 = vmatprep.mubr.bf16.mxu0 %v119
  %307 = vmatmul.mubr.bf16.gmra.mxu0 %v118
  %v308 = vpop.f32.mrf.mxu0
  %v309 = vadd.f32 %v81, %v308
  %v310 = vpop.f32.mrf.mxu0
  %v311 = vpop.f32.mrf.mxu0
  %v312 = vadd.f32 %v86, %v311
  %v313 = vpop.f32.mrf.mxu0
  %314 = vmatprep.mubr.bf16.mxu0 %v122
  %315 = vmatmul.mubr.bf16.gmra.mxu0 %v121
  %v316 = vpop.f32.mrf.mxu0
  %v317 = vadd.f32 %v91, %v316
  %v318 = vpop.f32.mrf.mxu0
  %v319 = vpop.f32.mrf.mxu0
  %v320 = vadd.f32 %v96, %v319
  %v321 = vpop.f32.mrf.mxu0
  %322 = vdwg.mxu0
  %323 = vmatprep.subr.bf16.mxu0 0
  %324 = vmatpush1.bf16.msra.mxu0 %v249
  %325 = vmatprep.subr.bf16.mxu0 0
  %326 = vmatpush1.bf16.msra.mxu0 %v248
  %327 = vmatprep.subr.bf16.mxu0 0
  %328 = vmatpush1.bf16.msra.mxu0 %v247
  %329 = vmatprep.subr.bf16.mxu0 0
  %330 = vmatpush1.bf16.msra.mxu0 %v246
  %331 = vmatprep.subr.bf16.mxu0 0
  %332 = vmatpush1.bf16.msra.mxu0 %v245
  %333 = vmatprep.subr.bf16.mxu0 0
  %334 = vmatpush1.bf16.msra.mxu0 %v244
  %335 = vmatprep.subr.bf16.mxu0 0
  %336 = vmatpush1.bf16.msra.mxu0 %v243
  %337 = vmatprep.subr.bf16.mxu0 0
  %338 = vmatpush1.bf16.msra.mxu0 %v242
  %339 = vmatprep.subr.bf16.mxu0 0
  %340 = vmatpush2.bf16.msra.mxu0 0
  %341 = vmatprep.subr.bf16.mxu0 0
  %342 = vmatpush2.bf16.msra.mxu0 0
  %343 = vmatprep.subr.bf16.mxu0 0
  %344 = vmatpush2.bf16.msra.mxu0 0
  %345 = vmatprep.subr.bf16.mxu0 0
  %346 = vmatpush2.bf16.msra.mxu0 0
  %347 = vmatprep.subr.bf16.mxu0 0
  %348 = vmatpush2.bf16.msra.mxu0 0
  %349 = vmatprep.subr.bf16.mxu0 0
  %350 = vmatpush2.bf16.msra.mxu0 0
  %351 = vmatprep.subr.bf16.mxu0 0
  %352 = vmatpush2.bf16.msra.mxu0 0
  %353 = vmatprep.subr.bf16.mxu0 0
  %354 = vmatpush2.bf16.msra.mxu0 0
  %355 = vmatprep.mubr.bf16.mxu0 0
  %356 = vmatmul.mubr.bf16.gmra.mxu0 %v120
  %v357 = vpop.f32.mrf.mxu0
  %v358 = vadd.f32 %v309, %v357
  %v359 = vpop.f32.mrf.mxu0
  %v360 = vpop.f32.mrf.mxu0
  %v361 = vadd.f32 %v312, %v360
  %v362 = vpop.f32.mrf.mxu0
  %363 = vmatprep.mubr.bf16.mxu0 0
  %364 = vmatmul.mubr.bf16.gmra.mxu0 %v123
  %v365 = vpop.f32.mrf.mxu0
  %v366 = vadd.f32 %v317, %v365
  %v367 = vpop.f32.mrf.mxu0
  %v368 = vpop.f32.mrf.mxu0
  %v369 = vadd.f32 %v320, %v368
  %v370 = vpop.f32.mrf.mxu0
  %371 = vdwg.mxu0
  %v372 = vld [vmem:[%s3] sm:$0xf]
  %v373 = vld [vmem:[%s3 + $0x4] sm:$0xf]
  %v374 = vld [vmem:[%s3 + $0x8] sm:$0xf]
  %v375 = vld [vmem:[%s3 + $0xc] sm:$0xf]
  %v376 = vunpack.c.l.bf16 %v372
  %v377 = vunpack.c.l.bf16 %v373
  %v378 = vunpack.c.l.bf16 %v374
  %v379 = vunpack.c.l.bf16 %v375
  %v380 = vadd.f32 %v358, %v376
  %v381 = vadd.f32 %v361, %v377
  %v382 = vadd.f32 %v366, %v378
  %v383 = vadd.f32 %v369, %v379
  %v384 = vmax.f32 %v380, 0.0
  %v385 = vmax.f32 %v381, 0.0
  %v386 = vmax.f32 %v382, 0.0
  %v387 = vmax.f32 %v383, 0.0
  %388 = vst [vmem:[%s4] sm:$0xff] %v384
  %389 = vst [vmem:[%s4 + $0x8] sm:$0xff] %v385
  %390 = vst [vmem:[%s4 + $0x10] sm:$0xff] %v386
  %391 = vst [vmem:[%s4 + $0x18] sm:$0xff] %v387
  // Predicated region
  $region18: #{resnet_forward.20} parent=0 // pred_check
    _
  $region19: #{resnet_forward.20} parent=0 // pred_check_branch
    %393 = sbr.rel (0) target = $region21
  $region20: #{resnet_forward.20} parent=0 // pred_region
    _
  $region21: #{resnet_forward.20} parent=0 // pred_fallthru
    _
  // Predicated region
  $region22: #{resnet_forward.20} parent=0 // pred_check
    _
  $region23: #{resnet_forward.20} parent=0 // pred_check_branch
    %395 = sbr.rel (0) target = $region25
  $region24: #{resnet_forward.20} parent=0 // pred_region
    _
  $region25: #{resnet_forward.20} parent=0 // pred_fallthru
    _

// kernel: resnet_forward.21
$region0: #{resnet_forward.21}
  #allocation0 [shape = 'u32[]', space=smem, size = 0x4, offset = 0x4, fixed_abs, tag = 'smem constant byte address 0x4 - core index']
  #allocation1 [shape = 'u32[144,128]{1,0:T(1,128)}', space=vmem, size = 0x12000, scoped, tag = 'internal scratch']
  %s0 = inlined_call_operand.vmem [shape: bf16[64,384], index: 0, kind: input, shape index: {}]
  %s1 = inlined_call_operand.vmem [shape: bf16[384,128], index: 1, kind: input, shape index: {}]
  %s2 = inlined_call_operand.vmem [shape: f32[64,1], index: 2, kind: input, shape index: {}]
  %s3 = inlined_call_operand.vmem [shape: f32[64,128], index: 3, kind: output, shape index: {}]
  %s4 = sld [smem:[#allocation0]]
  $region22: #{resnet_forward.21} parent=0
    _
  %s6 = ssub.s32 1, %s4
  %s7 = scalar_select 0, %s6, %s4
  // Predicated region
  $region2: #{resnet_forward.21} parent=0 // pred_check
    _
  $region3: #{resnet_forward.21} parent=0 // pred_check_branch
    %9 = sbr.rel (0) target = $region5
  $region4: #{resnet_forward.21} parent=0 // pred_region
    _
  $region5: #{resnet_forward.21} parent=0 // pred_fallthru
    _
  // Predicated region
  $region6: #{resnet_forward.21} parent=0 // pred_check
    _
  $region7: #{resnet_forward.21} parent=0 // pred_check_branch
    %11 = sbr.rel (0) target = $region9
  $region8: #{resnet_forward.21} parent=0 // pred_region
    _
  $region9: #{resnet_forward.21} parent=0 // pred_fallthru
    _
  // Predicated region
  $region10: #{resnet_forward.21} parent=0 // pred_check
    _
  $region11: #{resnet_forward.21} parent=0 // pred_check_branch
    %13 = sbr.rel (0) target = $region13
  $region12: #{resnet_forward.21} parent=0 // pred_region
    _
  $region13: #{resnet_forward.21} parent=0 // pred_fallthru
    _
  %v15 = vld [vmem:[%s0] sm:$0xff]
  %v16 = vld [vmem:[%s0 + $0x8] sm:$0xf]
  %v17 = vld [vmem:[%s0 + $0xc] sm:$0xff]
  %v18 = vld [vmem:[%s0 + $0x14] sm:$0xf]
  %v19 = vld [vmem:[%s0 + $0x18] sm:$0xff]
  %v20 = vld [vmem:[%s0 + $0x20] sm:$0xf]
  %v21 = vld [vmem:[%s0 + $0x24] sm:$0xff]
  %v22 = vld [vmem:[%s0 + $0x2c] sm:$0xf]
  %v23 = vld [vmem:[%s0 + $0x30] sm:$0xff]
  %v24 = vld [vmem:[%s0 + $0x38] sm:$0xf]
  %v25 = vld [vmem:[%s0 + $0x3c] sm:$0xff]
  %v26 = vld [vmem:[%s0 + $0x44] sm:$0xf]
  %v27 = vld [vmem:[%s0 + $0x48] sm:$0xff]
  %v28 = vld [vmem:[%s0 + $0x50] sm:$0xf]
  %v29 = vld [vmem:[%s0 + $0x54] sm:$0xff]
  %v30 = vld [vmem:[%s0 + $0x5c] sm:$0xf]
  %v31 = vld [vmem:[%s1] sm:$0xf]
  %v32 = vld [vmem:[%s1 + $0x4] sm:$0xf]
  %v33 = vld [vmem:[%s1 + $0x8] sm:$0xf]
  %v34 = vld [vmem:[%s1 + $0xc] sm:$0xf]
  %v35 = vld [vmem:[%s1 + $0x10] sm:$0xf]
  %v36 = vld [vmem:[%s1 + $0x14] sm:$0xf]
  %v37 = vld [vmem:[%s1 + $0x18] sm:$0xf]
  %v38 = vld [vmem:[%s1 + $0x1c] sm:$0xf]
  %v39 = vld [vmem:[%s1 + $0x20] sm:$0xf]
  %v40 = vld [vmem:[%s1 + $0x24] sm:$0xf]
  %v41 = vld [vmem:[%s1 + $0x28] sm:$0xf]
  %v42 = vld [vmem:[%s1 + $0x2c] sm:$0xf]
  %v43 = vld [vmem:[%s1 + $0x30] sm:$0xf]
  %v44 = vld [vmem:[%s1 + $0x34] sm:$0xf]
  %v45 = vld [vmem:[%s1 + $0x38] sm:$0xf]
  %v46 = vld [vmem:[%s1 + $0x3c] sm:$0xf]
  %v47 = vld [vmem:[%s1 + $0x40] sm:$0xf]
  %v48 = vld [vmem:[%s1 + $0x44] sm:$0xf]
  %v49 = vld [vmem:[%s1 + $0x48] sm:$0xf]
  %v50 = vld [vmem:[%s1 + $0x4c] sm:$0xf]
  %v51 = vld [vmem:[%s1 + $0x50] sm:$0xf]
  %v52 = vld [vmem:[%s1 + $0x54] sm:$0xf]
  %v53 = vld [vmem:[%s1 + $0x58] sm:$0xf]
  %v54 = vld [vmem:[%s1 + $0x5c] sm:$0xf]
  %v55 = vld [vmem:[%s1 + $0x60] sm:$0xf]
  %v56 = vld [vmem:[%s1 + $0x64] sm:$0xf]
  %v57 = vld [vmem:[%s1 + $0x68] sm:$0xf]
  %v58 = vld [vmem:[%s1 + $0x6c] sm:$0xf]
  %v59 = vld [vmem:[%s1 + $0x70] sm:$0xf]
  %v60 = vld [vmem:[%s1 + $0x74] sm:$0xf]
  %v61 = vld [vmem:[%s1 + $0x78] sm:$0xf]
  %v62 = vld [vmem:[%s1 + $0x7c] sm:$0xf]
  %v63 = vld [vmem:[%s1 + $0x80] sm:$0xf]
  %v64 = vld [vmem:[%s1 + $0x84] sm:$0xf]
  %v65 = vld [vmem:[%s1 + $0x88] sm:$0xf]
  %v66 = vld [vmem:[%s1 + $0x8c] sm:$0xf]
  %v67 = vld [vmem:[%s1 + $0x90] sm:$0xf]
  %v68 = vld [vmem:[%s1 + $0x94] sm:$0xf]
  %v69 = vld [vmem:[%s1 + $0x98] sm:$0xf]
  %v70 = vld [vmem:[%s1 + $0x9c] sm:$0xf]
  %v71 = vld [vmem:[%s1 + $0xa0] sm:$0xf]
  %v72 = vld [vmem:[%s1 + $0xa4] sm:$0xf]
  %v73 = vld [vmem:[%s1 + $0xa8] sm:$0xf]
  %v74 = vld [vmem:[%s1 + $0xac] sm:$0xf]
  %v75 = vld [vmem:[%s1 + $0xb0] sm:$0xf]
  %v76 = vld [vmem:[%s1 + $0xb4] sm:$0xf]
  %v77 = vld [vmem:[%s1 + $0xb8] sm:$0xf]
  %v78 = vld [vmem:[%s1 + $0xbc] sm:$0xf]
  %v79 = vld [vmem:[%s2] sm:$0xff]
  %v80 = vld [vmem:[%s2 + $0x8] sm:$0xff]
  %v81 = vld [vmem:[%s2 + $0x10] sm:$0xff]
  %v82 = vld [vmem:[%s2 + $0x18] sm:$0xff]
  %v83 = vld [vmem:[%s2 + $0x20] sm:$0xff]
  %v84 = vld [vmem:[%s2 + $0x28] sm:$0xff]
  %v85 = vld [vmem:[%s2 + $0x30] sm:$0xff]
  %v86 = vld [vmem:[%s2 + $0x38] sm:$0xff]
  %88 = vset.pattern.permute.xlu0 0
  %89 = vperm.xlu0 %88, %v79
  %v90 = vpop.permute.xlu0 %89
  %93 = vset.pattern.permute.xlu0 0
  %94 = vperm.xlu0 %93, %v80
  %v95 = vpop.permute.xlu0 %94
  %98 = vset.pattern.permute.xlu0 0
  %99 = vperm.xlu0 %98, %v81
  %v100 = vpop.permute.xlu0 %99
  %103 = vset.pattern.permute.xlu0 0
  %104 = vperm.xlu0 %103, %v82
  %v105 = vpop.permute.xlu0 %104
  %108 = vset.pattern.permute.xlu0 0
  %109 = vperm.xlu0 %108, %v83
  %v110 = vpop.permute.xlu0 %109
  %113 = vset.pattern.permute.xlu0 0
  %114 = vperm.xlu0 %113, %v84
  %v115 = vpop.permute.xlu0 %114
  %118 = vset.pattern.permute.xlu0 0
  %119 = vperm.xlu0 %118, %v85
  %v120 = vpop.permute.xlu0 %119
  %123 = vset.pattern.permute.xlu0 0
  %124 = vperm.xlu0 %123, %v86
  %v125 = vpop.permute.xlu0 %124
  %v143 = vunpack.c.l.b16 %v15
  %v144 = vunpack.c.h.b16 %v15
  %v145 = vunpack.c.l.b16 %v16
  %v146 = vunpack.c.l.b16 %v17
  %v147 = vunpack.c.h.b16 %v17
  %v148 = vunpack.c.l.b16 %v18
  %v149 = vunpack.c.l.b16 %v19
  %v150 = vunpack.c.h.b16 %v19
  %v151 = vunpack.c.l.b16 %v20
  %v152 = vunpack.c.l.b16 %v21
  %v153 = vunpack.c.h.b16 %v21
  %v154 = vunpack.c.l.b16 %v22
  %v155 = vunpack.c.l.b16 %v23
  %v156 = vunpack.c.h.b16 %v23
  %v157 = vunpack.c.l.b16 %v24
  %v158 = vunpack.c.l.b16 %v25
  %v159 = vunpack.c.h.b16 %v25
  %v160 = vunpack.c.l.b16 %v26
  %v161 = vunpack.c.l.b16 %v27
  %v162 = vunpack.c.h.b16 %v27
  %v163 = vunpack.c.l.b16 %v28
  %v164 = vunpack.c.l.b16 %v29
  %v165 = vunpack.c.h.b16 %v29
  %v166 = vunpack.c.l.b16 %v30
  %v167 = vpack.c.b16 %v146, %v143
  %v168 = vpack.c.b16 %v147, %v144
  %v169 = vpack.c.b16 %v148, %v145
  %v170 = vpack.c.b16 %v152, %v149
  %v171 = vpack.c.b16 %v153, %v150
  %v172 = vpack.c.b16 %v154, %v151
  %v173 = vpack.c.b16 %v158, %v155
  %v174 = vpack.c.b16 %v159, %v156
  %v175 = vpack.c.b16 %v160, %v157
  %v176 = vpack.c.b16 %v164, %v161
  %v177 = vpack.c.b16 %v165, %v162
  %v178 = vpack.c.b16 %v166, %v163
  %v239 = vunpack.c.l.b16 %v31
  %v240 = vunpack.c.l.b16 %v32
  %v241 = vunpack.c.l.b16 %v33
  %v242 = vunpack.c.l.b16 %v34
  %v243 = vunpack.c.l.b16 %v35
  %v244 = vunpack.c.l.b16 %v36
  %v245 = vunpack.c.l.b16 %v37
  %v246 = vunpack.c.l.b16 %v38
  %v247 = vunpack.c.l.b16 %v39
  %v248 = vunpack.c.l.b16 %v40
  %v249 = vunpack.c.l.b16 %v41
  %v250 = vunpack.c.l.b16 %v42
  %v251 = vunpack.c.l.b16 %v43
  %v252 = vunpack.c.l.b16 %v44
  %v253 = vunpack.c.l.b16 %v45
  %v254 = vunpack.c.l.b16 %v46
  %v255 = vunpack.c.l.b16 %v47
  %v256 = vunpack.c.l.b16 %v48
  %v257 = vunpack.c.l.b16 %v49
  %v258 = vunpack.c.l.b16 %v50
  %v259 = vunpack.c.l.b16 %v51
  %v260 = vunpack.c.l.b16 %v52
  %v261 = vunpack.c.l.b16 %v53
  %v262 = vunpack.c.l.b16 %v54
  %v263 = vunpack.c.l.b16 %v55
  %v264 = vunpack.c.l.b16 %v56
  %v265 = vunpack.c.l.b16 %v57
  %v266 = vunpack.c.l.b16 %v58
  %v267 = vunpack.c.l.b16 %v59
  %v268 = vunpack.c.l.b16 %v60
  %v269 = vunpack.c.l.b16 %v61
  %v270 = vunpack.c.l.b16 %v62
  %v271 = vunpack.c.l.b16 %v63
  %v272 = vunpack.c.l.b16 %v64
  %v273 = vunpack.c.l.b16 %v65
  %v274 = vunpack.c.l.b16 %v66
  %v275 = vunpack.c.l.b16 %v67
  %v276 = vunpack.c.l.b16 %v68
  %v277 = vunpack.c.l.b16 %v69
  %v278 = vunpack.c.l.b16 %v70
  %v279 = vunpack.c.l.b16 %v71
  %v280 = vunpack.c.l.b16 %v72
  %v281 = vunpack.c.l.b16 %v73
  %v282 = vunpack.c.l.b16 %v74
  %v283 = vunpack.c.l.b16 %v75
  %v284 = vunpack.c.l.b16 %v76
  %v285 = vunpack.c.l.b16 %v77
  %v286 = vunpack.c.l.b16 %v78
  %v287 = vpack.c.b16 %v240, %v239
  %v288 = vpack.c.b16 %v242, %v241
  %v289 = vpack.c.b16 %v244, %v243
  %v290 = vpack.c.b16 %v246, %v245
  %v291 = vpack.c.b16 %v248, %v247
  %v292 = vpack.c.b16 %v250, %v249
  %v293 = vpack.c.b16 %v252, %v251
  %v294 = vpack.c.b16 %v254, %v253
  %v295 = vpack.c.b16 %v256, %v255
  %v296 = vpack.c.b16 %v258, %v257
  %v297 = vpack.c.b16 %v260, %v259
  %v298 = vpack.c.b16 %v262, %v261
  %v299 = vpack.c.b16 %v264, %v263
  %v300 = vpack.c.b16 %v266, %v265
  %v301 = vpack.c.b16 %v268, %v267
  %v302 = vpack.c.b16 %v270, %v269
  %v303 = vpack.c.b16 %v272, %v271
  %v304 = vpack.c.b16 %v274, %v273
  %v305 = vpack.c.b16 %v276, %v275
  %v306 = vpack.c.b16 %v278, %v277
  %v307 = vpack.c.b16 %v280, %v279
  %v308 = vpack.c.b16 %v282, %v281
  %v309 = vpack.c.b16 %v284, %v283
  %v310 = vpack.c.b16 %v286, %v285
  %335 = vmatprep.subr.bf16.mxu0 0
  %336 = vmatpush1.bf16.msra.mxu0 %v294
  %337 = vmatprep.subr.bf16.mxu0 0
  %338 = vmatpush1.bf16.msra.mxu0 %v293
  %339 = vmatprep.subr.bf16.mxu0 0
  %340 = vmatpush1.bf16.msra.mxu0 %v292
  %341 = vmatprep.subr.bf16.mxu0 0
  %342 = vmatpush1.bf16.msra.mxu0 %v291
  %343 = vmatprep.subr.bf16.mxu0 0
  %344 = vmatpush1.bf16.msra.mxu0 %v290
  %345 = vmatprep.subr.bf16.mxu0 0
  %346 = vmatpush1.bf16.msra.mxu0 %v289
  %347 = vmatprep.subr.bf16.mxu0 0
  %348 = vmatpush1.bf16.msra.mxu0 %v288
  %349 = vmatprep.subr.bf16.mxu0 0
  %350 = vmatpush1.bf16.msra.mxu0 %v287
  %351 = vmatprep.subr.bf16.mxu0 0
  %352 = vmatpush2.bf16.msra.mxu0 %v302
  %353 = vmatprep.subr.bf16.mxu0 0
  %354 = vmatpush2.bf16.msra.mxu0 %v301
  %355 = vmatprep.subr.bf16.mxu0 0
  %356 = vmatpush2.bf16.msra.mxu0 %v300
  %357 = vmatprep.subr.bf16.mxu0 0
  %358 = vmatpush2.bf16.msra.mxu0 %v299
  %359 = vmatprep.subr.bf16.mxu0 0
  %360 = vmatpush2.bf16.msra.mxu0 %v298
  %361 = vmatprep.subr.bf16.mxu0 0
  %362 = vmatpush2.bf16.msra.mxu0 %v297
  %363 = vmatprep.subr.bf16.mxu0 0
  %364 = vmatpush2.bf16.msra.mxu0 %v296
  %365 = vmatprep.subr.bf16.mxu0 0
  %366 = vmatpush2.bf16.msra.mxu0 %v295
  %367 = vmatprep.mubr.bf16.mxu0 %v168
  %368 = vmatmul.mubr.bf16.gmra.mxu0 %v167
  %v369 = vpop.f32.mrf.mxu0
  %v370 = vadd.f32 %v90, %v369
  %v371 = vpop.f32.mrf.mxu0
  %v372 = vpop.f32.mrf.mxu0
  %v373 = vadd.f32 %v95, %v372
  %v374 = vpop.f32.mrf.mxu0
  %375 = vmatprep.mubr.bf16.mxu0 %v171
  %376 = vmatmul.mubr.bf16.gmra.mxu0 %v170
  %v377 = vpop.f32.mrf.mxu0
  %v378 = vadd.f32 %v100, %v377
  %v379 = vpop.f32.mrf.mxu0
  %v380 = vpop.f32.mrf.mxu0
  %v381 = vadd.f32 %v105, %v380
  %v382 = vpop.f32.mrf.mxu0
  %383 = vmatprep.mubr.bf16.mxu0 %v174
  %384 = vmatmul.mubr.bf16.gmra.mxu0 %v173
  %v385 = vpop.f32.mrf.mxu0
  %v386 = vadd.f32 %v110, %v385
  %v387 = vpop.f32.mrf.mxu0
  %v388 = vpop.f32.mrf.mxu0
  %v389 = vadd.f32 %v115, %v388
  %v390 = vpop.f32.mrf.mxu0
  %391 = vmatprep.mubr.bf16.mxu0 %v177
  %392 = vmatmul.mubr.bf16.gmra.mxu0 %v176
  %v393 = vpop.f32.mrf.mxu0
  %v394 = vadd.f32 %v120, %v393
  %v395 = vpop.f32.mrf.mxu0
  %v396 = vpop.f32.mrf.mxu0
  %v397 = vadd.f32 %v125, %v396
  %v398 = vpop.f32.mrf.mxu0
  %399 = vdwg.mxu0
  %400 = vmatprep.subr.bf16.mxu0 0
  %401 = vmatpush1.bf16.msra.mxu0 %v310
  %402 = vmatprep.subr.bf16.mxu0 0
  %403 = vmatpush1.bf16.msra.mxu0 %v309
  %404 = vmatprep.subr.bf16.mxu0 0
  %405 = vmatpush1.bf16.msra.mxu0 %v308
  %406 = vmatprep.subr.bf16.mxu0 0
  %407 = vmatpush1.bf16.msra.mxu0 %v307
  %408 = vmatprep.subr.bf16.mxu0 0
  %409 = vmatpush1.bf16.msra.mxu0 %v306
  %410 = vmatprep.subr.bf16.mxu0 0
  %411 = vmatpush1.bf16.msra.mxu0 %v305
  %412 = vmatprep.subr.bf16.mxu0 0
  %413 = vmatpush1.bf16.msra.mxu0 %v304
  %414 = vmatprep.subr.bf16.mxu0 0
  %415 = vmatpush1.bf16.msra.mxu0 %v303
  %416 = vmatprep.subr.bf16.mxu0 0
  %417 = vmatpush2.bf16.msra.mxu0 0
  %418 = vmatprep.subr.bf16.mxu0 0
  %419 = vmatpush2.bf16.msra.mxu0 0
  %420 = vmatprep.subr.bf16.mxu0 0
  %421 = vmatpush2.bf16.msra.mxu0 0
  %422 = vmatprep.subr.bf16.mxu0 0
  %423 = vmatpush2.bf16.msra.mxu0 0
  %424 = vmatprep.subr.bf16.mxu0 0
  %425 = vmatpush2.bf16.msra.mxu0 0
  %426 = vmatprep.subr.bf16.mxu0 0
  %427 = vmatpush2.bf16.msra.mxu0 0
  %428 = vmatprep.subr.bf16.mxu0 0
  %429 = vmatpush2.bf16.msra.mxu0 0
  %430 = vmatprep.subr.bf16.mxu0 0
  %431 = vmatpush2.bf16.msra.mxu0 0
  %432 = vmatprep.mubr.bf16.mxu0 0
  %433 = vmatmul.mubr.bf16.gmra.mxu0 %v169
  %v434 = vpop.f32.mrf.mxu0
  %v435 = vadd.f32 %v370, %v434
  %v436 = vpop.f32.mrf.mxu0
  %v437 = vpop.f32.mrf.mxu0
  %v438 = vadd.f32 %v373, %v437
  %v439 = vpop.f32.mrf.mxu0
  %440 = vmatprep.mubr.bf16.mxu0 0
  %441 = vmatmul.mubr.bf16.gmra.mxu0 %v172
  %v442 = vpop.f32.mrf.mxu0
  %v443 = vadd.f32 %v378, %v442
  %v444 = vpop.f32.mrf.mxu0
  %v445 = vpop.f32.mrf.mxu0
  %v446 = vadd.f32 %v381, %v445
  %v447 = vpop.f32.mrf.mxu0
  %448 = vmatprep.mubr.bf16.mxu0 0
  %449 = vmatmul.mubr.bf16.gmra.mxu0 %v175
  %v450 = vpop.f32.mrf.mxu0
  %v451 = vadd.f32 %v386, %v450
  %v452 = vpop.f32.mrf.mxu0
  %v453 = vpop.f32.mrf.mxu0
  %v454 = vadd.f32 %v389, %v453
  %v455 = vpop.f32.mrf.mxu0
  %456 = vmatprep.mubr.bf16.mxu0 0
  %457 = vmatmul.mubr.bf16.gmra.mxu0 %v178
  %v458 = vpop.f32.mrf.mxu0
  %v459 = vadd.f32 %v394, %v458
  %v460 = vpop.f32.mrf.mxu0
  %v461 = vpop.f32.mrf.mxu0
  %v462 = vadd.f32 %v397, %v461
  %v463 = vpop.f32.mrf.mxu0
  %464 = vdwg.mxu0
  %v465 = vmax.f32 %v435, 0.0
  %v466 = vmax.f32 %v438, 0.0
  %v467 = vmax.f32 %v443, 0.0
  %v468 = vmax.f32 %v446, 0.0
  %v469 = vmax.f32 %v451, 0.0
  %v470 = vmax.f32 %v454, 0.0
  %v471 = vmax.f32 %v459, 0.0
  %v472 = vmax.f32 %v462, 0.0
  %473 = vst [vmem:[%s3] sm:$0xff] %v465
  %474 = vst [vmem:[%s3 + $0x8] sm:$0xff] %v466
  %475 = vst [vmem:[%s3 + $0x10] sm:$0xff] %v467
  %476 = vst [vmem:[%s3 + $0x18] sm:$0xff] %v468
  %477 = vst [vmem:[%s3 + $0x20] sm:$0xff] %v469
  %478 = vst [vmem:[%s3 + $0x28] sm:$0xff] %v470
  %479 = vst [vmem:[%s3 + $0x30] sm:$0xff] %v471
  %480 = vst [vmem:[%s3 + $0x38] sm:$0xff] %v472
  // Predicated region
  $region14: #{resnet_forward.21} parent=0 // pred_check
    _
  $region15: #{resnet_forward.21} parent=0 // pred_check_branch
    %482 = sbr.rel (0) target = $region17
  $region16: #{resnet_forward.21} parent=0 // pred_region
    _
  $region17: #{resnet_forward.21} parent=0 // pred_fallthru
    _
  // Predicated region
  $region18: #{resnet_forward.21} parent=0 // pred_check
    _
  $region19: #{resnet_forward.21} parent=0 // pred_check_branch
    %484 = sbr.rel (0) target = $region21
  $region20: #{resnet_forward.21} parent=0 // pred_region
    _
  $region21: #{resnet_forward.21} parent=0 // pred_fallthru
    _

// kernel: resnet_forward.22
$region0: #{resnet_forward.22}
  #allocation0 [shape = 'u32[]', space=smem, size = 0x4, offset = 0x4, fixed_abs, tag = 'smem constant byte address 0x4 - core index']
  #allocation1 [shape = 'u32[144,128]{1,0:T(1,128)}', space=vmem, size = 0x12000, scoped, tag = 'internal scratch']
  %s0 = inlined_call_operand.vmem [shape: bf16[64,128], index: 0, kind: input, shape index: {}]
  %s1 = inlined_call_operand.vmem [shape: bf16[128,128], index: 1, kind: input, shape index: {}]
  %s2 = inlined_call_operand.vmem [shape: f32[64,1], index: 2, kind: input, shape index: {}]
  %s3 = inlined_call_operand.vmem [shape: f32[64,128], index: 3, kind: output, shape index: {}]
  %s4 = sld [smem:[#allocation0]]
  $region22: #{resnet_forward.22} parent=0
    _
  %s6 = ssub.s32 1, %s4
  %s7 = scalar_select 0, %s6, %s4
  // Predicated region
  $region2: #{resnet_forward.22} parent=0 // pred_check
    _
  $region3: #{resnet_forward.22} parent=0 // pred_check_branch
    %9 = sbr.rel (0) target = $region5
  $region4: #{resnet_forward.22} parent=0 // pred_region
    _
  $region5: #{resnet_forward.22} parent=0 // pred_fallthru
    _
  // Predicated region
  $region6: #{resnet_forward.22} parent=0 // pred_check
    _
  $region7: #{resnet_forward.22} parent=0 // pred_check_branch
    %11 = sbr.rel (0) target = $region9
  $region8: #{resnet_forward.22} parent=0 // pred_region
    _
  $region9: #{resnet_forward.22} parent=0 // pred_fallthru
    _
  // Predicated region
  $region10: #{resnet_forward.22} parent=0 // pred_check
    _
  $region11: #{resnet_forward.22} parent=0 // pred_check_branch
    %13 = sbr.rel (0) target = $region13
  $region12: #{resnet_forward.22} parent=0 // pred_region
    _
  $region13: #{resnet_forward.22} parent=0 // pred_fallthru
    _
  %v15 = vld [vmem:[%s0] sm:$0xf]
  %v16 = vld [vmem:[%s0 + $0x4] sm:$0xf]
  %v17 = vld [vmem:[%s0 + $0x8] sm:$0xf]
  %v18 = vld [vmem:[%s0 + $0xc] sm:$0xf]
  %v19 = vld [vmem:[%s0 + $0x10] sm:$0xf]
  %v20 = vld [vmem:[%s0 + $0x14] sm:$0xf]
  %v21 = vld [vmem:[%s0 + $0x18] sm:$0xf]
  %v22 = vld [vmem:[%s0 + $0x1c] sm:$0xf]
  %v23 = vld [vmem:[%s1] sm:$0xf]
  %v24 = vld [vmem:[%s1 + $0x4] sm:$0xf]
  %v25 = vld [vmem:[%s1 + $0x8] sm:$0xf]
  %v26 = vld [vmem:[%s1 + $0xc] sm:$0xf]
  %v27 = vld [vmem:[%s1 + $0x10] sm:$0xf]
  %v28 = vld [vmem:[%s1 + $0x14] sm:$0xf]
  %v29 = vld [vmem:[%s1 + $0x18] sm:$0xf]
  %v30 = vld [vmem:[%s1 + $0x1c] sm:$0xf]
  %v31 = vld [vmem:[%s1 + $0x20] sm:$0xf]
  %v32 = vld [vmem:[%s1 + $0x24] sm:$0xf]
  %v33 = vld [vmem:[%s1 + $0x28] sm:$0xf]
  %v34 = vld [vmem:[%s1 + $0x2c] sm:$0xf]
  %v35 = vld [vmem:[%s1 + $0x30] sm:$0xf]
  %v36 = vld [vmem:[%s1 + $0x34] sm:$0xf]
  %v37 = vld [vmem:[%s1 + $0x38] sm:$0xf]
  %v38 = vld [vmem:[%s1 + $0x3c] sm:$0xf]
  %v39 = vld [vmem:[%s2] sm:$0xff]
  %v40 = vld [vmem:[%s2 + $0x8] sm:$0xff]
  %v41 = vld [vmem:[%s2 + $0x10] sm:$0xff]
  %v42 = vld [vmem:[%s2 + $0x18] sm:$0xff]
  %v43 = vld [vmem:[%s2 + $0x20] sm:$0xff]
  %v44 = vld [vmem:[%s2 + $0x28] sm:$0xff]
  %v45 = vld [vmem:[%s2 + $0x30] sm:$0xff]
  %v46 = vld [vmem:[%s2 + $0x38] sm:$0xff]
  %48 = vset.pattern.permute.xlu0 0
  %49 = vperm.xlu0 %48, %v39
  %v50 = vpop.permute.xlu0 %49
  %53 = vset.pattern.permute.xlu0 0
  %54 = vperm.xlu0 %53, %v40
  %v55 = vpop.permute.xlu0 %54
  %58 = vset.pattern.permute.xlu0 0
  %59 = vperm.xlu0 %58, %v41
  %v60 = vpop.permute.xlu0 %59
  %63 = vset.pattern.permute.xlu0 0
  %64 = vperm.xlu0 %63, %v42
  %v65 = vpop.permute.xlu0 %64
  %68 = vset.pattern.permute.xlu0 0
  %69 = vperm.xlu0 %68, %v43
  %v70 = vpop.permute.xlu0 %69
  %73 = vset.pattern.permute.xlu0 0
  %74 = vperm.xlu0 %73, %v44
  %v75 = vpop.permute.xlu0 %74
  %78 = vset.pattern.permute.xlu0 0
  %79 = vperm.xlu0 %78, %v45
  %v80 = vpop.permute.xlu0 %79
  %83 = vset.pattern.permute.xlu0 0
  %84 = vperm.xlu0 %83, %v46
  %v85 = vpop.permute.xlu0 %84
  %v95 = vunpack.c.l.b16 %v15
  %v96 = vunpack.c.l.b16 %v16
  %v97 = vunpack.c.l.b16 %v17
  %v98 = vunpack.c.l.b16 %v18
  %v99 = vunpack.c.l.b16 %v19
  %v100 = vunpack.c.l.b16 %v20
  %v101 = vunpack.c.l.b16 %v21
  %v102 = vunpack.c.l.b16 %v22
  %v103 = vpack.c.b16 %v96, %v95
  %v104 = vpack.c.b16 %v98, %v97
  %v105 = vpack.c.b16 %v100, %v99
  %v106 = vpack.c.b16 %v102, %v101
  %v127 = vunpack.c.l.b16 %v23
  %v128 = vunpack.c.l.b16 %v24
  %v129 = vunpack.c.l.b16 %v25
  %v130 = vunpack.c.l.b16 %v26
  %v131 = vunpack.c.l.b16 %v27
  %v132 = vunpack.c.l.b16 %v28
  %v133 = vunpack.c.l.b16 %v29
  %v134 = vunpack.c.l.b16 %v30
  %v135 = vunpack.c.l.b16 %v31
  %v136 = vunpack.c.l.b16 %v32
  %v137 = vunpack.c.l.b16 %v33
  %v138 = vunpack.c.l.b16 %v34
  %v139 = vunpack.c.l.b16 %v35
  %v140 = vunpack.c.l.b16 %v36
  %v141 = vunpack.c.l.b16 %v37
  %v142 = vunpack.c.l.b16 %v38
  %v143 = vpack.c.b16 %v128, %v127
  %v144 = vpack.c.b16 %v130, %v129
  %v145 = vpack.c.b16 %v132, %v131
  %v146 = vpack.c.b16 %v134, %v133
  %v147 = vpack.c.b16 %v136, %v135
  %v148 = vpack.c.b16 %v138, %v137
  %v149 = vpack.c.b16 %v140, %v139
  %v150 = vpack.c.b16 %v142, %v141
  %159 = vmatprep.subr.bf16.mxu0 0
  %160 = vmatpush1.bf16.msra.mxu0 %v150
  %161 = vmatprep.subr.bf16.mxu0 0
  %162 = vmatpush1.bf16.msra.mxu0 %v149
  %163 = vmatprep.subr.bf16.mxu0 0
  %164 = vmatpush1.bf16.msra.mxu0 %v148
  %165 = vmatprep.subr.bf16.mxu0 0
  %166 = vmatpush1.bf16.msra.mxu0 %v147
  %167 = vmatprep.subr.bf16.mxu0 0
  %168 = vmatpush1.bf16.msra.mxu0 %v146
  %169 = vmatprep.subr.bf16.mxu0 0
  %170 = vmatpush1.bf16.msra.mxu0 %v145
  %171 = vmatprep.subr.bf16.mxu0 0
  %172 = vmatpush1.bf16.msra.mxu0 %v144
  %173 = vmatprep.subr.bf16.mxu0 0
  %174 = vmatpush1.bf16.msra.mxu0 %v143
  %175 = vmatprep.subr.bf16.mxu0 0
  %176 = vmatpush2.bf16.msra.mxu0 0
  %177 = vmatprep.subr.bf16.mxu0 0
  %178 = vmatpush2.bf16.msra.mxu0 0
  %179 = vmatprep.subr.bf16.mxu0 0
  %180 = vmatpush2.bf16.msra.mxu0 0
  %181 = vmatprep.subr.bf16.mxu0 0
  %182 = vmatpush2.bf16.msra.mxu0 0
  %183 = vmatprep.subr.bf16.mxu0 0
  %184 = vmatpush2.bf16.msra.mxu0 0
  %185 = vmatprep.subr.bf16.mxu0 0
  %186 = vmatpush2.bf16.msra.mxu0 0
  %187 = vmatprep.subr.bf16.mxu0 0
  %188 = vmatpush2.bf16.msra.mxu0 0
  %189 = vmatprep.subr.bf16.mxu0 0
  %190 = vmatpush2.bf16.msra.mxu0 0
  %191 = vmatprep.mubr.bf16.mxu0 0
  %192 = vmatmul.mubr.bf16.gmra.mxu0 %v103
  %v193 = vpop.f32.mrf.mxu0
  %v194 = vadd.f32 %v50, %v193
  %v195 = vpop.f32.mrf.mxu0
  %v196 = vpop.f32.mrf.mxu0
  %v197 = vadd.f32 %v55, %v196
  %v198 = vpop.f32.mrf.mxu0
  %199 = vmatprep.mubr.bf16.mxu0 0
  %200 = vmatmul.mubr.bf16.gmra.mxu0 %v104
  %v201 = vpop.f32.mrf.mxu0
  %v202 = vadd.f32 %v60, %v201
  %v203 = vpop.f32.mrf.mxu0
  %v204 = vpop.f32.mrf.mxu0
  %v205 = vadd.f32 %v65, %v204
  %v206 = vpop.f32.mrf.mxu0
  %207 = vmatprep.mubr.bf16.mxu0 0
  %208 = vmatmul.mubr.bf16.gmra.mxu0 %v105
  %v209 = vpop.f32.mrf.mxu0
  %v210 = vadd.f32 %v70, %v209
  %v211 = vpop.f32.mrf.mxu0
  %v212 = vpop.f32.mrf.mxu0
  %v213 = vadd.f32 %v75, %v212
  %v214 = vpop.f32.mrf.mxu0
  %215 = vmatprep.mubr.bf16.mxu0 0
  %216 = vmatmul.mubr.bf16.gmra.mxu0 %v106
  %v217 = vpop.f32.mrf.mxu0
  %v218 = vadd.f32 %v80, %v217
  %v219 = vpop.f32.mrf.mxu0
  %v220 = vpop.f32.mrf.mxu0
  %v221 = vadd.f32 %v85, %v220
  %v222 = vpop.f32.mrf.mxu0
  %223 = vdwg.mxu0
  %224 = vst [vmem:[%s3] sm:$0xff] %v194
  %225 = vst [vmem:[%s3 + $0x8] sm:$0xff] %v197
  %226 = vst [vmem:[%s3 + $0x10] sm:$0xff] %v202
  %227 = vst [vmem:[%s3 + $0x18] sm:$0xff] %v205
  %228 = vst [vmem:[%s3 + $0x20] sm:$0xff] %v210
  %229 = vst [vmem:[%s3 + $0x28] sm:$0xff] %v213
  %230 = vst [vmem:[%s3 + $0x30] sm:$0xff] %v218
  %231 = vst [vmem:[%s3 + $0x38] sm:$0xff] %v221
  // Predicated region
  $region14: #{resnet_forward.22} parent=0 // pred_check
    _
  $region15: #{resnet_forward.22} parent=0 // pred_check_branch
    %233 = sbr.rel (0) target = $region17
  $region16: #{resnet_forward.22} parent=0 // pred_region
    _
  $region17: #{resnet_forward.22} parent=0 // pred_fallthru
    _
  // Predicated region
  $region18: #{resnet_forward.22} parent=0 // pred_check
    _
  $region19: #{resnet_forward.22} parent=0 // pred_check_branch
    %235 = sbr.rel (0) target = $region21
  $region20: #{resnet_forward.22} parent=0 // pred_region
    _
  $region21: #{resnet_forward.22} parent=0 // pred_fallthru
    _

// kernel: resnet_forward.23
$region0: #{resnet_forward.23}
  #allocation0 [shape = 'u32[]', space=smem, size = 0x4, offset = 0x4, fixed_abs, tag = 'smem constant byte address 0x4 - core index']
  #allocation1 [shape = 'u32[144,128]{1,0:T(1,128)}', space=vmem, size = 0x12000, scoped, tag = 'internal scratch']
  %s0 = inlined_call_operand.vmem [shape: bf16[64,640], index: 0, kind: input, shape index: {}]
  %s1 = inlined_call_operand.vmem [shape: bf16[640,128], index: 1, kind: input, shape index: {}]
  %s2 = inlined_call_operand.vmem [shape: f32[64,1], index: 2, kind: input, shape index: {}]
  %s3 = inlined_call_operand.vmem [shape: bf16[64,128], index: 3, kind: input, shape index: {}]
  %s4 = inlined_call_operand.vmem [shape: f32[64,128], index: 4, kind: output, shape index: {}]
  %s5 = sld [smem:[#allocation0]]
  $region26: #{resnet_forward.23} parent=0
    _
  %s7 = ssub.s32 1, %s5
  %s8 = scalar_select 0, %s7, %s5
  // Predicated region
  $region2: #{resnet_forward.23} parent=0 // pred_check
    _
  $region3: #{resnet_forward.23} parent=0 // pred_check_branch
    %10 = sbr.rel (0) target = $region5
  $region4: #{resnet_forward.23} parent=0 // pred_region
    _
  $region5: #{resnet_forward.23} parent=0 // pred_fallthru
    _
  // Predicated region
  $region6: #{resnet_forward.23} parent=0 // pred_check
    _
  $region7: #{resnet_forward.23} parent=0 // pred_check_branch
    %12 = sbr.rel (0) target = $region9
  $region8: #{resnet_forward.23} parent=0 // pred_region
    _
  $region9: #{resnet_forward.23} parent=0 // pred_fallthru
    _
  // Predicated region
  $region10: #{resnet_forward.23} parent=0 // pred_check
    _
  $region11: #{resnet_forward.23} parent=0 // pred_check_branch
    %14 = sbr.rel (0) target = $region13
  $region12: #{resnet_forward.23} parent=0 // pred_region
    _
  $region13: #{resnet_forward.23} parent=0 // pred_fallthru
    _
  // Predicated region
  $region14: #{resnet_forward.23} parent=0 // pred_check
    _
  $region15: #{resnet_forward.23} parent=0 // pred_check_branch
    %16 = sbr.rel (0) target = $region17
  $region16: #{resnet_forward.23} parent=0 // pred_region
    _
  $region17: #{resnet_forward.23} parent=0 // pred_fallthru
    _
  %v18 = vld [vmem:[%s0] sm:$0xff]
  %v19 = vld [vmem:[%s0 + $0x8] sm:$0xff]
  %v20 = vld [vmem:[%s0 + $0x10] sm:$0xf]
  %v21 = vld [vmem:[%s0 + $0x14] sm:$0xff]
  %v22 = vld [vmem:[%s0 + $0x1c] sm:$0xff]
  %v23 = vld [vmem:[%s0 + $0x24] sm:$0xf]
  %v24 = vld [vmem:[%s0 + $0x28] sm:$0xff]
  %v25 = vld [vmem:[%s0 + $0x30] sm:$0xff]
  %v26 = vld [vmem:[%s0 + $0x38] sm:$0xf]
  %v27 = vld [vmem:[%s0 + $0x3c] sm:$0xff]
  %v28 = vld [vmem:[%s0 + $0x44] sm:$0xff]
  %v29 = vld [vmem:[%s0 + $0x4c] sm:$0xf]
  %v30 = vld [vmem:[%s0 + $0x50] sm:$0xff]
  %v31 = vld [vmem:[%s0 + $0x58] sm:$0xff]
  %v32 = vld [vmem:[%s0 + $0x60] sm:$0xf]
  %v33 = vld [vmem:[%s0 + $0x64] sm:$0xff]
  %v34 = vld [vmem:[%s0 + $0x6c] sm:$0xff]
  %v35 = vld [vmem:[%s0 + $0x74] sm:$0xf]
  %v36 = vld [vmem:[%s0 + $0x78] sm:$0xff]
  %v37 = vld [vmem:[%s0 + $0x80] sm:$0xff]
  %v38 = vld [vmem:[%s0 + $0x88] sm:$0xf]
  %v39 = vld [vmem:[%s0 + $0x8c] sm:$0xff]
  %v40 = vld [vmem:[%s0 + $0x94] sm:$0xff]
  %v41 = vld [vmem:[%s0 + $0x9c] sm:$0xf]
  %v42 = vld [vmem:[%s1] sm:$0xf]
  %v43 = vld [vmem:[%s1 + $0x4] sm:$0xf]
  %v44 = vld [vmem:[%s1 + $0x8] sm:$0xf]
  %v45 = vld [vmem:[%s1 + $0xc] sm:$0xf]
  %v46 = vld [vmem:[%s1 + $0x10] sm:$0xf]
  %v47 = vld [vmem:[%s1 + $0x14] sm:$0xf]
  %v48 = vld [vmem:[%s1 + $0x18] sm:$0xf]
  %v49 = vld [vmem:[%s1 + $0x1c] sm:$0xf]
  %v50 = vld [vmem:[%s1 + $0x20] sm:$0xf]
  %v51 = vld [vmem:[%s1 + $0x24] sm:$0xf]
  %v52 = vld [vmem:[%s1 + $0x28] sm:$0xf]
  %v53 = vld [vmem:[%s1 + $0x2c] sm:$0xf]
  %v54 = vld [vmem:[%s1 + $0x30] sm:$0xf]
  %v55 = vld [vmem:[%s1 + $0x34] sm:$0xf]
  %v56 = vld [vmem:[%s1 + $0x38] sm:$0xf]
  %v57 = vld [vmem:[%s1 + $0x3c] sm:$0xf]
  %v58 = vld [vmem:[%s1 + $0x40] sm:$0xf]
  %v59 = vld [vmem:[%s1 + $0x44] sm:$0xf]
  %v60 = vld [vmem:[%s1 + $0x48] sm:$0xf]
  %v61 = vld [vmem:[%s1 + $0x4c] sm:$0xf]
  %v62 = vld [vmem:[%s1 + $0x50] sm:$0xf]
  %v63 = vld [vmem:[%s1 + $0x54] sm:$0xf]
  %v64 = vld [vmem:[%s1 + $0x58] sm:$0xf]
  %v65 = vld [vmem:[%s1 + $0x5c] sm:$0xf]
  %v66 = vld [vmem:[%s1 + $0x60] sm:$0xf]
  %v67 = vld [vmem:[%s1 + $0x64] sm:$0xf]
  %v68 = vld [vmem:[%s1 + $0x68] sm:$0xf]
  %v69 = vld [vmem:[%s1 + $0x6c] sm:$0xf]
  %v70 = vld [vmem:[%s1 + $0x70] sm:$0xf]
  %v71 = vld [vmem:[%s1 + $0x74] sm:$0xf]
  %v72 = vld [vmem:[%s1 + $0x78] sm:$0xf]
  %v73 = vld [vmem:[%s1 + $0x7c] sm:$0xf]
  %v74 = vld [vmem:[%s1 + $0x80] sm:$0xf]
  %v75 = vld [vmem:[%s1 + $0x84] sm:$0xf]
  %v76 = vld [vmem:[%s1 + $0x88] sm:$0xf]
  %v77 = vld [vmem:[%s1 + $0x8c] sm:$0xf]
  %v78 = vld [vmem:[%s1 + $0x90] sm:$0xf]
  %v79 = vld [vmem:[%s1 + $0x94] sm:$0xf]
  %v80 = vld [vmem:[%s1 + $0x98] sm:$0xf]
  %v81 = vld [vmem:[%s1 + $0x9c] sm:$0xf]
  %v82 = vld [vmem:[%s1 + $0xa0] sm:$0xf]
  %v83 = vld [vmem:[%s1 + $0xa4] sm:$0xf]
  %v84 = vld [vmem:[%s1 + $0xa8] sm:$0xf]
  %v85 = vld [vmem:[%s1 + $0xac] sm:$0xf]
  %v86 = vld [vmem:[%s1 + $0xb0] sm:$0xf]
  %v87 = vld [vmem:[%s1 + $0xb4] sm:$0xf]
  %v88 = vld [vmem:[%s1 + $0xb8] sm:$0xf]
  %v89 = vld [vmem:[%s1 + $0xbc] sm:$0xf]
  %v90 = vld [vmem:[%s1 + $0xc0] sm:$0xf]
  %v91 = vld [vmem:[%s1 + $0xc4] sm:$0xf]
  %v92 = vld [vmem:[%s1 + $0xc8] sm:$0xf]
  %v93 = vld [vmem:[%s1 + $0xcc] sm:$0xf]
  %v94 = vld [vmem:[%s1 + $0xd0] sm:$0xf]
  %v95 = vld [vmem:[%s1 + $0xd4] sm:$0xf]
  %v96 = vld [vmem:[%s1 + $0xd8] sm:$0xf]
  %v97 = vld [vmem:[%s1 + $0xdc] sm:$0xf]
  %v98 = vld [vmem:[%s1 + $0xe0] sm:$0xf]
  %v99 = vld [vmem:[%s1 + $0xe4] sm:$0xf]
  %v100 = vld [vmem:[%s1 + $0xe8] sm:$0xf]
  %v101 = vld [vmem:[%s1 + $0xec] sm:$0xf]
  %v102 = vld [vmem:[%s1 + $0xf0] sm:$0xf]
  %v103 = vld [vmem:[%s1 + $0xf4] sm:$0xf]
  %v104 = vld [vmem:[%s1 + $0xf8] sm:$0xf]
  %v105 = vld [vmem:[%s1 + $0xfc] sm:$0xf]
  %v106 = vld [vmem:[%s1 + $0x100] sm:$0xf]
  %v107 = vld [vmem:[%s1 + $0x104] sm:$0xf]
  %v108 = vld [vmem:[%s1 + $0x108] sm:$0xf]
  %v109 = vld [vmem:[%s1 + $0x10c] sm:$0xf]
  %v110 = vld [vmem:[%s1 + $0x110] sm:$0xf]
  %v111 = vld [vmem:[%s1 + $0x114] sm:$0xf]
  %v112 = vld [vmem:[%s1 + $0x118] sm:$0xf]
  %v113 = vld [vmem:[%s1 + $0x11c] sm:$0xf]
  %v114 = vld [vmem:[%s1 + $0x120] sm:$0xf]
  %v115 = vld [vmem:[%s1 + $0x124] sm:$0xf]
  %v116 = vld [vmem:[%s1 + $0x128] sm:$0xf]
  %v117 = vld [vmem:[%s1 + $0x12c] sm:$0xf]
  %v118 = vld [vmem:[%s1 + $0x130] sm:$0xf]
  %v119 = vld [vmem:[%s1 + $0x134] sm:$0xf]
  %v120 = vld [vmem:[%s1 + $0x138] sm:$0xf]
  %v121 = vld [vmem:[%s1 + $0x13c] sm:$0xf]
  %v122 = vld [vmem:[%s2] sm:$0xff]
  %v123 = vld [vmem:[%s2 + $0x8] sm:$0xff]
  %v124 = vld [vmem:[%s2 + $0x10] sm:$0xff]
  %v125 = vld [vmem:[%s2 + $0x18] sm:$0xff]
  %v126 = vld [vmem:[%s2 + $0x20] sm:$0xff]
  %v127 = vld [vmem:[%s2 + $0x28] sm:$0xff]
  %v128 = vld [vmem:[%s2 + $0x30] sm:$0xff]
  %v129 = vld [vmem:[%s2 + $0x38] sm:$0xff]
  %131 = vset.pattern.permute.xlu0 0
  %132 = vperm.xlu0 %131, %v122
  %v133 = vpop.permute.xlu0 %132
  %136 = vset.pattern.permute.xlu0 0
  %137 = vperm.xlu0 %136, %v123
  %v138 = vpop.permute.xlu0 %137
  %141 = vset.pattern.permute.xlu0 0
  %142 = vperm.xlu0 %141, %v124
  %v143 = vpop.permute.xlu0 %142
  %146 = vset.pattern.permute.xlu0 0
  %147 = vperm.xlu0 %146, %v125
  %v148 = vpop.permute.xlu0 %147
  %151 = vset.pattern.permute.xlu0 0
  %152 = vperm.xlu0 %151, %v126
  %v153 = vpop.permute.xlu0 %152
  %156 = vset.pattern.permute.xlu0 0
  %157 = vperm.xlu0 %156, %v127
  %v158 = vpop.permute.xlu0 %157
  %161 = vset.pattern.permute.xlu0 0
  %162 = vperm.xlu0 %161, %v128
  %v163 = vpop.permute.xlu0 %162
  %166 = vset.pattern.permute.xlu0 0
  %167 = vperm.xlu0 %166, %v129
  %v168 = vpop.permute.xlu0 %167
  %v194 = vunpack.c.l.b16 %v18
  %v195 = vunpack.c.h.b16 %v18
  %v196 = vunpack.c.l.b16 %v19
  %v197 = vunpack.c.h.b16 %v19
  %v198 = vunpack.c.l.b16 %v20
  %v199 = vunpack.c.l.b16 %v21
  %v200 = vunpack.c.h.b16 %v21
  %v201 = vunpack.c.l.b16 %v22
  %v202 = vunpack.c.h.b16 %v22
  %v203 = vunpack.c.l.b16 %v23
  %v204 = vunpack.c.l.b16 %v24
  %v205 = vunpack.c.h.b16 %v24
  %v206 = vunpack.c.l.b16 %v25
  %v207 = vunpack.c.h.b16 %v25
  %v208 = vunpack.c.l.b16 %v26
  %v209 = vunpack.c.l.b16 %v27
  %v210 = vunpack.c.h.b16 %v27
  %v211 = vunpack.c.l.b16 %v28
  %v212 = vunpack.c.h.b16 %v28
  %v213 = vunpack.c.l.b16 %v29
  %v214 = vunpack.c.l.b16 %v30
  %v215 = vunpack.c.h.b16 %v30
  %v216 = vunpack.c.l.b16 %v31
  %v217 = vunpack.c.h.b16 %v31
  %v218 = vunpack.c.l.b16 %v32
  %v219 = vunpack.c.l.b16 %v33
  %v220 = vunpack.c.h.b16 %v33
  %v221 = vunpack.c.l.b16 %v34
  %v222 = vunpack.c.h.b16 %v34
  %v223 = vunpack.c.l.b16 %v35
  %v224 = vunpack.c.l.b16 %v36
  %v225 = vunpack.c.h.b16 %v36
  %v226 = vunpack.c.l.b16 %v37
  %v227 = vunpack.c.h.b16 %v37
  %v228 = vunpack.c.l.b16 %v38
  %v229 = vunpack.c.l.b16 %v39
  %v230 = vunpack.c.h.b16 %v39
  %v231 = vunpack.c.l.b16 %v40
  %v232 = vunpack.c.h.b16 %v40
  %v233 = vunpack.c.l.b16 %v41
  %v234 = vpack.c.b16 %v199, %v194
  %v235 = vpack.c.b16 %v200, %v195
  %v236 = vpack.c.b16 %v201, %v196
  %v237 = vpack.c.b16 %v202, %v197
  %v238 = vpack.c.b16 %v203, %v198
  %v239 = vpack.c.b16 %v209, %v204
  %v240 = vpack.c.b16 %v210, %v205
  %v241 = vpack.c.b16 %v211, %v206
  %v242 = vpack.c.b16 %v212, %v207
  %v243 = vpack.c.b16 %v213, %v208
  %v244 = vpack.c.b16 %v219, %v214
  %v245 = vpack.c.b16 %v220, %v215
  %v246 = vpack.c.b16 %v221, %v216
  %v247 = vpack.c.b16 %v222, %v217
  %v248 = vpack.c.b16 %v223, %v218
  %v249 = vpack.c.b16 %v229, %v224
  %v250 = vpack.c.b16 %v230, %v225
  %v251 = vpack.c.b16 %v231, %v226
  %v252 = vpack.c.b16 %v232, %v227
  %v253 = vpack.c.b16 %v233, %v228
  %v354 = vunpack.c.l.b16 %v42
  %v355 = vunpack.c.l.b16 %v43
  %v356 = vunpack.c.l.b16 %v44
  %v357 = vunpack.c.l.b16 %v45
  %v358 = vunpack.c.l.b16 %v46
  %v359 = vunpack.c.l.b16 %v47
  %v360 = vunpack.c.l.b16 %v48
  %v361 = vunpack.c.l.b16 %v49
  %v362 = vunpack.c.l.b16 %v50
  %v363 = vunpack.c.l.b16 %v51
  %v364 = vunpack.c.l.b16 %v52
  %v365 = vunpack.c.l.b16 %v53
  %v366 = vunpack.c.l.b16 %v54
  %v367 = vunpack.c.l.b16 %v55
  %v368 = vunpack.c.l.b16 %v56
  %v369 = vunpack.c.l.b16 %v57
  %v370 = vunpack.c.l.b16 %v58
  %v371 = vunpack.c.l.b16 %v59
  %v372 = vunpack.c.l.b16 %v60
  %v373 = vunpack.c.l.b16 %v61
  %v374 = vunpack.c.l.b16 %v62
  %v375 = vunpack.c.l.b16 %v63
  %v376 = vunpack.c.l.b16 %v64
  %v377 = vunpack.c.l.b16 %v65
  %v378 = vunpack.c.l.b16 %v66
  %v379 = vunpack.c.l.b16 %v67
  %v380 = vunpack.c.l.b16 %v68
  %v381 = vunpack.c.l.b16 %v69
  %v382 = vunpack.c.l.b16 %v70
  %v383 = vunpack.c.l.b16 %v71
  %v384 = vunpack.c.l.b16 %v72
  %v385 = vunpack.c.l.b16 %v73
  %v386 = vunpack.c.l.b16 %v74
  %v387 = vunpack.c.l.b16 %v75
  %v388 = vunpack.c.l.b16 %v76
  %v389 = vunpack.c.l.b16 %v77
  %v390 = vunpack.c.l.b16 %v78
  %v391 = vunpack.c.l.b16 %v79
  %v392 = vunpack.c.l.b16 %v80
  %v393 = vunpack.c.l.b16 %v81
  %v394 = vunpack.c.l.b16 %v82
  %v395 = vunpack.c.l.b16 %v83
  %v396 = vunpack.c.l.b16 %v84
  %v397 = vunpack.c.l.b16 %v85
  %v398 = vunpack.c.l.b16 %v86
  %v399 = vunpack.c.l.b16 %v87
  %v400 = vunpack.c.l.b16 %v88
  %v401 = vunpack.c.l.b16 %v89
  %v402 = vunpack.c.l.b16 %v90
  %v403 = vunpack.c.l.b16 %v91
  %v404 = vunpack.c.l.b16 %v92
  %v405 = vunpack.c.l.b16 %v93
  %v406 = vunpack.c.l.b16 %v94
  %v407 = vunpack.c.l.b16 %v95
  %v408 = vunpack.c.l.b16 %v96
  %v409 = vunpack.c.l.b16 %v97
  %v410 = vunpack.c.l.b16 %v98
  %v411 = vunpack.c.l.b16 %v99
  %v412 = vunpack.c.l.b16 %v100
  %v413 = vunpack.c.l.b16 %v101
  %v414 = vunpack.c.l.b16 %v102
  %v415 = vunpack.c.l.b16 %v103
  %v416 = vunpack.c.l.b16 %v104
  %v417 = vunpack.c.l.b16 %v105
  %v418 = vunpack.c.l.b16 %v106
  %v419 = vunpack.c.l.b16 %v107
  %v420 = vunpack.c.l.b16 %v108
  %v421 = vunpack.c.l.b16 %v109
  %v422 = vunpack.c.l.b16 %v110
  %v423 = vunpack.c.l.b16 %v111
  %v424 = vunpack.c.l.b16 %v112
  %v425 = vunpack.c.l.b16 %v113
  %v426 = vunpack.c.l.b16 %v114
  %v427 = vunpack.c.l.b16 %v115
  %v428 = vunpack.c.l.b16 %v116
  %v429 = vunpack.c.l.b16 %v117
  %v430 = vunpack.c.l.b16 %v118
  %v431 = vunpack.c.l.b16 %v119
  %v432 = vunpack.c.l.b16 %v120
  %v433 = vunpack.c.l.b16 %v121
  %v434 = vpack.c.b16 %v355, %v354
  %v435 = vpack.c.b16 %v357, %v356
  %v436 = vpack.c.b16 %v359, %v358
  %v437 = vpack.c.b16 %v361, %v360
  %v438 = vpack.c.b16 %v363, %v362
  %v439 = vpack.c.b16 %v365, %v364
  %v440 = vpack.c.b16 %v367, %v366
  %v441 = vpack.c.b16 %v369, %v368
  %v442 = vpack.c.b16 %v371, %v370
  %v443 = vpack.c.b16 %v373, %v372
  %v444 = vpack.c.b16 %v375, %v374
  %v445 = vpack.c.b16 %v377, %v376
  %v446 = vpack.c.b16 %v379, %v378
  %v447 = vpack.c.b16 %v381, %v380
  %v448 = vpack.c.b16 %v383, %v382
  %v449 = vpack.c.b16 %v385, %v384
  %v450 = vpack.c.b16 %v387, %v386
  %v451 = vpack.c.b16 %v389, %v388
  %v452 = vpack.c.b16 %v391, %v390
  %v453 = vpack.c.b16 %v393, %v392
  %v454 = vpack.c.b16 %v395, %v394
  %v455 = vpack.c.b16 %v397, %v396
  %v456 = vpack.c.b16 %v399, %v398
  %v457 = vpack.c.b16 %v401, %v400
  %v458 = vpack.c.b16 %v403, %v402
  %v459 = vpack.c.b16 %v405, %v404
  %v460 = vpack.c.b16 %v407, %v406
  %v461 = vpack.c.b16 %v409, %v408
  %v462 = vpack.c.b16 %v411, %v410
  %v463 = vpack.c.b16 %v413, %v412
  %v464 = vpack.c.b16 %v415, %v414
  %v465 = vpack.c.b16 %v417, %v416
  %v466 = vpack.c.b16 %v419, %v418
  %v467 = vpack.c.b16 %v421, %v420
  %v468 = vpack.c.b16 %v423, %v422
  %v469 = vpack.c.b16 %v425, %v424
  %v470 = vpack.c.b16 %v427, %v426
  %v471 = vpack.c.b16 %v429, %v428
  %v472 = vpack.c.b16 %v431, %v430
  %v473 = vpack.c.b16 %v433, %v432
  %514 = vmatprep.subr.bf16.mxu0 0
  %515 = vmatpush1.bf16.msra.mxu0 %v441
  %516 = vmatprep.subr.bf16.mxu0 0
  %517 = vmatpush1.bf16.msra.mxu0 %v440
  %518 = vmatprep.subr.bf16.mxu0 0
  %519 = vmatpush1.bf16.msra.mxu0 %v439
  %520 = vmatprep.subr.bf16.mxu0 0
  %521 = vmatpush1.bf16.msra.mxu0 %v438
  %522 = vmatprep.subr.bf16.mxu0 0
  %523 = vmatpush1.bf16.msra.mxu0 %v437
  %524 = vmatprep.subr.bf16.mxu0 0
  %525 = vmatpush1.bf16.msra.mxu0 %v436
  %526 = vmatprep.subr.bf16.mxu0 0
  %527 = vmatpush1.bf16.msra.mxu0 %v435
  %528 = vmatprep.subr.bf16.mxu0 0
  %529 = vmatpush1.bf16.msra.mxu0 %v434
  %530 = vmatprep.subr.bf16.mxu0 0
  %531 = vmatpush2.bf16.msra.mxu0 %v449
  %532 = vmatprep.subr.bf16.mxu0 0
  %533 = vmatpush2.bf16.msra.mxu0 %v448
  %534 = vmatprep.subr.bf16.mxu0 0
  %535 = vmatpush2.bf16.msra.mxu0 %v447
  %536 = vmatprep.subr.bf16.mxu0 0
  %537 = vmatpush2.bf16.msra.mxu0 %v446
  %538 = vmatprep.subr.bf16.mxu0 0
  %539 = vmatpush2.bf16.msra.mxu0 %v445
  %540 = vmatprep.subr.bf16.mxu0 0
  %541 = vmatpush2.bf16.msra.mxu0 %v444
  %542 = vmatprep.subr.bf16.mxu0 0
  %543 = vmatpush2.bf16.msra.mxu0 %v443
  %544 = vmatprep.subr.bf16.mxu0 0
  %545 = vmatpush2.bf16.msra.mxu0 %v442
  %546 = vmatprep.mubr.bf16.mxu0 %v235
  %547 = vmatmul.mubr.bf16.gmra.mxu0 %v234
  %v548 = vpop.f32.mrf.mxu0
  %v549 = vadd.f32 %v133, %v548
  %v550 = vpop.f32.mrf.mxu0
  %v551 = vpop.f32.mrf.mxu0
  %v552 = vadd.f32 %v138, %v551
  %v553 = vpop.f32.mrf.mxu0
  %554 = vmatprep.mubr.bf16.mxu0 %v240
  %555 = vmatmul.mubr.bf16.gmra.mxu0 %v239
  %v556 = vpop.f32.mrf.mxu0
  %v557 = vadd.f32 %v143, %v556
  %v558 = vpop.f32.mrf.mxu0
  %v559 = vpop.f32.mrf.mxu0
  %v560 = vadd.f32 %v148, %v559
  %v561 = vpop.f32.mrf.mxu0
  %562 = vmatprep.mubr.bf16.mxu0 %v245
  %563 = vmatmul.mubr.bf16.gmra.mxu0 %v244
  %v564 = vpop.f32.mrf.mxu0
  %v565 = vadd.f32 %v153, %v564
  %v566 = vpop.f32.mrf.mxu0
  %v567 = vpop.f32.mrf.mxu0
  %v568 = vadd.f32 %v158, %v567
  %v569 = vpop.f32.mrf.mxu0
  %570 = vmatprep.mubr.bf16.mxu0 %v250
  %571 = vmatmul.mubr.bf16.gmra.mxu0 %v249
  %v572 = vpop.f32.mrf.mxu0
  %v573 = vadd.f32 %v163, %v572
  %v574 = vpop.f32.mrf.mxu0
  %v575 = vpop.f32.mrf.mxu0
  %v576 = vadd.f32 %v168, %v575
  %v577 = vpop.f32.mrf.mxu0
  %578 = vdwg.mxu0
  %579 = vmatprep.subr.bf16.mxu0 0
  %580 = vmatpush1.bf16.msra.mxu0 %v457
  %581 = vmatprep.subr.bf16.mxu0 0
  %582 = vmatpush1.bf16.msra.mxu0 %v456
  %583 = vmatprep.subr.bf16.mxu0 0
  %584 = vmatpush1.bf16.msra.mxu0 %v455
  %585 = vmatprep.subr.bf16.mxu0 0
  %586 = vmatpush1.bf16.msra.mxu0 %v454
  %587 = vmatprep.subr.bf16.mxu0 0
  %588 = vmatpush1.bf16.msra.mxu0 %v453
  %589 = vmatprep.subr.bf16.mxu0 0
  %590 = vmatpush1.bf16.msra.mxu0 %v452
  %591 = vmatprep.subr.bf16.mxu0 0
  %592 = vmatpush1.bf16.msra.mxu0 %v451
  %593 = vmatprep.subr.bf16.mxu0 0
  %594 = vmatpush1.bf16.msra.mxu0 %v450
  %595 = vmatprep.subr.bf16.mxu0 0
  %596 = vmatpush2.bf16.msra.mxu0 %v465
  %597 = vmatprep.subr.bf16.mxu0 0
  %598 = vmatpush2.bf16.msra.mxu0 %v464
  %599 = vmatprep.subr.bf16.mxu0 0
  %600 = vmatpush2.bf16.msra.mxu0 %v463
  %601 = vmatprep.subr.bf16.mxu0 0
  %602 = vmatpush2.bf16.msra.mxu0 %v462
  %603 = vmatprep.subr.bf16.mxu0 0
  %604 = vmatpush2.bf16.msra.mxu0 %v461
  %605 = vmatprep.subr.bf16.mxu0 0
  %606 = vmatpush2.bf16.msra.mxu0 %v460
  %607 = vmatprep.subr.bf16.mxu0 0
  %608 = vmatpush2.bf16.msra.mxu0 %v459
  %609 = vmatprep.subr.bf16.mxu0 0
  %610 = vmatpush2.bf16.msra.mxu0 %v458
  %611 = vmatprep.mubr.bf16.mxu0 %v237
  %612 = vmatmul.mubr.bf16.gmra.mxu0 %v236
  %v613 = vpop.f32.mrf.mxu0
  %v614 = vadd.f32 %v549, %v613
  %v615 = vpop.f32.mrf.mxu0
  %v616 = vpop.f32.mrf.mxu0
  %v617 = vadd.f32 %v552, %v616
  %v618 = vpop.f32.mrf.mxu0
  %619 = vmatprep.mubr.bf16.mxu0 %v242
  %620 = vmatmul.mubr.bf16.gmra.mxu0 %v241
  %v621 = vpop.f32.mrf.mxu0
  %v622 = vadd.f32 %v557, %v621
  %v623 = vpop.f32.mrf.mxu0
  %v624 = vpop.f32.mrf.mxu0
  %v625 = vadd.f32 %v560, %v624
  %v626 = vpop.f32.mrf.mxu0
  %627 = vmatprep.mubr.bf16.mxu0 %v247
  %628 = vmatmul.mubr.bf16.gmra.mxu0 %v246
  %v629 = vpop.f32.mrf.mxu0
  %v630 = vadd.f32 %v565, %v629
  %v631 = vpop.f32.mrf.mxu0
  %v632 = vpop.f32.mrf.mxu0
  %v633 = vadd.f32 %v568, %v632
  %v634 = vpop.f32.mrf.mxu0
  %635 = vmatprep.mubr.bf16.mxu0 %v252
  %636 = vmatmul.mubr.bf16.gmra.mxu0 %v251
  %v637 = vpop.f32.mrf.mxu0
  %v638 = vadd.f32 %v573, %v637
  %v639 = vpop.f32.mrf.mxu0
  %v640 = vpop.f32.mrf.mxu0
  %v641 = vadd.f32 %v576, %v640
  %v642 = vpop.f32.mrf.mxu0
  %643 = vdwg.mxu0
  %644 = vmatprep.subr.bf16.mxu0 0
  %645 = vmatpush1.bf16.msra.mxu0 %v473
  %646 = vmatprep.subr.bf16.mxu0 0
  %647 = vmatpush1.bf16.msra.mxu0 %v472
  %648 = vmatprep.subr.bf16.mxu0 0
  %649 = vmatpush1.bf16.msra.mxu0 %v471
  %650 = vmatprep.subr.bf16.mxu0 0
  %651 = vmatpush1.bf16.msra.mxu0 %v470
  %652 = vmatprep.subr.bf16.mxu0 0
  %653 = vmatpush1.bf16.msra.mxu0 %v469
  %654 = vmatprep.subr.bf16.mxu0 0
  %655 = vmatpush1.bf16.msra.mxu0 %v468
  %656 = vmatprep.subr.bf16.mxu0 0
  %657 = vmatpush1.bf16.msra.mxu0 %v467
  %658 = vmatprep.subr.bf16.mxu0 0
  %659 = vmatpush1.bf16.msra.mxu0 %v466
  %660 = vmatprep.subr.bf16.mxu0 0
  %661 = vmatpush2.bf16.msra.mxu0 0
  %662 = vmatprep.subr.bf16.mxu0 0
  %663 = vmatpush2.bf16.msra.mxu0 0
  %664 = vmatprep.subr.bf16.mxu0 0
  %665 = vmatpush2.bf16.msra.mxu0 0
  %666 = vmatprep.subr.bf16.mxu0 0
  %667 = vmatpush2.bf16.msra.mxu0 0
  %668 = vmatprep.subr.bf16.mxu0 0
  %669 = vmatpush2.bf16.msra.mxu0 0
  %670 = vmatprep.subr.bf16.mxu0 0
  %671 = vmatpush2.bf16.msra.mxu0 0
  %672 = vmatprep.subr.bf16.mxu0 0
  %673 = vmatpush2.bf16.msra.mxu0 0
  %674 = vmatprep.subr.bf16.mxu0 0
  %675 = vmatpush2.bf16.msra.mxu0 0
  %676 = vmatprep.mubr.bf16.mxu0 0
  %677 = vmatmul.mubr.bf16.gmra.mxu0 %v238
  %v678 = vpop.f32.mrf.mxu0
  %v679 = vadd.f32 %v614, %v678
  %v680 = vpop.f32.mrf.mxu0
  %v681 = vpop.f32.mrf.mxu0
  %v682 = vadd.f32 %v617, %v681
  %v683 = vpop.f32.mrf.mxu0
  %684 = vmatprep.mubr.bf16.mxu0 0
  %685 = vmatmul.mubr.bf16.gmra.mxu0 %v243
  %v686 = vpop.f32.mrf.mxu0
  %v687 = vadd.f32 %v622, %v686
  %v688 = vpop.f32.mrf.mxu0
  %v689 = vpop.f32.mrf.mxu0
  %v690 = vadd.f32 %v625, %v689
  %v691 = vpop.f32.mrf.mxu0
  %692 = vmatprep.mubr.bf16.mxu0 0
  %693 = vmatmul.mubr.bf16.gmra.mxu0 %v248
  %v694 = vpop.f32.mrf.mxu0
  %v695 = vadd.f32 %v630, %v694
  %v696 = vpop.f32.mrf.mxu0
  %v697 = vpop.f32.mrf.mxu0
  %v698 = vadd.f32 %v633, %v697
  %v699 = vpop.f32.mrf.mxu0
  %700 = vmatprep.mubr.bf16.mxu0 0
  %701 = vmatmul.mubr.bf16.gmra.mxu0 %v253
  %v702 = vpop.f32.mrf.mxu0
  %v703 = vadd.f32 %v638, %v702
  %v704 = vpop.f32.mrf.mxu0
  %v705 = vpop.f32.mrf.mxu0
  %v706 = vadd.f32 %v641, %v705
  %v707 = vpop.f32.mrf.mxu0
  %708 = vdwg.mxu0
  %v709 = vld [vmem:[%s3] sm:$0xf]
  %v710 = vld [vmem:[%s3 + $0x4] sm:$0xf]
  %v711 = vld [vmem:[%s3 + $0x8] sm:$0xf]
  %v712 = vld [vmem:[%s3 + $0xc] sm:$0xf]
  %v713 = vld [vmem:[%s3 + $0x10] sm:$0xf]
  %v714 = vld [vmem:[%s3 + $0x14] sm:$0xf]
  %v715 = vld [vmem:[%s3 + $0x18] sm:$0xf]
  %v716 = vld [vmem:[%s3 + $0x1c] sm:$0xf]
  %v717 = vunpack.c.l.bf16 %v709
  %v718 = vunpack.c.l.bf16 %v710
  %v719 = vunpack.c.l.bf16 %v711
  %v720 = vunpack.c.l.bf16 %v712
  %v721 = vunpack.c.l.bf16 %v713
  %v722 = vunpack.c.l.bf16 %v714
  %v723 = vunpack.c.l.bf16 %v715
  %v724 = vunpack.c.l.bf16 %v716
  %v725 = vadd.f32 %v679, %v717
  %v726 = vadd.f32 %v682, %v718
  %v727 = vadd.f32 %v687, %v719
  %v728 = vadd.f32 %v690, %v720
  %v729 = vadd.f32 %v695, %v721
  %v730 = vadd.f32 %v698, %v722
  %v731 = vadd.f32 %v703, %v723
  %v732 = vadd.f32 %v706, %v724
  %v733 = vmax.f32 %v725, 0.0
  %v734 = vmax.f32 %v726, 0.0
  %v735 = vmax.f32 %v727, 0.0
  %v736 = vmax.f32 %v728, 0.0
  %v737 = vmax.f32 %v729, 0.0
  %v738 = vmax.f32 %v730, 0.0
  %v739 = vmax.f32 %v731, 0.0
  %v740 = vmax.f32 %v732, 0.0
  %741 = vst [vmem:[%s4] sm:$0xff] %v733
  %742 = vst [vmem:[%s4 + $0x8] sm:$0xff] %v734
  %743 = vst [vmem:[%s4 + $0x10] sm:$0xff] %v735
  %744 = vst [vmem:[%s4 + $0x18] sm:$0xff] %v736
  %745 = vst [vmem:[%s4 + $0x20] sm:$0xff] %v737
  %746 = vst [vmem:[%s4 + $0x28] sm:$0xff] %v738
  %747 = vst [vmem:[%s4 + $0x30] sm:$0xff] %v739
  %748 = vst [vmem:[%s4 + $0x38] sm:$0xff] %v740
  // Predicated region
  $region18: #{resnet_forward.23} parent=0 // pred_check
    _
  $region19: #{resnet_forward.23} parent=0 // pred_check_branch
    %750 = sbr.rel (0) target = $region21
  $region20: #{resnet_forward.23} parent=0 // pred_region
    _
  $region21: #{resnet_forward.23} parent=0 // pred_fallthru
    _
  // Predicated region
  $region22: #{resnet_forward.23} parent=0 // pred_check
    _
  $region23: #{resnet_forward.23} parent=0 // pred_check_branch
    %752 = sbr.rel (0) target = $region25
  $region24: #{resnet_forward.23} parent=0 // pred_region
    _
  $region25: #{resnet_forward.23} parent=0 // pred_fallthru
    _

// kernel: resnet_forward.24
$region0: #{resnet_forward.24}
  #allocation0 [shape = 'u32[]', space=smem, size = 0x4, offset = 0x4, fixed_abs, tag = 'smem constant byte address 0x4 - core index']
  #allocation1 [shape = 'u32[144,128]{1,0:T(1,128)}', space=vmem, size = 0x12000, scoped, tag = 'internal scratch']
  %s0 = inlined_call_operand.vmem [shape: bf16[128,640], index: 0, kind: input, shape index: {}]
  %s1 = inlined_call_operand.vmem [shape: bf16[640,128], index: 1, kind: input, shape index: {}]
  %s2 = inlined_call_operand.vmem [shape: f32[128,1], index: 2, kind: input, shape index: {}]
  %s3 = inlined_call_operand.vmem [shape: f32[128,128], index: 3, kind: output, shape index: {}]
  %s4 = sld [smem:[#allocation0]]
  $region22: #{resnet_forward.24} parent=0
    _
  %s6 = ssub.s32 1, %s4
  %s7 = scalar_select 0, %s6, %s4
  // Predicated region
  $region2: #{resnet_forward.24} parent=0 // pred_check
    _
  $region3: #{resnet_forward.24} parent=0 // pred_check_branch
    %9 = sbr.rel (0) target = $region5
  $region4: #{resnet_forward.24} parent=0 // pred_region
    _
  $region5: #{resnet_forward.24} parent=0 // pred_fallthru
    _
  // Predicated region
  $region6: #{resnet_forward.24} parent=0 // pred_check
    _
  $region7: #{resnet_forward.24} parent=0 // pred_check_branch
    %11 = sbr.rel (0) target = $region9
  $region8: #{resnet_forward.24} parent=0 // pred_region
    _
  $region9: #{resnet_forward.24} parent=0 // pred_fallthru
    _
  // Predicated region
  $region10: #{resnet_forward.24} parent=0 // pred_check
    _
  $region11: #{resnet_forward.24} parent=0 // pred_check_branch
    %13 = sbr.rel (0) target = $region13
  $region12: #{resnet_forward.24} parent=0 // pred_region
    _
  $region13: #{resnet_forward.24} parent=0 // pred_fallthru
    _
  %v15 = vld [vmem:[%s0] sm:$0xff]
  %v16 = vld [vmem:[%s0 + $0x8] sm:$0xff]
  %v17 = vld [vmem:[%s0 + $0x10] sm:$0xf]
  %v18 = vld [vmem:[%s0 + $0x14] sm:$0xff]
  %v19 = vld [vmem:[%s0 + $0x1c] sm:$0xff]
  %v20 = vld [vmem:[%s0 + $0x24] sm:$0xf]
  %v21 = vld [vmem:[%s0 + $0x28] sm:$0xff]
  %v22 = vld [vmem:[%s0 + $0x30] sm:$0xff]
  %v23 = vld [vmem:[%s0 + $0x38] sm:$0xf]
  %v24 = vld [vmem:[%s0 + $0x3c] sm:$0xff]
  %v25 = vld [vmem:[%s0 + $0x44] sm:$0xff]
  %v26 = vld [vmem:[%s0 + $0x4c] sm:$0xf]
  %v27 = vld [vmem:[%s0 + $0x50] sm:$0xff]
  %v28 = vld [vmem:[%s0 + $0x58] sm:$0xff]
  %v29 = vld [vmem:[%s0 + $0x60] sm:$0xf]
  %v30 = vld [vmem:[%s0 + $0x64] sm:$0xff]
  %v31 = vld [vmem:[%s0 + $0x6c] sm:$0xff]
  %v32 = vld [vmem:[%s0 + $0x74] sm:$0xf]
  %v33 = vld [vmem:[%s0 + $0x78] sm:$0xff]
  %v34 = vld [vmem:[%s0 + $0x80] sm:$0xff]
  %v35 = vld [vmem:[%s0 + $0x88] sm:$0xf]
  %v36 = vld [vmem:[%s0 + $0x8c] sm:$0xff]
  %v37 = vld [vmem:[%s0 + $0x94] sm:$0xff]
  %v38 = vld [vmem:[%s0 + $0x9c] sm:$0xf]
  %v39 = vld [vmem:[%s0 + $0xa0] sm:$0xff]
  %v40 = vld [vmem:[%s0 + $0xa8] sm:$0xff]
  %v41 = vld [vmem:[%s0 + $0xb0] sm:$0xf]
  %v42 = vld [vmem:[%s0 + $0xb4] sm:$0xff]
  %v43 = vld [vmem:[%s0 + $0xbc] sm:$0xff]
  %v44 = vld [vmem:[%s0 + $0xc4] sm:$0xf]
  %v45 = vld [vmem:[%s0 + $0xc8] sm:$0xff]
  %v46 = vld [vmem:[%s0 + $0xd0] sm:$0xff]
  %v47 = vld [vmem:[%s0 + $0xd8] sm:$0xf]
  %v48 = vld [vmem:[%s0 + $0xdc] sm:$0xff]
  %v49 = vld [vmem:[%s0 + $0xe4] sm:$0xff]
  %v50 = vld [vmem:[%s0 + $0xec] sm:$0xf]
  %v51 = vld [vmem:[%s0 + $0xf0] sm:$0xff]
  %v52 = vld [vmem:[%s0 + $0xf8] sm:$0xff]
  %v53 = vld [vmem:[%s0 + $0x100] sm:$0xf]
  %v54 = vld [vmem:[%s0 + $0x104] sm:$0xff]
  %v55 = vld [vmem:[%s0 + $0x10c] sm:$0xff]
  %v56 = vld [vmem:[%s0 + $0x114] sm:$0xf]
  %v57 = vld [vmem:[%s0 + $0x118] sm:$0xff]
  %v58 = vld [vmem:[%s0 + $0x120] sm:$0xff]
  %v59 = vld [vmem:[%s0 + $0x128] sm:$0xf]
  %v60 = vld [vmem:[%s0 + $0x12c] sm:$0xff]
  %v61 = vld [vmem:[%s0 + $0x134] sm:$0xff]
  %v62 = vld [vmem:[%s0 + $0x13c] sm:$0xf]
  %v63 = vld [vmem:[%s1] sm:$0xf]
  %v64 = vld [vmem:[%s1 + $0x4] sm:$0xf]
  %v65 = vld [vmem:[%s1 + $0x8] sm:$0xf]
  %v66 = vld [vmem:[%s1 + $0xc] sm:$0xf]
  %v67 = vld [vmem:[%s1 + $0x10] sm:$0xf]
  %v68 = vld [vmem:[%s1 + $0x14] sm:$0xf]
  %v69 = vld [vmem:[%s1 + $0x18] sm:$0xf]
  %v70 = vld [vmem:[%s1 + $0x1c] sm:$0xf]
  %v71 = vld [vmem:[%s1 + $0x20] sm:$0xf]
  %v72 = vld [vmem:[%s1 + $0x24] sm:$0xf]
  %v73 = vld [vmem:[%s1 + $0x28] sm:$0xf]
  %v74 = vld [vmem:[%s1 + $0x2c] sm:$0xf]
  %v75 = vld [vmem:[%s1 + $0x30] sm:$0xf]
  %v76 = vld [vmem:[%s1 + $0x34] sm:$0xf]
  %v77 = vld [vmem:[%s1 + $0x38] sm:$0xf]
  %v78 = vld [vmem:[%s1 + $0x3c] sm:$0xf]
  %v79 = vld [vmem:[%s1 + $0x40] sm:$0xf]
  %v80 = vld [vmem:[%s1 + $0x44] sm:$0xf]
  %v81 = vld [vmem:[%s1 + $0x48] sm:$0xf]
  %v82 = vld [vmem:[%s1 + $0x4c] sm:$0xf]
  %v83 = vld [vmem:[%s1 + $0x50] sm:$0xf]
  %v84 = vld [vmem:[%s1 + $0x54] sm:$0xf]
  %v85 = vld [vmem:[%s1 + $0x58] sm:$0xf]
  %v86 = vld [vmem:[%s1 + $0x5c] sm:$0xf]
  %v87 = vld [vmem:[%s1 + $0x60] sm:$0xf]
  %v88 = vld [vmem:[%s1 + $0x64] sm:$0xf]
  %v89 = vld [vmem:[%s1 + $0x68] sm:$0xf]
  %v90 = vld [vmem:[%s1 + $0x6c] sm:$0xf]
  %v91 = vld [vmem:[%s1 + $0x70] sm:$0xf]
  %v92 = vld [vmem:[%s1 + $0x74] sm:$0xf]
  %v93 = vld [vmem:[%s1 + $0x78] sm:$0xf]
  %v94 = vld [vmem:[%s1 + $0x7c] sm:$0xf]
  %v95 = vld [vmem:[%s1 + $0x80] sm:$0xf]
  %v96 = vld [vmem:[%s1 + $0x84] sm:$0xf]
  %v97 = vld [vmem:[%s1 + $0x88] sm:$0xf]
  %v98 = vld [vmem:[%s1 + $0x8c] sm:$0xf]
  %v99 = vld [vmem:[%s1 + $0x90] sm:$0xf]
  %v100 = vld [vmem:[%s1 + $0x94] sm:$0xf]
  %v101 = vld [vmem:[%s1 + $0x98] sm:$0xf]
  %v102 = vld [vmem:[%s1 + $0x9c] sm:$0xf]
  %v103 = vld [vmem:[%s1 + $0xa0] sm:$0xf]
  %v104 = vld [vmem:[%s1 + $0xa4] sm:$0xf]
  %v105 = vld [vmem:[%s1 + $0xa8] sm:$0xf]
  %v106 = vld [vmem:[%s1 + $0xac] sm:$0xf]
  %v107 = vld [vmem:[%s1 + $0xb0] sm:$0xf]
  %v108 = vld [vmem:[%s1 + $0xb4] sm:$0xf]
  %v109 = vld [vmem:[%s1 + $0xb8] sm:$0xf]
  %v110 = vld [vmem:[%s1 + $0xbc] sm:$0xf]
  %v111 = vld [vmem:[%s1 + $0xc0] sm:$0xf]
  %v112 = vld [vmem:[%s1 + $0xc4] sm:$0xf]
  %v113 = vld [vmem:[%s1 + $0xc8] sm:$0xf]
  %v114 = vld [vmem:[%s1 + $0xcc] sm:$0xf]
  %v115 = vld [vmem:[%s1 + $0xd0] sm:$0xf]
  %v116 = vld [vmem:[%s1 + $0xd4] sm:$0xf]
  %v117 = vld [vmem:[%s1 + $0xd8] sm:$0xf]
  %v118 = vld [vmem:[%s1 + $0xdc] sm:$0xf]
  %v119 = vld [vmem:[%s1 + $0xe0] sm:$0xf]
  %v120 = vld [vmem:[%s1 + $0xe4] sm:$0xf]
  %v121 = vld [vmem:[%s1 + $0xe8] sm:$0xf]
  %v122 = vld [vmem:[%s1 + $0xec] sm:$0xf]
  %v123 = vld [vmem:[%s1 + $0xf0] sm:$0xf]
  %v124 = vld [vmem:[%s1 + $0xf4] sm:$0xf]
  %v125 = vld [vmem:[%s1 + $0xf8] sm:$0xf]
  %v126 = vld [vmem:[%s1 + $0xfc] sm:$0xf]
  %v127 = vld [vmem:[%s1 + $0x100] sm:$0xf]
  %v128 = vld [vmem:[%s1 + $0x104] sm:$0xf]
  %v129 = vld [vmem:[%s1 + $0x108] sm:$0xf]
  %v130 = vld [vmem:[%s1 + $0x10c] sm:$0xf]
  %v131 = vld [vmem:[%s1 + $0x110] sm:$0xf]
  %v132 = vld [vmem:[%s1 + $0x114] sm:$0xf]
  %v133 = vld [vmem:[%s1 + $0x118] sm:$0xf]
  %v134 = vld [vmem:[%s1 + $0x11c] sm:$0xf]
  %v135 = vld [vmem:[%s1 + $0x120] sm:$0xf]
  %v136 = vld [vmem:[%s1 + $0x124] sm:$0xf]
  %v137 = vld [vmem:[%s1 + $0x128] sm:$0xf]
  %v138 = vld [vmem:[%s1 + $0x12c] sm:$0xf]
  %v139 = vld [vmem:[%s1 + $0x130] sm:$0xf]
  %v140 = vld [vmem:[%s1 + $0x134] sm:$0xf]
  %v141 = vld [vmem:[%s1 + $0x138] sm:$0xf]
  %v142 = vld [vmem:[%s1 + $0x13c] sm:$0xf]
  %v143 = vld [vmem:[%s2] sm:$0xff]
  %v144 = vld [vmem:[%s2 + $0x8] sm:$0xff]
  %v145 = vld [vmem:[%s2 + $0x10] sm:$0xff]
  %v146 = vld [vmem:[%s2 + $0x18] sm:$0xff]
  %v147 = vld [vmem:[%s2 + $0x20] sm:$0xff]
  %v148 = vld [vmem:[%s2 + $0x28] sm:$0xff]
  %v149 = vld [vmem:[%s2 + $0x30] sm:$0xff]
  %v150 = vld [vmem:[%s2 + $0x38] sm:$0xff]
  %v151 = vld [vmem:[%s2 + $0x40] sm:$0xff]
  %v152 = vld [vmem:[%s2 + $0x48] sm:$0xff]
  %v153 = vld [vmem:[%s2 + $0x50] sm:$0xff]
  %v154 = vld [vmem:[%s2 + $0x58] sm:$0xff]
  %v155 = vld [vmem:[%s2 + $0x60] sm:$0xff]
  %v156 = vld [vmem:[%s2 + $0x68] sm:$0xff]
  %v157 = vld [vmem:[%s2 + $0x70] sm:$0xff]
  %v158 = vld [vmem:[%s2 + $0x78] sm:$0xff]
  %160 = vset.pattern.permute.xlu0 0
  %161 = vperm.xlu0 %160, %v143
  %v162 = vpop.permute.xlu0 %161
  %165 = vset.pattern.permute.xlu0 0
  %166 = vperm.xlu0 %165, %v144
  %v167 = vpop.permute.xlu0 %166
  %170 = vset.pattern.permute.xlu0 0
  %171 = vperm.xlu0 %170, %v145
  %v172 = vpop.permute.xlu0 %171
  %175 = vset.pattern.permute.xlu0 0
  %176 = vperm.xlu0 %175, %v146
  %v177 = vpop.permute.xlu0 %176
  %180 = vset.pattern.permute.xlu0 0
  %181 = vperm.xlu0 %180, %v147
  %v182 = vpop.permute.xlu0 %181
  %185 = vset.pattern.permute.xlu0 0
  %186 = vperm.xlu0 %185, %v148
  %v187 = vpop.permute.xlu0 %186
  %190 = vset.pattern.permute.xlu0 0
  %191 = vperm.xlu0 %190, %v149
  %v192 = vpop.permute.xlu0 %191
  %195 = vset.pattern.permute.xlu0 0
  %196 = vperm.xlu0 %195, %v150
  %v197 = vpop.permute.xlu0 %196
  %200 = vset.pattern.permute.xlu0 0
  %201 = vperm.xlu0 %200, %v151
  %v202 = vpop.permute.xlu0 %201
  %205 = vset.pattern.permute.xlu0 0
  %206 = vperm.xlu0 %205, %v152
  %v207 = vpop.permute.xlu0 %206
  %210 = vset.pattern.permute.xlu0 0
  %211 = vperm.xlu0 %210, %v153
  %v212 = vpop.permute.xlu0 %211
  %215 = vset.pattern.permute.xlu0 0
  %216 = vperm.xlu0 %215, %v154
  %v217 = vpop.permute.xlu0 %216
  %220 = vset.pattern.permute.xlu0 0
  %221 = vperm.xlu0 %220, %v155
  %v222 = vpop.permute.xlu0 %221
  %225 = vset.pattern.permute.xlu0 0
  %226 = vperm.xlu0 %225, %v156
  %v227 = vpop.permute.xlu0 %226
  %230 = vset.pattern.permute.xlu0 0
  %231 = vperm.xlu0 %230, %v157
  %v232 = vpop.permute.xlu0 %231
  %235 = vset.pattern.permute.xlu0 0
  %236 = vperm.xlu0 %235, %v158
  %v237 = vpop.permute.xlu0 %236
  %v287 = vunpack.c.l.b16 %v15
  %v288 = vunpack.c.h.b16 %v15
  %v289 = vunpack.c.l.b16 %v16
  %v290 = vunpack.c.h.b16 %v16
  %v291 = vunpack.c.l.b16 %v17
  %v292 = vunpack.c.l.b16 %v18
  %v293 = vunpack.c.h.b16 %v18
  %v294 = vunpack.c.l.b16 %v19
  %v295 = vunpack.c.h.b16 %v19
  %v296 = vunpack.c.l.b16 %v20
  %v297 = vunpack.c.l.b16 %v21
  %v298 = vunpack.c.h.b16 %v21
  %v299 = vunpack.c.l.b16 %v22
  %v300 = vunpack.c.h.b16 %v22
  %v301 = vunpack.c.l.b16 %v23
  %v302 = vunpack.c.l.b16 %v24
  %v303 = vunpack.c.h.b16 %v24
  %v304 = vunpack.c.l.b16 %v25
  %v305 = vunpack.c.h.b16 %v25
  %v306 = vunpack.c.l.b16 %v26
  %v307 = vunpack.c.l.b16 %v27
  %v308 = vunpack.c.h.b16 %v27
  %v309 = vunpack.c.l.b16 %v28
  %v310 = vunpack.c.h.b16 %v28
  %v311 = vunpack.c.l.b16 %v29
  %v312 = vunpack.c.l.b16 %v30
  %v313 = vunpack.c.h.b16 %v30
  %v314 = vunpack.c.l.b16 %v31
  %v315 = vunpack.c.h.b16 %v31
  %v316 = vunpack.c.l.b16 %v32
  %v317 = vunpack.c.l.b16 %v33
  %v318 = vunpack.c.h.b16 %v33
  %v319 = vunpack.c.l.b16 %v34
  %v320 = vunpack.c.h.b16 %v34
  %v321 = vunpack.c.l.b16 %v35
  %v322 = vunpack.c.l.b16 %v36
  %v323 = vunpack.c.h.b16 %v36
  %v324 = vunpack.c.l.b16 %v37
  %v325 = vunpack.c.h.b16 %v37
  %v326 = vunpack.c.l.b16 %v38
  %v327 = vunpack.c.l.b16 %v39
  %v328 = vunpack.c.h.b16 %v39
  %v329 = vunpack.c.l.b16 %v40
  %v330 = vunpack.c.h.b16 %v40
  %v331 = vunpack.c.l.b16 %v41
  %v332 = vunpack.c.l.b16 %v42
  %v333 = vunpack.c.h.b16 %v42
  %v334 = vunpack.c.l.b16 %v43
  %v335 = vunpack.c.h.b16 %v43
  %v336 = vunpack.c.l.b16 %v44
  %v337 = vunpack.c.l.b16 %v45
  %v338 = vunpack.c.h.b16 %v45
  %v339 = vunpack.c.l.b16 %v46
  %v340 = vunpack.c.h.b16 %v46
  %v341 = vunpack.c.l.b16 %v47
  %v342 = vunpack.c.l.b16 %v48
  %v343 = vunpack.c.h.b16 %v48
  %v344 = vunpack.c.l.b16 %v49
  %v345 = vunpack.c.h.b16 %v49
  %v346 = vunpack.c.l.b16 %v50
  %v347 = vunpack.c.l.b16 %v51
  %v348 = vunpack.c.h.b16 %v51
  %v349 = vunpack.c.l.b16 %v52
  %v350 = vunpack.c.h.b16 %v52
  %v351 = vunpack.c.l.b16 %v53
  %v352 = vunpack.c.l.b16 %v54
  %v353 = vunpack.c.h.b16 %v54
  %v354 = vunpack.c.l.b16 %v55
  %v355 = vunpack.c.h.b16 %v55
  %v356 = vunpack.c.l.b16 %v56
  %v357 = vunpack.c.l.b16 %v57
  %v358 = vunpack.c.h.b16 %v57
  %v359 = vunpack.c.l.b16 %v58
  %v360 = vunpack.c.h.b16 %v58
  %v361 = vunpack.c.l.b16 %v59
  %v362 = vunpack.c.l.b16 %v60
  %v363 = vunpack.c.h.b16 %v60
  %v364 = vunpack.c.l.b16 %v61
  %v365 = vunpack.c.h.b16 %v61
  %v366 = vunpack.c.l.b16 %v62
  %v367 = vpack.c.b16 %v292, %v287
  %v368 = vpack.c.b16 %v293, %v288
  %v369 = vpack.c.b16 %v294, %v289
  %v370 = vpack.c.b16 %v295, %v290
  %v371 = vpack.c.b16 %v296, %v291
  %v372 = vpack.c.b16 %v302, %v297
  %v373 = vpack.c.b16 %v303, %v298
  %v374 = vpack.c.b16 %v304, %v299
  %v375 = vpack.c.b16 %v305, %v300
  %v376 = vpack.c.b16 %v306, %v301
  %v377 = vpack.c.b16 %v312, %v307
  %v378 = vpack.c.b16 %v313, %v308
  %v379 = vpack.c.b16 %v314, %v309
  %v380 = vpack.c.b16 %v315, %v310
  %v381 = vpack.c.b16 %v316, %v311
  %v382 = vpack.c.b16 %v322, %v317
  %v383 = vpack.c.b16 %v323, %v318
  %v384 = vpack.c.b16 %v324, %v319
  %v385 = vpack.c.b16 %v325, %v320
  %v386 = vpack.c.b16 %v326, %v321
  %v387 = vpack.c.b16 %v332, %v327
  %v388 = vpack.c.b16 %v333, %v328
  %v389 = vpack.c.b16 %v334, %v329
  %v390 = vpack.c.b16 %v335, %v330
  %v391 = vpack.c.b16 %v336, %v331
  %v392 = vpack.c.b16 %v342, %v337
  %v393 = vpack.c.b16 %v343, %v338
  %v394 = vpack.c.b16 %v344, %v339
  %v395 = vpack.c.b16 %v345, %v340
  %v396 = vpack.c.b16 %v346, %v341
  %v397 = vpack.c.b16 %v352, %v347
  %v398 = vpack.c.b16 %v353, %v348
  %v399 = vpack.c.b16 %v354, %v349
  %v400 = vpack.c.b16 %v355, %v350
  %v401 = vpack.c.b16 %v356, %v351
  %v402 = vpack.c.b16 %v362, %v357
  %v403 = vpack.c.b16 %v363, %v358
  %v404 = vpack.c.b16 %v364, %v359
  %v405 = vpack.c.b16 %v365, %v360
  %v406 = vpack.c.b16 %v366, %v361
  %v527 = vunpack.c.l.b16 %v63
  %v528 = vunpack.c.l.b16 %v64
  %v529 = vunpack.c.l.b16 %v65
  %v530 = vunpack.c.l.b16 %v66
  %v531 = vunpack.c.l.b16 %v67
  %v532 = vunpack.c.l.b16 %v68
  %v533 = vunpack.c.l.b16 %v69
  %v534 = vunpack.c.l.b16 %v70
  %v535 = vunpack.c.l.b16 %v71
  %v536 = vunpack.c.l.b16 %v72
  %v537 = vunpack.c.l.b16 %v73
  %v538 = vunpack.c.l.b16 %v74
  %v539 = vunpack.c.l.b16 %v75
  %v540 = vunpack.c.l.b16 %v76
  %v541 = vunpack.c.l.b16 %v77
  %v542 = vunpack.c.l.b16 %v78
  %v543 = vunpack.c.l.b16 %v79
  %v544 = vunpack.c.l.b16 %v80
  %v545 = vunpack.c.l.b16 %v81
  %v546 = vunpack.c.l.b16 %v82
  %v547 = vunpack.c.l.b16 %v83
  %v548 = vunpack.c.l.b16 %v84
  %v549 = vunpack.c.l.b16 %v85
  %v550 = vunpack.c.l.b16 %v86
  %v551 = vunpack.c.l.b16 %v87
  %v552 = vunpack.c.l.b16 %v88
  %v553 = vunpack.c.l.b16 %v89
  %v554 = vunpack.c.l.b16 %v90
  %v555 = vunpack.c.l.b16 %v91
  %v556 = vunpack.c.l.b16 %v92
  %v557 = vunpack.c.l.b16 %v93
  %v558 = vunpack.c.l.b16 %v94
  %v559 = vunpack.c.l.b16 %v95
  %v560 = vunpack.c.l.b16 %v96
  %v561 = vunpack.c.l.b16 %v97
  %v562 = vunpack.c.l.b16 %v98
  %v563 = vunpack.c.l.b16 %v99
  %v564 = vunpack.c.l.b16 %v100
  %v565 = vunpack.c.l.b16 %v101
  %v566 = vunpack.c.l.b16 %v102
  %v567 = vunpack.c.l.b16 %v103
  %v568 = vunpack.c.l.b16 %v104
  %v569 = vunpack.c.l.b16 %v105
  %v570 = vunpack.c.l.b16 %v106
  %v571 = vunpack.c.l.b16 %v107
  %v572 = vunpack.c.l.b16 %v108
  %v573 = vunpack.c.l.b16 %v109
  %v574 = vunpack.c.l.b16 %v110
  %v575 = vunpack.c.l.b16 %v111
  %v576 = vunpack.c.l.b16 %v112
  %v577 = vunpack.c.l.b16 %v113
  %v578 = vunpack.c.l.b16 %v114
  %v579 = vunpack.c.l.b16 %v115
  %v580 = vunpack.c.l.b16 %v116
  %v581 = vunpack.c.l.b16 %v117
  %v582 = vunpack.c.l.b16 %v118
  %v583 = vunpack.c.l.b16 %v119
  %v584 = vunpack.c.l.b16 %v120
  %v585 = vunpack.c.l.b16 %v121
  %v586 = vunpack.c.l.b16 %v122
  %v587 = vunpack.c.l.b16 %v123
  %v588 = vunpack.c.l.b16 %v124
  %v589 = vunpack.c.l.b16 %v125
  %v590 = vunpack.c.l.b16 %v126
  %v591 = vunpack.c.l.b16 %v127
  %v592 = vunpack.c.l.b16 %v128
  %v593 = vunpack.c.l.b16 %v129
  %v594 = vunpack.c.l.b16 %v130
  %v595 = vunpack.c.l.b16 %v131
  %v596 = vunpack.c.l.b16 %v132
  %v597 = vunpack.c.l.b16 %v133
  %v598 = vunpack.c.l.b16 %v134
  %v599 = vunpack.c.l.b16 %v135
  %v600 = vunpack.c.l.b16 %v136
  %v601 = vunpack.c.l.b16 %v137
  %v602 = vunpack.c.l.b16 %v138
  %v603 = vunpack.c.l.b16 %v139
  %v604 = vunpack.c.l.b16 %v140
  %v605 = vunpack.c.l.b16 %v141
  %v606 = vunpack.c.l.b16 %v142
  %v607 = vpack.c.b16 %v528, %v527
  %v608 = vpack.c.b16 %v530, %v529
  %v609 = vpack.c.b16 %v532, %v531
  %v610 = vpack.c.b16 %v534, %v533
  %v611 = vpack.c.b16 %v536, %v535
  %v612 = vpack.c.b16 %v538, %v537
  %v613 = vpack.c.b16 %v540, %v539
  %v614 = vpack.c.b16 %v542, %v541
  %v615 = vpack.c.b16 %v544, %v543
  %v616 = vpack.c.b16 %v546, %v545
  %v617 = vpack.c.b16 %v548, %v547
  %v618 = vpack.c.b16 %v550, %v549
  %v619 = vpack.c.b16 %v552, %v551
  %v620 = vpack.c.b16 %v554, %v553
  %v621 = vpack.c.b16 %v556, %v555
  %v622 = vpack.c.b16 %v558, %v557
  %v623 = vpack.c.b16 %v560, %v559
  %v624 = vpack.c.b16 %v562, %v561
  %v625 = vpack.c.b16 %v564, %v563
  %v626 = vpack.c.b16 %v566, %v565
  %v627 = vpack.c.b16 %v568, %v567
  %v628 = vpack.c.b16 %v570, %v569
  %v629 = vpack.c.b16 %v572, %v571
  %v630 = vpack.c.b16 %v574, %v573
  %v631 = vpack.c.b16 %v576, %v575
  %v632 = vpack.c.b16 %v578, %v577
  %v633 = vpack.c.b16 %v580, %v579
  %v634 = vpack.c.b16 %v582, %v581
  %v635 = vpack.c.b16 %v584, %v583
  %v636 = vpack.c.b16 %v586, %v585
  %v637 = vpack.c.b16 %v588, %v587
  %v638 = vpack.c.b16 %v590, %v589
  %v639 = vpack.c.b16 %v592, %v591
  %v640 = vpack.c.b16 %v594, %v593
  %v641 = vpack.c.b16 %v596, %v595
  %v642 = vpack.c.b16 %v598, %v597
  %v643 = vpack.c.b16 %v600, %v599
  %v644 = vpack.c.b16 %v602, %v601
  %v645 = vpack.c.b16 %v604, %v603
  %v646 = vpack.c.b16 %v606, %v605
  %687 = vmatprep.subr.bf16.mxu0 0
  %688 = vmatpush1.bf16.msra.mxu0 %v614
  %689 = vmatprep.subr.bf16.mxu0 0
  %690 = vmatpush1.bf16.msra.mxu0 %v613
  %691 = vmatprep.subr.bf16.mxu0 0
  %692 = vmatpush1.bf16.msra.mxu0 %v612
  %693 = vmatprep.subr.bf16.mxu0 0
  %694 = vmatpush1.bf16.msra.mxu0 %v611
  %695 = vmatprep.subr.bf16.mxu0 0
  %696 = vmatpush1.bf16.msra.mxu0 %v610
  %697 = vmatprep.subr.bf16.mxu0 0
  %698 = vmatpush1.bf16.msra.mxu0 %v609
  %699 = vmatprep.subr.bf16.mxu0 0
  %700 = vmatpush1.bf16.msra.mxu0 %v608
  %701 = vmatprep.subr.bf16.mxu0 0
  %702 = vmatpush1.bf16.msra.mxu0 %v607
  %703 = vmatprep.subr.bf16.mxu0 0
  %704 = vmatpush2.bf16.msra.mxu0 %v622
  %705 = vmatprep.subr.bf16.mxu0 0
  %706 = vmatpush2.bf16.msra.mxu0 %v621
  %707 = vmatprep.subr.bf16.mxu0 0
  %708 = vmatpush2.bf16.msra.mxu0 %v620
  %709 = vmatprep.subr.bf16.mxu0 0
  %710 = vmatpush2.bf16.msra.mxu0 %v619
  %711 = vmatprep.subr.bf16.mxu0 0
  %712 = vmatpush2.bf16.msra.mxu0 %v618
  %713 = vmatprep.subr.bf16.mxu0 0
  %714 = vmatpush2.bf16.msra.mxu0 %v617
  %715 = vmatprep.subr.bf16.mxu0 0
  %716 = vmatpush2.bf16.msra.mxu0 %v616
  %717 = vmatprep.subr.bf16.mxu0 0
  %718 = vmatpush2.bf16.msra.mxu0 %v615
  %719 = vmatprep.mubr.bf16.mxu0 %v368
  %720 = vmatmul.mubr.bf16.gmra.mxu0 %v367
  %v721 = vpop.f32.mrf.mxu0
  %v722 = vadd.f32 %v162, %v721
  %v723 = vpop.f32.mrf.mxu0
  %v724 = vpop.f32.mrf.mxu0
  %v725 = vadd.f32 %v167, %v724
  %v726 = vpop.f32.mrf.mxu0
  %727 = vmatprep.mubr.bf16.mxu0 %v373
  %728 = vmatmul.mubr.bf16.gmra.mxu0 %v372
  %v729 = vpop.f32.mrf.mxu0
  %v730 = vadd.f32 %v172, %v729
  %v731 = vpop.f32.mrf.mxu0
  %v732 = vpop.f32.mrf.mxu0
  %v733 = vadd.f32 %v177, %v732
  %v734 = vpop.f32.mrf.mxu0
  %735 = vmatprep.mubr.bf16.mxu0 %v378
  %736 = vmatmul.mubr.bf16.gmra.mxu0 %v377
  %v737 = vpop.f32.mrf.mxu0
  %v738 = vadd.f32 %v182, %v737
  %v739 = vpop.f32.mrf.mxu0
  %v740 = vpop.f32.mrf.mxu0
  %v741 = vadd.f32 %v187, %v740
  %v742 = vpop.f32.mrf.mxu0
  %743 = vmatprep.mubr.bf16.mxu0 %v383
  %744 = vmatmul.mubr.bf16.gmra.mxu0 %v382
  %v745 = vpop.f32.mrf.mxu0
  %v746 = vadd.f32 %v192, %v745
  %v747 = vpop.f32.mrf.mxu0
  %v748 = vpop.f32.mrf.mxu0
  %v749 = vadd.f32 %v197, %v748
  %v750 = vpop.f32.mrf.mxu0
  %751 = vmatprep.mubr.bf16.mxu0 %v388
  %752 = vmatmul.mubr.bf16.gmra.mxu0 %v387
  %v753 = vpop.f32.mrf.mxu0
  %v754 = vadd.f32 %v202, %v753
  %v755 = vpop.f32.mrf.mxu0
  %v756 = vpop.f32.mrf.mxu0
  %v757 = vadd.f32 %v207, %v756
  %v758 = vpop.f32.mrf.mxu0
  %759 = vmatprep.mubr.bf16.mxu0 %v393
  %760 = vmatmul.mubr.bf16.gmra.mxu0 %v392
  %v761 = vpop.f32.mrf.mxu0
  %v762 = vadd.f32 %v212, %v761
  %v763 = vpop.f32.mrf.mxu0
  %v764 = vpop.f32.mrf.mxu0
  %v765 = vadd.f32 %v217, %v764
  %v766 = vpop.f32.mrf.mxu0
  %767 = vmatprep.mubr.bf16.mxu0 %v398
  %768 = vmatmul.mubr.bf16.gmra.mxu0 %v397
  %v769 = vpop.f32.mrf.mxu0
  %v770 = vadd.f32 %v222, %v769
  %v771 = vpop.f32.mrf.mxu0
  %v772 = vpop.f32.mrf.mxu0
  %v773 = vadd.f32 %v227, %v772
  %v774 = vpop.f32.mrf.mxu0
  %775 = vmatprep.mubr.bf16.mxu0 %v403
  %776 = vmatmul.mubr.bf16.gmra.mxu0 %v402
  %v777 = vpop.f32.mrf.mxu0
  %v778 = vadd.f32 %v232, %v777
  %v779 = vpop.f32.mrf.mxu0
  %v780 = vpop.f32.mrf.mxu0
  %v781 = vadd.f32 %v237, %v780
  %v782 = vpop.f32.mrf.mxu0
  %783 = vdwg.mxu0
  %784 = vmatprep.subr.bf16.mxu0 0
  %785 = vmatpush1.bf16.msra.mxu0 %v630
  %786 = vmatprep.subr.bf16.mxu0 0
  %787 = vmatpush1.bf16.msra.mxu0 %v629
  %788 = vmatprep.subr.bf16.mxu0 0
  %789 = vmatpush1.bf16.msra.mxu0 %v628
  %790 = vmatprep.subr.bf16.mxu0 0
  %791 = vmatpush1.bf16.msra.mxu0 %v627
  %792 = vmatprep.subr.bf16.mxu0 0
  %793 = vmatpush1.bf16.msra.mxu0 %v626
  %794 = vmatprep.subr.bf16.mxu0 0
  %795 = vmatpush1.bf16.msra.mxu0 %v625
  %796 = vmatprep.subr.bf16.mxu0 0
  %797 = vmatpush1.bf16.msra.mxu0 %v624
  %798 = vmatprep.subr.bf16.mxu0 0
  %799 = vmatpush1.bf16.msra.mxu0 %v623
  %800 = vmatprep.subr.bf16.mxu0 0
  %801 = vmatpush2.bf16.msra.mxu0 %v638
  %802 = vmatprep.subr.bf16.mxu0 0
  %803 = vmatpush2.bf16.msra.mxu0 %v637
  %804 = vmatprep.subr.bf16.mxu0 0
  %805 = vmatpush2.bf16.msra.mxu0 %v636
  %806 = vmatprep.subr.bf16.mxu0 0
  %807 = vmatpush2.bf16.msra.mxu0 %v635
  %808 = vmatprep.subr.bf16.mxu0 0
  %809 = vmatpush2.bf16.msra.mxu0 %v634
  %810 = vmatprep.subr.bf16.mxu0 0
  %811 = vmatpush2.bf16.msra.mxu0 %v633
  %812 = vmatprep.subr.bf16.mxu0 0
  %813 = vmatpush2.bf16.msra.mxu0 %v632
  %814 = vmatprep.subr.bf16.mxu0 0
  %815 = vmatpush2.bf16.msra.mxu0 %v631
  %816 = vmatprep.mubr.bf16.mxu0 %v370
  %817 = vmatmul.mubr.bf16.gmra.mxu0 %v369
  %v818 = vpop.f32.mrf.mxu0
  %v819 = vadd.f32 %v722, %v818
  %v820 = vpop.f32.mrf.mxu0
  %v821 = vpop.f32.mrf.mxu0
  %v822 = vadd.f32 %v725, %v821
  %v823 = vpop.f32.mrf.mxu0
  %824 = vmatprep.mubr.bf16.mxu0 %v375
  %825 = vmatmul.mubr.bf16.gmra.mxu0 %v374
  %v826 = vpop.f32.mrf.mxu0
  %v827 = vadd.f32 %v730, %v826
  %v828 = vpop.f32.mrf.mxu0
  %v829 = vpop.f32.mrf.mxu0
  %v830 = vadd.f32 %v733, %v829
  %v831 = vpop.f32.mrf.mxu0
  %832 = vmatprep.mubr.bf16.mxu0 %v380
  %833 = vmatmul.mubr.bf16.gmra.mxu0 %v379
  %v834 = vpop.f32.mrf.mxu0
  %v835 = vadd.f32 %v738, %v834
  %v836 = vpop.f32.mrf.mxu0
  %v837 = vpop.f32.mrf.mxu0
  %v838 = vadd.f32 %v741, %v837
  %v839 = vpop.f32.mrf.mxu0
  %840 = vmatprep.mubr.bf16.mxu0 %v385
  %841 = vmatmul.mubr.bf16.gmra.mxu0 %v384
  %v842 = vpop.f32.mrf.mxu0
  %v843 = vadd.f32 %v746, %v842
  %v844 = vpop.f32.mrf.mxu0
  %v845 = vpop.f32.mrf.mxu0
  %v846 = vadd.f32 %v749, %v845
  %v847 = vpop.f32.mrf.mxu0
  %848 = vmatprep.mubr.bf16.mxu0 %v390
  %849 = vmatmul.mubr.bf16.gmra.mxu0 %v389
  %v850 = vpop.f32.mrf.mxu0
  %v851 = vadd.f32 %v754, %v850
  %v852 = vpop.f32.mrf.mxu0
  %v853 = vpop.f32.mrf.mxu0
  %v854 = vadd.f32 %v757, %v853
  %v855 = vpop.f32.mrf.mxu0
  %856 = vmatprep.mubr.bf16.mxu0 %v395
  %857 = vmatmul.mubr.bf16.gmra.mxu0 %v394
  %v858 = vpop.f32.mrf.mxu0
  %v859 = vadd.f32 %v762, %v858
  %v860 = vpop.f32.mrf.mxu0
  %v861 = vpop.f32.mrf.mxu0
  %v862 = vadd.f32 %v765, %v861
  %v863 = vpop.f32.mrf.mxu0
  %864 = vmatprep.mubr.bf16.mxu0 %v400
  %865 = vmatmul.mubr.bf16.gmra.mxu0 %v399
  %v866 = vpop.f32.mrf.mxu0
  %v867 = vadd.f32 %v770, %v866
  %v868 = vpop.f32.mrf.mxu0
  %v869 = vpop.f32.mrf.mxu0
  %v870 = vadd.f32 %v773, %v869
  %v871 = vpop.f32.mrf.mxu0
  %872 = vmatprep.mubr.bf16.mxu0 %v405
  %873 = vmatmul.mubr.bf16.gmra.mxu0 %v404
  %v874 = vpop.f32.mrf.mxu0
  %v875 = vadd.f32 %v778, %v874
  %v876 = vpop.f32.mrf.mxu0
  %v877 = vpop.f32.mrf.mxu0
  %v878 = vadd.f32 %v781, %v877
  %v879 = vpop.f32.mrf.mxu0
  %880 = vdwg.mxu0
  %881 = vmatprep.subr.bf16.mxu0 0
  %882 = vmatpush1.bf16.msra.mxu0 %v646
  %883 = vmatprep.subr.bf16.mxu0 0
  %884 = vmatpush1.bf16.msra.mxu0 %v645
  %885 = vmatprep.subr.bf16.mxu0 0
  %886 = vmatpush1.bf16.msra.mxu0 %v644
  %887 = vmatprep.subr.bf16.mxu0 0
  %888 = vmatpush1.bf16.msra.mxu0 %v643
  %889 = vmatprep.subr.bf16.mxu0 0
  %890 = vmatpush1.bf16.msra.mxu0 %v642
  %891 = vmatprep.subr.bf16.mxu0 0
  %892 = vmatpush1.bf16.msra.mxu0 %v641
  %893 = vmatprep.subr.bf16.mxu0 0
  %894 = vmatpush1.bf16.msra.mxu0 %v640
  %895 = vmatprep.subr.bf16.mxu0 0
  %896 = vmatpush1.bf16.msra.mxu0 %v639
  %897 = vmatprep.subr.bf16.mxu0 0
  %898 = vmatpush2.bf16.msra.mxu0 0
  %899 = vmatprep.subr.bf16.mxu0 0
  %900 = vmatpush2.bf16.msra.mxu0 0
  %901 = vmatprep.subr.bf16.mxu0 0
  %902 = vmatpush2.bf16.msra.mxu0 0
  %903 = vmatprep.subr.bf16.mxu0 0
  %904 = vmatpush2.bf16.msra.mxu0 0
  %905 = vmatprep.subr.bf16.mxu0 0
  %906 = vmatpush2.bf16.msra.mxu0 0
  %907 = vmatprep.subr.bf16.mxu0 0
  %908 = vmatpush2.bf16.msra.mxu0 0
  %909 = vmatprep.subr.bf16.mxu0 0
  %910 = vmatpush2.bf16.msra.mxu0 0
  %911 = vmatprep.subr.bf16.mxu0 0
  %912 = vmatpush2.bf16.msra.mxu0 0
  %913 = vmatprep.mubr.bf16.mxu0 0
  %914 = vmatmul.mubr.bf16.gmra.mxu0 %v371
  %v915 = vpop.f32.mrf.mxu0
  %v916 = vadd.f32 %v819, %v915
  %v917 = vpop.f32.mrf.mxu0
  %v918 = vpop.f32.mrf.mxu0
  %v919 = vadd.f32 %v822, %v918
  %v920 = vpop.f32.mrf.mxu0
  %921 = vmatprep.mubr.bf16.mxu0 0
  %922 = vmatmul.mubr.bf16.gmra.mxu0 %v376
  %v923 = vpop.f32.mrf.mxu0
  %v924 = vadd.f32 %v827, %v923
  %v925 = vpop.f32.mrf.mxu0
  %v926 = vpop.f32.mrf.mxu0
  %v927 = vadd.f32 %v830, %v926
  %v928 = vpop.f32.mrf.mxu0
  %929 = vmatprep.mubr.bf16.mxu0 0
  %930 = vmatmul.mubr.bf16.gmra.mxu0 %v381
  %v931 = vpop.f32.mrf.mxu0
  %v932 = vadd.f32 %v835, %v931
  %v933 = vpop.f32.mrf.mxu0
  %v934 = vpop.f32.mrf.mxu0
  %v935 = vadd.f32 %v838, %v934
  %v936 = vpop.f32.mrf.mxu0
  %937 = vmatprep.mubr.bf16.mxu0 0
  %938 = vmatmul.mubr.bf16.gmra.mxu0 %v386
  %v939 = vpop.f32.mrf.mxu0
  %v940 = vadd.f32 %v843, %v939
  %v941 = vpop.f32.mrf.mxu0
  %v942 = vpop.f32.mrf.mxu0
  %v943 = vadd.f32 %v846, %v942
  %v944 = vpop.f32.mrf.mxu0
  %945 = vmatprep.mubr.bf16.mxu0 0
  %946 = vmatmul.mubr.bf16.gmra.mxu0 %v391
  %v947 = vpop.f32.mrf.mxu0
  %v948 = vadd.f32 %v851, %v947
  %v949 = vpop.f32.mrf.mxu0
  %v950 = vpop.f32.mrf.mxu0
  %v951 = vadd.f32 %v854, %v950
  %v952 = vpop.f32.mrf.mxu0
  %953 = vmatprep.mubr.bf16.mxu0 0
  %954 = vmatmul.mubr.bf16.gmra.mxu0 %v396
  %v955 = vpop.f32.mrf.mxu0
  %v956 = vadd.f32 %v859, %v955
  %v957 = vpop.f32.mrf.mxu0
  %v958 = vpop.f32.mrf.mxu0
  %v959 = vadd.f32 %v862, %v958
  %v960 = vpop.f32.mrf.mxu0
  %961 = vmatprep.mubr.bf16.mxu0 0
  %962 = vmatmul.mubr.bf16.gmra.mxu0 %v401
  %v963 = vpop.f32.mrf.mxu0
  %v964 = vadd.f32 %v867, %v963
  %v965 = vpop.f32.mrf.mxu0
  %v966 = vpop.f32.mrf.mxu0
  %v967 = vadd.f32 %v870, %v966
  %v968 = vpop.f32.mrf.mxu0
  %969 = vmatprep.mubr.bf16.mxu0 0
  %970 = vmatmul.mubr.bf16.gmra.mxu0 %v406
  %v971 = vpop.f32.mrf.mxu0
  %v972 = vadd.f32 %v875, %v971
  %v973 = vpop.f32.mrf.mxu0
  %v974 = vpop.f32.mrf.mxu0
  %v975 = vadd.f32 %v878, %v974
  %v976 = vpop.f32.mrf.mxu0
  %977 = vdwg.mxu0
  %v978 = vmax.f32 %v916, 0.0
  %v979 = vmax.f32 %v919, 0.0
  %v980 = vmax.f32 %v924, 0.0
  %v981 = vmax.f32 %v927, 0.0
  %v982 = vmax.f32 %v932, 0.0
  %v983 = vmax.f32 %v935, 0.0
  %v984 = vmax.f32 %v940, 0.0
  %v985 = vmax.f32 %v943, 0.0
  %v986 = vmax.f32 %v948, 0.0
  %v987 = vmax.f32 %v951, 0.0
  %v988 = vmax.f32 %v956, 0.0
  %v989 = vmax.f32 %v959, 0.0
  %v990 = vmax.f32 %v964, 0.0
  %v991 = vmax.f32 %v967, 0.0
  %v992 = vmax.f32 %v972, 0.0
  %v993 = vmax.f32 %v975, 0.0
  %994 = vst [vmem:[%s3] sm:$0xff] %v978
  %995 = vst [vmem:[%s3 + $0x8] sm:$0xff] %v979
  %996 = vst [vmem:[%s3 + $0x10] sm:$0xff] %v980
  %997 = vst [vmem:[%s3 + $0x18] sm:$0xff] %v981
  %998 = vst [vmem:[%s3 + $0x20] sm:$0xff] %v982
  %999 = vst [vmem:[%s3 + $0x28] sm:$0xff] %v983
  %1000 = vst [vmem:[%s3 + $0x30] sm:$0xff] %v984
  %1001 = vst [vmem:[%s3 + $0x38] sm:$0xff] %v985
  %1002 = vst [vmem:[%s3 + $0x40] sm:$0xff] %v986
  %1003 = vst [vmem:[%s3 + $0x48] sm:$0xff] %v987
  %1004 = vst [vmem:[%s3 + $0x50] sm:$0xff] %v988
  %1005 = vst [vmem:[%s3 + $0x58] sm:$0xff] %v989
  %1006 = vst [vmem:[%s3 + $0x60] sm:$0xff] %v990
  %1007 = vst [vmem:[%s3 + $0x68] sm:$0xff] %v991
  %1008 = vst [vmem:[%s3 + $0x70] sm:$0xff] %v992
  %1009 = vst [vmem:[%s3 + $0x78] sm:$0xff] %v993
  // Predicated region
  $region14: #{resnet_forward.24} parent=0 // pred_check
    _
  $region15: #{resnet_forward.24} parent=0 // pred_check_branch
    %1011 = sbr.rel (0) target = $region17
  $region16: #{resnet_forward.24} parent=0 // pred_region
    _
  $region17: #{resnet_forward.24} parent=0 // pred_fallthru
    _
  // Predicated region
  $region18: #{resnet_forward.24} parent=0 // pred_check
    _
  $region19: #{resnet_forward.24} parent=0 // pred_check_branch
    %1013 = sbr.rel (0) target = $region21
  $region20: #{resnet_forward.24} parent=0 // pred_region
    _
  $region21: #{resnet_forward.24} parent=0 // pred_fallthru
    _

// kernel: resnet_forward.25
$region0: #{resnet_forward.25}
  #allocation0 [shape = 'u32[]', space=smem, size = 0x4, offset = 0x4, fixed_abs, tag = 'smem constant byte address 0x4 - core index']
  #allocation1 [shape = 'u32[144,128]{1,0:T(1,128)}', space=vmem, size = 0x12000, scoped, tag = 'internal scratch']
  %s0 = inlined_call_operand.vmem [shape: bf16[128,128], index: 0, kind: input, shape index: {}]
  %s1 = inlined_call_operand.vmem [shape: bf16[128,128], index: 1, kind: input, shape index: {}]
  %s2 = inlined_call_operand.vmem [shape: f32[128,1], index: 2, kind: input, shape index: {}]
  %s3 = inlined_call_operand.vmem [shape: f32[128,128], index: 3, kind: output, shape index: {}]
  %s4 = sld [smem:[#allocation0]]
  $region22: #{resnet_forward.25} parent=0
    _
  %s6 = ssub.s32 1, %s4
  %s7 = scalar_select 0, %s6, %s4
  // Predicated region
  $region2: #{resnet_forward.25} parent=0 // pred_check
    _
  $region3: #{resnet_forward.25} parent=0 // pred_check_branch
    %9 = sbr.rel (0) target = $region5
  $region4: #{resnet_forward.25} parent=0 // pred_region
    _
  $region5: #{resnet_forward.25} parent=0 // pred_fallthru
    _
  // Predicated region
  $region6: #{resnet_forward.25} parent=0 // pred_check
    _
  $region7: #{resnet_forward.25} parent=0 // pred_check_branch
    %11 = sbr.rel (0) target = $region9
  $region8: #{resnet_forward.25} parent=0 // pred_region
    _
  $region9: #{resnet_forward.25} parent=0 // pred_fallthru
    _
  // Predicated region
  $region10: #{resnet_forward.25} parent=0 // pred_check
    _
  $region11: #{resnet_forward.25} parent=0 // pred_check_branch
    %13 = sbr.rel (0) target = $region13
  $region12: #{resnet_forward.25} parent=0 // pred_region
    _
  $region13: #{resnet_forward.25} parent=0 // pred_fallthru
    _
  %v15 = vld [vmem:[%s0] sm:$0xf]
  %v16 = vld [vmem:[%s0 + $0x4] sm:$0xf]
  %v17 = vld [vmem:[%s0 + $0x8] sm:$0xf]
  %v18 = vld [vmem:[%s0 + $0xc] sm:$0xf]
  %v19 = vld [vmem:[%s0 + $0x10] sm:$0xf]
  %v20 = vld [vmem:[%s0 + $0x14] sm:$0xf]
  %v21 = vld [vmem:[%s0 + $0x18] sm:$0xf]
  %v22 = vld [vmem:[%s0 + $0x1c] sm:$0xf]
  %v23 = vld [vmem:[%s0 + $0x20] sm:$0xf]
  %v24 = vld [vmem:[%s0 + $0x24] sm:$0xf]
  %v25 = vld [vmem:[%s0 + $0x28] sm:$0xf]
  %v26 = vld [vmem:[%s0 + $0x2c] sm:$0xf]
  %v27 = vld [vmem:[%s0 + $0x30] sm:$0xf]
  %v28 = vld [vmem:[%s0 + $0x34] sm:$0xf]
  %v29 = vld [vmem:[%s0 + $0x38] sm:$0xf]
  %v30 = vld [vmem:[%s0 + $0x3c] sm:$0xf]
  %v31 = vld [vmem:[%s1] sm:$0xf]
  %v32 = vld [vmem:[%s1 + $0x4] sm:$0xf]
  %v33 = vld [vmem:[%s1 + $0x8] sm:$0xf]
  %v34 = vld [vmem:[%s1 + $0xc] sm:$0xf]
  %v35 = vld [vmem:[%s1 + $0x10] sm:$0xf]
  %v36 = vld [vmem:[%s1 + $0x14] sm:$0xf]
  %v37 = vld [vmem:[%s1 + $0x18] sm:$0xf]
  %v38 = vld [vmem:[%s1 + $0x1c] sm:$0xf]
  %v39 = vld [vmem:[%s1 + $0x20] sm:$0xf]
  %v40 = vld [vmem:[%s1 + $0x24] sm:$0xf]
  %v41 = vld [vmem:[%s1 + $0x28] sm:$0xf]
  %v42 = vld [vmem:[%s1 + $0x2c] sm:$0xf]
  %v43 = vld [vmem:[%s1 + $0x30] sm:$0xf]
  %v44 = vld [vmem:[%s1 + $0x34] sm:$0xf]
  %v45 = vld [vmem:[%s1 + $0x38] sm:$0xf]
  %v46 = vld [vmem:[%s1 + $0x3c] sm:$0xf]
  %v47 = vld [vmem:[%s2] sm:$0xff]
  %v48 = vld [vmem:[%s2 + $0x8] sm:$0xff]
  %v49 = vld [vmem:[%s2 + $0x10] sm:$0xff]
  %v50 = vld [vmem:[%s2 + $0x18] sm:$0xff]
  %v51 = vld [vmem:[%s2 + $0x20] sm:$0xff]
  %v52 = vld [vmem:[%s2 + $0x28] sm:$0xff]
  %v53 = vld [vmem:[%s2 + $0x30] sm:$0xff]
  %v54 = vld [vmem:[%s2 + $0x38] sm:$0xff]
  %v55 = vld [vmem:[%s2 + $0x40] sm:$0xff]
  %v56 = vld [vmem:[%s2 + $0x48] sm:$0xff]
  %v57 = vld [vmem:[%s2 + $0x50] sm:$0xff]
  %v58 = vld [vmem:[%s2 + $0x58] sm:$0xff]
  %v59 = vld [vmem:[%s2 + $0x60] sm:$0xff]
  %v60 = vld [vmem:[%s2 + $0x68] sm:$0xff]
  %v61 = vld [vmem:[%s2 + $0x70] sm:$0xff]
  %v62 = vld [vmem:[%s2 + $0x78] sm:$0xff]
  %64 = vset.pattern.permute.xlu0 0
  %65 = vperm.xlu0 %64, %v47
  %v66 = vpop.permute.xlu0 %65
  %69 = vset.pattern.permute.xlu0 0
  %70 = vperm.xlu0 %69, %v48
  %v71 = vpop.permute.xlu0 %70
  %74 = vset.pattern.permute.xlu0 0
  %75 = vperm.xlu0 %74, %v49
  %v76 = vpop.permute.xlu0 %75
  %79 = vset.pattern.permute.xlu0 0
  %80 = vperm.xlu0 %79, %v50
  %v81 = vpop.permute.xlu0 %80
  %84 = vset.pattern.permute.xlu0 0
  %85 = vperm.xlu0 %84, %v51
  %v86 = vpop.permute.xlu0 %85
  %89 = vset.pattern.permute.xlu0 0
  %90 = vperm.xlu0 %89, %v52
  %v91 = vpop.permute.xlu0 %90
  %94 = vset.pattern.permute.xlu0 0
  %95 = vperm.xlu0 %94, %v53
  %v96 = vpop.permute.xlu0 %95
  %99 = vset.pattern.permute.xlu0 0
  %100 = vperm.xlu0 %99, %v54
  %v101 = vpop.permute.xlu0 %100
  %104 = vset.pattern.permute.xlu0 0
  %105 = vperm.xlu0 %104, %v55
  %v106 = vpop.permute.xlu0 %105
  %109 = vset.pattern.permute.xlu0 0
  %110 = vperm.xlu0 %109, %v56
  %v111 = vpop.permute.xlu0 %110
  %114 = vset.pattern.permute.xlu0 0
  %115 = vperm.xlu0 %114, %v57
  %v116 = vpop.permute.xlu0 %115
  %119 = vset.pattern.permute.xlu0 0
  %120 = vperm.xlu0 %119, %v58
  %v121 = vpop.permute.xlu0 %120
  %124 = vset.pattern.permute.xlu0 0
  %125 = vperm.xlu0 %124, %v59
  %v126 = vpop.permute.xlu0 %125
  %129 = vset.pattern.permute.xlu0 0
  %130 = vperm.xlu0 %129, %v60
  %v131 = vpop.permute.xlu0 %130
  %134 = vset.pattern.permute.xlu0 0
  %135 = vperm.xlu0 %134, %v61
  %v136 = vpop.permute.xlu0 %135
  %139 = vset.pattern.permute.xlu0 0
  %140 = vperm.xlu0 %139, %v62
  %v141 = vpop.permute.xlu0 %140
  %v159 = vunpack.c.l.b16 %v15
  %v160 = vunpack.c.l.b16 %v16
  %v161 = vunpack.c.l.b16 %v17
  %v162 = vunpack.c.l.b16 %v18
  %v163 = vunpack.c.l.b16 %v19
  %v164 = vunpack.c.l.b16 %v20
  %v165 = vunpack.c.l.b16 %v21
  %v166 = vunpack.c.l.b16 %v22
  %v167 = vunpack.c.l.b16 %v23
  %v168 = vunpack.c.l.b16 %v24
  %v169 = vunpack.c.l.b16 %v25
  %v170 = vunpack.c.l.b16 %v26
  %v171 = vunpack.c.l.b16 %v27
  %v172 = vunpack.c.l.b16 %v28
  %v173 = vunpack.c.l.b16 %v29
  %v174 = vunpack.c.l.b16 %v30
  %v175 = vpack.c.b16 %v160, %v159
  %v176 = vpack.c.b16 %v162, %v161
  %v177 = vpack.c.b16 %v164, %v163
  %v178 = vpack.c.b16 %v166, %v165
  %v179 = vpack.c.b16 %v168, %v167
  %v180 = vpack.c.b16 %v170, %v169
  %v181 = vpack.c.b16 %v172, %v171
  %v182 = vpack.c.b16 %v174, %v173
  %v207 = vunpack.c.l.b16 %v31
  %v208 = vunpack.c.l.b16 %v32
  %v209 = vunpack.c.l.b16 %v33
  %v210 = vunpack.c.l.b16 %v34
  %v211 = vunpack.c.l.b16 %v35
  %v212 = vunpack.c.l.b16 %v36
  %v213 = vunpack.c.l.b16 %v37
  %v214 = vunpack.c.l.b16 %v38
  %v215 = vunpack.c.l.b16 %v39
  %v216 = vunpack.c.l.b16 %v40
  %v217 = vunpack.c.l.b16 %v41
  %v218 = vunpack.c.l.b16 %v42
  %v219 = vunpack.c.l.b16 %v43
  %v220 = vunpack.c.l.b16 %v44
  %v221 = vunpack.c.l.b16 %v45
  %v222 = vunpack.c.l.b16 %v46
  %v223 = vpack.c.b16 %v208, %v207
  %v224 = vpack.c.b16 %v210, %v209
  %v225 = vpack.c.b16 %v212, %v211
  %v226 = vpack.c.b16 %v214, %v213
  %v227 = vpack.c.b16 %v216, %v215
  %v228 = vpack.c.b16 %v218, %v217
  %v229 = vpack.c.b16 %v220, %v219
  %v230 = vpack.c.b16 %v222, %v221
  %239 = vmatprep.subr.bf16.mxu0 0
  %240 = vmatpush1.bf16.msra.mxu0 %v230
  %241 = vmatprep.subr.bf16.mxu0 0
  %242 = vmatpush1.bf16.msra.mxu0 %v229
  %243 = vmatprep.subr.bf16.mxu0 0
  %244 = vmatpush1.bf16.msra.mxu0 %v228
  %245 = vmatprep.subr.bf16.mxu0 0
  %246 = vmatpush1.bf16.msra.mxu0 %v227
  %247 = vmatprep.subr.bf16.mxu0 0
  %248 = vmatpush1.bf16.msra.mxu0 %v226
  %249 = vmatprep.subr.bf16.mxu0 0
  %250 = vmatpush1.bf16.msra.mxu0 %v225
  %251 = vmatprep.subr.bf16.mxu0 0
  %252 = vmatpush1.bf16.msra.mxu0 %v224
  %253 = vmatprep.subr.bf16.mxu0 0
  %254 = vmatpush1.bf16.msra.mxu0 %v223
  %255 = vmatprep.subr.bf16.mxu0 0
  %256 = vmatpush2.bf16.msra.mxu0 0
  %257 = vmatprep.subr.bf16.mxu0 0
  %258 = vmatpush2.bf16.msra.mxu0 0
  %259 = vmatprep.subr.bf16.mxu0 0
  %260 = vmatpush2.bf16.msra.mxu0 0
  %261 = vmatprep.subr.bf16.mxu0 0
  %262 = vmatpush2.bf16.msra.mxu0 0
  %263 = vmatprep.subr.bf16.mxu0 0
  %264 = vmatpush2.bf16.msra.mxu0 0
  %265 = vmatprep.subr.bf16.mxu0 0
  %266 = vmatpush2.bf16.msra.mxu0 0
  %267 = vmatprep.subr.bf16.mxu0 0
  %268 = vmatpush2.bf16.msra.mxu0 0
  %269 = vmatprep.subr.bf16.mxu0 0
  %270 = vmatpush2.bf16.msra.mxu0 0
  %271 = vmatprep.mubr.bf16.mxu0 0
  %272 = vmatmul.mubr.bf16.gmra.mxu0 %v175
  %v273 = vpop.f32.mrf.mxu0
  %v274 = vadd.f32 %v66, %v273
  %v275 = vpop.f32.mrf.mxu0
  %v276 = vpop.f32.mrf.mxu0
  %v277 = vadd.f32 %v71, %v276
  %v278 = vpop.f32.mrf.mxu0
  %279 = vmatprep.mubr.bf16.mxu0 0
  %280 = vmatmul.mubr.bf16.gmra.mxu0 %v176
  %v281 = vpop.f32.mrf.mxu0
  %v282 = vadd.f32 %v76, %v281
  %v283 = vpop.f32.mrf.mxu0
  %v284 = vpop.f32.mrf.mxu0
  %v285 = vadd.f32 %v81, %v284
  %v286 = vpop.f32.mrf.mxu0
  %287 = vmatprep.mubr.bf16.mxu0 0
  %288 = vmatmul.mubr.bf16.gmra.mxu0 %v177
  %v289 = vpop.f32.mrf.mxu0
  %v290 = vadd.f32 %v86, %v289
  %v291 = vpop.f32.mrf.mxu0
  %v292 = vpop.f32.mrf.mxu0
  %v293 = vadd.f32 %v91, %v292
  %v294 = vpop.f32.mrf.mxu0
  %295 = vmatprep.mubr.bf16.mxu0 0
  %296 = vmatmul.mubr.bf16.gmra.mxu0 %v178
  %v297 = vpop.f32.mrf.mxu0
  %v298 = vadd.f32 %v96, %v297
  %v299 = vpop.f32.mrf.mxu0
  %v300 = vpop.f32.mrf.mxu0
  %v301 = vadd.f32 %v101, %v300
  %v302 = vpop.f32.mrf.mxu0
  %303 = vmatprep.mubr.bf16.mxu0 0
  %304 = vmatmul.mubr.bf16.gmra.mxu0 %v179
  %v305 = vpop.f32.mrf.mxu0
  %v306 = vadd.f32 %v106, %v305
  %v307 = vpop.f32.mrf.mxu0
  %v308 = vpop.f32.mrf.mxu0
  %v309 = vadd.f32 %v111, %v308
  %v310 = vpop.f32.mrf.mxu0
  %311 = vmatprep.mubr.bf16.mxu0 0
  %312 = vmatmul.mubr.bf16.gmra.mxu0 %v180
  %v313 = vpop.f32.mrf.mxu0
  %v314 = vadd.f32 %v116, %v313
  %v315 = vpop.f32.mrf.mxu0
  %v316 = vpop.f32.mrf.mxu0
  %v317 = vadd.f32 %v121, %v316
  %v318 = vpop.f32.mrf.mxu0
  %319 = vmatprep.mubr.bf16.mxu0 0
  %320 = vmatmul.mubr.bf16.gmra.mxu0 %v181
  %v321 = vpop.f32.mrf.mxu0
  %v322 = vadd.f32 %v126, %v321
  %v323 = vpop.f32.mrf.mxu0
  %v324 = vpop.f32.mrf.mxu0
  %v325 = vadd.f32 %v131, %v324
  %v326 = vpop.f32.mrf.mxu0
  %327 = vmatprep.mubr.bf16.mxu0 0
  %328 = vmatmul.mubr.bf16.gmra.mxu0 %v182
  %v329 = vpop.f32.mrf.mxu0
  %v330 = vadd.f32 %v136, %v329
  %v331 = vpop.f32.mrf.mxu0
  %v332 = vpop.f32.mrf.mxu0
  %v333 = vadd.f32 %v141, %v332
  %v334 = vpop.f32.mrf.mxu0
  %335 = vdwg.mxu0
  %336 = vst [vmem:[%s3] sm:$0xff] %v274
  %337 = vst [vmem:[%s3 + $0x8] sm:$0xff] %v277
  %338 = vst [vmem:[%s3 + $0x10] sm:$0xff] %v282
  %339 = vst [vmem:[%s3 + $0x18] sm:$0xff] %v285
  %340 = vst [vmem:[%s3 + $0x20] sm:$0xff] %v290
  %341 = vst [vmem:[%s3 + $0x28] sm:$0xff] %v293
  %342 = vst [vmem:[%s3 + $0x30] sm:$0xff] %v298
  %343 = vst [vmem:[%s3 + $0x38] sm:$0xff] %v301
  %344 = vst [vmem:[%s3 + $0x40] sm:$0xff] %v306
  %345 = vst [vmem:[%s3 + $0x48] sm:$0xff] %v309
  %346 = vst [vmem:[%s3 + $0x50] sm:$0xff] %v314
  %347 = vst [vmem:[%s3 + $0x58] sm:$0xff] %v317
  %348 = vst [vmem:[%s3 + $0x60] sm:$0xff] %v322
  %349 = vst [vmem:[%s3 + $0x68] sm:$0xff] %v325
  %350 = vst [vmem:[%s3 + $0x70] sm:$0xff] %v330
  %351 = vst [vmem:[%s3 + $0x78] sm:$0xff] %v333
  // Predicated region
  $region14: #{resnet_forward.25} parent=0 // pred_check
    _
  $region15: #{resnet_forward.25} parent=0 // pred_check_branch
    %353 = sbr.rel (0) target = $region17
  $region16: #{resnet_forward.25} parent=0 // pred_region
    _
  $region17: #{resnet_forward.25} parent=0 // pred_fallthru
    _
  // Predicated region
  $region18: #{resnet_forward.25} parent=0 // pred_check
    _
  $region19: #{resnet_forward.25} parent=0 // pred_check_branch
    %355 = sbr.rel (0) target = $region21
  $region20: #{resnet_forward.25} parent=0 // pred_region
    _
  $region21: #{resnet_forward.25} parent=0 // pred_fallthru
    _

// kernel: resnet_forward.27
$region0: #{resnet_forward.27}
  #allocation0 [shape = 'u32[]', space=smem, size = 0x4, offset = 0x4, fixed_abs, tag = 'smem constant byte address 0x4 - core index']
  #allocation1 [shape = 'u32[144,128]{1,0:T(1,128)}', space=vmem, size = 0x12000, scoped, tag = 'internal scratch']
  %s0 = inlined_call_operand.vmem [shape: f32[128,2], index: 0, kind: input, shape index: {}]
  %s1 = inlined_call_operand.vmem [shape: f32[2,2], index: 1, kind: input, shape index: {}]
  %s2 = inlined_call_operand.vmem [shape: f32[10,128], index: 2, kind: input, shape index: {}]
  %s3 = inlined_call_operand.vmem [shape: f32[10,1], index: 3, kind: input, shape index: {}]
  %s4 = inlined_call_operand.vmem [shape: f32[10,2], index: 4, kind: output, shape index: {}]
  %s5 = sld [smem:[#allocation0]]
  $region26: #{resnet_forward.27} parent=0
    _
  %s7 = ssub.s32 1, %s5
  %s8 = scalar_select 0, %s7, %s5
  // Predicated region
  $region2: #{resnet_forward.27} parent=0 // pred_check
    _
  $region3: #{resnet_forward.27} parent=0 // pred_check_branch
    %10 = sbr.rel (0) target = $region5
  $region4: #{resnet_forward.27} parent=0 // pred_region
    _
  $region5: #{resnet_forward.27} parent=0 // pred_fallthru
    _
  // Predicated region
  $region6: #{resnet_forward.27} parent=0 // pred_check
    _
  $region7: #{resnet_forward.27} parent=0 // pred_check_branch
    %12 = sbr.rel (0) target = $region9
  $region8: #{resnet_forward.27} parent=0 // pred_region
    _
  $region9: #{resnet_forward.27} parent=0 // pred_fallthru
    _
  // Predicated region
  $region10: #{resnet_forward.27} parent=0 // pred_check
    _
  $region11: #{resnet_forward.27} parent=0 // pred_check_branch
    %14 = sbr.rel (0) target = $region13
  $region12: #{resnet_forward.27} parent=0 // pred_region
    _
  $region13: #{resnet_forward.27} parent=0 // pred_fallthru
    _
  // Predicated region
  $region14: #{resnet_forward.27} parent=0 // pred_check
    _
  $region15: #{resnet_forward.27} parent=0 // pred_check_branch
    %16 = sbr.rel (0) target = $region17
  $region16: #{resnet_forward.27} parent=0 // pred_region
    _
  $region17: #{resnet_forward.27} parent=0 // pred_fallthru
    _
  %v17 = vld [vmem:[%s0] sm:$0xff]
  %v18 = vld [vmem:[%s0 + $0x8] sm:$0xff]
  %v19 = vld [vmem:[%s0 + $0x10] sm:$0xff]
  %v20 = vld [vmem:[%s0 + $0x18] sm:$0xff]
  %v21 = vld [vmem:[%s0 + $0x20] sm:$0xff]
  %v22 = vld [vmem:[%s0 + $0x28] sm:$0xff]
  %v23 = vld [vmem:[%s0 + $0x30] sm:$0xff]
  %v24 = vld [vmem:[%s0 + $0x38] sm:$0xff]
  %v25 = vld [vmem:[%s0 + $0x40] sm:$0xff]
  %v26 = vld [vmem:[%s0 + $0x48] sm:$0xff]
  %v27 = vld [vmem:[%s0 + $0x50] sm:$0xff]
  %v28 = vld [vmem:[%s0 + $0x58] sm:$0xff]
  %v29 = vld [vmem:[%s0 + $0x60] sm:$0xff]
  %v30 = vld [vmem:[%s0 + $0x68] sm:$0xff]
  %v31 = vld [vmem:[%s0 + $0x70] sm:$0xff]
  %v32 = vld [vmem:[%s0 + $0x78] sm:$0xff]
  %v33 = vld [vmem:[%s1] sm:$0x3]
  %vm34 = vcmask 15360
  %v36 = vsel %vm34, %v17, 0
  %v39 = vsel %vm34, %v18, 0
  %v42 = vsel %vm34, %v19, 0
  %v45 = vsel %vm34, %v20, 0
  %v48 = vsel %vm34, %v21, 0
  %v51 = vsel %vm34, %v22, 0
  %v54 = vsel %vm34, %v23, 0
  %v57 = vsel %vm34, %v24, 0
  %v60 = vsel %vm34, %v25, 0
  %v63 = vsel %vm34, %v26, 0
  %v66 = vsel %vm34, %v27, 0
  %v69 = vsel %vm34, %v28, 0
  %v72 = vsel %vm34, %v29, 0
  %v75 = vsel %vm34, %v30, 0
  %v78 = vsel %vm34, %v31, 0
  %v81 = vsel %vm34, %v32, 0
  %vm83 = vcmask 1041408
  %v85 = vsel %vm83, %v33, 0
  %87 = vmatprep.subr.mxu0 0.0
  %88 = vmatpush1.msra.mxu0 0.0
  %89 = vmatprep.subr.mxu0 0.0
  %90 = vmatpush1.msra.mxu0 0.0
  %91 = vmatprep.subr.mxu0 0.0
  %92 = vmatpush1.msra.mxu0 0.0
  %93 = vmatprep.subr.mxu0 0.0
  %94 = vmatpush1.msra.mxu0 0.0
  %95 = vmatprep.subr.mxu0 0.0
  %96 = vmatpush1.msra.mxu0 0.0
  %97 = vmatprep.subr.mxu0 0.0
  %98 = vmatpush1.msra.mxu0 0.0
  %99 = vmatprep.subr.mxu0 0.0
  %100 = vmatpush1.msra.mxu0 0.0
  %101 = vmatprep.subr.mxu0 0.0
  %102 = vmatpush1.msra.mxu0 0.0
  %103 = vmatprep.subr.mxu0 0.0
  %104 = vmatpush1.msra.mxu0 0.0
  %105 = vmatprep.subr.mxu0 0.0
  %106 = vmatpush1.msra.mxu0 0.0
  %107 = vmatprep.subr.mxu0 0.0
  %108 = vmatpush1.msra.mxu0 0.0
  %109 = vmatprep.subr.mxu0 0.0
  %110 = vmatpush1.msra.mxu0 0.0
  %111 = vmatprep.subr.mxu0 0.0
  %112 = vmatpush1.msra.mxu0 0.0
  %113 = vmatprep.subr.mxu0 0.0
  %114 = vmatpush1.msra.mxu0 0.0
  %115 = vmatprep.subr.mxu0 0.0
  %116 = vmatpush1.msra.mxu0 0.0
  %117 = vmatprep.subr.mxu0 0.0
  %118 = vmatpush1.msra.mxu0 %v85
  %119 = vmatprep.subr.mxu0 0.0
  %120 = vmatpush2.msra.mxu0 0.0
  %121 = vmatprep.subr.mxu0 0.0
  %122 = vmatpush2.msra.mxu0 0.0
  %123 = vmatprep.subr.mxu0 0.0
  %124 = vmatpush2.msra.mxu0 0.0
  %125 = vmatprep.subr.mxu0 0.0
  %126 = vmatpush2.msra.mxu0 0.0
  %127 = vmatprep.subr.mxu0 0.0
  %128 = vmatpush2.msra.mxu0 0.0
  %129 = vmatprep.subr.mxu0 0.0
  %130 = vmatpush2.msra.mxu0 0.0
  %131 = vmatprep.subr.mxu0 0.0
  %132 = vmatpush2.msra.mxu0 0.0
  %133 = vmatprep.subr.mxu0 0.0
  %134 = vmatpush2.msra.mxu0 0.0
  %135 = vmatprep.subr.mxu0 0.0
  %136 = vmatpush2.msra.mxu0 0.0
  %137 = vmatprep.subr.mxu0 0.0
  %138 = vmatpush2.msra.mxu0 0.0
  %139 = vmatprep.subr.mxu0 0.0
  %140 = vmatpush2.msra.mxu0 0.0
  %141 = vmatprep.subr.mxu0 0.0
  %142 = vmatpush2.msra.mxu0 0.0
  %143 = vmatprep.subr.mxu0 0.0
  %144 = vmatpush2.msra.mxu0 0.0
  %145 = vmatprep.subr.mxu0 0.0
  %146 = vmatpush2.msra.mxu0 0.0
  %147 = vmatprep.subr.mxu0 0.0
  %148 = vmatpush2.msra.mxu0 0.0
  %149 = vmatprep.subr.mxu0 0.0
  %150 = vmatpush2.msra.mxu0 0.0
  %151 = vmatprep.mubr.f32.mxu0 0.0
  %152 = vmatmul.mubr.f32.gmra.mxu0 %v36
  %v153 = vpop.f32.mrf.mxu0
  %v154 = vadd.f32 0.0, %v153
  %v155 = vpop.f32.mrf.mxu0
  %156 = vmatprep.mubr.f32.mxu0 0.0
  %157 = vmatmul.mubr.f32.gmra.mxu0 %v39
  %v158 = vpop.f32.mrf.mxu0
  %v159 = vadd.f32 0.0, %v158
  %v160 = vpop.f32.mrf.mxu0
  %161 = vmatprep.mubr.f32.mxu0 0.0
  %162 = vmatmul.mubr.f32.gmra.mxu0 %v42
  %v163 = vpop.f32.mrf.mxu0
  %v164 = vadd.f32 0.0, %v163
  %v165 = vpop.f32.mrf.mxu0
  %166 = vmatprep.mubr.f32.mxu0 0.0
  %167 = vmatmul.mubr.f32.gmra.mxu0 %v45
  %v168 = vpop.f32.mrf.mxu0
  %v169 = vadd.f32 0.0, %v168
  %v170 = vpop.f32.mrf.mxu0
  %171 = vmatprep.mubr.f32.mxu0 0.0
  %172 = vmatmul.mubr.f32.gmra.mxu0 %v48
  %v173 = vpop.f32.mrf.mxu0
  %v174 = vadd.f32 0.0, %v173
  %v175 = vpop.f32.mrf.mxu0
  %176 = vmatprep.mubr.f32.mxu0 0.0
  %177 = vmatmul.mubr.f32.gmra.mxu0 %v51
  %v178 = vpop.f32.mrf.mxu0
  %v179 = vadd.f32 0.0, %v178
  %v180 = vpop.f32.mrf.mxu0
  %181 = vmatprep.mubr.f32.mxu0 0.0
  %182 = vmatmul.mubr.f32.gmra.mxu0 %v54
  %v183 = vpop.f32.mrf.mxu0
  %v184 = vadd.f32 0.0, %v183
  %v185 = vpop.f32.mrf.mxu0
  %186 = vmatprep.mubr.f32.mxu0 0.0
  %187 = vmatmul.mubr.f32.gmra.mxu0 %v57
  %v188 = vpop.f32.mrf.mxu0
  %v189 = vadd.f32 0.0, %v188
  %v190 = vpop.f32.mrf.mxu0
  %191 = vmatprep.mubr.f32.mxu0 0.0
  %192 = vmatmul.mubr.f32.gmra.mxu0 %v60
  %v193 = vpop.f32.mrf.mxu0
  %v194 = vadd.f32 0.0, %v193
  %v195 = vpop.f32.mrf.mxu0
  %196 = vmatprep.mubr.f32.mxu0 0.0
  %197 = vmatmul.mubr.f32.gmra.mxu0 %v63
  %v198 = vpop.f32.mrf.mxu0
  %v199 = vadd.f32 0.0, %v198
  %v200 = vpop.f32.mrf.mxu0
  %201 = vmatprep.mubr.f32.mxu0 0.0
  %202 = vmatmul.mubr.f32.gmra.mxu0 %v66
  %v203 = vpop.f32.mrf.mxu0
  %v204 = vadd.f32 0.0, %v203
  %v205 = vpop.f32.mrf.mxu0
  %206 = vmatprep.mubr.f32.mxu0 0.0
  %207 = vmatmul.mubr.f32.gmra.mxu0 %v69
  %v208 = vpop.f32.mrf.mxu0
  %v209 = vadd.f32 0.0, %v208
  %v210 = vpop.f32.mrf.mxu0
  %211 = vmatprep.mubr.f32.mxu0 0.0
  %212 = vmatmul.mubr.f32.gmra.mxu0 %v72
  %v213 = vpop.f32.mrf.mxu0
  %v214 = vadd.f32 0.0, %v213
  %v215 = vpop.f32.mrf.mxu0
  %216 = vmatprep.mubr.f32.mxu0 0.0
  %217 = vmatmul.mubr.f32.gmra.mxu0 %v75
  %v218 = vpop.f32.mrf.mxu0
  %v219 = vadd.f32 0.0, %v218
  %v220 = vpop.f32.mrf.mxu0
  %221 = vmatprep.mubr.f32.mxu0 0.0
  %222 = vmatmul.mubr.f32.gmra.mxu0 %v78
  %v223 = vpop.f32.mrf.mxu0
  %v224 = vadd.f32 0.0, %v223
  %v225 = vpop.f32.mrf.mxu0
  %226 = vmatprep.mubr.f32.mxu0 0.0
  %227 = vmatmul.mubr.f32.gmra.mxu0 %v81
  %v228 = vpop.f32.mrf.mxu0
  %v229 = vadd.f32 0.0, %v228
  %v230 = vpop.f32.mrf.mxu0
  %231 = vdwg.mxu0
  %v232 = vld [vmem:[%s2] sm:$0xff]
  %v233 = vld [vmem:[%s2 + $0x8] sm:$0x3]
  %v234 = vld [vmem:[%s3] sm:$0xff]
  %v235 = vld [vmem:[%s3 + $0x8] sm:$0x3]
  %237 = vset.pattern.permute.xlu0 0
  %238 = vperm.xlu0 %237, %v234
  %v239 = vpop.permute.xlu0 %238
  %242 = vset.pattern.permute.xlu0 0
  %243 = vperm.xlu0 %242, %v235
  %v244 = vpop.permute.xlu0 %243
  %246 = vmatprep.subr.mxu0 0.0
  %247 = vmatpush1.msra.mxu0 %v229
  %248 = vmatprep.subr.mxu0 0.0
  %249 = vmatpush1.msra.mxu0 %v224
  %250 = vmatprep.subr.mxu0 0.0
  %251 = vmatpush1.msra.mxu0 %v219
  %252 = vmatprep.subr.mxu0 0.0
  %253 = vmatpush1.msra.mxu0 %v214
  %254 = vmatprep.subr.mxu0 0.0
  %255 = vmatpush1.msra.mxu0 %v209
  %256 = vmatprep.subr.mxu0 0.0
  %257 = vmatpush1.msra.mxu0 %v204
  %258 = vmatprep.subr.mxu0 0.0
  %259 = vmatpush1.msra.mxu0 %v199
  %260 = vmatprep.subr.mxu0 0.0
  %261 = vmatpush1.msra.mxu0 %v194
  %262 = vmatprep.subr.mxu0 0.0
  %263 = vmatpush1.msra.mxu0 %v189
  %264 = vmatprep.subr.mxu0 0.0
  %265 = vmatpush1.msra.mxu0 %v184
  %266 = vmatprep.subr.mxu0 0.0
  %267 = vmatpush1.msra.mxu0 %v179
  %268 = vmatprep.subr.mxu0 0.0
  %269 = vmatpush1.msra.mxu0 %v174
  %270 = vmatprep.subr.mxu0 0.0
  %271 = vmatpush1.msra.mxu0 %v169
  %272 = vmatprep.subr.mxu0 0.0
  %273 = vmatpush1.msra.mxu0 %v164
  %274 = vmatprep.subr.mxu0 0.0
  %275 = vmatpush1.msra.mxu0 %v159
  %276 = vmatprep.subr.mxu0 0.0
  %277 = vmatpush1.msra.mxu0 %v154
  %278 = vmatprep.subr.mxu0 0.0
  %279 = vmatpush2.msra.mxu0 0.0
  %280 = vmatprep.subr.mxu0 0.0
  %281 = vmatpush2.msra.mxu0 0.0
  %282 = vmatprep.subr.mxu0 0.0
  %283 = vmatpush2.msra.mxu0 0.0
  %284 = vmatprep.subr.mxu0 0.0
  %285 = vmatpush2.msra.mxu0 0.0
  %286 = vmatprep.subr.mxu0 0.0
  %287 = vmatpush2.msra.mxu0 0.0
  %288 = vmatprep.subr.mxu0 0.0
  %289 = vmatpush2.msra.mxu0 0.0
  %290 = vmatprep.subr.mxu0 0.0
  %291 = vmatpush2.msra.mxu0 0.0
  %292 = vmatprep.subr.mxu0 0.0
  %293 = vmatpush2.msra.mxu0 0.0
  %294 = vmatprep.subr.mxu0 0.0
  %295 = vmatpush2.msra.mxu0 0.0
  %296 = vmatprep.subr.mxu0 0.0
  %297 = vmatpush2.msra.mxu0 0.0
  %298 = vmatprep.subr.mxu0 0.0
  %299 = vmatpush2.msra.mxu0 0.0
  %300 = vmatprep.subr.mxu0 0.0
  %301 = vmatpush2.msra.mxu0 0.0
  %302 = vmatprep.subr.mxu0 0.0
  %303 = vmatpush2.msra.mxu0 0.0
  %304 = vmatprep.subr.mxu0 0.0
  %305 = vmatpush2.msra.mxu0 0.0
  %306 = vmatprep.subr.mxu0 0.0
  %307 = vmatpush2.msra.mxu0 0.0
  %308 = vmatprep.subr.mxu0 0.0
  %309 = vmatpush2.msra.mxu0 0.0
  %310 = vmatprep.mubr.f32.mxu0 0.0
  %311 = vmatmul.mubr.f32.gmra.mxu0 %v232
  %v312 = vpop.f32.mrf.mxu0
  %v313 = vadd.f32 %v239, %v312
  %v314 = vpop.f32.mrf.mxu0
  %315 = vmatprep.mubr.f32.mxu0 0.0
  %316 = vmatmul.mubr.f32.gmra.mxu0 %v233
  %v317 = vpop.f32.mrf.mxu0
  %v318 = vadd.f32 %v244, %v317
  %v319 = vpop.f32.mrf.mxu0
  %320 = vdwg.mxu0
  %321 = vst.msk [vmem:[%s4] sm:$0xff] %vm34, %v313
  %vm322 = vcmask 9216
  %323 = vst.msk [vmem:[%s4 + $0x8] sm:$0x3] %vm322, %v318
  // Predicated region
  $region18: #{resnet_forward.27} parent=0 // pred_check
    _
  $region19: #{resnet_forward.27} parent=0 // pred_check_branch
    %325 = sbr.rel (0) target = $region21
  $region20: #{resnet_forward.27} parent=0 // pred_region
    _
  $region21: #{resnet_forward.27} parent=0 // pred_fallthru
    _
  // Predicated region
  $region22: #{resnet_forward.27} parent=0 // pred_check
    _
  $region23: #{resnet_forward.27} parent=0 // pred_check_branch
    %327 = sbr.rel (0) target = $region25
  $region24: #{resnet_forward.27} parent=0 // pred_region
    _
  $region25: #{resnet_forward.27} parent=0 // pred_fallthru
    _

// kernel: resnet_forward.26
$region0: #{resnet_forward.26}
  #allocation0 [shape = 'u32[]', space=smem, size = 0x4, offset = 0x4, fixed_abs, tag = 'smem constant byte address 0x4 - core index']
  #allocation1 [shape = 'u32[144,128]{1,0:T(1,128)}', space=vmem, size = 0x12000, scoped, tag = 'internal scratch']
  %s0 = inlined_call_operand.vmem [shape: bf16[128,1152], index: 0, kind: input, shape index: {}]
  %s1 = inlined_call_operand.vmem [shape: bf16[1152,128], index: 1, kind: input, shape index: {}]
  %s2 = inlined_call_operand.vmem [shape: f32[128,1], index: 2, kind: input, shape index: {}]
  %s3 = inlined_call_operand.vmem [shape: bf16[128,128], index: 3, kind: input, shape index: {}]
  %s4 = inlined_call_operand.vmem [shape: f32[128,128], index: 4, kind: output, shape index: {}]
  %s5 = sld [smem:[#allocation0]]
  $region26: #{resnet_forward.26} parent=0
    _
  %s7 = ssub.s32 1, %s5
  %s8 = scalar_select 0, %s7, %s5
  // Predicated region
  $region2: #{resnet_forward.26} parent=0 // pred_check
    _
  $region3: #{resnet_forward.26} parent=0 // pred_check_branch
    %10 = sbr.rel (0) target = $region5
  $region4: #{resnet_forward.26} parent=0 // pred_region
    _
  $region5: #{resnet_forward.26} parent=0 // pred_fallthru
    _
  // Predicated region
  $region6: #{resnet_forward.26} parent=0 // pred_check
    _
  $region7: #{resnet_forward.26} parent=0 // pred_check_branch
    %12 = sbr.rel (0) target = $region9
  $region8: #{resnet_forward.26} parent=0 // pred_region
    _
  $region9: #{resnet_forward.26} parent=0 // pred_fallthru
    _
  // Predicated region
  $region10: #{resnet_forward.26} parent=0 // pred_check
    _
  $region11: #{resnet_forward.26} parent=0 // pred_check_branch
    %14 = sbr.rel (0) target = $region13
  $region12: #{resnet_forward.26} parent=0 // pred_region
    _
  $region13: #{resnet_forward.26} parent=0 // pred_fallthru
    _
  // Predicated region
  $region14: #{resnet_forward.26} parent=0 // pred_check
    _
  $region15: #{resnet_forward.26} parent=0 // pred_check_branch
    %16 = sbr.rel (0) target = $region17
  $region16: #{resnet_forward.26} parent=0 // pred_region
    _
  $region17: #{resnet_forward.26} parent=0 // pred_fallthru
    _
  %v18 = vld [vmem:[%s0] sm:$0xff]
  %v19 = vld [vmem:[%s0 + $0x8] sm:$0xff]
  %v20 = vld [vmem:[%s0 + $0x10] sm:$0xff]
  %v21 = vld [vmem:[%s0 + $0x18] sm:$0xff]
  %v22 = vld [vmem:[%s0 + $0x20] sm:$0xf]
  %v23 = vld [vmem:[%s0 + $0x24] sm:$0xff]
  %v24 = vld [vmem:[%s0 + $0x2c] sm:$0xff]
  %v25 = vld [vmem:[%s0 + $0x34] sm:$0xff]
  %v26 = vld [vmem:[%s0 + $0x3c] sm:$0xff]
  %v27 = vld [vmem:[%s0 + $0x44] sm:$0xf]
  %v28 = vld [vmem:[%s0 + $0x48] sm:$0xff]
  %v29 = vld [vmem:[%s0 + $0x50] sm:$0xff]
  %v30 = vld [vmem:[%s0 + $0x58] sm:$0xff]
  %v31 = vld [vmem:[%s0 + $0x60] sm:$0xff]
  %v32 = vld [vmem:[%s0 + $0x68] sm:$0xf]
  %v33 = vld [vmem:[%s0 + $0x6c] sm:$0xff]
  %v34 = vld [vmem:[%s0 + $0x74] sm:$0xff]
  %v35 = vld [vmem:[%s0 + $0x7c] sm:$0xff]
  %v36 = vld [vmem:[%s0 + $0x84] sm:$0xff]
  %v37 = vld [vmem:[%s0 + $0x8c] sm:$0xf]
  %v38 = vld [vmem:[%s0 + $0x90] sm:$0xff]
  %v39 = vld [vmem:[%s0 + $0x98] sm:$0xff]
  %v40 = vld [vmem:[%s0 + $0xa0] sm:$0xff]
  %v41 = vld [vmem:[%s0 + $0xa8] sm:$0xff]
  %v42 = vld [vmem:[%s0 + $0xb0] sm:$0xf]
  %v43 = vld [vmem:[%s0 + $0xb4] sm:$0xff]
  %v44 = vld [vmem:[%s0 + $0xbc] sm:$0xff]
  %v45 = vld [vmem:[%s0 + $0xc4] sm:$0xff]
  %v46 = vld [vmem:[%s0 + $0xcc] sm:$0xff]
  %v47 = vld [vmem:[%s0 + $0xd4] sm:$0xf]
  %v48 = vld [vmem:[%s0 + $0xd8] sm:$0xff]
  %v49 = vld [vmem:[%s0 + $0xe0] sm:$0xff]
  %v50 = vld [vmem:[%s0 + $0xe8] sm:$0xff]
  %v51 = vld [vmem:[%s0 + $0xf0] sm:$0xff]
  %v52 = vld [vmem:[%s0 + $0xf8] sm:$0xf]
  %v53 = vld [vmem:[%s0 + $0xfc] sm:$0xff]
  %v54 = vld [vmem:[%s0 + $0x104] sm:$0xff]
  %v55 = vld [vmem:[%s0 + $0x10c] sm:$0xff]
  %v56 = vld [vmem:[%s0 + $0x114] sm:$0xff]
  %v57 = vld [vmem:[%s0 + $0x11c] sm:$0xf]
  %v58 = vld [vmem:[%s0 + $0x120] sm:$0xff]
  %v59 = vld [vmem:[%s0 + $0x128] sm:$0xff]
  %v60 = vld [vmem:[%s0 + $0x130] sm:$0xff]
  %v61 = vld [vmem:[%s0 + $0x138] sm:$0xff]
  %v62 = vld [vmem:[%s0 + $0x140] sm:$0xf]
  %v63 = vld [vmem:[%s0 + $0x144] sm:$0xff]
  %v64 = vld [vmem:[%s0 + $0x14c] sm:$0xff]
  %v65 = vld [vmem:[%s0 + $0x154] sm:$0xff]
  %v66 = vld [vmem:[%s0 + $0x15c] sm:$0xff]
  %v67 = vld [vmem:[%s0 + $0x164] sm:$0xf]
  %v68 = vld [vmem:[%s0 + $0x168] sm:$0xff]
  %v69 = vld [vmem:[%s0 + $0x170] sm:$0xff]
  %v70 = vld [vmem:[%s0 + $0x178] sm:$0xff]
  %v71 = vld [vmem:[%s0 + $0x180] sm:$0xff]
  %v72 = vld [vmem:[%s0 + $0x188] sm:$0xf]
  %v73 = vld [vmem:[%s0 + $0x18c] sm:$0xff]
  %v74 = vld [vmem:[%s0 + $0x194] sm:$0xff]
  %v75 = vld [vmem:[%s0 + $0x19c] sm:$0xff]
  %v76 = vld [vmem:[%s0 + $0x1a4] sm:$0xff]
  %v77 = vld [vmem:[%s0 + $0x1ac] sm:$0xf]
  %v78 = vld [vmem:[%s0 + $0x1b0] sm:$0xff]
  %v79 = vld [vmem:[%s0 + $0x1b8] sm:$0xff]
  %v80 = vld [vmem:[%s0 + $0x1c0] sm:$0xff]
  %v81 = vld [vmem:[%s0 + $0x1c8] sm:$0xff]
  %v82 = vld [vmem:[%s0 + $0x1d0] sm:$0xf]
  %v83 = vld [vmem:[%s0 + $0x1d4] sm:$0xff]
  %v84 = vld [vmem:[%s0 + $0x1dc] sm:$0xff]
  %v85 = vld [vmem:[%s0 + $0x1e4] sm:$0xff]
  %v86 = vld [vmem:[%s0 + $0x1ec] sm:$0xff]
  %v87 = vld [vmem:[%s0 + $0x1f4] sm:$0xf]
  %v88 = vld [vmem:[%s0 + $0x1f8] sm:$0xff]
  %v89 = vld [vmem:[%s0 + $0x200] sm:$0xff]
  %v90 = vld [vmem:[%s0 + $0x208] sm:$0xff]
  %v91 = vld [vmem:[%s0 + $0x210] sm:$0xff]
  %v92 = vld [vmem:[%s0 + $0x218] sm:$0xf]
  %v93 = vld [vmem:[%s0 + $0x21c] sm:$0xff]
  %v94 = vld [vmem:[%s0 + $0x224] sm:$0xff]
  %v95 = vld [vmem:[%s0 + $0x22c] sm:$0xff]
  %v96 = vld [vmem:[%s0 + $0x234] sm:$0xff]
  %v97 = vld [vmem:[%s0 + $0x23c] sm:$0xf]
  %v98 = vld [vmem:[%s1] sm:$0xf]
  %v99 = vld [vmem:[%s1 + $0x4] sm:$0xf]
  %v100 = vld [vmem:[%s1 + $0x8] sm:$0xf]
  %v101 = vld [vmem:[%s1 + $0xc] sm:$0xf]
  %v102 = vld [vmem:[%s1 + $0x10] sm:$0xf]
  %v103 = vld [vmem:[%s1 + $0x14] sm:$0xf]
  %v104 = vld [vmem:[%s1 + $0x18] sm:$0xf]
  %v105 = vld [vmem:[%s1 + $0x1c] sm:$0xf]
  %v106 = vld [vmem:[%s1 + $0x20] sm:$0xf]
  %v107 = vld [vmem:[%s1 + $0x24] sm:$0xf]
  %v108 = vld [vmem:[%s1 + $0x28] sm:$0xf]
  %v109 = vld [vmem:[%s1 + $0x2c] sm:$0xf]
  %v110 = vld [vmem:[%s1 + $0x30] sm:$0xf]
  %v111 = vld [vmem:[%s1 + $0x34] sm:$0xf]
  %v112 = vld [vmem:[%s1 + $0x38] sm:$0xf]
  %v113 = vld [vmem:[%s1 + $0x3c] sm:$0xf]
  %v114 = vld [vmem:[%s1 + $0x40] sm:$0xf]
  %v115 = vld [vmem:[%s1 + $0x44] sm:$0xf]
  %v116 = vld [vmem:[%s1 + $0x48] sm:$0xf]
  %v117 = vld [vmem:[%s1 + $0x4c] sm:$0xf]
  %v118 = vld [vmem:[%s1 + $0x50] sm:$0xf]
  %v119 = vld [vmem:[%s1 + $0x54] sm:$0xf]
  %v120 = vld [vmem:[%s1 + $0x58] sm:$0xf]
  %v121 = vld [vmem:[%s1 + $0x5c] sm:$0xf]
  %v122 = vld [vmem:[%s1 + $0x60] sm:$0xf]
  %v123 = vld [vmem:[%s1 + $0x64] sm:$0xf]
  %v124 = vld [vmem:[%s1 + $0x68] sm:$0xf]
  %v125 = vld [vmem:[%s1 + $0x6c] sm:$0xf]
  %v126 = vld [vmem:[%s1 + $0x70] sm:$0xf]
  %v127 = vld [vmem:[%s1 + $0x74] sm:$0xf]
  %v128 = vld [vmem:[%s1 + $0x78] sm:$0xf]
  %v129 = vld [vmem:[%s1 + $0x7c] sm:$0xf]
  %v130 = vld [vmem:[%s1 + $0x80] sm:$0xf]
  %v131 = vld [vmem:[%s1 + $0x84] sm:$0xf]
  %v132 = vld [vmem:[%s1 + $0x88] sm:$0xf]
  %v133 = vld [vmem:[%s1 + $0x8c] sm:$0xf]
  %v134 = vld [vmem:[%s1 + $0x90] sm:$0xf]
  %v135 = vld [vmem:[%s1 + $0x94] sm:$0xf]
  %v136 = vld [vmem:[%s1 + $0x98] sm:$0xf]
  %v137 = vld [vmem:[%s1 + $0x9c] sm:$0xf]
  %v138 = vld [vmem:[%s1 + $0xa0] sm:$0xf]
  %v139 = vld [vmem:[%s1 + $0xa4] sm:$0xf]
  %v140 = vld [vmem:[%s1 + $0xa8] sm:$0xf]
  %v141 = vld [vmem:[%s1 + $0xac] sm:$0xf]
  %v142 = vld [vmem:[%s1 + $0xb0] sm:$0xf]
  %v143 = vld [vmem:[%s1 + $0xb4] sm:$0xf]
  %v144 = vld [vmem:[%s1 + $0xb8] sm:$0xf]
  %v145 = vld [vmem:[%s1 + $0xbc] sm:$0xf]
  %v146 = vld [vmem:[%s1 + $0xc0] sm:$0xf]
  %v147 = vld [vmem:[%s1 + $0xc4] sm:$0xf]
  %v148 = vld [vmem:[%s1 + $0xc8] sm:$0xf]
  %v149 = vld [vmem:[%s1 + $0xcc] sm:$0xf]
  %v150 = vld [vmem:[%s1 + $0xd0] sm:$0xf]
  %v151 = vld [vmem:[%s1 + $0xd4] sm:$0xf]
  %v152 = vld [vmem:[%s1 + $0xd8] sm:$0xf]
  %v153 = vld [vmem:[%s1 + $0xdc] sm:$0xf]
  %v154 = vld [vmem:[%s1 + $0xe0] sm:$0xf]
  %v155 = vld [vmem:[%s1 + $0xe4] sm:$0xf]
  %v156 = vld [vmem:[%s1 + $0xe8] sm:$0xf]
  %v157 = vld [vmem:[%s1 + $0xec] sm:$0xf]
  %v158 = vld [vmem:[%s1 + $0xf0] sm:$0xf]
  %v159 = vld [vmem:[%s1 + $0xf4] sm:$0xf]
  %v160 = vld [vmem:[%s1 + $0xf8] sm:$0xf]
  %v161 = vld [vmem:[%s1 + $0xfc] sm:$0xf]
  %v162 = vld [vmem:[%s1 + $0x100] sm:$0xf]
  %v163 = vld [vmem:[%s1 + $0x104] sm:$0xf]
  %v164 = vld [vmem:[%s1 + $0x108] sm:$0xf]
  %v165 = vld [vmem:[%s1 + $0x10c] sm:$0xf]
  %v166 = vld [vmem:[%s1 + $0x110] sm:$0xf]
  %v167 = vld [vmem:[%s1 + $0x114] sm:$0xf]
  %v168 = vld [vmem:[%s1 + $0x118] sm:$0xf]
  %v169 = vld [vmem:[%s1 + $0x11c] sm:$0xf]
  %v170 = vld [vmem:[%s1 + $0x120] sm:$0xf]
  %v171 = vld [vmem:[%s1 + $0x124] sm:$0xf]
  %v172 = vld [vmem:[%s1 + $0x128] sm:$0xf]
  %v173 = vld [vmem:[%s1 + $0x12c] sm:$0xf]
  %v174 = vld [vmem:[%s1 + $0x130] sm:$0xf]
  %v175 = vld [vmem:[%s1 + $0x134] sm:$0xf]
  %v176 = vld [vmem:[%s1 + $0x138] sm:$0xf]
  %v177 = vld [vmem:[%s1 + $0x13c] sm:$0xf]
  %v178 = vld [vmem:[%s1 + $0x140] sm:$0xf]
  %v179 = vld [vmem:[%s1 + $0x144] sm:$0xf]
  %v180 = vld [vmem:[%s1 + $0x148] sm:$0xf]
  %v181 = vld [vmem:[%s1 + $0x14c] sm:$0xf]
  %v182 = vld [vmem:[%s1 + $0x150] sm:$0xf]
  %v183 = vld [vmem:[%s1 + $0x154] sm:$0xf]
  %v184 = vld [vmem:[%s1 + $0x158] sm:$0xf]
  %v185 = vld [vmem:[%s1 + $0x15c] sm:$0xf]
  %v186 = vld [vmem:[%s1 + $0x160] sm:$0xf]
  %v187 = vld [vmem:[%s1 + $0x164] sm:$0xf]
  %v188 = vld [vmem:[%s1 + $0x168] sm:$0xf]
  %v189 = vld [vmem:[%s1 + $0x16c] sm:$0xf]
  %v190 = vld [vmem:[%s1 + $0x170] sm:$0xf]
  %v191 = vld [vmem:[%s1 + $0x174] sm:$0xf]
  %v192 = vld [vmem:[%s1 + $0x178] sm:$0xf]
  %v193 = vld [vmem:[%s1 + $0x17c] sm:$0xf]
  %v194 = vld [vmem:[%s1 + $0x180] sm:$0xf]
  %v195 = vld [vmem:[%s1 + $0x184] sm:$0xf]
  %v196 = vld [vmem:[%s1 + $0x188] sm:$0xf]
  %v197 = vld [vmem:[%s1 + $0x18c] sm:$0xf]
  %v198 = vld [vmem:[%s1 + $0x190] sm:$0xf]
  %v199 = vld [vmem:[%s1 + $0x194] sm:$0xf]
  %v200 = vld [vmem:[%s1 + $0x198] sm:$0xf]
  %v201 = vld [vmem:[%s1 + $0x19c] sm:$0xf]
  %v202 = vld [vmem:[%s1 + $0x1a0] sm:$0xf]
  %v203 = vld [vmem:[%s1 + $0x1a4] sm:$0xf]
  %v204 = vld [vmem:[%s1 + $0x1a8] sm:$0xf]
  %v205 = vld [vmem:[%s1 + $0x1ac] sm:$0xf]
  %v206 = vld [vmem:[%s1 + $0x1b0] sm:$0xf]
  %v207 = vld [vmem:[%s1 + $0x1b4] sm:$0xf]
  %v208 = vld [vmem:[%s1 + $0x1b8] sm:$0xf]
  %v209 = vld [vmem:[%s1 + $0x1bc] sm:$0xf]
  %v210 = vld [vmem:[%s1 + $0x1c0] sm:$0xf]
  %v211 = vld [vmem:[%s1 + $0x1c4] sm:$0xf]
  %v212 = vld [vmem:[%s1 + $0x1c8] sm:$0xf]
  %v213 = vld [vmem:[%s1 + $0x1cc] sm:$0xf]
  %v214 = vld [vmem:[%s1 + $0x1d0] sm:$0xf]
  %v215 = vld [vmem:[%s1 + $0x1d4] sm:$0xf]
  %v216 = vld [vmem:[%s1 + $0x1d8] sm:$0xf]
  %v217 = vld [vmem:[%s1 + $0x1dc] sm:$0xf]
  %v218 = vld [vmem:[%s1 + $0x1e0] sm:$0xf]
  %v219 = vld [vmem:[%s1 + $0x1e4] sm:$0xf]
  %v220 = vld [vmem:[%s1 + $0x1e8] sm:$0xf]
  %v221 = vld [vmem:[%s1 + $0x1ec] sm:$0xf]
  %v222 = vld [vmem:[%s1 + $0x1f0] sm:$0xf]
  %v223 = vld [vmem:[%s1 + $0x1f4] sm:$0xf]
  %v224 = vld [vmem:[%s1 + $0x1f8] sm:$0xf]
  %v225 = vld [vmem:[%s1 + $0x1fc] sm:$0xf]
  %v226 = vld [vmem:[%s1 + $0x200] sm:$0xf]
  %v227 = vld [vmem:[%s1 + $0x204] sm:$0xf]
  %v228 = vld [vmem:[%s1 + $0x208] sm:$0xf]
  %v229 = vld [vmem:[%s1 + $0x20c] sm:$0xf]
  %v230 = vld [vmem:[%s1 + $0x210] sm:$0xf]
  %v231 = vld [vmem:[%s1 + $0x214] sm:$0xf]
  %v232 = vld [vmem:[%s1 + $0x218] sm:$0xf]
  %v233 = vld [vmem:[%s1 + $0x21c] sm:$0xf]
  %v234 = vld [vmem:[%s1 + $0x220] sm:$0xf]
  %v235 = vld [vmem:[%s1 + $0x224] sm:$0xf]
  %v236 = vld [vmem:[%s1 + $0x228] sm:$0xf]
  %v237 = vld [vmem:[%s1 + $0x22c] sm:$0xf]
  %v238 = vld [vmem:[%s1 + $0x230] sm:$0xf]
  %v239 = vld [vmem:[%s1 + $0x234] sm:$0xf]
  %v240 = vld [vmem:[%s1 + $0x238] sm:$0xf]
  %v241 = vld [vmem:[%s1 + $0x23c] sm:$0xf]
  %v242 = vld [vmem:[%s2] sm:$0xff]
  %v243 = vld [vmem:[%s2 + $0x8] sm:$0xff]
  %v244 = vld [vmem:[%s2 + $0x10] sm:$0xff]
  %v245 = vld [vmem:[%s2 + $0x18] sm:$0xff]
  %v246 = vld [vmem:[%s2 + $0x20] sm:$0xff]
  %v247 = vld [vmem:[%s2 + $0x28] sm:$0xff]
  %v248 = vld [vmem:[%s2 + $0x30] sm:$0xff]
  %v249 = vld [vmem:[%s2 + $0x38] sm:$0xff]
  %v250 = vld [vmem:[%s2 + $0x40] sm:$0xff]
  %v251 = vld [vmem:[%s2 + $0x48] sm:$0xff]
  %v252 = vld [vmem:[%s2 + $0x50] sm:$0xff]
  %v253 = vld [vmem:[%s2 + $0x58] sm:$0xff]
  %v254 = vld [vmem:[%s2 + $0x60] sm:$0xff]
  %v255 = vld [vmem:[%s2 + $0x68] sm:$0xff]
  %v256 = vld [vmem:[%s2 + $0x70] sm:$0xff]
  %v257 = vld [vmem:[%s2 + $0x78] sm:$0xff]
  %259 = vset.pattern.permute.xlu0 0
  %260 = vperm.xlu0 %259, %v242
  %v261 = vpop.permute.xlu0 %260
  %264 = vset.pattern.permute.xlu0 0
  %265 = vperm.xlu0 %264, %v243
  %v266 = vpop.permute.xlu0 %265
  %269 = vset.pattern.permute.xlu0 0
  %270 = vperm.xlu0 %269, %v244
  %v271 = vpop.permute.xlu0 %270
  %274 = vset.pattern.permute.xlu0 0
  %275 = vperm.xlu0 %274, %v245
  %v276 = vpop.permute.xlu0 %275
  %279 = vset.pattern.permute.xlu0 0
  %280 = vperm.xlu0 %279, %v246
  %v281 = vpop.permute.xlu0 %280
  %284 = vset.pattern.permute.xlu0 0
  %285 = vperm.xlu0 %284, %v247
  %v286 = vpop.permute.xlu0 %285
  %289 = vset.pattern.permute.xlu0 0
  %290 = vperm.xlu0 %289, %v248
  %v291 = vpop.permute.xlu0 %290
  %294 = vset.pattern.permute.xlu0 0
  %295 = vperm.xlu0 %294, %v249
  %v296 = vpop.permute.xlu0 %295
  %299 = vset.pattern.permute.xlu0 0
  %300 = vperm.xlu0 %299, %v250
  %v301 = vpop.permute.xlu0 %300
  %304 = vset.pattern.permute.xlu0 0
  %305 = vperm.xlu0 %304, %v251
  %v306 = vpop.permute.xlu0 %305
  %309 = vset.pattern.permute.xlu0 0
  %310 = vperm.xlu0 %309, %v252
  %v311 = vpop.permute.xlu0 %310
  %314 = vset.pattern.permute.xlu0 0
  %315 = vperm.xlu0 %314, %v253
  %v316 = vpop.permute.xlu0 %315
  %319 = vset.pattern.permute.xlu0 0
  %320 = vperm.xlu0 %319, %v254
  %v321 = vpop.permute.xlu0 %320
  %324 = vset.pattern.permute.xlu0 0
  %325 = vperm.xlu0 %324, %v255
  %v326 = vpop.permute.xlu0 %325
  %329 = vset.pattern.permute.xlu0 0
  %330 = vperm.xlu0 %329, %v256
  %v331 = vpop.permute.xlu0 %330
  %334 = vset.pattern.permute.xlu0 0
  %335 = vperm.xlu0 %334, %v257
  %v336 = vpop.permute.xlu0 %335
  %v418 = vunpack.c.l.b16 %v18
  %v419 = vunpack.c.h.b16 %v18
  %v420 = vunpack.c.l.b16 %v19
  %v421 = vunpack.c.h.b16 %v19
  %v422 = vunpack.c.l.b16 %v20
  %v423 = vunpack.c.h.b16 %v20
  %v424 = vunpack.c.l.b16 %v21
  %v425 = vunpack.c.h.b16 %v21
  %v426 = vunpack.c.l.b16 %v22
  %v427 = vunpack.c.l.b16 %v23
  %v428 = vunpack.c.h.b16 %v23
  %v429 = vunpack.c.l.b16 %v24
  %v430 = vunpack.c.h.b16 %v24
  %v431 = vunpack.c.l.b16 %v25
  %v432 = vunpack.c.h.b16 %v25
  %v433 = vunpack.c.l.b16 %v26
  %v434 = vunpack.c.h.b16 %v26
  %v435 = vunpack.c.l.b16 %v27
  %v436 = vunpack.c.l.b16 %v28
  %v437 = vunpack.c.h.b16 %v28
  %v438 = vunpack.c.l.b16 %v29
  %v439 = vunpack.c.h.b16 %v29
  %v440 = vunpack.c.l.b16 %v30
  %v441 = vunpack.c.h.b16 %v30
  %v442 = vunpack.c.l.b16 %v31
  %v443 = vunpack.c.h.b16 %v31
  %v444 = vunpack.c.l.b16 %v32
  %v445 = vunpack.c.l.b16 %v33
  %v446 = vunpack.c.h.b16 %v33
  %v447 = vunpack.c.l.b16 %v34
  %v448 = vunpack.c.h.b16 %v34
  %v449 = vunpack.c.l.b16 %v35
  %v450 = vunpack.c.h.b16 %v35
  %v451 = vunpack.c.l.b16 %v36
  %v452 = vunpack.c.h.b16 %v36
  %v453 = vunpack.c.l.b16 %v37
  %v454 = vunpack.c.l.b16 %v38
  %v455 = vunpack.c.h.b16 %v38
  %v456 = vunpack.c.l.b16 %v39
  %v457 = vunpack.c.h.b16 %v39
  %v458 = vunpack.c.l.b16 %v40
  %v459 = vunpack.c.h.b16 %v40
  %v460 = vunpack.c.l.b16 %v41
  %v461 = vunpack.c.h.b16 %v41
  %v462 = vunpack.c.l.b16 %v42
  %v463 = vunpack.c.l.b16 %v43
  %v464 = vunpack.c.h.b16 %v43
  %v465 = vunpack.c.l.b16 %v44
  %v466 = vunpack.c.h.b16 %v44
  %v467 = vunpack.c.l.b16 %v45
  %v468 = vunpack.c.h.b16 %v45
  %v469 = vunpack.c.l.b16 %v46
  %v470 = vunpack.c.h.b16 %v46
  %v471 = vunpack.c.l.b16 %v47
  %v472 = vunpack.c.l.b16 %v48
  %v473 = vunpack.c.h.b16 %v48
  %v474 = vunpack.c.l.b16 %v49
  %v475 = vunpack.c.h.b16 %v49
  %v476 = vunpack.c.l.b16 %v50
  %v477 = vunpack.c.h.b16 %v50
  %v478 = vunpack.c.l.b16 %v51
  %v479 = vunpack.c.h.b16 %v51
  %v480 = vunpack.c.l.b16 %v52
  %v481 = vunpack.c.l.b16 %v53
  %v482 = vunpack.c.h.b16 %v53
  %v483 = vunpack.c.l.b16 %v54
  %v484 = vunpack.c.h.b16 %v54
  %v485 = vunpack.c.l.b16 %v55
  %v486 = vunpack.c.h.b16 %v55
  %v487 = vunpack.c.l.b16 %v56
  %v488 = vunpack.c.h.b16 %v56
  %v489 = vunpack.c.l.b16 %v57
  %v490 = vunpack.c.l.b16 %v58
  %v491 = vunpack.c.h.b16 %v58
  %v492 = vunpack.c.l.b16 %v59
  %v493 = vunpack.c.h.b16 %v59
  %v494 = vunpack.c.l.b16 %v60
  %v495 = vunpack.c.h.b16 %v60
  %v496 = vunpack.c.l.b16 %v61
  %v497 = vunpack.c.h.b16 %v61
  %v498 = vunpack.c.l.b16 %v62
  %v499 = vunpack.c.l.b16 %v63
  %v500 = vunpack.c.h.b16 %v63
  %v501 = vunpack.c.l.b16 %v64
  %v502 = vunpack.c.h.b16 %v64
  %v503 = vunpack.c.l.b16 %v65
  %v504 = vunpack.c.h.b16 %v65
  %v505 = vunpack.c.l.b16 %v66
  %v506 = vunpack.c.h.b16 %v66
  %v507 = vunpack.c.l.b16 %v67
  %v508 = vunpack.c.l.b16 %v68
  %v509 = vunpack.c.h.b16 %v68
  %v510 = vunpack.c.l.b16 %v69
  %v511 = vunpack.c.h.b16 %v69
  %v512 = vunpack.c.l.b16 %v70
  %v513 = vunpack.c.h.b16 %v70
  %v514 = vunpack.c.l.b16 %v71
  %v515 = vunpack.c.h.b16 %v71
  %v516 = vunpack.c.l.b16 %v72
  %v517 = vunpack.c.l.b16 %v73
  %v518 = vunpack.c.h.b16 %v73
  %v519 = vunpack.c.l.b16 %v74
  %v520 = vunpack.c.h.b16 %v74
  %v521 = vunpack.c.l.b16 %v75
  %v522 = vunpack.c.h.b16 %v75
  %v523 = vunpack.c.l.b16 %v76
  %v524 = vunpack.c.h.b16 %v76
  %v525 = vunpack.c.l.b16 %v77
  %v526 = vunpack.c.l.b16 %v78
  %v527 = vunpack.c.h.b16 %v78
  %v528 = vunpack.c.l.b16 %v79
  %v529 = vunpack.c.h.b16 %v79
  %v530 = vunpack.c.l.b16 %v80
  %v531 = vunpack.c.h.b16 %v80
  %v532 = vunpack.c.l.b16 %v81
  %v533 = vunpack.c.h.b16 %v81
  %v534 = vunpack.c.l.b16 %v82
  %v535 = vunpack.c.l.b16 %v83
  %v536 = vunpack.c.h.b16 %v83
  %v537 = vunpack.c.l.b16 %v84
  %v538 = vunpack.c.h.b16 %v84
  %v539 = vunpack.c.l.b16 %v85
  %v540 = vunpack.c.h.b16 %v85
  %v541 = vunpack.c.l.b16 %v86
  %v542 = vunpack.c.h.b16 %v86
  %v543 = vunpack.c.l.b16 %v87
  %v544 = vunpack.c.l.b16 %v88
  %v545 = vunpack.c.h.b16 %v88
  %v546 = vunpack.c.l.b16 %v89
  %v547 = vunpack.c.h.b16 %v89
  %v548 = vunpack.c.l.b16 %v90
  %v549 = vunpack.c.h.b16 %v90
  %v550 = vunpack.c.l.b16 %v91
  %v551 = vunpack.c.h.b16 %v91
  %v552 = vunpack.c.l.b16 %v92
  %v553 = vunpack.c.l.b16 %v93
  %v554 = vunpack.c.h.b16 %v93
  %v555 = vunpack.c.l.b16 %v94
  %v556 = vunpack.c.h.b16 %v94
  %v557 = vunpack.c.l.b16 %v95
  %v558 = vunpack.c.h.b16 %v95
  %v559 = vunpack.c.l.b16 %v96
  %v560 = vunpack.c.h.b16 %v96
  %v561 = vunpack.c.l.b16 %v97
  %v562 = vpack.c.b16 %v427, %v418
  %v563 = vpack.c.b16 %v428, %v419
  %v564 = vpack.c.b16 %v429, %v420
  %v565 = vpack.c.b16 %v430, %v421
  %v566 = vpack.c.b16 %v431, %v422
  %v567 = vpack.c.b16 %v432, %v423
  %v568 = vpack.c.b16 %v433, %v424
  %v569 = vpack.c.b16 %v434, %v425
  %v570 = vpack.c.b16 %v435, %v426
  %v571 = vpack.c.b16 %v445, %v436
  %v572 = vpack.c.b16 %v446, %v437
  %v573 = vpack.c.b16 %v447, %v438
  %v574 = vpack.c.b16 %v448, %v439
  %v575 = vpack.c.b16 %v449, %v440
  %v576 = vpack.c.b16 %v450, %v441
  %v577 = vpack.c.b16 %v451, %v442
  %v578 = vpack.c.b16 %v452, %v443
  %v579 = vpack.c.b16 %v453, %v444
  %v580 = vpack.c.b16 %v463, %v454
  %v581 = vpack.c.b16 %v464, %v455
  %v582 = vpack.c.b16 %v465, %v456
  %v583 = vpack.c.b16 %v466, %v457
  %v584 = vpack.c.b16 %v467, %v458
  %v585 = vpack.c.b16 %v468, %v459
  %v586 = vpack.c.b16 %v469, %v460
  %v587 = vpack.c.b16 %v470, %v461
  %v588 = vpack.c.b16 %v471, %v462
  %v589 = vpack.c.b16 %v481, %v472
  %v590 = vpack.c.b16 %v482, %v473
  %v591 = vpack.c.b16 %v483, %v474
  %v592 = vpack.c.b16 %v484, %v475
  %v593 = vpack.c.b16 %v485, %v476
  %v594 = vpack.c.b16 %v486, %v477
  %v595 = vpack.c.b16 %v487, %v478
  %v596 = vpack.c.b16 %v488, %v479
  %v597 = vpack.c.b16 %v489, %v480
  %v598 = vpack.c.b16 %v499, %v490
  %v599 = vpack.c.b16 %v500, %v491
  %v600 = vpack.c.b16 %v501, %v492
  %v601 = vpack.c.b16 %v502, %v493
  %v602 = vpack.c.b16 %v503, %v494
  %v603 = vpack.c.b16 %v504, %v495
  %v604 = vpack.c.b16 %v505, %v496
  %v605 = vpack.c.b16 %v506, %v497
  %v606 = vpack.c.b16 %v507, %v498
  %v607 = vpack.c.b16 %v517, %v508
  %v608 = vpack.c.b16 %v518, %v509
  %v609 = vpack.c.b16 %v519, %v510
  %v610 = vpack.c.b16 %v520, %v511
  %v611 = vpack.c.b16 %v521, %v512
  %v612 = vpack.c.b16 %v522, %v513
  %v613 = vpack.c.b16 %v523, %v514
  %v614 = vpack.c.b16 %v524, %v515
  %v615 = vpack.c.b16 %v525, %v516
  %v616 = vpack.c.b16 %v535, %v526
  %v617 = vpack.c.b16 %v536, %v527
  %v618 = vpack.c.b16 %v537, %v528
  %v619 = vpack.c.b16 %v538, %v529
  %v620 = vpack.c.b16 %v539, %v530
  %v621 = vpack.c.b16 %v540, %v531
  %v622 = vpack.c.b16 %v541, %v532
  %v623 = vpack.c.b16 %v542, %v533
  %v624 = vpack.c.b16 %v543, %v534
  %v625 = vpack.c.b16 %v553, %v544
  %v626 = vpack.c.b16 %v554, %v545
  %v627 = vpack.c.b16 %v555, %v546
  %v628 = vpack.c.b16 %v556, %v547
  %v629 = vpack.c.b16 %v557, %v548
  %v630 = vpack.c.b16 %v558, %v549
  %v631 = vpack.c.b16 %v559, %v550
  %v632 = vpack.c.b16 %v560, %v551
  %v633 = vpack.c.b16 %v561, %v552
  %v850 = vunpack.c.l.b16 %v98
  %v851 = vunpack.c.l.b16 %v99
  %v852 = vunpack.c.l.b16 %v100
  %v853 = vunpack.c.l.b16 %v101
  %v854 = vunpack.c.l.b16 %v102
  %v855 = vunpack.c.l.b16 %v103
  %v856 = vunpack.c.l.b16 %v104
  %v857 = vunpack.c.l.b16 %v105
  %v858 = vunpack.c.l.b16 %v106
  %v859 = vunpack.c.l.b16 %v107
  %v860 = vunpack.c.l.b16 %v108
  %v861 = vunpack.c.l.b16 %v109
  %v862 = vunpack.c.l.b16 %v110
  %v863 = vunpack.c.l.b16 %v111
  %v864 = vunpack.c.l.b16 %v112
  %v865 = vunpack.c.l.b16 %v113
  %v866 = vunpack.c.l.b16 %v114
  %v867 = vunpack.c.l.b16 %v115
  %v868 = vunpack.c.l.b16 %v116
  %v869 = vunpack.c.l.b16 %v117
  %v870 = vunpack.c.l.b16 %v118
  %v871 = vunpack.c.l.b16 %v119
  %v872 = vunpack.c.l.b16 %v120
  %v873 = vunpack.c.l.b16 %v121
  %v874 = vunpack.c.l.b16 %v122
  %v875 = vunpack.c.l.b16 %v123
  %v876 = vunpack.c.l.b16 %v124
  %v877 = vunpack.c.l.b16 %v125
  %v878 = vunpack.c.l.b16 %v126
  %v879 = vunpack.c.l.b16 %v127
  %v880 = vunpack.c.l.b16 %v128
  %v881 = vunpack.c.l.b16 %v129
  %v882 = vunpack.c.l.b16 %v130
  %v883 = vunpack.c.l.b16 %v131
  %v884 = vunpack.c.l.b16 %v132
  %v885 = vunpack.c.l.b16 %v133
  %v886 = vunpack.c.l.b16 %v134
  %v887 = vunpack.c.l.b16 %v135
  %v888 = vunpack.c.l.b16 %v136
  %v889 = vunpack.c.l.b16 %v137
  %v890 = vunpack.c.l.b16 %v138
  %v891 = vunpack.c.l.b16 %v139
  %v892 = vunpack.c.l.b16 %v140
  %v893 = vunpack.c.l.b16 %v141
  %v894 = vunpack.c.l.b16 %v142
  %v895 = vunpack.c.l.b16 %v143
  %v896 = vunpack.c.l.b16 %v144
  %v897 = vunpack.c.l.b16 %v145
  %v898 = vunpack.c.l.b16 %v146
  %v899 = vunpack.c.l.b16 %v147
  %v900 = vunpack.c.l.b16 %v148
  %v901 = vunpack.c.l.b16 %v149
  %v902 = vunpack.c.l.b16 %v150
  %v903 = vunpack.c.l.b16 %v151
  %v904 = vunpack.c.l.b16 %v152
  %v905 = vunpack.c.l.b16 %v153
  %v906 = vunpack.c.l.b16 %v154
  %v907 = vunpack.c.l.b16 %v155
  %v908 = vunpack.c.l.b16 %v156
  %v909 = vunpack.c.l.b16 %v157
  %v910 = vunpack.c.l.b16 %v158
  %v911 = vunpack.c.l.b16 %v159
  %v912 = vunpack.c.l.b16 %v160
  %v913 = vunpack.c.l.b16 %v161
  %v914 = vunpack.c.l.b16 %v162
  %v915 = vunpack.c.l.b16 %v163
  %v916 = vunpack.c.l.b16 %v164
  %v917 = vunpack.c.l.b16 %v165
  %v918 = vunpack.c.l.b16 %v166
  %v919 = vunpack.c.l.b16 %v167
  %v920 = vunpack.c.l.b16 %v168
  %v921 = vunpack.c.l.b16 %v169
  %v922 = vunpack.c.l.b16 %v170
  %v923 = vunpack.c.l.b16 %v171
  %v924 = vunpack.c.l.b16 %v172
  %v925 = vunpack.c.l.b16 %v173
  %v926 = vunpack.c.l.b16 %v174
  %v927 = vunpack.c.l.b16 %v175
  %v928 = vunpack.c.l.b16 %v176
  %v929 = vunpack.c.l.b16 %v177
  %v930 = vunpack.c.l.b16 %v178
  %v931 = vunpack.c.l.b16 %v179
  %v932 = vunpack.c.l.b16 %v180
  %v933 = vunpack.c.l.b16 %v181
  %v934 = vunpack.c.l.b16 %v182
  %v935 = vunpack.c.l.b16 %v183
  %v936 = vunpack.c.l.b16 %v184
  %v937 = vunpack.c.l.b16 %v185
  %v938 = vunpack.c.l.b16 %v186
  %v939 = vunpack.c.l.b16 %v187
  %v940 = vunpack.c.l.b16 %v188
  %v941 = vunpack.c.l.b16 %v189
  %v942 = vunpack.c.l.b16 %v190
  %v943 = vunpack.c.l.b16 %v191
  %v944 = vunpack.c.l.b16 %v192
  %v945 = vunpack.c.l.b16 %v193
  %v946 = vunpack.c.l.b16 %v194
  %v947 = vunpack.c.l.b16 %v195
  %v948 = vunpack.c.l.b16 %v196
  %v949 = vunpack.c.l.b16 %v197
  %v950 = vunpack.c.l.b16 %v198
  %v951 = vunpack.c.l.b16 %v199
  %v952 = vunpack.c.l.b16 %v200
  %v953 = vunpack.c.l.b16 %v201
  %v954 = vunpack.c.l.b16 %v202
  %v955 = vunpack.c.l.b16 %v203
  %v956 = vunpack.c.l.b16 %v204
  %v957 = vunpack.c.l.b16 %v205
  %v958 = vunpack.c.l.b16 %v206
  %v959 = vunpack.c.l.b16 %v207
  %v960 = vunpack.c.l.b16 %v208
  %v961 = vunpack.c.l.b16 %v209
  %v962 = vunpack.c.l.b16 %v210
  %v963 = vunpack.c.l.b16 %v211
  %v964 = vunpack.c.l.b16 %v212
  %v965 = vunpack.c.l.b16 %v213
  %v966 = vunpack.c.l.b16 %v214
  %v967 = vunpack.c.l.b16 %v215
  %v968 = vunpack.c.l.b16 %v216
  %v969 = vunpack.c.l.b16 %v217
  %v970 = vunpack.c.l.b16 %v218
  %v971 = vunpack.c.l.b16 %v219
  %v972 = vunpack.c.l.b16 %v220
  %v973 = vunpack.c.l.b16 %v221
  %v974 = vunpack.c.l.b16 %v222
  %v975 = vunpack.c.l.b16 %v223
  %v976 = vunpack.c.l.b16 %v224
  %v977 = vunpack.c.l.b16 %v225
  %v978 = vunpack.c.l.b16 %v226
  %v979 = vunpack.c.l.b16 %v227
  %v980 = vunpack.c.l.b16 %v228
  %v981 = vunpack.c.l.b16 %v229
  %v982 = vunpack.c.l.b16 %v230
  %v983 = vunpack.c.l.b16 %v231
  %v984 = vunpack.c.l.b16 %v232
  %v985 = vunpack.c.l.b16 %v233
  %v986 = vunpack.c.l.b16 %v234
  %v987 = vunpack.c.l.b16 %v235
  %v988 = vunpack.c.l.b16 %v236
  %v989 = vunpack.c.l.b16 %v237
  %v990 = vunpack.c.l.b16 %v238
  %v991 = vunpack.c.l.b16 %v239
  %v992 = vunpack.c.l.b16 %v240
  %v993 = vunpack.c.l.b16 %v241
  %v994 = vpack.c.b16 %v851, %v850
  %v995 = vpack.c.b16 %v853, %v852
  %v996 = vpack.c.b16 %v855, %v854
  %v997 = vpack.c.b16 %v857, %v856
  %v998 = vpack.c.b16 %v859, %v858
  %v999 = vpack.c.b16 %v861, %v860
  %v1000 = vpack.c.b16 %v863, %v862
  %v1001 = vpack.c.b16 %v865, %v864
  %v1002 = vpack.c.b16 %v867, %v866
  %v1003 = vpack.c.b16 %v869, %v868
  %v1004 = vpack.c.b16 %v871, %v870
  %v1005 = vpack.c.b16 %v873, %v872
  %v1006 = vpack.c.b16 %v875, %v874
  %v1007 = vpack.c.b16 %v877, %v876
  %v1008 = vpack.c.b16 %v879, %v878
  %v1009 = vpack.c.b16 %v881, %v880
  %v1010 = vpack.c.b16 %v883, %v882
  %v1011 = vpack.c.b16 %v885, %v884
  %v1012 = vpack.c.b16 %v887, %v886
  %v1013 = vpack.c.b16 %v889, %v888
  %v1014 = vpack.c.b16 %v891, %v890
  %v1015 = vpack.c.b16 %v893, %v892
  %v1016 = vpack.c.b16 %v895, %v894
  %v1017 = vpack.c.b16 %v897, %v896
  %v1018 = vpack.c.b16 %v899, %v898
  %v1019 = vpack.c.b16 %v901, %v900
  %v1020 = vpack.c.b16 %v903, %v902
  %v1021 = vpack.c.b16 %v905, %v904
  %v1022 = vpack.c.b16 %v907, %v906
  %v1023 = vpack.c.b16 %v909, %v908
  %v1024 = vpack.c.b16 %v911, %v910
  %v1025 = vpack.c.b16 %v913, %v912
  %v1026 = vpack.c.b16 %v915, %v914
  %v1027 = vpack.c.b16 %v917, %v916
  %v1028 = vpack.c.b16 %v919, %v918
  %v1029 = vpack.c.b16 %v921, %v920
  %v1030 = vpack.c.b16 %v923, %v922
  %v1031 = vpack.c.b16 %v925, %v924
  %v1032 = vpack.c.b16 %v927, %v926
  %v1033 = vpack.c.b16 %v929, %v928
  %v1034 = vpack.c.b16 %v931, %v930
  %v1035 = vpack.c.b16 %v933, %v932
  %v1036 = vpack.c.b16 %v935, %v934
  %v1037 = vpack.c.b16 %v937, %v936
  %v1038 = vpack.c.b16 %v939, %v938
  %v1039 = vpack.c.b16 %v941, %v940
  %v1040 = vpack.c.b16 %v943, %v942
  %v1041 = vpack.c.b16 %v945, %v944
  %v1042 = vpack.c.b16 %v947, %v946
  %v1043 = vpack.c.b16 %v949, %v948
  %v1044 = vpack.c.b16 %v951, %v950
  %v1045 = vpack.c.b16 %v953, %v952
  %v1046 = vpack.c.b16 %v955, %v954
  %v1047 = vpack.c.b16 %v957, %v956
  %v1048 = vpack.c.b16 %v959, %v958
  %v1049 = vpack.c.b16 %v961, %v960
  %v1050 = vpack.c.b16 %v963, %v962
  %v1051 = vpack.c.b16 %v965, %v964
  %v1052 = vpack.c.b16 %v967, %v966
  %v1053 = vpack.c.b16 %v969, %v968
  %v1054 = vpack.c.b16 %v971, %v970
  %v1055 = vpack.c.b16 %v973, %v972
  %v1056 = vpack.c.b16 %v975, %v974
  %v1057 = vpack.c.b16 %v977, %v976
  %v1058 = vpack.c.b16 %v979, %v978
  %v1059 = vpack.c.b16 %v981, %v980
  %v1060 = vpack.c.b16 %v983, %v982
  %v1061 = vpack.c.b16 %v985, %v984
  %v1062 = vpack.c.b16 %v987, %v986
  %v1063 = vpack.c.b16 %v989, %v988
  %v1064 = vpack.c.b16 %v991, %v990
  %v1065 = vpack.c.b16 %v993, %v992
  %1138 = vmatprep.subr.bf16.mxu0 0
  %1139 = vmatpush1.bf16.msra.mxu0 %v1001
  %1140 = vmatprep.subr.bf16.mxu0 0
  %1141 = vmatpush1.bf16.msra.mxu0 %v1000
  %1142 = vmatprep.subr.bf16.mxu0 0
  %1143 = vmatpush1.bf16.msra.mxu0 %v999
  %1144 = vmatprep.subr.bf16.mxu0 0
  %1145 = vmatpush1.bf16.msra.mxu0 %v998
  %1146 = vmatprep.subr.bf16.mxu0 0
  %1147 = vmatpush1.bf16.msra.mxu0 %v997
  %1148 = vmatprep.subr.bf16.mxu0 0
  %1149 = vmatpush1.bf16.msra.mxu0 %v996
  %1150 = vmatprep.subr.bf16.mxu0 0
  %1151 = vmatpush1.bf16.msra.mxu0 %v995
  %1152 = vmatprep.subr.bf16.mxu0 0
  %1153 = vmatpush1.bf16.msra.mxu0 %v994
  %1154 = vmatprep.subr.bf16.mxu0 0
  %1155 = vmatpush2.bf16.msra.mxu0 %v1009
  %1156 = vmatprep.subr.bf16.mxu0 0
  %1157 = vmatpush2.bf16.msra.mxu0 %v1008
  %1158 = vmatprep.subr.bf16.mxu0 0
  %1159 = vmatpush2.bf16.msra.mxu0 %v1007
  %1160 = vmatprep.subr.bf16.mxu0 0
  %1161 = vmatpush2.bf16.msra.mxu0 %v1006
  %1162 = vmatprep.subr.bf16.mxu0 0
  %1163 = vmatpush2.bf16.msra.mxu0 %v1005
  %1164 = vmatprep.subr.bf16.mxu0 0
  %1165 = vmatpush2.bf16.msra.mxu0 %v1004
  %1166 = vmatprep.subr.bf16.mxu0 0
  %1167 = vmatpush2.bf16.msra.mxu0 %v1003
  %1168 = vmatprep.subr.bf16.mxu0 0
  %1169 = vmatpush2.bf16.msra.mxu0 %v1002
  %1170 = vmatprep.mubr.bf16.mxu0 %v563
  %1171 = vmatmul.mubr.bf16.gmra.mxu0 %v562
  %v1172 = vpop.f32.mrf.mxu0
  %v1173 = vadd.f32 %v261, %v1172
  %v1174 = vpop.f32.mrf.mxu0
  %v1175 = vpop.f32.mrf.mxu0
  %v1176 = vadd.f32 %v266, %v1175
  %v1177 = vpop.f32.mrf.mxu0
  %1178 = vmatprep.mubr.bf16.mxu0 %v572
  %1179 = vmatmul.mubr.bf16.gmra.mxu0 %v571
  %v1180 = vpop.f32.mrf.mxu0
  %v1181 = vadd.f32 %v271, %v1180
  %v1182 = vpop.f32.mrf.mxu0
  %v1183 = vpop.f32.mrf.mxu0
  %v1184 = vadd.f32 %v276, %v1183
  %v1185 = vpop.f32.mrf.mxu0
  %1186 = vmatprep.mubr.bf16.mxu0 %v581
  %1187 = vmatmul.mubr.bf16.gmra.mxu0 %v580
  %v1188 = vpop.f32.mrf.mxu0
  %v1189 = vadd.f32 %v281, %v1188
  %v1190 = vpop.f32.mrf.mxu0
  %v1191 = vpop.f32.mrf.mxu0
  %v1192 = vadd.f32 %v286, %v1191
  %v1193 = vpop.f32.mrf.mxu0
  %1194 = vmatprep.mubr.bf16.mxu0 %v590
  %1195 = vmatmul.mubr.bf16.gmra.mxu0 %v589
  %v1196 = vpop.f32.mrf.mxu0
  %v1197 = vadd.f32 %v291, %v1196
  %v1198 = vpop.f32.mrf.mxu0
  %v1199 = vpop.f32.mrf.mxu0
  %v1200 = vadd.f32 %v296, %v1199
  %v1201 = vpop.f32.mrf.mxu0
  %1202 = vmatprep.mubr.bf16.mxu0 %v599
  %1203 = vmatmul.mubr.bf16.gmra.mxu0 %v598
  %v1204 = vpop.f32.mrf.mxu0
  %v1205 = vadd.f32 %v301, %v1204
  %v1206 = vpop.f32.mrf.mxu0
  %v1207 = vpop.f32.mrf.mxu0
  %v1208 = vadd.f32 %v306, %v1207
  %v1209 = vpop.f32.mrf.mxu0
  %1210 = vmatprep.mubr.bf16.mxu0 %v608
  %1211 = vmatmul.mubr.bf16.gmra.mxu0 %v607
  %v1212 = vpop.f32.mrf.mxu0
  %v1213 = vadd.f32 %v311, %v1212
  %v1214 = vpop.f32.mrf.mxu0
  %v1215 = vpop.f32.mrf.mxu0
  %v1216 = vadd.f32 %v316, %v1215
  %v1217 = vpop.f32.mrf.mxu0
  %1218 = vmatprep.mubr.bf16.mxu0 %v617
  %1219 = vmatmul.mubr.bf16.gmra.mxu0 %v616
  %v1220 = vpop.f32.mrf.mxu0
  %v1221 = vadd.f32 %v321, %v1220
  %v1222 = vpop.f32.mrf.mxu0
  %v1223 = vpop.f32.mrf.mxu0
  %v1224 = vadd.f32 %v326, %v1223
  %v1225 = vpop.f32.mrf.mxu0
  %1226 = vmatprep.mubr.bf16.mxu0 %v626
  %1227 = vmatmul.mubr.bf16.gmra.mxu0 %v625
  %v1228 = vpop.f32.mrf.mxu0
  %v1229 = vadd.f32 %v331, %v1228
  %v1230 = vpop.f32.mrf.mxu0
  %v1231 = vpop.f32.mrf.mxu0
  %v1232 = vadd.f32 %v336, %v1231
  %v1233 = vpop.f32.mrf.mxu0
  %1234 = vdwg.mxu0
  %1235 = vmatprep.subr.bf16.mxu0 0
  %1236 = vmatpush1.bf16.msra.mxu0 %v1017
  %1237 = vmatprep.subr.bf16.mxu0 0
  %1238 = vmatpush1.bf16.msra.mxu0 %v1016
  %1239 = vmatprep.subr.bf16.mxu0 0
  %1240 = vmatpush1.bf16.msra.mxu0 %v1015
  %1241 = vmatprep.subr.bf16.mxu0 0
  %1242 = vmatpush1.bf16.msra.mxu0 %v1014
  %1243 = vmatprep.subr.bf16.mxu0 0
  %1244 = vmatpush1.bf16.msra.mxu0 %v1013
  %1245 = vmatprep.subr.bf16.mxu0 0
  %1246 = vmatpush1.bf16.msra.mxu0 %v1012
  %1247 = vmatprep.subr.bf16.mxu0 0
  %1248 = vmatpush1.bf16.msra.mxu0 %v1011
  %1249 = vmatprep.subr.bf16.mxu0 0
  %1250 = vmatpush1.bf16.msra.mxu0 %v1010
  %1251 = vmatprep.subr.bf16.mxu0 0
  %1252 = vmatpush2.bf16.msra.mxu0 %v1025
  %1253 = vmatprep.subr.bf16.mxu0 0
  %1254 = vmatpush2.bf16.msra.mxu0 %v1024
  %1255 = vmatprep.subr.bf16.mxu0 0
  %1256 = vmatpush2.bf16.msra.mxu0 %v1023
  %1257 = vmatprep.subr.bf16.mxu0 0
  %1258 = vmatpush2.bf16.msra.mxu0 %v1022
  %1259 = vmatprep.subr.bf16.mxu0 0
  %1260 = vmatpush2.bf16.msra.mxu0 %v1021
  %1261 = vmatprep.subr.bf16.mxu0 0
  %1262 = vmatpush2.bf16.msra.mxu0 %v1020
  %1263 = vmatprep.subr.bf16.mxu0 0
  %1264 = vmatpush2.bf16.msra.mxu0 %v1019
  %1265 = vmatprep.subr.bf16.mxu0 0
  %1266 = vmatpush2.bf16.msra.mxu0 %v1018
  %1267 = vmatprep.mubr.bf16.mxu0 %v565
  %1268 = vmatmul.mubr.bf16.gmra.mxu0 %v564
  %v1269 = vpop.f32.mrf.mxu0
  %v1270 = vadd.f32 %v1173, %v1269
  %v1271 = vpop.f32.mrf.mxu0
  %v1272 = vpop.f32.mrf.mxu0
  %v1273 = vadd.f32 %v1176, %v1272
  %v1274 = vpop.f32.mrf.mxu0
  %1275 = vmatprep.mubr.bf16.mxu0 %v574
  %1276 = vmatmul.mubr.bf16.gmra.mxu0 %v573
  %v1277 = vpop.f32.mrf.mxu0
  %v1278 = vadd.f32 %v1181, %v1277
  %v1279 = vpop.f32.mrf.mxu0
  %v1280 = vpop.f32.mrf.mxu0
  %v1281 = vadd.f32 %v1184, %v1280
  %v1282 = vpop.f32.mrf.mxu0
  %1283 = vmatprep.mubr.bf16.mxu0 %v583
  %1284 = vmatmul.mubr.bf16.gmra.mxu0 %v582
  %v1285 = vpop.f32.mrf.mxu0
  %v1286 = vadd.f32 %v1189, %v1285
  %v1287 = vpop.f32.mrf.mxu0
  %v1288 = vpop.f32.mrf.mxu0
  %v1289 = vadd.f32 %v1192, %v1288
  %v1290 = vpop.f32.mrf.mxu0
  %1291 = vmatprep.mubr.bf16.mxu0 %v592
  %1292 = vmatmul.mubr.bf16.gmra.mxu0 %v591
  %v1293 = vpop.f32.mrf.mxu0
  %v1294 = vadd.f32 %v1197, %v1293
  %v1295 = vpop.f32.mrf.mxu0
  %v1296 = vpop.f32.mrf.mxu0
  %v1297 = vadd.f32 %v1200, %v1296
  %v1298 = vpop.f32.mrf.mxu0
  %1299 = vmatprep.mubr.bf16.mxu0 %v601
  %1300 = vmatmul.mubr.bf16.gmra.mxu0 %v600
  %v1301 = vpop.f32.mrf.mxu0
  %v1302 = vadd.f32 %v1205, %v1301
  %v1303 = vpop.f32.mrf.mxu0
  %v1304 = vpop.f32.mrf.mxu0
  %v1305 = vadd.f32 %v1208, %v1304
  %v1306 = vpop.f32.mrf.mxu0
  %1307 = vmatprep.mubr.bf16.mxu0 %v610
  %1308 = vmatmul.mubr.bf16.gmra.mxu0 %v609
  %v1309 = vpop.f32.mrf.mxu0
  %v1310 = vadd.f32 %v1213, %v1309
  %v1311 = vpop.f32.mrf.mxu0
  %v1312 = vpop.f32.mrf.mxu0
  %v1313 = vadd.f32 %v1216, %v1312
  %v1314 = vpop.f32.mrf.mxu0
  %1315 = vmatprep.mubr.bf16.mxu0 %v619
  %1316 = vmatmul.mubr.bf16.gmra.mxu0 %v618
  %v1317 = vpop.f32.mrf.mxu0
  %v1318 = vadd.f32 %v1221, %v1317
  %v1319 = vpop.f32.mrf.mxu0
  %v1320 = vpop.f32.mrf.mxu0
  %v1321 = vadd.f32 %v1224, %v1320
  %v1322 = vpop.f32.mrf.mxu0
  %1323 = vmatprep.mubr.bf16.mxu0 %v628
  %1324 = vmatmul.mubr.bf16.gmra.mxu0 %v627
  %v1325 = vpop.f32.mrf.mxu0
  %v1326 = vadd.f32 %v1229, %v1325
  %v1327 = vpop.f32.mrf.mxu0
  %v1328 = vpop.f32.mrf.mxu0
  %v1329 = vadd.f32 %v1232, %v1328
  %v1330 = vpop.f32.mrf.mxu0
  %1331 = vdwg.mxu0
  %1332 = vmatprep.subr.bf16.mxu0 0
  %1333 = vmatpush1.bf16.msra.mxu0 %v1033
  %1334 = vmatprep.subr.bf16.mxu0 0
  %1335 = vmatpush1.bf16.msra.mxu0 %v1032
  %1336 = vmatprep.subr.bf16.mxu0 0
  %1337 = vmatpush1.bf16.msra.mxu0 %v1031
  %1338 = vmatprep.subr.bf16.mxu0 0
  %1339 = vmatpush1.bf16.msra.mxu0 %v1030
  %1340 = vmatprep.subr.bf16.mxu0 0
  %1341 = vmatpush1.bf16.msra.mxu0 %v1029
  %1342 = vmatprep.subr.bf16.mxu0 0
  %1343 = vmatpush1.bf16.msra.mxu0 %v1028
  %1344 = vmatprep.subr.bf16.mxu0 0
  %1345 = vmatpush1.bf16.msra.mxu0 %v1027
  %1346 = vmatprep.subr.bf16.mxu0 0
  %1347 = vmatpush1.bf16.msra.mxu0 %v1026
  %1348 = vmatprep.subr.bf16.mxu0 0
  %1349 = vmatpush2.bf16.msra.mxu0 %v1041
  %1350 = vmatprep.subr.bf16.mxu0 0
  %1351 = vmatpush2.bf16.msra.mxu0 %v1040
  %1352 = vmatprep.subr.bf16.mxu0 0
  %1353 = vmatpush2.bf16.msra.mxu0 %v1039
  %1354 = vmatprep.subr.bf16.mxu0 0
  %1355 = vmatpush2.bf16.msra.mxu0 %v1038
  %1356 = vmatprep.subr.bf16.mxu0 0
  %1357 = vmatpush2.bf16.msra.mxu0 %v1037
  %1358 = vmatprep.subr.bf16.mxu0 0
  %1359 = vmatpush2.bf16.msra.mxu0 %v1036
  %1360 = vmatprep.subr.bf16.mxu0 0
  %1361 = vmatpush2.bf16.msra.mxu0 %v1035
  %1362 = vmatprep.subr.bf16.mxu0 0
  %1363 = vmatpush2.bf16.msra.mxu0 %v1034
  %1364 = vmatprep.mubr.bf16.mxu0 %v567
  %1365 = vmatmul.mubr.bf16.gmra.mxu0 %v566
  %v1366 = vpop.f32.mrf.mxu0
  %v1367 = vadd.f32 %v1270, %v1366
  %v1368 = vpop.f32.mrf.mxu0
  %v1369 = vpop.f32.mrf.mxu0
  %v1370 = vadd.f32 %v1273, %v1369
  %v1371 = vpop.f32.mrf.mxu0
  %1372 = vmatprep.mubr.bf16.mxu0 %v576
  %1373 = vmatmul.mubr.bf16.gmra.mxu0 %v575
  %v1374 = vpop.f32.mrf.mxu0
  %v1375 = vadd.f32 %v1278, %v1374
  %v1376 = vpop.f32.mrf.mxu0
  %v1377 = vpop.f32.mrf.mxu0
  %v1378 = vadd.f32 %v1281, %v1377
  %v1379 = vpop.f32.mrf.mxu0
  %1380 = vmatprep.mubr.bf16.mxu0 %v585
  %1381 = vmatmul.mubr.bf16.gmra.mxu0 %v584
  %v1382 = vpop.f32.mrf.mxu0
  %v1383 = vadd.f32 %v1286, %v1382
  %v1384 = vpop.f32.mrf.mxu0
  %v1385 = vpop.f32.mrf.mxu0
  %v1386 = vadd.f32 %v1289, %v1385
  %v1387 = vpop.f32.mrf.mxu0
  %1388 = vmatprep.mubr.bf16.mxu0 %v594
  %1389 = vmatmul.mubr.bf16.gmra.mxu0 %v593
  %v1390 = vpop.f32.mrf.mxu0
  %v1391 = vadd.f32 %v1294, %v1390
  %v1392 = vpop.f32.mrf.mxu0
  %v1393 = vpop.f32.mrf.mxu0
  %v1394 = vadd.f32 %v1297, %v1393
  %v1395 = vpop.f32.mrf.mxu0
  %1396 = vmatprep.mubr.bf16.mxu0 %v603
  %1397 = vmatmul.mubr.bf16.gmra.mxu0 %v602
  %v1398 = vpop.f32.mrf.mxu0
  %v1399 = vadd.f32 %v1302, %v1398
  %v1400 = vpop.f32.mrf.mxu0
  %v1401 = vpop.f32.mrf.mxu0
  %v1402 = vadd.f32 %v1305, %v1401
  %v1403 = vpop.f32.mrf.mxu0
  %1404 = vmatprep.mubr.bf16.mxu0 %v612
  %1405 = vmatmul.mubr.bf16.gmra.mxu0 %v611
  %v1406 = vpop.f32.mrf.mxu0
  %v1407 = vadd.f32 %v1310, %v1406
  %v1408 = vpop.f32.mrf.mxu0
  %v1409 = vpop.f32.mrf.mxu0
  %v1410 = vadd.f32 %v1313, %v1409
  %v1411 = vpop.f32.mrf.mxu0
  %1412 = vmatprep.mubr.bf16.mxu0 %v621
  %1413 = vmatmul.mubr.bf16.gmra.mxu0 %v620
  %v1414 = vpop.f32.mrf.mxu0
  %v1415 = vadd.f32 %v1318, %v1414
  %v1416 = vpop.f32.mrf.mxu0
  %v1417 = vpop.f32.mrf.mxu0
  %v1418 = vadd.f32 %v1321, %v1417
  %v1419 = vpop.f32.mrf.mxu0
  %1420 = vmatprep.mubr.bf16.mxu0 %v630
  %1421 = vmatmul.mubr.bf16.gmra.mxu0 %v629
  %v1422 = vpop.f32.mrf.mxu0
  %v1423 = vadd.f32 %v1326, %v1422
  %v1424 = vpop.f32.mrf.mxu0
  %v1425 = vpop.f32.mrf.mxu0
  %v1426 = vadd.f32 %v1329, %v1425
  %v1427 = vpop.f32.mrf.mxu0
  %1428 = vdwg.mxu0
  %1429 = vmatprep.subr.bf16.mxu0 0
  %1430 = vmatpush1.bf16.msra.mxu0 %v1049
  %1431 = vmatprep.subr.bf16.mxu0 0
  %1432 = vmatpush1.bf16.msra.mxu0 %v1048
  %1433 = vmatprep.subr.bf16.mxu0 0
  %1434 = vmatpush1.bf16.msra.mxu0 %v1047
  %1435 = vmatprep.subr.bf16.mxu0 0
  %1436 = vmatpush1.bf16.msra.mxu0 %v1046
  %1437 = vmatprep.subr.bf16.mxu0 0
  %1438 = vmatpush1.bf16.msra.mxu0 %v1045
  %1439 = vmatprep.subr.bf16.mxu0 0
  %1440 = vmatpush1.bf16.msra.mxu0 %v1044
  %1441 = vmatprep.subr.bf16.mxu0 0
  %1442 = vmatpush1.bf16.msra.mxu0 %v1043
  %1443 = vmatprep.subr.bf16.mxu0 0
  %1444 = vmatpush1.bf16.msra.mxu0 %v1042
  %1445 = vmatprep.subr.bf16.mxu0 0
  %1446 = vmatpush2.bf16.msra.mxu0 %v1057
  %1447 = vmatprep.subr.bf16.mxu0 0
  %1448 = vmatpush2.bf16.msra.mxu0 %v1056
  %1449 = vmatprep.subr.bf16.mxu0 0
  %1450 = vmatpush2.bf16.msra.mxu0 %v1055
  %1451 = vmatprep.subr.bf16.mxu0 0
  %1452 = vmatpush2.bf16.msra.mxu0 %v1054
  %1453 = vmatprep.subr.bf16.mxu0 0
  %1454 = vmatpush2.bf16.msra.mxu0 %v1053
  %1455 = vmatprep.subr.bf16.mxu0 0
  %1456 = vmatpush2.bf16.msra.mxu0 %v1052
  %1457 = vmatprep.subr.bf16.mxu0 0
  %1458 = vmatpush2.bf16.msra.mxu0 %v1051
  %1459 = vmatprep.subr.bf16.mxu0 0
  %1460 = vmatpush2.bf16.msra.mxu0 %v1050
  %1461 = vmatprep.mubr.bf16.mxu0 %v569
  %1462 = vmatmul.mubr.bf16.gmra.mxu0 %v568
  %v1463 = vpop.f32.mrf.mxu0
  %v1464 = vadd.f32 %v1367, %v1463
  %v1465 = vpop.f32.mrf.mxu0
  %v1466 = vpop.f32.mrf.mxu0
  %v1467 = vadd.f32 %v1370, %v1466
  %v1468 = vpop.f32.mrf.mxu0
  %1469 = vmatprep.mubr.bf16.mxu0 %v578
  %1470 = vmatmul.mubr.bf16.gmra.mxu0 %v577
  %v1471 = vpop.f32.mrf.mxu0
  %v1472 = vadd.f32 %v1375, %v1471
  %v1473 = vpop.f32.mrf.mxu0
  %v1474 = vpop.f32.mrf.mxu0
  %v1475 = vadd.f32 %v1378, %v1474
  %v1476 = vpop.f32.mrf.mxu0
  %1477 = vmatprep.mubr.bf16.mxu0 %v587
  %1478 = vmatmul.mubr.bf16.gmra.mxu0 %v586
  %v1479 = vpop.f32.mrf.mxu0
  %v1480 = vadd.f32 %v1383, %v1479
  %v1481 = vpop.f32.mrf.mxu0
  %v1482 = vpop.f32.mrf.mxu0
  %v1483 = vadd.f32 %v1386, %v1482
  %v1484 = vpop.f32.mrf.mxu0
  %1485 = vmatprep.mubr.bf16.mxu0 %v596
  %1486 = vmatmul.mubr.bf16.gmra.mxu0 %v595
  %v1487 = vpop.f32.mrf.mxu0
  %v1488 = vadd.f32 %v1391, %v1487
  %v1489 = vpop.f32.mrf.mxu0
  %v1490 = vpop.f32.mrf.mxu0
  %v1491 = vadd.f32 %v1394, %v1490
  %v1492 = vpop.f32.mrf.mxu0
  %1493 = vmatprep.mubr.bf16.mxu0 %v605
  %1494 = vmatmul.mubr.bf16.gmra.mxu0 %v604
  %v1495 = vpop.f32.mrf.mxu0
  %v1496 = vadd.f32 %v1399, %v1495
  %v1497 = vpop.f32.mrf.mxu0
  %v1498 = vpop.f32.mrf.mxu0
  %v1499 = vadd.f32 %v1402, %v1498
  %v1500 = vpop.f32.mrf.mxu0
  %1501 = vmatprep.mubr.bf16.mxu0 %v614
  %1502 = vmatmul.mubr.bf16.gmra.mxu0 %v613
  %v1503 = vpop.f32.mrf.mxu0
  %v1504 = vadd.f32 %v1407, %v1503
  %v1505 = vpop.f32.mrf.mxu0
  %v1506 = vpop.f32.mrf.mxu0
  %v1507 = vadd.f32 %v1410, %v1506
  %v1508 = vpop.f32.mrf.mxu0
  %1509 = vmatprep.mubr.bf16.mxu0 %v623
  %1510 = vmatmul.mubr.bf16.gmra.mxu0 %v622
  %v1511 = vpop.f32.mrf.mxu0
  %v1512 = vadd.f32 %v1415, %v1511
  %v1513 = vpop.f32.mrf.mxu0
  %v1514 = vpop.f32.mrf.mxu0
  %v1515 = vadd.f32 %v1418, %v1514
  %v1516 = vpop.f32.mrf.mxu0
  %1517 = vmatprep.mubr.bf16.mxu0 %v632
  %1518 = vmatmul.mubr.bf16.gmra.mxu0 %v631
  %v1519 = vpop.f32.mrf.mxu0
  %v1520 = vadd.f32 %v1423, %v1519
  %v1521 = vpop.f32.mrf.mxu0
  %v1522 = vpop.f32.mrf.mxu0
  %v1523 = vadd.f32 %v1426, %v1522
  %v1524 = vpop.f32.mrf.mxu0
  %1525 = vdwg.mxu0
  %1526 = vmatprep.subr.bf16.mxu0 0
  %1527 = vmatpush1.bf16.msra.mxu0 %v1065
  %1528 = vmatprep.subr.bf16.mxu0 0
  %1529 = vmatpush1.bf16.msra.mxu0 %v1064
  %1530 = vmatprep.subr.bf16.mxu0 0
  %1531 = vmatpush1.bf16.msra.mxu0 %v1063
  %1532 = vmatprep.subr.bf16.mxu0 0
  %1533 = vmatpush1.bf16.msra.mxu0 %v1062
  %1534 = vmatprep.subr.bf16.mxu0 0
  %1535 = vmatpush1.bf16.msra.mxu0 %v1061
  %1536 = vmatprep.subr.bf16.mxu0 0
  %1537 = vmatpush1.bf16.msra.mxu0 %v1060
  %1538 = vmatprep.subr.bf16.mxu0 0
  %1539 = vmatpush1.bf16.msra.mxu0 %v1059
  %1540 = vmatprep.subr.bf16.mxu0 0
  %1541 = vmatpush1.bf16.msra.mxu0 %v1058
  %1542 = vmatprep.subr.bf16.mxu0 0
  %1543 = vmatpush2.bf16.msra.mxu0 0
  %1544 = vmatprep.subr.bf16.mxu0 0
  %1545 = vmatpush2.bf16.msra.mxu0 0
  %1546 = vmatprep.subr.bf16.mxu0 0
  %1547 = vmatpush2.bf16.msra.mxu0 0
  %1548 = vmatprep.subr.bf16.mxu0 0
  %1549 = vmatpush2.bf16.msra.mxu0 0
  %1550 = vmatprep.subr.bf16.mxu0 0
  %1551 = vmatpush2.bf16.msra.mxu0 0
  %1552 = vmatprep.subr.bf16.mxu0 0
  %1553 = vmatpush2.bf16.msra.mxu0 0
  %1554 = vmatprep.subr.bf16.mxu0 0
  %1555 = vmatpush2.bf16.msra.mxu0 0
  %1556 = vmatprep.subr.bf16.mxu0 0
  %1557 = vmatpush2.bf16.msra.mxu0 0
  %1558 = vmatprep.mubr.bf16.mxu0 0
  %1559 = vmatmul.mubr.bf16.gmra.mxu0 %v570
  %v1560 = vpop.f32.mrf.mxu0
  %v1561 = vadd.f32 %v1464, %v1560
  %v1562 = vpop.f32.mrf.mxu0
  %v1563 = vpop.f32.mrf.mxu0
  %v1564 = vadd.f32 %v1467, %v1563
  %v1565 = vpop.f32.mrf.mxu0
  %1566 = vmatprep.mubr.bf16.mxu0 0
  %1567 = vmatmul.mubr.bf16.gmra.mxu0 %v579
  %v1568 = vpop.f32.mrf.mxu0
  %v1569 = vadd.f32 %v1472, %v1568
  %v1570 = vpop.f32.mrf.mxu0
  %v1571 = vpop.f32.mrf.mxu0
  %v1572 = vadd.f32 %v1475, %v1571
  %v1573 = vpop.f32.mrf.mxu0
  %1574 = vmatprep.mubr.bf16.mxu0 0
  %1575 = vmatmul.mubr.bf16.gmra.mxu0 %v588
  %v1576 = vpop.f32.mrf.mxu0
  %v1577 = vadd.f32 %v1480, %v1576
  %v1578 = vpop.f32.mrf.mxu0
  %v1579 = vpop.f32.mrf.mxu0
  %v1580 = vadd.f32 %v1483, %v1579
  %v1581 = vpop.f32.mrf.mxu0
  %1582 = vmatprep.mubr.bf16.mxu0 0
  %1583 = vmatmul.mubr.bf16.gmra.mxu0 %v597
  %v1584 = vpop.f32.mrf.mxu0
  %v1585 = vadd.f32 %v1488, %v1584
  %v1586 = vpop.f32.mrf.mxu0
  %v1587 = vpop.f32.mrf.mxu0
  %v1588 = vadd.f32 %v1491, %v1587
  %v1589 = vpop.f32.mrf.mxu0
  %1590 = vmatprep.mubr.bf16.mxu0 0
  %1591 = vmatmul.mubr.bf16.gmra.mxu0 %v606
  %v1592 = vpop.f32.mrf.mxu0
  %v1593 = vadd.f32 %v1496, %v1592
  %v1594 = vpop.f32.mrf.mxu0
  %v1595 = vpop.f32.mrf.mxu0
  %v1596 = vadd.f32 %v1499, %v1595
  %v1597 = vpop.f32.mrf.mxu0
  %1598 = vmatprep.mubr.bf16.mxu0 0
  %1599 = vmatmul.mubr.bf16.gmra.mxu0 %v615
  %v1600 = vpop.f32.mrf.mxu0
  %v1601 = vadd.f32 %v1504, %v1600
  %v1602 = vpop.f32.mrf.mxu0
  %v1603 = vpop.f32.mrf.mxu0
  %v1604 = vadd.f32 %v1507, %v1603
  %v1605 = vpop.f32.mrf.mxu0
  %1606 = vmatprep.mubr.bf16.mxu0 0
  %1607 = vmatmul.mubr.bf16.gmra.mxu0 %v624
  %v1608 = vpop.f32.mrf.mxu0
  %v1609 = vadd.f32 %v1512, %v1608
  %v1610 = vpop.f32.mrf.mxu0
  %v1611 = vpop.f32.mrf.mxu0
  %v1612 = vadd.f32 %v1515, %v1611
  %v1613 = vpop.f32.mrf.mxu0
  %1614 = vmatprep.mubr.bf16.mxu0 0
  %1615 = vmatmul.mubr.bf16.gmra.mxu0 %v633
  %v1616 = vpop.f32.mrf.mxu0
  %v1617 = vadd.f32 %v1520, %v1616
  %v1618 = vpop.f32.mrf.mxu0
  %v1619 = vpop.f32.mrf.mxu0
  %v1620 = vadd.f32 %v1523, %v1619
  %v1621 = vpop.f32.mrf.mxu0
  %1622 = vdwg.mxu0
  %v1623 = vld [vmem:[%s3] sm:$0xf]
  %v1624 = vld [vmem:[%s3 + $0x4] sm:$0xf]
  %v1625 = vld [vmem:[%s3 + $0x8] sm:$0xf]
  %v1626 = vld [vmem:[%s3 + $0xc] sm:$0xf]
  %v1627 = vld [vmem:[%s3 + $0x10] sm:$0xf]
  %v1628 = vld [vmem:[%s3 + $0x14] sm:$0xf]
  %v1629 = vld [vmem:[%s3 + $0x18] sm:$0xf]
  %v1630 = vld [vmem:[%s3 + $0x1c] sm:$0xf]
  %v1631 = vld [vmem:[%s3 + $0x20] sm:$0xf]
  %v1632 = vld [vmem:[%s3 + $0x24] sm:$0xf]
  %v1633 = vld [vmem:[%s3 + $0x28] sm:$0xf]
  %v1634 = vld [vmem:[%s3 + $0x2c] sm:$0xf]
  %v1635 = vld [vmem:[%s3 + $0x30] sm:$0xf]
  %v1636 = vld [vmem:[%s3 + $0x34] sm:$0xf]
  %v1637 = vld [vmem:[%s3 + $0x38] sm:$0xf]
  %v1638 = vld [vmem:[%s3 + $0x3c] sm:$0xf]
  %v1639 = vunpack.c.l.bf16 %v1623
  %v1640 = vunpack.c.l.bf16 %v1624
  %v1641 = vunpack.c.l.bf16 %v1625
  %v1642 = vunpack.c.l.bf16 %v1626
  %v1643 = vunpack.c.l.bf16 %v1627
  %v1644 = vunpack.c.l.bf16 %v1628
  %v1645 = vunpack.c.l.bf16 %v1629
  %v1646 = vunpack.c.l.bf16 %v1630
  %v1647 = vunpack.c.l.bf16 %v1631
  %v1648 = vunpack.c.l.bf16 %v1632
  %v1649 = vunpack.c.l.bf16 %v1633
  %v1650 = vunpack.c.l.bf16 %v1634
  %v1651 = vunpack.c.l.bf16 %v1635
  %v1652 = vunpack.c.l.bf16 %v1636
  %v1653 = vunpack.c.l.bf16 %v1637
  %v1654 = vunpack.c.l.bf16 %v1638
  %v1655 = vadd.f32 %v1561, %v1639
  %v1656 = vadd.f32 %v1564, %v1640
  %v1657 = vadd.f32 %v1569, %v1641
  %v1658 = vadd.f32 %v1572, %v1642
  %v1659 = vadd.f32 %v1577, %v1643
  %v1660 = vadd.f32 %v1580, %v1644
  %v1661 = vadd.f32 %v1585, %v1645
  %v1662 = vadd.f32 %v1588, %v1646
  %v1663 = vadd.f32 %v1593, %v1647
  %v1664 = vadd.f32 %v1596, %v1648
  %v1665 = vadd.f32 %v1601, %v1649
  %v1666 = vadd.f32 %v1604, %v1650
  %v1667 = vadd.f32 %v1609, %v1651
  %v1668 = vadd.f32 %v1612, %v1652
  %v1669 = vadd.f32 %v1617, %v1653
  %v1670 = vadd.f32 %v1620, %v1654
  %v1671 = vmax.f32 %v1655, 0.0
  %v1672 = vmax.f32 %v1656, 0.0
  %v1673 = vmax.f32 %v1657, 0.0
  %v1674 = vmax.f32 %v1658, 0.0
  %v1675 = vmax.f32 %v1659, 0.0
  %v1676 = vmax.f32 %v1660, 0.0
  %v1677 = vmax.f32 %v1661, 0.0
  %v1678 = vmax.f32 %v1662, 0.0
  %v1679 = vmax.f32 %v1663, 0.0
  %v1680 = vmax.f32 %v1664, 0.0
  %v1681 = vmax.f32 %v1665, 0.0
  %v1682 = vmax.f32 %v1666, 0.0
  %v1683 = vmax.f32 %v1667, 0.0
  %v1684 = vmax.f32 %v1668, 0.0
  %v1685 = vmax.f32 %v1669, 0.0
  %v1686 = vmax.f32 %v1670, 0.0
  %1687 = vst [vmem:[%s4] sm:$0xff] %v1671
  %1688 = vst [vmem:[%s4 + $0x8] sm:$0xff] %v1672
  %1689 = vst [vmem:[%s4 + $0x10] sm:$0xff] %v1673
  %1690 = vst [vmem:[%s4 + $0x18] sm:$0xff] %v1674
  %1691 = vst [vmem:[%s4 + $0x20] sm:$0xff] %v1675
  %1692 = vst [vmem:[%s4 + $0x28] sm:$0xff] %v1676
  %1693 = vst [vmem:[%s4 + $0x30] sm:$0xff] %v1677
  %1694 = vst [vmem:[%s4 + $0x38] sm:$0xff] %v1678
  %1695 = vst [vmem:[%s4 + $0x40] sm:$0xff] %v1679
  %1696 = vst [vmem:[%s4 + $0x48] sm:$0xff] %v1680
  %1697 = vst [vmem:[%s4 + $0x50] sm:$0xff] %v1681
  %1698 = vst [vmem:[%s4 + $0x58] sm:$0xff] %v1682
  %1699 = vst [vmem:[%s4 + $0x60] sm:$0xff] %v1683
  %1700 = vst [vmem:[%s4 + $0x68] sm:$0xff] %v1684
  %1701 = vst [vmem:[%s4 + $0x70] sm:$0xff] %v1685
  %1702 = vst [vmem:[%s4 + $0x78] sm:$0xff] %v1686
  // Predicated region
  $region18: #{resnet_forward.26} parent=0 // pred_check
    _
  $region19: #{resnet_forward.26} parent=0 // pred_check_branch
    %1704 = sbr.rel (0) target = $region21
  $region20: #{resnet_forward.26} parent=0 // pred_region
    _
  $region21: #{resnet_forward.26} parent=0 // pred_fallthru
    _
  // Predicated region
  $region22: #{resnet_forward.26} parent=0 // pred_check
    _
  $region23: #{resnet_forward.26} parent=0 // pred_check_branch
    %1706 = sbr.rel (0) target = $region25
  $region24: #{resnet_forward.26} parent=0 // pred_region
    _
  $region25: #{resnet_forward.26} parent=0 // pred_fallthru
    _

</llo_original>
